<compile_context>
chip_gen: v7x
topology: tpu7x:2x2x1
jax: 0.10.0
libtpu: 0.0.40
codegen_flags: <defaults>
</compile_context>

<pallas_src>
import functools
import math

import jax
import jax.numpy as jnp
from jax.experimental import pallas as pl
from jax.experimental.pallas import tpu as pltpu

NEG_SLOPE = 0.01   # F.leaky_relu default
LN_EPS = 1e-5      # nn.LayerNorm default


def _leaky_relu(y):
    return jnp.where(y > 0, y, NEG_SLOPE * y)


def _layer_norm(v, gamma, beta):
    mu = jnp.mean(v, axis=-1, keepdims=True)
    var = jnp.mean(jnp.square(v - mu), axis=-1, keepdims=True)
    return (v - mu) * jax.lax.rsqrt(var + LN_EPS) * gamma + beta


# ---------------------------------------------------------------------------
# Kernel 1: fused downsample + input-projection + pos-embedding + full
# TransformerEncoder stack (post-norm, relu FFN, eval mode).
#   grid = (n_layers,) [arbitrary]; the (B, L, C) output block is resident
#   across the layer axis and doubles as the sequence state; per-layer weights
#   stream through the layer grid axis (double-buffered by the pipeline).
# ---------------------------------------------------------------------------
def _encoder_stack_kernel(srch_ref, srca_ref, wd_ref, bd_ref,
                          win_ref, bin_ref, pos_ref,
                          wq_ref, bq_ref, wk_ref, bk_ref, wv_ref, bv_ref,
                          wo_ref, bo_ref, ln1g_ref, ln1b_ref,
                          wf1_ref, bf1_ref, wf2_ref, bf2_ref,
                          ln2g_ref, ln2b_ref,
                          o_ref, *, n_heads):
    l_id = pl.program_id(0)
    B, L, C = o_ref.shape
    dh = C // n_heads
    scale = 1.0 / math.sqrt(dh)

    @pl.when(l_id == 0)
    def _embed():
        # downsample: Linear(n_hi -> n_enc) on the tail of the raw input.
        a = jnp.dot(srca_ref[...].astype(jnp.bfloat16), wd_ref[...],
                    preferred_element_type=jnp.float32) + bd_ref[...]
        seq = jnp.concatenate([srch_ref[...], a], axis=1)            # (B, L)
        # input_projection(Linear(1, C)) + positional embedding, fused.
        state = (seq[:, :, None] * win_ref[...].reshape(1, 1, C)
                 + bin_ref[...].reshape(1, 1, C)
                 + pos_ref[...][None, :, :])                          # (B, L, C)
        o_ref[...] = state.astype(o_ref.dtype)

    x3 = o_ref[...]                          # (B, L, C) resident f32 state
    x2 = x3.reshape(B * L, C)
    xb = x2.astype(jnp.bfloat16)

    def proj(w_ref, b_ref):
        return (jnp.dot(xb, w_ref[0], preferred_element_type=jnp.float32)
                + b_ref[0])

    # ---- self-attention: 3 separate lane-aligned projections ---------------
    q = (proj(wq_ref, bq_ref) * scale).reshape(B, L, C).astype(jnp.bfloat16)
    k = proj(wk_ref, bk_ref).reshape(B, L, C).astype(jnp.bfloat16)
    v = proj(wv_ref, bv_ref).reshape(B, L, C).astype(jnp.bfloat16)

    heads = []
    for h in range(n_heads):                 # static loop over heads
        lo = h * dh
        qh = q[:, :, lo:lo + dh]
        kh = k[:, :, lo:lo + dh]
        vh = v[:, :, lo:lo + dh]
        s = jnp.einsum('bqd,bkd->bqk', qh, kh,
                       preferred_element_type=jnp.float32)
        s = s - jnp.max(s, axis=-1, keepdims=True)
        p = jnp.exp(s)
        p = p * pl.reciprocal(jnp.sum(p, axis=-1, keepdims=True), approx=True)
        heads.append(jnp.einsum('bqk,bkd->bqd', p.astype(jnp.bfloat16), vh,
                                preferred_element_type=jnp.float32))
    ctx = jnp.concatenate(heads, axis=-1).reshape(B * L, C)
    attn = jnp.dot(ctx.astype(jnp.bfloat16), wo_ref[0],
                   preferred_element_type=jnp.float32) + bo_ref[0]

    h1 = _layer_norm(x2 + attn, ln1g_ref[0], ln1b_ref[0])            # post-norm 1

    # ---- feed-forward (relu, dim_feedforward = 4*C) -------------------------
    ff = jnp.dot(h1.astype(jnp.bfloat16), wf1_ref[0],
                 preferred_element_type=jnp.float32) + bf1_ref[0]
    ff = jnp.maximum(ff, 0.0)
    ff = jnp.dot(ff.astype(jnp.bfloat16), wf2_ref[0],
                 preferred_element_type=jnp.float32) + bf2_ref[0]

    y = _layer_norm(h1 + ff, ln2g_ref[0], ln2b_ref[0])               # post-norm 2
    o_ref[...] = y.reshape(B, L, C).astype(o_ref.dtype)


def encoder_stack(src_head, src_a, params, *, n_heads):
    B, n_enc = src_head.shape
    n_hi = src_a.shape[1]
    C = params['w_in'].shape[-1]
    nl = params['wq'].shape[0]
    L = 2 * n_enc
    pos = params['pos_emb'][:L]              # arange(L) lookup == static slice

    c2 = lambda l: (0, 0)                    # constants: resident, DMA'd once
    p3 = lambda l: (l, 0, 0)                 # per-layer weights: streamed

    per_layer = [
        ('wq', (1, C, C)), ('bq', (1, 1, C)),
        ('wk', (1, C, C)), ('bk', (1, 1, C)),
        ('wv', (1, C, C)), ('bv', (1, 1, C)),
        ('wo', (1, C, C)), ('bo', (1, 1, C)),
        ('ln1_g', (1, 1, C)), ('ln1_b', (1, 1, C)),
        ('wf1', (1, C, 4 * C)), ('bf1', (1, 1, 4 * C)),
        ('wf2', (1, 4 * C, C)), ('bf2', (1, 1, C)),
        ('ln2_g', (1, 1, C)), ('ln2_b', (1, 1, C)),
    ]

    in_specs = [
        pl.BlockSpec((B, n_enc), c2),        # raw head of the sequence
        pl.BlockSpec((B, n_hi), c2),         # raw tail (downsample input)
        pl.BlockSpec((n_hi, n_enc), c2),     # downsample W (bf16)
        pl.BlockSpec((1, n_enc), c2),        # downsample b
        pl.BlockSpec((1, C), c2),            # input_projection W
        pl.BlockSpec((1, C), c2),            # input_projection b
        pl.BlockSpec((L, C), c2),            # positional embedding slab
    ] + [pl.BlockSpec(shape, p3) for _, shape in per_layer]

    args = [src_head, src_a, params['wd'], params['bd'],
            params['w_in'], params['b_in'], pos] + \
           [params[name] for name, _ in per_layer]

    # NOTE(production sizing): at large C set vmem_limit_bytes explicitly
    # (~12*C^2 bytes of bf16 weights per layer, double-buffered) — v7x has only
    # 64 MiB physical / 32 MiB default scoped VMEM.
    return pl.pallas_call(
        functools.partial(_encoder_stack_kernel, n_heads=n_heads),
        out_shape=jax.ShapeDtypeStruct((B, L, C), jnp.float32),
        grid=(nl,),
        in_specs=in_specs,
        out_specs=pl.BlockSpec((B, L, C), lambda l: (0, 0, 0)),
        compiler_params=pltpu.CompilerParams(
            dimension_semantics=("arbitrary",)),
    )(*args)


# ---------------------------------------------------------------------------
# Kernel 2: fused head  fc1 -> fc2 -> fc3  (leaky_relu after each).
# Single launch, all weights resident in VMEM, intermediates never hit HBM.
# ---------------------------------------------------------------------------
def _head_kernel(x_ref, w1_ref, b1_ref, w2_ref, b2_ref, w3_ref, b3_ref, o_ref):
    h = jnp.dot(x_ref[...].astype(jnp.bfloat16), w1_ref[...],
                preferred_element_type=jnp.float32) + b1_ref[...]
    h = _leaky_relu(h)
    h = jnp.dot(h.astype(jnp.bfloat16), w2_ref[...],
                preferred_element_type=jnp.float32) + b2_ref[...]
    h = _leaky_relu(h)
    h = jnp.dot(h.astype(jnp.bfloat16), w3_ref[...],
                preferred_element_type=jnp.float32) + b3_ref[...]
    o_ref[...] = _leaky_relu(h).astype(o_ref.dtype)


def head_mlp(flat, params):
    B = flat.shape[0]
    n_out = params['fc3_w'].shape[-1]
    return pl.pallas_call(
        _head_kernel,
        out_shape=jax.ShapeDtypeStruct((B, n_out), jnp.float32),
    )(flat, params['fc1_w'], params['fc1_b'],
      params['fc2_w'], params['fc2_b'],
      params['fc3_w'], params['fc3_b'])


# ---------------------------------------------------------------------------
# Parameter init (deterministic, synthetic) and forward wrapper.
# Big matmul weights stored in bf16 (streamed at half the bytes);
# biases / LayerNorm / embeddings stay f32.
# ---------------------------------------------------------------------------
def init_params(key, *, n_enc, n_hi, channels, n_heads, n_layers, n_outputs):
    C = channels
    bf = jnp.bfloat16
    keys = iter(jax.random.split(key, 64))

    def w(shape, dtype=jnp.float32, scale=0.05):
        return (scale * jax.random.normal(next(keys), shape)).astype(dtype)

    params = dict(
        # downsample: Linear(n_hi, n_enc) stored as (n_hi, n_enc) for x @ W
        wd=w((n_hi, n_enc), bf), bd=w((1, n_enc)),
        # input_projection: Linear(1, C)
        w_in=w((1, C)), b_in=w((1, C)),
        # input_pos_embedding: Embedding(256, C)
        pos_emb=w((256, C)),
        # heads: fc1(C*2*n_enc -> 1024), fc2(1024 -> 64), fc3(64 -> n_outputs)
        fc1_w=w((C * 2 * n_enc, 1024), bf), fc1_b=w((1, 1024)),
        fc2_w=w((1024, 64), bf), fc2_b=w((1, 64)),
        fc3_w=w((64, n_outputs), bf), fc3_b=w((1, n_outputs)),
        # per-layer encoder weights, stacked along a leading layer axis
        wq=w((n_layers, C, C), bf), bq=w((n_layers, 1, C)),
        wk=w((n_layers, C, C), bf), bk=w((n_layers, 1, C)),
        wv=w((n_layers, C, C), bf), bv=w((n_layers, 1, C)),
        wo=w((n_layers, C, C), bf), bo=w((n_layers, 1, C)),
        ln1_g=jnp.ones((n_layers, 1, C), jnp.float32),
        ln1_b=jnp.zeros((n_layers, 1, C), jnp.float32),
        wf1=w((n_layers, C, 4 * C), bf), bf1=w((n_layers, 1, 4 * C)),
        wf2=w((n_layers, 4 * C, C), bf), bf2=w((n_layers, 1, C)),
        ln2_g=jnp.ones((n_layers, 1, C), jnp.float32),
        ln2_b=jnp.zeros((n_layers, 1, C), jnp.float32),
    )
    return params


def xp2label_seg_forward(x, params, *, n_enc, n_hi, channels, n_heads):
    B = x.shape[0]
    x = x.reshape(B, n_enc + n_hi)           # x.view(-1, n_enc + n_hi, 1)
    src_head = x[:, :n_enc]                  # src[:, :n_enc, 0]
    src_a = x[:, n_enc:]                     # src[:, -n_hi:, 0]

    # downsample + input_projection + pos-emb + full TransformerEncoder, fused.
    enc = encoder_stack(src_head, src_a, params, n_heads=n_heads)  # (B, 2*n_enc, C)

    # flatten + dropout(identity, eval) + fused fc1/fc2/fc3 with leaky_relu.
    flat = enc.reshape(B, -1)
    return head_mlp(flat, params)


if __name__ == "__main__":
    # Small synthetic configuration (module defaults scaled down).
    B = 2
    n_enc, n_hi = 10, 246                    # seq len into encoder = 2*n_enc = 20
    channels, n_heads = 32, 4                # head_dim = 8
    n_layers, n_outputs = 2, 4

    key = jax.random.PRNGKey(0)
    pkey, xkey = jax.random.split(key)
    params = init_params(pkey, n_enc=n_enc, n_hi=n_hi, channels=channels,
                         n_heads=n_heads, n_layers=n_layers,
                         n_outputs=n_outputs)
    x = jax.random.normal(xkey, (B, n_enc + n_hi), dtype=jnp.float32)

    fwd = jax.jit(functools.partial(xp2label_seg_forward, n_enc=n_enc,
                                    n_hi=n_hi, channels=channels,
                                    n_heads=n_heads))
    out = jax.block_until_ready(fwd(x, params))
    assert out.shape == (B, n_outputs), out.shape
    assert bool(jnp.all(jnp.isfinite(out)))
    print("KERNEL_OK")
</pallas_src>

<mosaic_0001>
module attributes {stable_mosaic.version = 11 : i64} {
  func.func @_encoder_stack_kernel(%arg0: i32, %arg1: memref<2x10xf32, #tpu.memory_space<vmem>>, %arg2: memref<2x246xf32, #tpu.memory_space<vmem>>, %arg3: memref<246x10xbf16, #tpu.memory_space<vmem>>, %arg4: memref<1x10xf32, #tpu.memory_space<vmem>>, %arg5: memref<1x32xf32, #tpu.memory_space<vmem>>, %arg6: memref<1x32xf32, #tpu.memory_space<vmem>>, %arg7: memref<20x32xf32, #tpu.memory_space<vmem>>, %arg8: memref<1x32x32xbf16, #tpu.memory_space<vmem>>, %arg9: memref<1x1x32xf32, #tpu.memory_space<vmem>>, %arg10: memref<1x32x32xbf16, #tpu.memory_space<vmem>>, %arg11: memref<1x1x32xf32, #tpu.memory_space<vmem>>, %arg12: memref<1x32x32xbf16, #tpu.memory_space<vmem>>, %arg13: memref<1x1x32xf32, #tpu.memory_space<vmem>>, %arg14: memref<1x32x32xbf16, #tpu.memory_space<vmem>>, %arg15: memref<1x1x32xf32, #tpu.memory_space<vmem>>, %arg16: memref<1x1x32xf32, #tpu.memory_space<vmem>>, %arg17: memref<1x1x32xf32, #tpu.memory_space<vmem>>, %arg18: memref<1x32x128xbf16, #tpu.memory_space<vmem>>, %arg19: memref<1x1x128xf32, #tpu.memory_space<vmem>>, %arg20: memref<1x128x32xbf16, #tpu.memory_space<vmem>>, %arg21: memref<1x1x32xf32, #tpu.memory_space<vmem>>, %arg22: memref<1x1x32xf32, #tpu.memory_space<vmem>>, %arg23: memref<1x1x32xf32, #tpu.memory_space<vmem>>, %arg24: memref<2x20x32xf32, #tpu.memory_space<vmem>>) attributes {dimension_semantics = [#tpu.dimension_semantics<arbitrary>], iteration_bounds = array<i64: 2>, scalar_prefetch = 0 : i64, scratch_operands = 0 : i64, tpu.core_type = #tpu.core_type<tc>, window_params = [{pipeline_mode = #tpu.pipeline_mode<synchronous>, transform_indices = @transform_0, window_bounds = array<i64: 2, 10>}, {pipeline_mode = #tpu.pipeline_mode<synchronous>, transform_indices = @transform_1, window_bounds = array<i64: 2, 246>}, {pipeline_mode = #tpu.pipeline_mode<synchronous>, transform_indices = @transform_2, window_bounds = array<i64: 246, 10>}, {pipeline_mode = #tpu.pipeline_mode<synchronous>, transform_indices = @transform_3, window_bounds = array<i64: 1, 10>}, {pipeline_mode = #tpu.pipeline_mode<synchronous>, transform_indices = @transform_4, window_bounds = array<i64: 1, 32>}, {pipeline_mode = #tpu.pipeline_mode<synchronous>, transform_indices = @transform_5, window_bounds = array<i64: 1, 32>}, {pipeline_mode = #tpu.pipeline_mode<synchronous>, transform_indices = @transform_6, window_bounds = array<i64: 20, 32>}, {transform_indices = @transform_7, window_bounds = array<i64: 1, 32, 32>}, {transform_indices = @transform_8, window_bounds = array<i64: 1, 1, 32>}, {transform_indices = @transform_9, window_bounds = array<i64: 1, 32, 32>}, {transform_indices = @transform_10, window_bounds = array<i64: 1, 1, 32>}, {transform_indices = @transform_11, window_bounds = array<i64: 1, 32, 32>}, {transform_indices = @transform_12, window_bounds = array<i64: 1, 1, 32>}, {transform_indices = @transform_13, window_bounds = array<i64: 1, 32, 32>}, {transform_indices = @transform_14, window_bounds = array<i64: 1, 1, 32>}, {transform_indices = @transform_15, window_bounds = array<i64: 1, 1, 32>}, {transform_indices = @transform_16, window_bounds = array<i64: 1, 1, 32>}, {transform_indices = @transform_17, window_bounds = array<i64: 1, 32, 128>}, {transform_indices = @transform_18, window_bounds = array<i64: 1, 1, 128>}, {transform_indices = @transform_19, window_bounds = array<i64: 1, 128, 32>}, {transform_indices = @transform_20, window_bounds = array<i64: 1, 1, 32>}, {transform_indices = @transform_21, window_bounds = array<i64: 1, 1, 32>}, {transform_indices = @transform_22, window_bounds = array<i64: 1, 1, 32>}, {pipeline_mode = #tpu.pipeline_mode<synchronous>, transform_indices = @transform_23, window_bounds = array<i64: 2, 20, 32>}]} {
    %c0_i32 = arith.constant 0 : i32
    %0 = arith.cmpi eq, %arg0, %c0_i32 : i32
    %1 = arith.extui %0 : i1 to i32
    %c0_i32_0 = arith.constant 0 : i32
    %2 = arith.cmpi ne, %1, %c0_i32_0 : i32
    scf.if %2 {
      %c0_87 = arith.constant 0 : index
      %c0_88 = arith.constant 0 : index
      %183 = vector.load %arg2[%c0_87, %c0_88] : memref<2x246xf32, #tpu.memory_space<vmem>>, vector<2x246xf32>
      %184 = arith.truncf %183 : vector<2x246xf32> to vector<2x246xbf16>
      %c0_89 = arith.constant 0 : index
      %c0_90 = arith.constant 0 : index
      %185 = vector.load %arg3[%c0_89, %c0_90] : memref<246x10xbf16, #tpu.memory_space<vmem>>, vector<246x10xbf16>
      %cst_91 = arith.constant dense<0.000000e+00> : vector<2x10xf32>
      %186 = tpu.matmul %184, %185, %cst_91 {dimension_numbers = #tpu.dot_dimension_numbers<[1], [0], [0], [1], [0, 0, 1, 1], [], []>} : vector<2x246xbf16>, vector<246x10xbf16>, vector<2x10xf32> -> vector<2x10xf32>
      %c0_92 = arith.constant 0 : index
      %c0_93 = arith.constant 0 : index
      %187 = vector.load %arg4[%c0_92, %c0_93] : memref<1x10xf32, #tpu.memory_space<vmem>>, vector<1x10xf32>
      %188 = vector.broadcast %187 : vector<1x10xf32> to vector<2x10xf32>
      %189 = arith.addf %186, %188 : vector<2x10xf32>
      %c0_94 = arith.constant 0 : index
      %c0_95 = arith.constant 0 : index
      %190 = vector.load %arg1[%c0_94, %c0_95] : memref<2x10xf32, #tpu.memory_space<vmem>>, vector<2x10xf32>
      %191 = tpu.concatenate %190, %189 in 1 : vector<2x10xf32>, vector<2x10xf32> -> vector<2x20xf32>
      %192 = vector.shape_cast %191 : vector<2x20xf32> to vector<2x20x1xf32>
      %c0_96 = arith.constant 0 : index
      %c0_97 = arith.constant 0 : index
      %193 = vector.load %arg5[%c0_96, %c0_97] : memref<1x32xf32, #tpu.memory_space<vmem>>, vector<1x32xf32>
      %194 = vector.shape_cast %193 : vector<1x32xf32> to vector<1x1x32xf32>
      %195 = vector.broadcast %192 : vector<2x20x1xf32> to vector<2x20x32xf32>
      %196 = vector.broadcast %194 : vector<1x1x32xf32> to vector<2x20x32xf32>
      %197 = arith.mulf %195, %196 : vector<2x20x32xf32>
      %c0_98 = arith.constant 0 : index
      %c0_99 = arith.constant 0 : index
      %198 = vector.load %arg6[%c0_98, %c0_99] : memref<1x32xf32, #tpu.memory_space<vmem>>, vector<1x32xf32>
      %199 = vector.shape_cast %198 : vector<1x32xf32> to vector<1x1x32xf32>
      %200 = vector.broadcast %199 : vector<1x1x32xf32> to vector<2x20x32xf32>
      %201 = arith.addf %197, %200 : vector<2x20x32xf32>
      %c0_100 = arith.constant 0 : index
      %c0_101 = arith.constant 0 : index
      %202 = vector.load %arg7[%c0_100, %c0_101] : memref<20x32xf32, #tpu.memory_space<vmem>>, vector<20x32xf32>
      %203 = vector.shape_cast %202 : vector<20x32xf32> to vector<1x20x32xf32>
      %204 = vector.broadcast %203 : vector<1x20x32xf32> to vector<2x20x32xf32>
      %205 = arith.addf %201, %204 : vector<2x20x32xf32>
      %c0_102 = arith.constant 0 : index
      %c0_103 = arith.constant 0 : index
      %c0_104 = arith.constant 0 : index
      %206 = vector.load %arg24[%c0_102, %c0_103, %c0_104] : memref<2x20x32xf32, #tpu.memory_space<vmem>>, vector<2x20x32xf32>
      tpu.vector_store %arg24[%c0_102, %c0_103, %c0_104], %205 {strides = array<i32>} : memref<2x20x32xf32, #tpu.memory_space<vmem>>, vector<2x20x32xf32>,
    } else {
    }
    %c0 = arith.constant 0 : index
    %c0_1 = arith.constant 0 : index
    %c0_2 = arith.constant 0 : index
    %3 = vector.load %arg24[%c0, %c0_1, %c0_2] : memref<2x20x32xf32, #tpu.memory_space<vmem>>, vector<2x20x32xf32>
    %4 = vector.shape_cast %3 : vector<2x20x32xf32> to vector<40x32xf32>
    %5 = arith.truncf %4 : vector<40x32xf32> to vector<40x32xbf16>
    %c0_3 = arith.constant 0 : index
    %c0_4 = arith.constant 0 : index
    %c0_5 = arith.constant 0 : index
    %6 = vector.load %arg8[%c0_3, %c0_4, %c0_5] : memref<1x32x32xbf16, #tpu.memory_space<vmem>>, vector<1x32x32xbf16>
    %7 = vector.shape_cast %6 : vector<1x32x32xbf16> to vector<32x32xbf16>
    %cst = arith.constant dense<0.000000e+00> : vector<40x32xf32>
    %8 = tpu.matmul %5, %7, %cst {dimension_numbers = #tpu.dot_dimension_numbers<[1], [0], [0], [1], [0, 0, 1, 1], [], []>} : vector<40x32xbf16>, vector<32x32xbf16>, vector<40x32xf32> -> vector<40x32xf32>
    %c0_6 = arith.constant 0 : index
    %c0_7 = arith.constant 0 : index
    %c0_8 = arith.constant 0 : index
    %9 = vector.load %arg9[%c0_6, %c0_7, %c0_8] : memref<1x1x32xf32, #tpu.memory_space<vmem>>, vector<1x1x32xf32>
    %10 = vector.shape_cast %9 : vector<1x1x32xf32> to vector<1x32xf32>
    %11 = vector.broadcast %10 : vector<1x32xf32> to vector<40x32xf32>
    %12 = arith.addf %8, %11 : vector<40x32xf32>
    %cst_9 = arith.constant 0.353553385 : f32
    %13 = vector.broadcast %cst_9 : f32 to vector<40x32xf32>
    %14 = arith.mulf %12, %13 : vector<40x32xf32>
    %15 = vector.shape_cast %14 : vector<40x32xf32> to vector<2x20x32xf32>
    %16 = arith.truncf %15 : vector<2x20x32xf32> to vector<2x20x32xbf16>
    %c0_10 = arith.constant 0 : index
    %c0_11 = arith.constant 0 : index
    %c0_12 = arith.constant 0 : index
    %17 = vector.load %arg10[%c0_10, %c0_11, %c0_12] : memref<1x32x32xbf16, #tpu.memory_space<vmem>>, vector<1x32x32xbf16>
    %18 = vector.shape_cast %17 : vector<1x32x32xbf16> to vector<32x32xbf16>
    %cst_13 = arith.constant dense<0.000000e+00> : vector<40x32xf32>
    %19 = tpu.matmul %5, %18, %cst_13 {dimension_numbers = #tpu.dot_dimension_numbers<[1], [0], [0], [1], [0, 0, 1, 1], [], []>} : vector<40x32xbf16>, vector<32x32xbf16>, vector<40x32xf32> -> vector<40x32xf32>
    %c0_14 = arith.constant 0 : index
    %c0_15 = arith.constant 0 : index
    %c0_16 = arith.constant 0 : index
    %20 = vector.load %arg11[%c0_14, %c0_15, %c0_16] : memref<1x1x32xf32, #tpu.memory_space<vmem>>, vector<1x1x32xf32>
    %21 = vector.shape_cast %20 : vector<1x1x32xf32> to vector<1x32xf32>
    %22 = vector.broadcast %21 : vector<1x32xf32> to vector<40x32xf32>
    %23 = arith.addf %19, %22 : vector<40x32xf32>
    %24 = vector.shape_cast %23 : vector<40x32xf32> to vector<2x20x32xf32>
    %25 = arith.truncf %24 : vector<2x20x32xf32> to vector<2x20x32xbf16>
    %c0_17 = arith.constant 0 : index
    %c0_18 = arith.constant 0 : index
    %c0_19 = arith.constant 0 : index
    %26 = vector.load %arg12[%c0_17, %c0_18, %c0_19] : memref<1x32x32xbf16, #tpu.memory_space<vmem>>, vector<1x32x32xbf16>
    %27 = vector.shape_cast %26 : vector<1x32x32xbf16> to vector<32x32xbf16>
    %cst_20 = arith.constant dense<0.000000e+00> : vector<40x32xf32>
    %28 = tpu.matmul %5, %27, %cst_20 {dimension_numbers = #tpu.dot_dimension_numbers<[1], [0], [0], [1], [0, 0, 1, 1], [], []>} : vector<40x32xbf16>, vector<32x32xbf16>, vector<40x32xf32> -> vector<40x32xf32>
    %c0_21 = arith.constant 0 : index
    %c0_22 = arith.constant 0 : index
    %c0_23 = arith.constant 0 : index
    %29 = vector.load %arg13[%c0_21, %c0_22, %c0_23] : memref<1x1x32xf32, #tpu.memory_space<vmem>>, vector<1x1x32xf32>
    %30 = vector.shape_cast %29 : vector<1x1x32xf32> to vector<1x32xf32>
    %31 = vector.broadcast %30 : vector<1x32xf32> to vector<40x32xf32>
    %32 = arith.addf %28, %31 : vector<40x32xf32>
    %33 = vector.shape_cast %32 : vector<40x32xf32> to vector<2x20x32xf32>
    %34 = arith.truncf %33 : vector<2x20x32xf32> to vector<2x20x32xbf16>
    %35 = vector.extract_strided_slice %16 {offsets = [0, 0, 0], sizes = [2, 20, 8], strides = [1, 1, 1]} : vector<2x20x32xbf16> to vector<2x20x8xbf16>
    %36 = vector.extract_strided_slice %25 {offsets = [0, 0, 0], sizes = [2, 20, 8], strides = [1, 1, 1]} : vector<2x20x32xbf16> to vector<2x20x8xbf16>
    %37 = vector.extract_strided_slice %34 {offsets = [0, 0, 0], sizes = [2, 20, 8], strides = [1, 1, 1]} : vector<2x20x32xbf16> to vector<2x20x8xbf16>
    "tpu.trace_start"() <{level = 10 : i32, message = "bqd,bkd->bqk"}> : () -> ()
    %cst_24 = arith.constant dense<0.000000e+00> : vector<2x20x20xf32>
    %38 = tpu.matmul %35, %36, %cst_24 {dimension_numbers = #tpu.dot_dimension_numbers<[2], [2], [1], [1], [0, 0, 0, 1, 1, 1], [0], [0]>} : vector<2x20x8xbf16>, vector<2x20x8xbf16>, vector<2x20x20xf32> -> vector<2x20x20xf32>
    "tpu.trace_stop"() : () -> ()
    %cst_25 = arith.constant dense<0xFF800000> : vector<2x20xf32>
    %39 = vector.multi_reduction <maximumf>, %38, %cst_25 [2] : vector<2x20x20xf32> to vector<2x20xf32>
    %40 = vector.shape_cast %39 : vector<2x20xf32> to vector<2x20x1xf32>
    %41 = vector.broadcast %40 : vector<2x20x1xf32> to vector<2x20x20xf32>
    %42 = arith.subf %38, %41 : vector<2x20x20xf32>
    %43 = math.exp %42 : vector<2x20x20xf32>
    %cst_26 = arith.constant dense<0.000000e+00> : vector<2x20xf32>
    %44 = vector.multi_reduction <add>, %43, %cst_26 [2] : vector<2x20x20xf32> to vector<2x20xf32>
    %45 = vector.shape_cast %44 : vector<2x20xf32> to vector<2x20x1xf32>
    %46 = tpu.reciprocal %45 {approx = true} : vector<2x20x1xf32> -> vector<2x20x1xf32>
    %47 = vector.broadcast %46 : vector<2x20x1xf32> to vector<2x20x20xf32>
    %48 = arith.mulf %43, %47 : vector<2x20x20xf32>
    %49 = arith.truncf %48 : vector<2x20x20xf32> to vector<2x20x20xbf16>
    "tpu.trace_start"() <{level = 10 : i32, message = "bqk,bkd->bqd"}> : () -> ()
    %cst_27 = arith.constant dense<0.000000e+00> : vector<2x20x8xf32>
    %50 = tpu.matmul %49, %37, %cst_27 {dimension_numbers = #tpu.dot_dimension_numbers<[2], [1], [1], [2], [0, 0, 0, 1, 1, 2], [0], [0]>} : vector<2x20x20xbf16>, vector<2x20x8xbf16>, vector<2x20x8xf32> -> vector<2x20x8xf32>
    "tpu.trace_stop"() : () -> ()
    %51 = vector.extract_strided_slice %16 {offsets = [0, 0, 8], sizes = [2, 20, 8], strides = [1, 1, 1]} : vector<2x20x32xbf16> to vector<2x20x8xbf16>
    %52 = vector.extract_strided_slice %25 {offsets = [0, 0, 8], sizes = [2, 20, 8], strides = [1, 1, 1]} : vector<2x20x32xbf16> to vector<2x20x8xbf16>
    %53 = vector.extract_strided_slice %34 {offsets = [0, 0, 8], sizes = [2, 20, 8], strides = [1, 1, 1]} : vector<2x20x32xbf16> to vector<2x20x8xbf16>
    "tpu.trace_start"() <{level = 10 : i32, message = "bqd,bkd->bqk"}> : () -> ()
    %cst_28 = arith.constant dense<0.000000e+00> : vector<2x20x20xf32>
    %54 = tpu.matmul %51, %52, %cst_28 {dimension_numbers = #tpu.dot_dimension_numbers<[2], [2], [1], [1], [0, 0, 0, 1, 1, 1], [0], [0]>} : vector<2x20x8xbf16>, vector<2x20x8xbf16>, vector<2x20x20xf32> -> vector<2x20x20xf32>
    "tpu.trace_stop"() : () -> ()
    %cst_29 = arith.constant dense<0xFF800000> : vector<2x20xf32>
    %55 = vector.multi_reduction <maximumf>, %54, %cst_29 [2] : vector<2x20x20xf32> to vector<2x20xf32>
    %56 = vector.shape_cast %55 : vector<2x20xf32> to vector<2x20x1xf32>
    %57 = vector.broadcast %56 : vector<2x20x1xf32> to vector<2x20x20xf32>
    %58 = arith.subf %54, %57 : vector<2x20x20xf32>
    %59 = math.exp %58 : vector<2x20x20xf32>
    %cst_30 = arith.constant dense<0.000000e+00> : vector<2x20xf32>
    %60 = vector.multi_reduction <add>, %59, %cst_30 [2] : vector<2x20x20xf32> to vector<2x20xf32>
    %61 = vector.shape_cast %60 : vector<2x20xf32> to vector<2x20x1xf32>
    %62 = tpu.reciprocal %61 {approx = true} : vector<2x20x1xf32> -> vector<2x20x1xf32>
    %63 = vector.broadcast %62 : vector<2x20x1xf32> to vector<2x20x20xf32>
    %64 = arith.mulf %59, %63 : vector<2x20x20xf32>
    %65 = arith.truncf %64 : vector<2x20x20xf32> to vector<2x20x20xbf16>
    "tpu.trace_start"() <{level = 10 : i32, message = "bqk,bkd->bqd"}> : () -> ()
    %cst_31 = arith.constant dense<0.000000e+00> : vector<2x20x8xf32>
    %66 = tpu.matmul %65, %53, %cst_31 {dimension_numbers = #tpu.dot_dimension_numbers<[2], [1], [1], [2], [0, 0, 0, 1, 1, 2], [0], [0]>} : vector<2x20x20xbf16>, vector<2x20x8xbf16>, vector<2x20x8xf32> -> vector<2x20x8xf32>
    "tpu.trace_stop"() : () -> ()
    %67 = vector.extract_strided_slice %16 {offsets = [0, 0, 16], sizes = [2, 20, 8], strides = [1, 1, 1]} : vector<2x20x32xbf16> to vector<2x20x8xbf16>
    %68 = vector.extract_strided_slice %25 {offsets = [0, 0, 16], sizes = [2, 20, 8], strides = [1, 1, 1]} : vector<2x20x32xbf16> to vector<2x20x8xbf16>
    %69 = vector.extract_strided_slice %34 {offsets = [0, 0, 16], sizes = [2, 20, 8], strides = [1, 1, 1]} : vector<2x20x32xbf16> to vector<2x20x8xbf16>
    "tpu.trace_start"() <{level = 10 : i32, message = "bqd,bkd->bqk"}> : () -> ()
    %cst_32 = arith.constant dense<0.000000e+00> : vector<2x20x20xf32>
    %70 = tpu.matmul %67, %68, %cst_32 {dimension_numbers = #tpu.dot_dimension_numbers<[2], [2], [1], [1], [0, 0, 0, 1, 1, 1], [0], [0]>} : vector<2x20x8xbf16>, vector<2x20x8xbf16>, vector<2x20x20xf32> -> vector<2x20x20xf32>
    "tpu.trace_stop"() : () -> ()
    %cst_33 = arith.constant dense<0xFF800000> : vector<2x20xf32>
    %71 = vector.multi_reduction <maximumf>, %70, %cst_33 [2] : vector<2x20x20xf32> to vector<2x20xf32>
    %72 = vector.shape_cast %71 : vector<2x20xf32> to vector<2x20x1xf32>
    %73 = vector.broadcast %72 : vector<2x20x1xf32> to vector<2x20x20xf32>
    %74 = arith.subf %70, %73 : vector<2x20x20xf32>
    %75 = math.exp %74 : vector<2x20x20xf32>
    %cst_34 = arith.constant dense<0.000000e+00> : vector<2x20xf32>
    %76 = vector.multi_reduction <add>, %75, %cst_34 [2] : vector<2x20x20xf32> to vector<2x20xf32>
    %77 = vector.shape_cast %76 : vector<2x20xf32> to vector<2x20x1xf32>
    %78 = tpu.reciprocal %77 {approx = true} : vector<2x20x1xf32> -> vector<2x20x1xf32>
    %79 = vector.broadcast %78 : vector<2x20x1xf32> to vector<2x20x20xf32>
    %80 = arith.mulf %75, %79 : vector<2x20x20xf32>
    %81 = arith.truncf %80 : vector<2x20x20xf32> to vector<2x20x20xbf16>
    "tpu.trace_start"() <{level = 10 : i32, message = "bqk,bkd->bqd"}> : () -> ()
    %cst_35 = arith.constant dense<0.000000e+00> : vector<2x20x8xf32>
    %82 = tpu.matmul %81, %69, %cst_35 {dimension_numbers = #tpu.dot_dimension_numbers<[2], [1], [1], [2], [0, 0, 0, 1, 1, 2], [0], [0]>} : vector<2x20x20xbf16>, vector<2x20x8xbf16>, vector<2x20x8xf32> -> vector<2x20x8xf32>
    "tpu.trace_stop"() : () -> ()
    %83 = vector.extract_strided_slice %16 {offsets = [0, 0, 24], sizes = [2, 20, 8], strides = [1, 1, 1]} : vector<2x20x32xbf16> to vector<2x20x8xbf16>
    %84 = vector.extract_strided_slice %25 {offsets = [0, 0, 24], sizes = [2, 20, 8], strides = [1, 1, 1]} : vector<2x20x32xbf16> to vector<2x20x8xbf16>
    %85 = vector.extract_strided_slice %34 {offsets = [0, 0, 24], sizes = [2, 20, 8], strides = [1, 1, 1]} : vector<2x20x32xbf16> to vector<2x20x8xbf16>
    "tpu.trace_start"() <{level = 10 : i32, message = "bqd,bkd->bqk"}> : () -> ()
    %cst_36 = arith.constant dense<0.000000e+00> : vector<2x20x20xf32>
    %86 = tpu.matmul %83, %84, %cst_36 {dimension_numbers = #tpu.dot_dimension_numbers<[2], [2], [1], [1], [0, 0, 0, 1, 1, 1], [0], [0]>} : vector<2x20x8xbf16>, vector<2x20x8xbf16>, vector<2x20x20xf32> -> vector<2x20x20xf32>
    "tpu.trace_stop"() : () -> ()
    %cst_37 = arith.constant dense<0xFF800000> : vector<2x20xf32>
    %87 = vector.multi_reduction <maximumf>, %86, %cst_37 [2] : vector<2x20x20xf32> to vector<2x20xf32>
    %88 = vector.shape_cast %87 : vector<2x20xf32> to vector<2x20x1xf32>
    %89 = vector.broadcast %88 : vector<2x20x1xf32> to vector<2x20x20xf32>
    %90 = arith.subf %86, %89 : vector<2x20x20xf32>
    %91 = math.exp %90 : vector<2x20x20xf32>
    %cst_38 = arith.constant dense<0.000000e+00> : vector<2x20xf32>
    %92 = vector.multi_reduction <add>, %91, %cst_38 [2] : vector<2x20x20xf32> to vector<2x20xf32>
    %93 = vector.shape_cast %92 : vector<2x20xf32> to vector<2x20x1xf32>
    %94 = tpu.reciprocal %93 {approx = true} : vector<2x20x1xf32> -> vector<2x20x1xf32>
    %95 = vector.broadcast %94 : vector<2x20x1xf32> to vector<2x20x20xf32>
    %96 = arith.mulf %91, %95 : vector<2x20x20xf32>
    %97 = arith.truncf %96 : vector<2x20x20xf32> to vector<2x20x20xbf16>
    "tpu.trace_start"() <{level = 10 : i32, message = "bqk,bkd->bqd"}> : () -> ()
    %cst_39 = arith.constant dense<0.000000e+00> : vector<2x20x8xf32>
    %98 = tpu.matmul %97, %85, %cst_39 {dimension_numbers = #tpu.dot_dimension_numbers<[2], [1], [1], [2], [0, 0, 0, 1, 1, 2], [0], [0]>} : vector<2x20x20xbf16>, vector<2x20x8xbf16>, vector<2x20x8xf32> -> vector<2x20x8xf32>
    "tpu.trace_stop"() : () -> ()
    %99 = tpu.concatenate %50, %66, %82, %98 in 2 : vector<2x20x8xf32>, vector<2x20x8xf32>, vector<2x20x8xf32>, vector<2x20x8xf32> -> vector<2x20x32xf32>
    %100 = vector.shape_cast %99 : vector<2x20x32xf32> to vector<40x32xf32>
    %101 = arith.truncf %100 : vector<40x32xf32> to vector<40x32xbf16>
    %c0_40 = arith.constant 0 : index
    %c0_41 = arith.constant 0 : index
    %c0_42 = arith.constant 0 : index
    %102 = vector.load %arg14[%c0_40, %c0_41, %c0_42] : memref<1x32x32xbf16, #tpu.memory_space<vmem>>, vector<1x32x32xbf16>
    %103 = vector.shape_cast %102 : vector<1x32x32xbf16> to vector<32x32xbf16>
    %cst_43 = arith.constant dense<0.000000e+00> : vector<40x32xf32>
    %104 = tpu.matmul %101, %103, %cst_43 {dimension_numbers = #tpu.dot_dimension_numbers<[1], [0], [0], [1], [0, 0, 1, 1], [], []>} : vector<40x32xbf16>, vector<32x32xbf16>, vector<40x32xf32> -> vector<40x32xf32>
    %c0_44 = arith.constant 0 : index
    %c0_45 = arith.constant 0 : index
    %c0_46 = arith.constant 0 : index
    %105 = vector.load %arg15[%c0_44, %c0_45, %c0_46] : memref<1x1x32xf32, #tpu.memory_space<vmem>>, vector<1x1x32xf32>
    %106 = vector.shape_cast %105 : vector<1x1x32xf32> to vector<1x32xf32>
    %107 = vector.broadcast %106 : vector<1x32xf32> to vector<40x32xf32>
    %108 = arith.addf %104, %107 : vector<40x32xf32>
    %109 = arith.addf %4, %108 : vector<40x32xf32>
    %c0_47 = arith.constant 0 : index
    %c0_48 = arith.constant 0 : index
    %c0_49 = arith.constant 0 : index
    %110 = vector.load %arg16[%c0_47, %c0_48, %c0_49] : memref<1x1x32xf32, #tpu.memory_space<vmem>>, vector<1x1x32xf32>
    %111 = vector.shape_cast %110 : vector<1x1x32xf32> to vector<1x32xf32>
    %c0_50 = arith.constant 0 : index
    %c0_51 = arith.constant 0 : index
    %c0_52 = arith.constant 0 : index
    %112 = vector.load %arg17[%c0_50, %c0_51, %c0_52] : memref<1x1x32xf32, #tpu.memory_space<vmem>>, vector<1x1x32xf32>
    %113 = vector.shape_cast %112 : vector<1x1x32xf32> to vector<1x32xf32>
    %cst_53 = arith.constant dense<0.000000e+00> : vector<40xf32>
    %114 = vector.multi_reduction <add>, %109, %cst_53 [1] : vector<40x32xf32> to vector<40xf32>
    %115 = vector.shape_cast %114 : vector<40xf32> to vector<40x1xf32>
    %cst_54 = arith.constant 3.200000e+01 : f32
    %116 = vector.broadcast %cst_54 : f32 to vector<40x1xf32>
    %117 = arith.divf %115, %116 : vector<40x1xf32>
    %118 = vector.broadcast %117 : vector<40x1xf32> to vector<40x32xf32>
    %119 = arith.subf %109, %118 : vector<40x32xf32>
    %120 = arith.mulf %119, %119 : vector<40x32xf32>
    %cst_55 = arith.constant dense<0.000000e+00> : vector<40xf32>
    %121 = vector.multi_reduction <add>, %120, %cst_55 [1] : vector<40x32xf32> to vector<40xf32>
    %122 = vector.shape_cast %121 : vector<40xf32> to vector<40x1xf32>
    %cst_56 = arith.constant 3.200000e+01 : f32
    %123 = vector.broadcast %cst_56 : f32 to vector<40x1xf32>
    %124 = arith.divf %122, %123 : vector<40x1xf32>
    %125 = vector.broadcast %117 : vector<40x1xf32> to vector<40x32xf32>
    %126 = arith.subf %109, %125 : vector<40x32xf32>
    %cst_57 = arith.constant 9.99999974E-6 : f32
    %127 = vector.broadcast %cst_57 : f32 to vector<40x1xf32>
    %128 = arith.addf %124, %127 : vector<40x1xf32>
    %129 = math.rsqrt %128 : vector<40x1xf32>
    %130 = vector.broadcast %129 : vector<40x1xf32> to vector<40x32xf32>
    %131 = arith.mulf %126, %130 : vector<40x32xf32>
    %132 = vector.broadcast %111 : vector<1x32xf32> to vector<40x32xf32>
    %133 = arith.mulf %131, %132 : vector<40x32xf32>
    %134 = vector.broadcast %113 : vector<1x32xf32> to vector<40x32xf32>
    %135 = arith.addf %133, %134 : vector<40x32xf32>
    %136 = arith.truncf %135 : vector<40x32xf32> to vector<40x32xbf16>
    %c0_58 = arith.constant 0 : index
    %c0_59 = arith.constant 0 : index
    %c0_60 = arith.constant 0 : index
    %137 = vector.load %arg18[%c0_58, %c0_59, %c0_60] : memref<1x32x128xbf16, #tpu.memory_space<vmem>>, vector<1x32x128xbf16>
    %138 = vector.shape_cast %137 : vector<1x32x128xbf16> to vector<32x128xbf16>
    %cst_61 = arith.constant dense<0.000000e+00> : vector<40x128xf32>
    %139 = tpu.matmul %136, %138, %cst_61 {dimension_numbers = #tpu.dot_dimension_numbers<[1], [0], [0], [1], [0, 0, 1, 1], [], []>} : vector<40x32xbf16>, vector<32x128xbf16>, vector<40x128xf32> -> vector<40x128xf32>
    %c0_62 = arith.constant 0 : index
    %c0_63 = arith.constant 0 : index
    %c0_64 = arith.constant 0 : index
    %140 = vector.load %arg19[%c0_62, %c0_63, %c0_64] : memref<1x1x128xf32, #tpu.memory_space<vmem>>, vector<1x1x128xf32>
    %141 = vector.shape_cast %140 : vector<1x1x128xf32> to vector<1x128xf32>
    %142 = vector.broadcast %141 : vector<1x128xf32> to vector<40x128xf32>
    %143 = arith.addf %139, %142 : vector<40x128xf32>
    %cst_65 = arith.constant 0.000000e+00 : f32
    %144 = vector.broadcast %cst_65 : f32 to vector<40x128xf32>
    %145 = arith.maximumf %143, %144 : vector<40x128xf32>
    %146 = arith.truncf %145 : vector<40x128xf32> to vector<40x128xbf16>
    %c0_66 = arith.constant 0 : index
    %c0_67 = arith.constant 0 : index
    %c0_68 = arith.constant 0 : index
    %147 = vector.load %arg20[%c0_66, %c0_67, %c0_68] : memref<1x128x32xbf16, #tpu.memory_space<vmem>>, vector<1x128x32xbf16>
    %148 = vector.shape_cast %147 : vector<1x128x32xbf16> to vector<128x32xbf16>
    %cst_69 = arith.constant dense<0.000000e+00> : vector<40x32xf32>
    %149 = tpu.matmul %146, %148, %cst_69 {dimension_numbers = #tpu.dot_dimension_numbers<[1], [0], [0], [1], [0, 0, 1, 1], [], []>} : vector<40x128xbf16>, vector<128x32xbf16>, vector<40x32xf32> -> vector<40x32xf32>
    %c0_70 = arith.constant 0 : index
    %c0_71 = arith.constant 0 : index
    %c0_72 = arith.constant 0 : index
    %150 = vector.load %arg21[%c0_70, %c0_71, %c0_72] : memref<1x1x32xf32, #tpu.memory_space<vmem>>, vector<1x1x32xf32>
    %151 = vector.shape_cast %150 : vector<1x1x32xf32> to vector<1x32xf32>
    %152 = vector.broadcast %151 : vector<1x32xf32> to vector<40x32xf32>
    %153 = arith.addf %149, %152 : vector<40x32xf32>
    %154 = arith.addf %135, %153 : vector<40x32xf32>
    %c0_73 = arith.constant 0 : index
    %c0_74 = arith.constant 0 : index
    %c0_75 = arith.constant 0 : index
    %155 = vector.load %arg22[%c0_73, %c0_74, %c0_75] : memref<1x1x32xf32, #tpu.memory_space<vmem>>, vector<1x1x32xf32>
    %156 = vector.shape_cast %155 : vector<1x1x32xf32> to vector<1x32xf32>
    %c0_76 = arith.constant 0 : index
    %c0_77 = arith.constant 0 : index
    %c0_78 = arith.constant 0 : index
    %157 = vector.load %arg23[%c0_76, %c0_77, %c0_78] : memref<1x1x32xf32, #tpu.memory_space<vmem>>, vector<1x1x32xf32>
    %158 = vector.shape_cast %157 : vector<1x1x32xf32> to vector<1x32xf32>
    %cst_79 = arith.constant dense<0.000000e+00> : vector<40xf32>
    %159 = vector.multi_reduction <add>, %154, %cst_79 [1] : vector<40x32xf32> to vector<40xf32>
    %160 = vector.shape_cast %159 : vector<40xf32> to vector<40x1xf32>
    %cst_80 = arith.constant 3.200000e+01 : f32
    %161 = vector.broadcast %cst_80 : f32 to vector<40x1xf32>
    %162 = arith.divf %160, %161 : vector<40x1xf32>
    %163 = vector.broadcast %162 : vector<40x1xf32> to vector<40x32xf32>
    %164 = arith.subf %154, %163 : vector<40x32xf32>
    %165 = arith.mulf %164, %164 : vector<40x32xf32>
    %cst_81 = arith.constant dense<0.000000e+00> : vector<40xf32>
    %166 = vector.multi_reduction <add>, %165, %cst_81 [1] : vector<40x32xf32> to vector<40xf32>
    %167 = vector.shape_cast %166 : vector<40xf32> to vector<40x1xf32>
    %cst_82 = arith.constant 3.200000e+01 : f32
    %168 = vector.broadcast %cst_82 : f32 to vector<40x1xf32>
    %169 = arith.divf %167, %168 : vector<40x1xf32>
    %170 = vector.broadcast %162 : vector<40x1xf32> to vector<40x32xf32>
    %171 = arith.subf %154, %170 : vector<40x32xf32>
    %cst_83 = arith.constant 9.99999974E-6 : f32
    %172 = vector.broadcast %cst_83 : f32 to vector<40x1xf32>
    %173 = arith.addf %169, %172 : vector<40x1xf32>
    %174 = math.rsqrt %173 : vector<40x1xf32>
    %175 = vector.broadcast %174 : vector<40x1xf32> to vector<40x32xf32>
    %176 = arith.mulf %171, %175 : vector<40x32xf32>
    %177 = vector.broadcast %156 : vector<1x32xf32> to vector<40x32xf32>
    %178 = arith.mulf %176, %177 : vector<40x32xf32>
    %179 = vector.broadcast %158 : vector<1x32xf32> to vector<40x32xf32>
    %180 = arith.addf %178, %179 : vector<40x32xf32>
    %181 = vector.shape_cast %180 : vector<40x32xf32> to vector<2x20x32xf32>
    %c0_84 = arith.constant 0 : index
    %c0_85 = arith.constant 0 : index
    %c0_86 = arith.constant 0 : index
    %182 = vector.load %arg24[%c0_84, %c0_85, %c0_86] : memref<2x20x32xf32, #tpu.memory_space<vmem>>, vector<2x20x32xf32>
    tpu.vector_store %arg24[%c0_84, %c0_85, %c0_86], %181 {strides = array<i32>} : memref<2x20x32xf32, #tpu.memory_space<vmem>>, vector<2x20x32xf32>,
    return
  }
  func.func @transform_0(%arg0: i32) -> (i32, i32) {
    %c0_i32 = arith.constant 0 : i32
    %c0_i32_0 = arith.constant 0 : i32
    %c0_i32_1 = arith.constant 0 : i32
    return %c0_i32, %c0_i32_0 : i32, i32
  }
  func.func @transform_1(%arg0: i32) -> (i32, i32) {
    %c0_i32 = arith.constant 0 : i32
    %c0_i32_0 = arith.constant 0 : i32
    %c0_i32_1 = arith.constant 0 : i32
    return %c0_i32, %c0_i32_0 : i32, i32
  }
  func.func @transform_2(%arg0: i32) -> (i32, i32) {
    %c0_i32 = arith.constant 0 : i32
    %c0_i32_0 = arith.constant 0 : i32
    %c0_i32_1 = arith.constant 0 : i32
    return %c0_i32, %c0_i32_0 : i32, i32
  }
  func.func @transform_3(%arg0: i32) -> (i32, i32) {
    %c0_i32 = arith.constant 0 : i32
    %c0_i32_0 = arith.constant 0 : i32
    %c0_i32_1 = arith.constant 0 : i32
    return %c0_i32, %c0_i32_0 : i32, i32
  }
  func.func @transform_4(%arg0: i32) -> (i32, i32) {
    %c0_i32 = arith.constant 0 : i32
    %c0_i32_0 = arith.constant 0 : i32
    %c0_i32_1 = arith.constant 0 : i32
    return %c0_i32, %c0_i32_0 : i32, i32
  }
  func.func @transform_5(%arg0: i32) -> (i32, i32) {
    %c0_i32 = arith.constant 0 : i32
    %c0_i32_0 = arith.constant 0 : i32
    %c0_i32_1 = arith.constant 0 : i32
    return %c0_i32, %c0_i32_0 : i32, i32
  }
  func.func @transform_6(%arg0: i32) -> (i32, i32) {
    %c0_i32 = arith.constant 0 : i32
    %c0_i32_0 = arith.constant 0 : i32
    %c0_i32_1 = arith.constant 0 : i32
    return %c0_i32, %c0_i32_0 : i32, i32
  }
  func.func @transform_7(%arg0: i32) -> (i32, i32, i32) {
    %c0_i32 = arith.constant 0 : i32
    %c0_i32_0 = arith.constant 0 : i32
    %c0_i32_1 = arith.constant 0 : i32
    return %arg0, %c0_i32, %c0_i32_0 : i32, i32, i32
  }
  func.func @transform_8(%arg0: i32) -> (i32, i32, i32) {
    %c0_i32 = arith.constant 0 : i32
    %c0_i32_0 = arith.constant 0 : i32
    %c0_i32_1 = arith.constant 0 : i32
    return %arg0, %c0_i32, %c0_i32_0 : i32, i32, i32
  }
  func.func @transform_9(%arg0: i32) -> (i32, i32, i32) {
    %c0_i32 = arith.constant 0 : i32
    %c0_i32_0 = arith.constant 0 : i32
    %c0_i32_1 = arith.constant 0 : i32
    return %arg0, %c0_i32, %c0_i32_0 : i32, i32, i32
  }
  func.func @transform_10(%arg0: i32) -> (i32, i32, i32) {
    %c0_i32 = arith.constant 0 : i32
    %c0_i32_0 = arith.constant 0 : i32
    %c0_i32_1 = arith.constant 0 : i32
    return %arg0, %c0_i32, %c0_i32_0 : i32, i32, i32
  }
  func.func @transform_11(%arg0: i32) -> (i32, i32, i32) {
    %c0_i32 = arith.constant 0 : i32
    %c0_i32_0 = arith.constant 0 : i32
    %c0_i32_1 = arith.constant 0 : i32
    return %arg0, %c0_i32, %c0_i32_0 : i32, i32, i32
  }
  func.func @transform_12(%arg0: i32) -> (i32, i32, i32) {
    %c0_i32 = arith.constant 0 : i32
    %c0_i32_0 = arith.constant 0 : i32
    %c0_i32_1 = arith.constant 0 : i32
    return %arg0, %c0_i32, %c0_i32_0 : i32, i32, i32
  }
  func.func @transform_13(%arg0: i32) -> (i32, i32, i32) {
    %c0_i32 = arith.constant 0 : i32
    %c0_i32_0 = arith.constant 0 : i32
    %c0_i32_1 = arith.constant 0 : i32
    return %arg0, %c0_i32, %c0_i32_0 : i32, i32, i32
  }
  func.func @transform_14(%arg0: i32) -> (i32, i32, i32) {
    %c0_i32 = arith.constant 0 : i32
    %c0_i32_0 = arith.constant 0 : i32
    %c0_i32_1 = arith.constant 0 : i32
    return %arg0, %c0_i32, %c0_i32_0 : i32, i32, i32
  }
  func.func @transform_15(%arg0: i32) -> (i32, i32, i32) {
    %c0_i32 = arith.constant 0 : i32
    %c0_i32_0 = arith.constant 0 : i32
    %c0_i32_1 = arith.constant 0 : i32
    return %arg0, %c0_i32, %c0_i32_0 : i32, i32, i32
  }
  func.func @transform_16(%arg0: i32) -> (i32, i32, i32) {
    %c0_i32 = arith.constant 0 : i32
    %c0_i32_0 = arith.constant 0 : i32
    %c0_i32_1 = arith.constant 0 : i32
    return %arg0, %c0_i32, %c0_i32_0 : i32, i32, i32
  }
  func.func @transform_17(%arg0: i32) -> (i32, i32, i32) {
    %c0_i32 = arith.constant 0 : i32
    %c0_i32_0 = arith.constant 0 : i32
    %c0_i32_1 = arith.constant 0 : i32
    return %arg0, %c0_i32, %c0_i32_0 : i32, i32, i32
  }
  func.func @transform_18(%arg0: i32) -> (i32, i32, i32) {
    %c0_i32 = arith.constant 0 : i32
    %c0_i32_0 = arith.constant 0 : i32
    %c0_i32_1 = arith.constant 0 : i32
    return %arg0, %c0_i32, %c0_i32_0 : i32, i32, i32
  }
  func.func @transform_19(%arg0: i32) -> (i32, i32, i32) {
    %c0_i32 = arith.constant 0 : i32
    %c0_i32_0 = arith.constant 0 : i32
    %c0_i32_1 = arith.constant 0 : i32
    return %arg0, %c0_i32, %c0_i32_0 : i32, i32, i32
  }
  func.func @transform_20(%arg0: i32) -> (i32, i32, i32) {
    %c0_i32 = arith.constant 0 : i32
    %c0_i32_0 = arith.constant 0 : i32
    %c0_i32_1 = arith.constant 0 : i32
    return %arg0, %c0_i32, %c0_i32_0 : i32, i32, i32
  }
  func.func @transform_21(%arg0: i32) -> (i32, i32, i32) {
    %c0_i32 = arith.constant 0 : i32
    %c0_i32_0 = arith.constant 0 : i32
    %c0_i32_1 = arith.constant 0 : i32
    return %arg0, %c0_i32, %c0_i32_0 : i32, i32, i32
  }
  func.func @transform_22(%arg0: i32) -> (i32, i32, i32) {
    %c0_i32 = arith.constant 0 : i32
    %c0_i32_0 = arith.constant 0 : i32
    %c0_i32_1 = arith.constant 0 : i32
    return %arg0, %c0_i32, %c0_i32_0 : i32, i32, i32
  }
  func.func @transform_23(%arg0: i32) -> (i32, i32, i32) {
    %c0_i32 = arith.constant 0 : i32
    %c0_i32_0 = arith.constant 0 : i32
    %c0_i32_1 = arith.constant 0 : i32
    %c0_i32_2 = arith.constant 0 : i32
    return %c0_i32, %c0_i32_0, %c0_i32_1 : i32, i32, i32
  }
}

module attributes {stable_mosaic.version = 11 : i64} {
  func.func @_head_kernel(%arg0: memref<2x640xf32, #tpu.memory_space<vmem>>, %arg1: memref<640x1024xbf16, #tpu.memory_space<vmem>>, %arg2: memref<1x1024xf32, #tpu.memory_space<vmem>>, %arg3: memref<1024x64xbf16, #tpu.memory_space<vmem>>, %arg4: memref<1x64xf32, #tpu.memory_space<vmem>>, %arg5: memref<64x4xbf16, #tpu.memory_space<vmem>>, %arg6: memref<1x4xf32, #tpu.memory_space<vmem>>, %arg7: memref<2x4xf32, #tpu.memory_space<vmem>>) attributes {dimension_semantics = [], scalar_prefetch = 0 : i64, scratch_operands = 0 : i64, tpu.core_type = #tpu.core_type<tc>} {
    %c0 = arith.constant 0 : index
    %c0_0 = arith.constant 0 : index
    %0 = vector.load %arg0[%c0, %c0_0] : memref<2x640xf32, #tpu.memory_space<vmem>>, vector<2x640xf32>
    %1 = arith.truncf %0 : vector<2x640xf32> to vector<2x640xbf16>
    %c0_1 = arith.constant 0 : index
    %c0_2 = arith.constant 0 : index
    %2 = vector.load %arg1[%c0_1, %c0_2] : memref<640x1024xbf16, #tpu.memory_space<vmem>>, vector<640x1024xbf16>
    %cst = arith.constant dense<0.000000e+00> : vector<2x1024xf32>
    %3 = tpu.matmul %1, %2, %cst {dimension_numbers = #tpu.dot_dimension_numbers<[1], [0], [0], [1], [0, 0, 1, 1], [], []>} : vector<2x640xbf16>, vector<640x1024xbf16>, vector<2x1024xf32> -> vector<2x1024xf32>
    %c0_3 = arith.constant 0 : index
    %c0_4 = arith.constant 0 : index
    %4 = vector.load %arg2[%c0_3, %c0_4] : memref<1x1024xf32, #tpu.memory_space<vmem>>, vector<1x1024xf32>
    %5 = vector.broadcast %4 : vector<1x1024xf32> to vector<2x1024xf32>
    %6 = arith.addf %3, %5 : vector<2x1024xf32>
    %cst_5 = arith.constant 0.000000e+00 : f32
    %7 = vector.broadcast %cst_5 : f32 to vector<2x1024xf32>
    %8 = arith.cmpf ogt, %6, %7 : vector<2x1024xf32>
    %cst_6 = arith.constant 0.00999999977 : f32
    %9 = vector.broadcast %cst_6 : f32 to vector<2x1024xf32>
    %10 = arith.mulf %9, %6 : vector<2x1024xf32>
    %11 = arith.select %8, %6, %10 : vector<2x1024xi1>, vector<2x1024xf32>
    %12 = arith.truncf %11 : vector<2x1024xf32> to vector<2x1024xbf16>
    %c0_7 = arith.constant 0 : index
    %c0_8 = arith.constant 0 : index
    %13 = vector.load %arg3[%c0_7, %c0_8] : memref<1024x64xbf16, #tpu.memory_space<vmem>>, vector<1024x64xbf16>
    %cst_9 = arith.constant dense<0.000000e+00> : vector<2x64xf32>
    %14 = tpu.matmul %12, %13, %cst_9 {dimension_numbers = #tpu.dot_dimension_numbers<[1], [0], [0], [1], [0, 0, 1, 1], [], []>} : vector<2x1024xbf16>, vector<1024x64xbf16>, vector<2x64xf32> -> vector<2x64xf32>
    %c0_10 = arith.constant 0 : index
    %c0_11 = arith.constant 0 : index
    %15 = vector.load %arg4[%c0_10, %c0_11] : memref<1x64xf32, #tpu.memory_space<vmem>>, vector<1x64xf32>
    %16 = vector.broadcast %15 : vector<1x64xf32> to vector<2x64xf32>
    %17 = arith.addf %14, %16 : vector<2x64xf32>
    %cst_12 = arith.constant 0.000000e+00 : f32
    %18 = vector.broadcast %cst_12 : f32 to vector<2x64xf32>
    %19 = arith.cmpf ogt, %17, %18 : vector<2x64xf32>
    %cst_13 = arith.constant 0.00999999977 : f32
    %20 = vector.broadcast %cst_13 : f32 to vector<2x64xf32>
    %21 = arith.mulf %20, %17 : vector<2x64xf32>
    %22 = arith.select %19, %17, %21 : vector<2x64xi1>, vector<2x64xf32>
    %23 = arith.truncf %22 : vector<2x64xf32> to vector<2x64xbf16>
    %c0_14 = arith.constant 0 : index
    %c0_15 = arith.constant 0 : index
    %24 = vector.load %arg5[%c0_14, %c0_15] : memref<64x4xbf16, #tpu.memory_space<vmem>>, vector<64x4xbf16>
    %cst_16 = arith.constant dense<0.000000e+00> : vector<2x4xf32>
    %25 = tpu.matmul %23, %24, %cst_16 {dimension_numbers = #tpu.dot_dimension_numbers<[1], [0], [0], [1], [0, 0, 1, 1], [], []>} : vector<2x64xbf16>, vector<64x4xbf16>, vector<2x4xf32> -> vector<2x4xf32>
    %c0_17 = arith.constant 0 : index
    %c0_18 = arith.constant 0 : index
    %26 = vector.load %arg6[%c0_17, %c0_18] : memref<1x4xf32, #tpu.memory_space<vmem>>, vector<1x4xf32>
    %27 = vector.broadcast %26 : vector<1x4xf32> to vector<2x4xf32>
    %28 = arith.addf %25, %27 : vector<2x4xf32>
    %cst_19 = arith.constant 0.000000e+00 : f32
    %29 = vector.broadcast %cst_19 : f32 to vector<2x4xf32>
    %30 = arith.cmpf ogt, %28, %29 : vector<2x4xf32>
    %cst_20 = arith.constant 0.00999999977 : f32
    %31 = vector.broadcast %cst_20 : f32 to vector<2x4xf32>
    %32 = arith.mulf %31, %28 : vector<2x4xf32>
    %33 = arith.select %30, %28, %32 : vector<2x4xi1>, vector<2x4xf32>
    %c0_21 = arith.constant 0 : index
    %c0_22 = arith.constant 0 : index
    %34 = vector.load %arg7[%c0_21, %c0_22] : memref<2x4xf32, #tpu.memory_space<vmem>>, vector<2x4xf32>
    tpu.vector_store %arg7[%c0_21, %c0_22], %33 {strides = array<i32>} : memref<2x4xf32, #tpu.memory_space<vmem>>, vector<2x4xf32>,
    return
  }
}

</mosaic_0001>

<llo_original>
// kernel: xp2label_seg_forward.2
$region0: #{xp2label_seg_forward.2}
  #allocation0 [shape = 'u32[]', space=smem, size = 0x4, offset = 0x4, fixed_abs, tag = 'smem constant byte address 0x4 - core index']
  #allocation1 [shape = 'u32[144,128]{1,0:T(1,128)}', space=vmem, size = 0x12000, scoped, tag = 'internal scratch']
  %s0 = inlined_call_operand.vmem [shape: f32[2,10], index: 0, kind: input, shape index: {}]
  %s1 = inlined_call_operand.vmem [shape: f32[2,246], index: 1, kind: input, shape index: {}]
  %s2 = inlined_call_operand.vmem [shape: bf16[246,10], index: 2, kind: input, shape index: {}]
  %s3 = inlined_call_operand.hbm [shape: f32[1,10], index: 3, kind: input, shape index: {}]
  %s4 = inlined_call_operand.hbm [shape: f32[1,32], index: 4, kind: input, shape index: {}]
  %s5 = inlined_call_operand.hbm [shape: f32[1,32], index: 5, kind: input, shape index: {}]
  %s6 = inlined_call_operand.vmem [shape: f32[20,32], index: 6, kind: input, shape index: {}]
  %s7 = inlined_call_operand.hbm [shape: bf16[2,32,32], index: 7, kind: input, shape index: {}]
  %s8 = inlined_call_operand.hbm [shape: f32[2,1,32], index: 8, kind: input, shape index: {}]
  %s9 = inlined_call_operand.hbm [shape: bf16[2,32,32], index: 9, kind: input, shape index: {}]
  %s10 = inlined_call_operand.hbm [shape: f32[2,1,32], index: 10, kind: input, shape index: {}]
  %s11 = inlined_call_operand.hbm [shape: bf16[2,32,32], index: 11, kind: input, shape index: {}]
  %s12 = inlined_call_operand.hbm [shape: f32[2,1,32], index: 12, kind: input, shape index: {}]
  %s13 = inlined_call_operand.hbm [shape: bf16[2,32,32], index: 13, kind: input, shape index: {}]
  %s14 = inlined_call_operand.hbm [shape: f32[2,1,32], index: 14, kind: input, shape index: {}]
  %s15 = inlined_call_operand.hbm [shape: f32[2,1,32], index: 15, kind: input, shape index: {}]
  %s16 = inlined_call_operand.hbm [shape: f32[2,1,32], index: 16, kind: input, shape index: {}]
  %s17 = inlined_call_operand.hbm [shape: bf16[2,32,128], index: 17, kind: input, shape index: {}]
  %s18 = inlined_call_operand.hbm [shape: f32[2,1,128], index: 18, kind: input, shape index: {}]
  %s19 = inlined_call_operand.vmem [shape: bf16[2,128,32], index: 19, kind: input, shape index: {}]
  %s20 = inlined_call_operand.hbm [shape: f32[2,1,32], index: 20, kind: input, shape index: {}]
  %s21 = inlined_call_operand.hbm [shape: f32[2,1,32], index: 21, kind: input, shape index: {}]
  %s22 = inlined_call_operand.hbm [shape: f32[2,1,32], index: 22, kind: input, shape index: {}]
  %s23 = inlined_call_operand.vmem [shape: f32[2,20,32], index: 23, kind: output, shape index: {}]
  %s24 = sld [smem:[#allocation0]]
  $region201: #{xp2label_seg_forward.2} parent=0
    _
  %s26 = ssub.s32 1, %s24
  %s27 = scalar_select 0, %s26, %s24
  $region1: #{xp2label_seg_forward.2} parent=0
    #allocation2 [shape = 'u8[512]{0}', space=vmem, size = 0x400, scoped, tag = 'input window, operand 3, single buffered']
    #allocation3 [shape = 's32[2]{0}', space=sflag, size = 0x8, scoped, tag = 'scoped memory for xp2label_seg_forward.2']
    #allocation4 [shape = 'u8[512]{0}', space=vmem, size = 0x400, scoped, tag = 'input window, operand 4, single buffered']
    #allocation5 [shape = 's32[1]{0}', space=sflag, size = 0x4, scoped, tag = 'scoped memory for xp2label_seg_forward.2']
    #allocation6 [shape = 'u8[512]{0}', space=vmem, size = 0x400, scoped, tag = 'input window, operand 5, single buffered']
    #allocation7 [shape = 'u8[16384]{0}', space=vmem, size = 0x4000, scoped, tag = 'input window, operand 7']
    #allocation8 [shape = 's32[2]{0}', space=sflag, size = 0x8, scoped, tag = 'scoped memory for xp2label_seg_forward.2']
    #allocation9 [shape = 'u8[1024]{0}', space=vmem, size = 0x400, scoped, tag = 'input window, operand 8']
    #allocation10 [shape = 'u8[16384]{0}', space=vmem, size = 0x4000, scoped, tag = 'input window, operand 9']
    #allocation11 [shape = 's32[2]{0}', space=sflag, size = 0x8, scoped, tag = 'scoped memory for xp2label_seg_forward.2']
    #allocation12 [shape = 'u8[1024]{0}', space=vmem, size = 0x400, scoped, tag = 'input window, operand 10']
    #allocation13 [shape = 'u8[16384]{0}', space=vmem, size = 0x4000, scoped, tag = 'input window, operand 11']
    #allocation14 [shape = 's32[2]{0}', space=sflag, size = 0x8, scoped, tag = 'scoped memory for xp2label_seg_forward.2']
    #allocation15 [shape = 'u8[1024]{0}', space=vmem, size = 0x400, scoped, tag = 'input window, operand 12']
    #allocation16 [shape = 'u8[16384]{0}', space=vmem, size = 0x4000, scoped, tag = 'input window, operand 13']
    #allocation17 [shape = 's32[2]{0}', space=sflag, size = 0x8, scoped, tag = 'scoped memory for xp2label_seg_forward.2']
    #allocation18 [shape = 'u8[1024]{0}', space=vmem, size = 0x400, scoped, tag = 'input window, operand 14']
    #allocation19 [shape = 'u8[1024]{0}', space=vmem, size = 0x400, scoped, tag = 'input window, operand 15']
    #allocation20 [shape = 's32[2]{0}', space=sflag, size = 0x8, scoped, tag = 'scoped memory for xp2label_seg_forward.2']
    #allocation21 [shape = 'u8[1024]{0}', space=vmem, size = 0x400, scoped, tag = 'input window, operand 16']
    #allocation22 [shape = 'u8[16384]{0}', space=vmem, size = 0x4000, scoped, tag = 'input window, operand 17']
    #allocation23 [shape = 's32[2]{0}', space=sflag, size = 0x8, scoped, tag = 'scoped memory for xp2label_seg_forward.2']
    #allocation24 [shape = 'u8[1024]{0}', space=vmem, size = 0x400, scoped, tag = 'input window, operand 18']
    #allocation25 [shape = 'u8[1024]{0}', space=vmem, size = 0x400, scoped, tag = 'input window, operand 20']
    #allocation26 [shape = 's32[2]{0}', space=sflag, size = 0x8, scoped, tag = 'scoped memory for xp2label_seg_forward.2']
    #allocation27 [shape = 'u8[1024]{0}', space=vmem, size = 0x400, scoped, tag = 'input window, operand 21']
    #allocation28 [shape = 'u8[1024]{0}', space=vmem, size = 0x400, scoped, tag = 'input window, operand 22']
    #allocation29 [shape = 's32[2]{0}', space=sflag, size = 0x8, scoped, tag = 'scoped memory for xp2label_seg_forward.2']
    %28 = vsyncpa [#allocation3], 0
    %29 = vsyncpa [#allocation5], 0
    %30 = vsyncpa [#allocation8], 0
    %s31 = scalar_lea.sflag [#allocation8], 1
    %32 = vsyncpa %s31, 0
    %33 = vsyncpa [#allocation11], 0
    %s34 = scalar_lea.sflag [#allocation11], 1
    %35 = vsyncpa %s34, 0
    %36 = vsyncpa [#allocation14], 0
    %s37 = scalar_lea.sflag [#allocation14], 1
    %38 = vsyncpa %s37, 0
    %39 = vsyncpa [#allocation17], 0
    %s40 = scalar_lea.sflag [#allocation17], 1
    %41 = vsyncpa %s40, 0
    %42 = vsyncpa [#allocation20], 0
    %s43 = scalar_lea.sflag [#allocation20], 1
    %44 = vsyncpa %s43, 0
    %45 = vsyncpa [#allocation23], 0
    %s46 = scalar_lea.sflag [#allocation23], 1
    %47 = vsyncpa %s46, 0
    %48 = vsyncpa [#allocation26], 0
    %s49 = scalar_lea.sflag [#allocation26], 1
    %50 = vsyncpa %s49, 0
    %51 = vsyncpa [#allocation29], 0
    %s52 = scalar_lea.sflag [#allocation29], 1
    %53 = vsyncpa %s52, 0
    loop: start=0, step=1, limit=4
    $region2: #{xp2label_seg_forward.2} parent=1 // loop_pre_header
      _
    $region3: #{xp2label_seg_forward.2} parent=1 // loop_header
      %s55 = sphi 0, %s59
      %p56 = scmp.ge.s32.totalorder %s55, 4
      %s63 = sphi 0, %s63
      %s65 = sphi 0, %s63
      %s66 = sphi 0, %s65
      %s80 = sphi 0, %s66
      %s84 = sphi 0, %s84
      %s86 = sphi 0, %s84
      %s87 = sphi 0, %s86
      %s101 = sphi 0, %s87
      %s105 = sphi 0, %s105
      %s107 = sphi 0, %s105
      %s108 = sphi 0, %s107
      %s122 = sphi 0, %s108
      %s126 = sphi 0, %s126
      %s128 = sphi 0, %s126
      %s129 = sphi 0, %s128
      %s143 = sphi 0, %s129
      %s147 = sphi 0, %s147
      %s149 = sphi 0, %s147
      %s150 = sphi 0, %s149
      %s164 = sphi 0, %s150
      %s168 = sphi 0, %s168
      %s170 = sphi 0, %s168
      %s171 = sphi 0, %s170
      %s185 = sphi 0, %s171
      %s189 = sphi 0, %s189
      %s191 = sphi 0, %s189
      %s192 = sphi 0, %s191
      %s206 = sphi 0, %s192
      %s212 = sphi 0, %s214
      %s215 = sphi 0, %s212
      %s216 = sphi 0, %s215
      %s232 = sphi 0, %s216
      %s238 = sphi 0, %s240
      %s241 = sphi 0, %s238
      %s242 = sphi 0, %s241
      %s258 = sphi 0, %s242
      %s264 = sphi 0, %s266
      %s267 = sphi 0, %s264
      %s268 = sphi 0, %s267
      %s284 = sphi 0, %s268
      %s290 = sphi 0, %s292
      %s293 = sphi 0, %s290
      %s294 = sphi 0, %s293
      %s310 = sphi 0, %s294
      %s316 = sphi 0, %s318
      %s319 = sphi 0, %s316
      %s320 = sphi 0, %s319
      %s336 = sphi 0, %s320
      %s342 = sphi 0, %s344
      %s345 = sphi 0, %s342
      %s346 = sphi 0, %s345
      %s362 = sphi 0, %s346
      %s368 = sphi 0, %s370
      %s371 = sphi 0, %s368
      %s372 = sphi 0, %s371
      %s388 = sphi 0, %s372
      %s394 = sphi 0, %s396
      %s397 = sphi 0, %s394
      %s398 = sphi 0, %s397
      %s414 = sphi 0, %s398
      %s420 = sphi 0, %s422
      %s423 = sphi 0, %s420
      %s424 = sphi 0, %s423
      %s440 = sphi 0, %s424
      %s446 = sphi 0, %s448
      %s449 = sphi 0, %s446
      %s450 = sphi 0, %s449
      %s466 = sphi 0, %s450
      %s472 = sphi 0, %s474
      %s475 = sphi 0, %s472
      %s476 = sphi 0, %s475
      %s492 = sphi 0, %s476
      %s498 = sphi 0, %s500
      %s501 = sphi 0, %s498
      %s502 = sphi 0, %s501
      %s518 = sphi 0, %s502
      %s524 = sphi 0, %s526
      %s527 = sphi 0, %s524
      %s528 = sphi 0, %s527
      %s544 = sphi 0, %s528
      %s550 = sphi 0, %s552
      %s553 = sphi 0, %s550
      %s554 = sphi 0, %s553
      %s570 = sphi 0, %s554
      %s576 = sphi 0, %s578
      %s579 = sphi 0, %s576
      %s580 = sphi 0, %s579
      %s596 = sphi 0, %s580
      %s602 = sphi 0, %s604
      %s605 = sphi 0, %s602
      %s606 = sphi 0, %s605
      %s622 = sphi 0, %s606
      %s626 = sphi 0, %s626
      %s628 = sphi 0, %s626
      %s629 = sphi 0, %s628
      %s643 = sphi 0, %s629
    $region4: #{xp2label_seg_forward.2} parent=1 // loop_header_branch
      %58 = sbr.rel (%p56) target = $region8
    $region5: #{xp2label_seg_forward.2} parent=1 // loop_body
      %s60 = ssub.s32 %s55, 1
      %s61 = ssub.s32 %s55, 2
      %s62 = sadd.s32 %s55, 1
      %s64 = sadd.s32 %s63, 1
      %p67 = scmp.eq.s32.totalorder %s55, 1
      %p68 = scmp.ne.s32.totalorder %s63, %s65
      %p69 = scmp.eq.s32.totalorder %s55, 0
      %p70 = por %p68, %p69
      %p71 = scmp.ne.s32.totalorder %s63, %s65
      %p72 = scmp.eq.s32.totalorder %s60, 1
      %p73 = por %p71, %p72
      %p74 = scmp.ne.s32.totalorder %s65, %s66
      %p75 = scmp.eq.s32.totalorder %s60, 0
      %p76 = por %p74, %p75
      %p77 = scmp.ne.s32.totalorder %s65, %s66
      %p78 = scmp.eq.s32.totalorder %s61, 1
      %p79 = por %p77, %p78
      %p81 = scmp.ne.s32.totalorder %s66, %s80
      %p82 = scmp.eq.s32.totalorder %s61, 0
      %p83 = por %p81, %p82
      %s85 = sadd.s32 %s84, 1
      %p88 = scmp.eq.s32.totalorder %s55, 1
      %p89 = scmp.ne.s32.totalorder %s84, %s86
      %p90 = scmp.eq.s32.totalorder %s55, 0
      %p91 = por %p89, %p90
      %p92 = scmp.ne.s32.totalorder %s84, %s86
      %p93 = scmp.eq.s32.totalorder %s60, 1
      %p94 = por %p92, %p93
      %p95 = scmp.ne.s32.totalorder %s86, %s87
      %p96 = scmp.eq.s32.totalorder %s60, 0
      %p97 = por %p95, %p96
      %p98 = scmp.ne.s32.totalorder %s86, %s87
      %p99 = scmp.eq.s32.totalorder %s61, 1
      %p100 = por %p98, %p99
      %p102 = scmp.ne.s32.totalorder %s87, %s101
      %p103 = scmp.eq.s32.totalorder %s61, 0
      %p104 = por %p102, %p103
      %s106 = sadd.s32 %s105, 1
      %p109 = scmp.eq.s32.totalorder %s55, 1
      %p110 = scmp.ne.s32.totalorder %s105, %s107
      %p111 = scmp.eq.s32.totalorder %s55, 0
      %p112 = por %p110, %p111
      %p113 = scmp.ne.s32.totalorder %s105, %s107
      %p114 = scmp.eq.s32.totalorder %s60, 1
      %p115 = por %p113, %p114
      %p116 = scmp.ne.s32.totalorder %s107, %s108
      %p117 = scmp.eq.s32.totalorder %s60, 0
      %p118 = por %p116, %p117
      %p119 = scmp.ne.s32.totalorder %s107, %s108
      %p120 = scmp.eq.s32.totalorder %s61, 1
      %p121 = por %p119, %p120
      %p123 = scmp.ne.s32.totalorder %s108, %s122
      %p124 = scmp.eq.s32.totalorder %s61, 0
      %p125 = por %p123, %p124
      %s127 = sadd.s32 %s126, 1
      %p130 = scmp.eq.s32.totalorder %s55, 1
      %p131 = scmp.ne.s32.totalorder %s126, %s128
      %p132 = scmp.eq.s32.totalorder %s55, 0
      %p133 = por %p131, %p132
      %p134 = scmp.ne.s32.totalorder %s126, %s128
      %p135 = scmp.eq.s32.totalorder %s60, 1
      %p136 = por %p134, %p135
      %p137 = scmp.ne.s32.totalorder %s128, %s129
      %p138 = scmp.eq.s32.totalorder %s60, 0
      %p139 = por %p137, %p138
      %p140 = scmp.ne.s32.totalorder %s128, %s129
      %p141 = scmp.eq.s32.totalorder %s61, 1
      %p142 = por %p140, %p141
      %p144 = scmp.ne.s32.totalorder %s129, %s143
      %p145 = scmp.eq.s32.totalorder %s61, 0
      %p146 = por %p144, %p145
      %s148 = sadd.s32 %s147, 1
      %p151 = scmp.eq.s32.totalorder %s55, 1
      %p152 = scmp.ne.s32.totalorder %s147, %s149
      %p153 = scmp.eq.s32.totalorder %s55, 0
      %p154 = por %p152, %p153
      %p155 = scmp.ne.s32.totalorder %s147, %s149
      %p156 = scmp.eq.s32.totalorder %s60, 1
      %p157 = por %p155, %p156
      %p158 = scmp.ne.s32.totalorder %s149, %s150
      %p159 = scmp.eq.s32.totalorder %s60, 0
      %p160 = por %p158, %p159
      %p161 = scmp.ne.s32.totalorder %s149, %s150
      %p162 = scmp.eq.s32.totalorder %s61, 1
      %p163 = por %p161, %p162
      %p165 = scmp.ne.s32.totalorder %s150, %s164
      %p166 = scmp.eq.s32.totalorder %s61, 0
      %p167 = por %p165, %p166
      %s169 = sadd.s32 %s168, 1
      %p172 = scmp.eq.s32.totalorder %s55, 1
      %p173 = scmp.ne.s32.totalorder %s168, %s170
      %p174 = scmp.eq.s32.totalorder %s55, 0
      %p175 = por %p173, %p174
      %p176 = scmp.ne.s32.totalorder %s168, %s170
      %p177 = scmp.eq.s32.totalorder %s60, 1
      %p178 = por %p176, %p177
      %p179 = scmp.ne.s32.totalorder %s170, %s171
      %p180 = scmp.eq.s32.totalorder %s60, 0
      %p181 = por %p179, %p180
      %p182 = scmp.ne.s32.totalorder %s170, %s171
      %p183 = scmp.eq.s32.totalorder %s61, 1
      %p184 = por %p182, %p183
      %p186 = scmp.ne.s32.totalorder %s171, %s185
      %p187 = scmp.eq.s32.totalorder %s61, 0
      %p188 = por %p186, %p187
      %s190 = sadd.s32 %s189, 1
      %p193 = scmp.eq.s32.totalorder %s55, 1
      %p194 = scmp.ne.s32.totalorder %s189, %s191
      %p195 = scmp.eq.s32.totalorder %s55, 0
      %p196 = por %p194, %p195
      %p197 = scmp.ne.s32.totalorder %s189, %s191
      %p198 = scmp.eq.s32.totalorder %s60, 1
      %p199 = por %p197, %p198
      %p200 = scmp.ne.s32.totalorder %s191, %s192
      %p201 = scmp.eq.s32.totalorder %s60, 0
      %p202 = por %p200, %p201
      %p203 = scmp.ne.s32.totalorder %s191, %s192
      %p204 = scmp.eq.s32.totalorder %s61, 1
      %p205 = por %p203, %p204
      %p207 = scmp.ne.s32.totalorder %s192, %s206
      %p208 = scmp.eq.s32.totalorder %s61, 0
      %p209 = por %p207, %p208
      %s210 = ssub.s32 %s55, %s62
      %p211 = scmp.eq.s32.totalorder %s210, 0
      %s213 = sadd.s32 %s212, 1
      %s214 = scalar_select %p211, %s212, %s213
      %p217 = pneg %p211
      %p218 = scmp.eq.s32.totalorder %s55, 1
      %p219 = por %p217, %p218
      %p220 = scmp.ne.s32.totalorder %s212, %s215
      %p221 = scmp.eq.s32.totalorder %s55, 0
      %p222 = por %p220, %p221
      %p223 = scmp.ne.s32.totalorder %s212, %s215
      %p224 = scmp.eq.s32.totalorder %s60, 1
      %p225 = por %p223, %p224
      %p226 = scmp.ne.s32.totalorder %s215, %s216
      %p227 = scmp.eq.s32.totalorder %s60, 0
      %p228 = por %p226, %p227
      %p229 = scmp.ne.s32.totalorder %s215, %s216
      %p230 = scmp.eq.s32.totalorder %s61, 1
      %p231 = por %p229, %p230
      %p233 = scmp.ne.s32.totalorder %s216, %s232
      %p234 = scmp.eq.s32.totalorder %s61, 0
      %p235 = por %p233, %p234
      %s236 = ssub.s32 %s55, %s62
      %p237 = scmp.eq.s32.totalorder %s236, 0
      %s239 = sadd.s32 %s238, 1
      %s240 = scalar_select %p237, %s238, %s239
      %p243 = pneg %p237
      %p244 = scmp.eq.s32.totalorder %s55, 1
      %p245 = por %p243, %p244
      %p246 = scmp.ne.s32.totalorder %s238, %s241
      %p247 = scmp.eq.s32.totalorder %s55, 0
      %p248 = por %p246, %p247
      %p249 = scmp.ne.s32.totalorder %s238, %s241
      %p250 = scmp.eq.s32.totalorder %s60, 1
      %p251 = por %p249, %p250
      %p252 = scmp.ne.s32.totalorder %s241, %s242
      %p253 = scmp.eq.s32.totalorder %s60, 0
      %p254 = por %p252, %p253
      %p255 = scmp.ne.s32.totalorder %s241, %s242
      %p256 = scmp.eq.s32.totalorder %s61, 1
      %p257 = por %p255, %p256
      %p259 = scmp.ne.s32.totalorder %s242, %s258
      %p260 = scmp.eq.s32.totalorder %s61, 0
      %p261 = por %p259, %p260
      %s262 = ssub.s32 %s55, %s62
      %p263 = scmp.eq.s32.totalorder %s262, 0
      %s265 = sadd.s32 %s264, 1
      %s266 = scalar_select %p263, %s264, %s265
      %p269 = pneg %p263
      %p270 = scmp.eq.s32.totalorder %s55, 1
      %p271 = por %p269, %p270
      %p272 = scmp.ne.s32.totalorder %s264, %s267
      %p273 = scmp.eq.s32.totalorder %s55, 0
      %p274 = por %p272, %p273
      %p275 = scmp.ne.s32.totalorder %s264, %s267
      %p276 = scmp.eq.s32.totalorder %s60, 1
      %p277 = por %p275, %p276
      %p278 = scmp.ne.s32.totalorder %s267, %s268
      %p279 = scmp.eq.s32.totalorder %s60, 0
      %p280 = por %p278, %p279
      %p281 = scmp.ne.s32.totalorder %s267, %s268
      %p282 = scmp.eq.s32.totalorder %s61, 1
      %p283 = por %p281, %p282
      %p285 = scmp.ne.s32.totalorder %s268, %s284
      %p286 = scmp.eq.s32.totalorder %s61, 0
      %p287 = por %p285, %p286
      %s288 = ssub.s32 %s55, %s62
      %p289 = scmp.eq.s32.totalorder %s288, 0
      %s291 = sadd.s32 %s290, 1
      %s292 = scalar_select %p289, %s290, %s291
      %p295 = pneg %p289
      %p296 = scmp.eq.s32.totalorder %s55, 1
      %p297 = por %p295, %p296
      %p298 = scmp.ne.s32.totalorder %s290, %s293
      %p299 = scmp.eq.s32.totalorder %s55, 0
      %p300 = por %p298, %p299
      %p301 = scmp.ne.s32.totalorder %s290, %s293
      %p302 = scmp.eq.s32.totalorder %s60, 1
      %p303 = por %p301, %p302
      %p304 = scmp.ne.s32.totalorder %s293, %s294
      %p305 = scmp.eq.s32.totalorder %s60, 0
      %p306 = por %p304, %p305
      %p307 = scmp.ne.s32.totalorder %s293, %s294
      %p308 = scmp.eq.s32.totalorder %s61, 1
      %p309 = por %p307, %p308
      %p311 = scmp.ne.s32.totalorder %s294, %s310
      %p312 = scmp.eq.s32.totalorder %s61, 0
      %p313 = por %p311, %p312
      %s314 = ssub.s32 %s55, %s62
      %p315 = scmp.eq.s32.totalorder %s314, 0
      %s317 = sadd.s32 %s316, 1
      %s318 = scalar_select %p315, %s316, %s317
      %p321 = pneg %p315
      %p322 = scmp.eq.s32.totalorder %s55, 1
      %p323 = por %p321, %p322
      %p324 = scmp.ne.s32.totalorder %s316, %s319
      %p325 = scmp.eq.s32.totalorder %s55, 0
      %p326 = por %p324, %p325
      %p327 = scmp.ne.s32.totalorder %s316, %s319
      %p328 = scmp.eq.s32.totalorder %s60, 1
      %p329 = por %p327, %p328
      %p330 = scmp.ne.s32.totalorder %s319, %s320
      %p331 = scmp.eq.s32.totalorder %s60, 0
      %p332 = por %p330, %p331
      %p333 = scmp.ne.s32.totalorder %s319, %s320
      %p334 = scmp.eq.s32.totalorder %s61, 1
      %p335 = por %p333, %p334
      %p337 = scmp.ne.s32.totalorder %s320, %s336
      %p338 = scmp.eq.s32.totalorder %s61, 0
      %p339 = por %p337, %p338
      %s340 = ssub.s32 %s55, %s62
      %p341 = scmp.eq.s32.totalorder %s340, 0
      %s343 = sadd.s32 %s342, 1
      %s344 = scalar_select %p341, %s342, %s343
      %p347 = pneg %p341
      %p348 = scmp.eq.s32.totalorder %s55, 1
      %p349 = por %p347, %p348
      %p350 = scmp.ne.s32.totalorder %s342, %s345
      %p351 = scmp.eq.s32.totalorder %s55, 0
      %p352 = por %p350, %p351
      %p353 = scmp.ne.s32.totalorder %s342, %s345
      %p354 = scmp.eq.s32.totalorder %s60, 1
      %p355 = por %p353, %p354
      %p356 = scmp.ne.s32.totalorder %s345, %s346
      %p357 = scmp.eq.s32.totalorder %s60, 0
      %p358 = por %p356, %p357
      %p359 = scmp.ne.s32.totalorder %s345, %s346
      %p360 = scmp.eq.s32.totalorder %s61, 1
      %p361 = por %p359, %p360
      %p363 = scmp.ne.s32.totalorder %s346, %s362
      %p364 = scmp.eq.s32.totalorder %s61, 0
      %p365 = por %p363, %p364
      %s366 = ssub.s32 %s55, %s62
      %p367 = scmp.eq.s32.totalorder %s366, 0
      %s369 = sadd.s32 %s368, 1
      %s370 = scalar_select %p367, %s368, %s369
      %p373 = pneg %p367
      %p374 = scmp.eq.s32.totalorder %s55, 1
      %p375 = por %p373, %p374
      %p376 = scmp.ne.s32.totalorder %s368, %s371
      %p377 = scmp.eq.s32.totalorder %s55, 0
      %p378 = por %p376, %p377
      %p379 = scmp.ne.s32.totalorder %s368, %s371
      %p380 = scmp.eq.s32.totalorder %s60, 1
      %p381 = por %p379, %p380
      %p382 = scmp.ne.s32.totalorder %s371, %s372
      %p383 = scmp.eq.s32.totalorder %s60, 0
      %p384 = por %p382, %p383
      %p385 = scmp.ne.s32.totalorder %s371, %s372
      %p386 = scmp.eq.s32.totalorder %s61, 1
      %p387 = por %p385, %p386
      %p389 = scmp.ne.s32.totalorder %s372, %s388
      %p390 = scmp.eq.s32.totalorder %s61, 0
      %p391 = por %p389, %p390
      %s392 = ssub.s32 %s55, %s62
      %p393 = scmp.eq.s32.totalorder %s392, 0
      %s395 = sadd.s32 %s394, 1
      %s396 = scalar_select %p393, %s394, %s395
      %p399 = pneg %p393
      %p400 = scmp.eq.s32.totalorder %s55, 1
      %p401 = por %p399, %p400
      %p402 = scmp.ne.s32.totalorder %s394, %s397
      %p403 = scmp.eq.s32.totalorder %s55, 0
      %p404 = por %p402, %p403
      %p405 = scmp.ne.s32.totalorder %s394, %s397
      %p406 = scmp.eq.s32.totalorder %s60, 1
      %p407 = por %p405, %p406
      %p408 = scmp.ne.s32.totalorder %s397, %s398
      %p409 = scmp.eq.s32.totalorder %s60, 0
      %p410 = por %p408, %p409
      %p411 = scmp.ne.s32.totalorder %s397, %s398
      %p412 = scmp.eq.s32.totalorder %s61, 1
      %p413 = por %p411, %p412
      %p415 = scmp.ne.s32.totalorder %s398, %s414
      %p416 = scmp.eq.s32.totalorder %s61, 0
      %p417 = por %p415, %p416
      %s418 = ssub.s32 %s55, %s62
      %p419 = scmp.eq.s32.totalorder %s418, 0
      %s421 = sadd.s32 %s420, 1
      %s422 = scalar_select %p419, %s420, %s421
      %p425 = pneg %p419
      %p426 = scmp.eq.s32.totalorder %s55, 1
      %p427 = por %p425, %p426
      %p428 = scmp.ne.s32.totalorder %s420, %s423
      %p429 = scmp.eq.s32.totalorder %s55, 0
      %p430 = por %p428, %p429
      %p431 = scmp.ne.s32.totalorder %s420, %s423
      %p432 = scmp.eq.s32.totalorder %s60, 1
      %p433 = por %p431, %p432
      %p434 = scmp.ne.s32.totalorder %s423, %s424
      %p435 = scmp.eq.s32.totalorder %s60, 0
      %p436 = por %p434, %p435
      %p437 = scmp.ne.s32.totalorder %s423, %s424
      %p438 = scmp.eq.s32.totalorder %s61, 1
      %p439 = por %p437, %p438
      %p441 = scmp.ne.s32.totalorder %s424, %s440
      %p442 = scmp.eq.s32.totalorder %s61, 0
      %p443 = por %p441, %p442
      %s444 = ssub.s32 %s55, %s62
      %p445 = scmp.eq.s32.totalorder %s444, 0
      %s447 = sadd.s32 %s446, 1
      %s448 = scalar_select %p445, %s446, %s447
      %p451 = pneg %p445
      %p452 = scmp.eq.s32.totalorder %s55, 1
      %p453 = por %p451, %p452
      %p454 = scmp.ne.s32.totalorder %s446, %s449
      %p455 = scmp.eq.s32.totalorder %s55, 0
      %p456 = por %p454, %p455
      %p457 = scmp.ne.s32.totalorder %s446, %s449
      %p458 = scmp.eq.s32.totalorder %s60, 1
      %p459 = por %p457, %p458
      %p460 = scmp.ne.s32.totalorder %s449, %s450
      %p461 = scmp.eq.s32.totalorder %s60, 0
      %p462 = por %p460, %p461
      %p463 = scmp.ne.s32.totalorder %s449, %s450
      %p464 = scmp.eq.s32.totalorder %s61, 1
      %p465 = por %p463, %p464
      %p467 = scmp.ne.s32.totalorder %s450, %s466
      %p468 = scmp.eq.s32.totalorder %s61, 0
      %p469 = por %p467, %p468
      %s470 = ssub.s32 %s55, %s62
      %p471 = scmp.eq.s32.totalorder %s470, 0
      %s473 = sadd.s32 %s472, 1
      %s474 = scalar_select %p471, %s472, %s473
      %p477 = pneg %p471
      %p478 = scmp.eq.s32.totalorder %s55, 1
      %p479 = por %p477, %p478
      %p480 = scmp.ne.s32.totalorder %s472, %s475
      %p481 = scmp.eq.s32.totalorder %s55, 0
      %p482 = por %p480, %p481
      %p483 = scmp.ne.s32.totalorder %s472, %s475
      %p484 = scmp.eq.s32.totalorder %s60, 1
      %p485 = por %p483, %p484
      %p486 = scmp.ne.s32.totalorder %s475, %s476
      %p487 = scmp.eq.s32.totalorder %s60, 0
      %p488 = por %p486, %p487
      %p489 = scmp.ne.s32.totalorder %s475, %s476
      %p490 = scmp.eq.s32.totalorder %s61, 1
      %p491 = por %p489, %p490
      %p493 = scmp.ne.s32.totalorder %s476, %s492
      %p494 = scmp.eq.s32.totalorder %s61, 0
      %p495 = por %p493, %p494
      %s496 = ssub.s32 %s55, %s62
      %p497 = scmp.eq.s32.totalorder %s496, 0
      %s499 = sadd.s32 %s498, 1
      %s500 = scalar_select %p497, %s498, %s499
      %p503 = pneg %p497
      %p504 = scmp.eq.s32.totalorder %s55, 1
      %p505 = por %p503, %p504
      %p506 = scmp.ne.s32.totalorder %s498, %s501
      %p507 = scmp.eq.s32.totalorder %s55, 0
      %p508 = por %p506, %p507
      %p509 = scmp.ne.s32.totalorder %s498, %s501
      %p510 = scmp.eq.s32.totalorder %s60, 1
      %p511 = por %p509, %p510
      %p512 = scmp.ne.s32.totalorder %s501, %s502
      %p513 = scmp.eq.s32.totalorder %s60, 0
      %p514 = por %p512, %p513
      %p515 = scmp.ne.s32.totalorder %s501, %s502
      %p516 = scmp.eq.s32.totalorder %s61, 1
      %p517 = por %p515, %p516
      %p519 = scmp.ne.s32.totalorder %s502, %s518
      %p520 = scmp.eq.s32.totalorder %s61, 0
      %p521 = por %p519, %p520
      %s522 = ssub.s32 %s55, %s62
      %p523 = scmp.eq.s32.totalorder %s522, 0
      %s525 = sadd.s32 %s524, 1
      %s526 = scalar_select %p523, %s524, %s525
      %p529 = pneg %p523
      %p530 = scmp.eq.s32.totalorder %s55, 1
      %p531 = por %p529, %p530
      %p532 = scmp.ne.s32.totalorder %s524, %s527
      %p533 = scmp.eq.s32.totalorder %s55, 0
      %p534 = por %p532, %p533
      %p535 = scmp.ne.s32.totalorder %s524, %s527
      %p536 = scmp.eq.s32.totalorder %s60, 1
      %p537 = por %p535, %p536
      %p538 = scmp.ne.s32.totalorder %s527, %s528
      %p539 = scmp.eq.s32.totalorder %s60, 0
      %p540 = por %p538, %p539
      %p541 = scmp.ne.s32.totalorder %s527, %s528
      %p542 = scmp.eq.s32.totalorder %s61, 1
      %p543 = por %p541, %p542
      %p545 = scmp.ne.s32.totalorder %s528, %s544
      %p546 = scmp.eq.s32.totalorder %s61, 0
      %p547 = por %p545, %p546
      %s548 = ssub.s32 %s55, %s62
      %p549 = scmp.eq.s32.totalorder %s548, 0
      %s551 = sadd.s32 %s550, 1
      %s552 = scalar_select %p549, %s550, %s551
      %p555 = pneg %p549
      %p556 = scmp.eq.s32.totalorder %s55, 1
      %p557 = por %p555, %p556
      %p558 = scmp.ne.s32.totalorder %s550, %s553
      %p559 = scmp.eq.s32.totalorder %s55, 0
      %p560 = por %p558, %p559
      %p561 = scmp.ne.s32.totalorder %s550, %s553
      %p562 = scmp.eq.s32.totalorder %s60, 1
      %p563 = por %p561, %p562
      %p564 = scmp.ne.s32.totalorder %s553, %s554
      %p565 = scmp.eq.s32.totalorder %s60, 0
      %p566 = por %p564, %p565
      %p567 = scmp.ne.s32.totalorder %s553, %s554
      %p568 = scmp.eq.s32.totalorder %s61, 1
      %p569 = por %p567, %p568
      %p571 = scmp.ne.s32.totalorder %s554, %s570
      %p572 = scmp.eq.s32.totalorder %s61, 0
      %p573 = por %p571, %p572
      %s574 = ssub.s32 %s55, %s62
      %p575 = scmp.eq.s32.totalorder %s574, 0
      %s577 = sadd.s32 %s576, 1
      %s578 = scalar_select %p575, %s576, %s577
      %p581 = pneg %p575
      %p582 = scmp.eq.s32.totalorder %s55, 1
      %p583 = por %p581, %p582
      %p584 = scmp.ne.s32.totalorder %s576, %s579
      %p585 = scmp.eq.s32.totalorder %s55, 0
      %p586 = por %p584, %p585
      %p587 = scmp.ne.s32.totalorder %s576, %s579
      %p588 = scmp.eq.s32.totalorder %s60, 1
      %p589 = por %p587, %p588
      %p590 = scmp.ne.s32.totalorder %s579, %s580
      %p591 = scmp.eq.s32.totalorder %s60, 0
      %p592 = por %p590, %p591
      %p593 = scmp.ne.s32.totalorder %s579, %s580
      %p594 = scmp.eq.s32.totalorder %s61, 1
      %p595 = por %p593, %p594
      %p597 = scmp.ne.s32.totalorder %s580, %s596
      %p598 = scmp.eq.s32.totalorder %s61, 0
      %p599 = por %p597, %p598
      %s600 = ssub.s32 %s55, %s62
      %p601 = scmp.eq.s32.totalorder %s600, 0
      %s603 = sadd.s32 %s602, 1
      %s604 = scalar_select %p601, %s602, %s603
      %p607 = pneg %p601
      %p608 = scmp.eq.s32.totalorder %s55, 1
      %p609 = por %p607, %p608
      %p610 = scmp.ne.s32.totalorder %s602, %s605
      %p611 = scmp.eq.s32.totalorder %s55, 0
      %p612 = por %p610, %p611
      %p613 = scmp.ne.s32.totalorder %s602, %s605
      %p614 = scmp.eq.s32.totalorder %s60, 1
      %p615 = por %p613, %p614
      %p616 = scmp.ne.s32.totalorder %s605, %s606
      %p617 = scmp.eq.s32.totalorder %s60, 0
      %p618 = por %p616, %p617
      %p619 = scmp.ne.s32.totalorder %s605, %s606
      %p620 = scmp.eq.s32.totalorder %s61, 1
      %p621 = por %p619, %p620
      %p623 = scmp.ne.s32.totalorder %s606, %s622
      %p624 = scmp.eq.s32.totalorder %s61, 0
      %p625 = por %p623, %p624
      %s627 = sadd.s32 %s626, 1
      %p630 = scmp.eq.s32.totalorder %s55, 1
      %p631 = scmp.ne.s32.totalorder %s626, %s628
      %p632 = scmp.eq.s32.totalorder %s55, 0
      %p633 = por %p631, %p632
      %p634 = scmp.ne.s32.totalorder %s626, %s628
      %p635 = scmp.eq.s32.totalorder %s60, 1
      %p636 = por %p634, %p635
      %p637 = scmp.ne.s32.totalorder %s628, %s629
      %p638 = scmp.eq.s32.totalorder %s60, 0
      %p639 = por %p637, %p638
      %p640 = scmp.ne.s32.totalorder %s628, %s629
      %p641 = scmp.eq.s32.totalorder %s61, 1
      %p642 = por %p640, %p641
      %p644 = scmp.ne.s32.totalorder %s629, %s643
      %p645 = scmp.eq.s32.totalorder %s61, 0
      %p646 = por %p644, %p645
      %p647 = scmp.le.s32.totalorder 1, %s55
      %p648 = scmp.lt.s32.totalorder %s55, 3
      %p649 = pnand %p647, %p648
      %p650 = pneg %p649
      // Predicated region
      $region9: #{xp2label_seg_forward.2} parent=5 // pred_check
        _
      $region10: #{xp2label_seg_forward.2} parent=5 // pred_check_branch
        %652 = sbr.rel (%p649) target = $region12
      $region11: #{xp2label_seg_forward.2} parent=5 // pred_region
        %s653 = ssub.s32 %s55, 1
        // Predicated region
        $region13: #{xp2label_seg_forward.2} parent=11 // pred_check
          %p654 = pneg %p76
        $region14: #{xp2label_seg_forward.2} parent=11 // pred_check_branch
          %656 = sbr.rel (%p654) target = $region16
        $region15: #{xp2label_seg_forward.2} parent=11 // pred_region
          _
        $region16: #{xp2label_seg_forward.2} parent=11 // pred_fallthru
          _
        // Predicated region
        $region17: #{xp2label_seg_forward.2} parent=11 // pred_check
          %p657 = pneg %p97
        $region18: #{xp2label_seg_forward.2} parent=11 // pred_check_branch
          %659 = sbr.rel (%p657) target = $region20
        $region19: #{xp2label_seg_forward.2} parent=11 // pred_region
          _
        $region20: #{xp2label_seg_forward.2} parent=11 // pred_fallthru
          _
        // Predicated region
        $region21: #{xp2label_seg_forward.2} parent=11 // pred_check
          %p660 = pneg %p118
        $region22: #{xp2label_seg_forward.2} parent=11 // pred_check_branch
          %662 = sbr.rel (%p660) target = $region24
        $region23: #{xp2label_seg_forward.2} parent=11 // pred_region
          _
        $region24: #{xp2label_seg_forward.2} parent=11 // pred_fallthru
          _
        // Predicated region
        $region25: #{xp2label_seg_forward.2} parent=11 // pred_check
          %p663 = pneg %p139
        $region26: #{xp2label_seg_forward.2} parent=11 // pred_check_branch
          %665 = sbr.rel (%p663) target = $region28
        $region27: #{xp2label_seg_forward.2} parent=11 // pred_region
          %s667 = ssub.s32 16, 16
          %668 = vsyncadd [#allocation3], %s667
          %s670 = sshll.u32 [#allocation2], 4
          %s671 = int_to_ptr.vmem [resolvable:$true] %s670
          %673 = dma.hbm_to_vmem [thread:$0]  %s3, 16, %s671, [#allocation3]
        $region28: #{xp2label_seg_forward.2} parent=11 // pred_fallthru
          _
        // Predicated region
        $region29: #{xp2label_seg_forward.2} parent=11 // pred_check
          %p674 = pneg %p160
        $region30: #{xp2label_seg_forward.2} parent=11 // pred_check_branch
          %676 = sbr.rel (%p674) target = $region32
        $region31: #{xp2label_seg_forward.2} parent=11 // pred_region
          %s678 = ssub.s32 16, 16
          %679 = vsyncadd [#allocation5], %s678
          %s681 = sshll.u32 [#allocation4], 4
          %s682 = int_to_ptr.vmem [resolvable:$true] %s681
          %684 = dma.hbm_to_vmem [thread:$0]  %s4, 16, %s682, [#allocation5]
        $region32: #{xp2label_seg_forward.2} parent=11 // pred_fallthru
          _
        // Predicated region
        $region33: #{xp2label_seg_forward.2} parent=11 // pred_check
          %p685 = pneg %p181
        $region34: #{xp2label_seg_forward.2} parent=11 // pred_check_branch
          %687 = sbr.rel (%p685) target = $region36
        $region35: #{xp2label_seg_forward.2} parent=11 // pred_region
          %s689 = ssub.s32 16, 16
          %690 = vsyncadd [#allocation5], %s689
          %s692 = sshll.u32 [#allocation6], 4
          %s693 = int_to_ptr.vmem [resolvable:$true] %s692
          %695 = dma.hbm_to_vmem [thread:$0]  %s5, 16, %s693, [#allocation5]
        $region36: #{xp2label_seg_forward.2} parent=11 // pred_fallthru
          _
        // Predicated region
        $region37: #{xp2label_seg_forward.2} parent=11 // pred_check
          %p696 = pneg %p202
        $region38: #{xp2label_seg_forward.2} parent=11 // pred_check_branch
          %698 = sbr.rel (%p696) target = $region40
        $region39: #{xp2label_seg_forward.2} parent=11 // pred_region
          _
        $region40: #{xp2label_seg_forward.2} parent=11 // pred_fallthru
          _
      $region12: #{xp2label_seg_forward.2} parent=5 // pred_fallthru
        _
      %p699 = scmp.lt.s32.totalorder %s55, 2
      // Predicated region
      $region41: #{xp2label_seg_forward.2} parent=5 // pred_check
        %p700 = pneg %p699
      $region42: #{xp2label_seg_forward.2} parent=5 // pred_check_branch
        %702 = sbr.rel (%p700) target = $region44
      $region43: #{xp2label_seg_forward.2} parent=5 // pred_region
        // Predicated region
        $region45: #{xp2label_seg_forward.2} parent=43 // pred_check
          %p703 = pneg %p222
        $region46: #{xp2label_seg_forward.2} parent=43 // pred_check_branch
          %705 = sbr.rel (%p703) target = $region48
        $region47: #{xp2label_seg_forward.2} parent=43 // pred_region
          %s706 = sand.u32 %s55, 1
          %s707 = scalar_lea.sflag [#allocation8], %s706
          %s708 = sand.u32 %s212, 1
          %s709 = smul.addr %s708, 16
          %s710 = scalar_lea.vmem [#allocation7], %s709
          %s712 = ssub.s32 256, 256
          %713 = vsyncadd %s707, %s712
          %s714 = smul.addr %s55, 4
          %s715 = smul.addr %s714, 64
          %s716 = scalar_lea.hbm %s7, %s715
          %s717 = sshll.u32 %s710, 4
          %s718 = int_to_ptr.vmem [resolvable:$true] %s717
          %723 = dma.hbm_to_vmem [thread:$0]  %s716, 256, %s718, %s707, 64, 64, 4
        $region48: #{xp2label_seg_forward.2} parent=43 // pred_fallthru
          _
        // Predicated region
        $region49: #{xp2label_seg_forward.2} parent=43 // pred_check
          %p724 = pneg %p248
        $region50: #{xp2label_seg_forward.2} parent=43 // pred_check_branch
          %726 = sbr.rel (%p724) target = $region52
        $region51: #{xp2label_seg_forward.2} parent=43 // pred_region
          %s727 = sand.u32 %s55, 1
          %s728 = scalar_lea.sflag [#allocation8], %s727
          %s729 = sand.u32 %s238, 1
          %s730 = scalar_lea.vmem [#allocation9], %s729
          %s732 = ssub.s32 16, 16
          %733 = vsyncadd %s728, %s732
          %s734 = smul.addr %s55, 16
          %s735 = scalar_lea.hbm %s8, %s734
          %s737 = sshll.u32 %s730, 4
          %s738 = int_to_ptr.vmem [resolvable:$true] %s737
          %740 = dma.hbm_to_vmem [thread:$0]  %s735, 16, %s738, %s728
        $region52: #{xp2label_seg_forward.2} parent=43 // pred_fallthru
          _
        // Predicated region
        $region53: #{xp2label_seg_forward.2} parent=43 // pred_check
          %p741 = pneg %p274
        $region54: #{xp2label_seg_forward.2} parent=43 // pred_check_branch
          %743 = sbr.rel (%p741) target = $region56
        $region55: #{xp2label_seg_forward.2} parent=43 // pred_region
          %s744 = sand.u32 %s55, 1
          %s745 = scalar_lea.sflag [#allocation11], %s744
          %s746 = sand.u32 %s264, 1
          %s747 = smul.addr %s746, 16
          %s748 = scalar_lea.vmem [#allocation10], %s747
          %s750 = ssub.s32 256, 256
          %751 = vsyncadd %s745, %s750
          %s752 = smul.addr %s55, 4
          %s753 = smul.addr %s752, 64
          %s754 = scalar_lea.hbm %s9, %s753
          %s755 = sshll.u32 %s748, 4
          %s756 = int_to_ptr.vmem [resolvable:$true] %s755
          %761 = dma.hbm_to_vmem [thread:$0]  %s754, 256, %s756, %s745, 64, 64, 4
        $region56: #{xp2label_seg_forward.2} parent=43 // pred_fallthru
          _
        // Predicated region
        $region57: #{xp2label_seg_forward.2} parent=43 // pred_check
          %p762 = pneg %p300
        $region58: #{xp2label_seg_forward.2} parent=43 // pred_check_branch
          %764 = sbr.rel (%p762) target = $region60
        $region59: #{xp2label_seg_forward.2} parent=43 // pred_region
          %s765 = sand.u32 %s55, 1
          %s766 = scalar_lea.sflag [#allocation11], %s765
          %s767 = sand.u32 %s290, 1
          %s768 = scalar_lea.vmem [#allocation12], %s767
          %s770 = ssub.s32 16, 16
          %771 = vsyncadd %s766, %s770
          %s772 = smul.addr %s55, 16
          %s773 = scalar_lea.hbm %s10, %s772
          %s775 = sshll.u32 %s768, 4
          %s776 = int_to_ptr.vmem [resolvable:$true] %s775
          %778 = dma.hbm_to_vmem [thread:$0]  %s773, 16, %s776, %s766
        $region60: #{xp2label_seg_forward.2} parent=43 // pred_fallthru
          _
        // Predicated region
        $region61: #{xp2label_seg_forward.2} parent=43 // pred_check
          %p779 = pneg %p326
        $region62: #{xp2label_seg_forward.2} parent=43 // pred_check_branch
          %781 = sbr.rel (%p779) target = $region64
        $region63: #{xp2label_seg_forward.2} parent=43 // pred_region
          %s782 = sand.u32 %s55, 1
          %s783 = scalar_lea.sflag [#allocation14], %s782
          %s784 = sand.u32 %s316, 1
          %s785 = smul.addr %s784, 16
          %s786 = scalar_lea.vmem [#allocation13], %s785
          %s788 = ssub.s32 256, 256
          %789 = vsyncadd %s783, %s788
          %s790 = smul.addr %s55, 4
          %s791 = smul.addr %s790, 64
          %s792 = scalar_lea.hbm %s11, %s791
          %s793 = sshll.u32 %s786, 4
          %s794 = int_to_ptr.vmem [resolvable:$true] %s793
          %799 = dma.hbm_to_vmem [thread:$0]  %s792, 256, %s794, %s783, 64, 64, 4
        $region64: #{xp2label_seg_forward.2} parent=43 // pred_fallthru
          _
        // Predicated region
        $region65: #{xp2label_seg_forward.2} parent=43 // pred_check
          %p800 = pneg %p352
        $region66: #{xp2label_seg_forward.2} parent=43 // pred_check_branch
          %802 = sbr.rel (%p800) target = $region68
        $region67: #{xp2label_seg_forward.2} parent=43 // pred_region
          %s803 = sand.u32 %s55, 1
          %s804 = scalar_lea.sflag [#allocation14], %s803
          %s805 = sand.u32 %s342, 1
          %s806 = scalar_lea.vmem [#allocation15], %s805
          %s808 = ssub.s32 16, 16
          %809 = vsyncadd %s804, %s808
          %s810 = smul.addr %s55, 16
          %s811 = scalar_lea.hbm %s12, %s810
          %s813 = sshll.u32 %s806, 4
          %s814 = int_to_ptr.vmem [resolvable:$true] %s813
          %816 = dma.hbm_to_vmem [thread:$0]  %s811, 16, %s814, %s804
        $region68: #{xp2label_seg_forward.2} parent=43 // pred_fallthru
          _
        // Predicated region
        $region69: #{xp2label_seg_forward.2} parent=43 // pred_check
          %p817 = pneg %p378
        $region70: #{xp2label_seg_forward.2} parent=43 // pred_check_branch
          %819 = sbr.rel (%p817) target = $region72
        $region71: #{xp2label_seg_forward.2} parent=43 // pred_region
          %s820 = sand.u32 %s55, 1
          %s821 = scalar_lea.sflag [#allocation17], %s820
          %s822 = sand.u32 %s368, 1
          %s823 = smul.addr %s822, 16
          %s824 = scalar_lea.vmem [#allocation16], %s823
          %s826 = ssub.s32 256, 256
          %827 = vsyncadd %s821, %s826
          %s828 = smul.addr %s55, 4
          %s829 = smul.addr %s828, 64
          %s830 = scalar_lea.hbm %s13, %s829
          %s831 = sshll.u32 %s824, 4
          %s832 = int_to_ptr.vmem [resolvable:$true] %s831
          %837 = dma.hbm_to_vmem [thread:$0]  %s830, 256, %s832, %s821, 64, 64, 4
        $region72: #{xp2label_seg_forward.2} parent=43 // pred_fallthru
          _
        // Predicated region
        $region73: #{xp2label_seg_forward.2} parent=43 // pred_check
          %p838 = pneg %p404
        $region74: #{xp2label_seg_forward.2} parent=43 // pred_check_branch
          %840 = sbr.rel (%p838) target = $region76
        $region75: #{xp2label_seg_forward.2} parent=43 // pred_region
          %s841 = sand.u32 %s55, 1
          %s842 = scalar_lea.sflag [#allocation17], %s841
          %s843 = sand.u32 %s394, 1
          %s844 = scalar_lea.vmem [#allocation18], %s843
          %s846 = ssub.s32 16, 16
          %847 = vsyncadd %s842, %s846
          %s848 = smul.addr %s55, 16
          %s849 = scalar_lea.hbm %s14, %s848
          %s851 = sshll.u32 %s844, 4
          %s852 = int_to_ptr.vmem [resolvable:$true] %s851
          %854 = dma.hbm_to_vmem [thread:$0]  %s849, 16, %s852, %s842
        $region76: #{xp2label_seg_forward.2} parent=43 // pred_fallthru
          _
        // Predicated region
        $region77: #{xp2label_seg_forward.2} parent=43 // pred_check
          %p855 = pneg %p430
        $region78: #{xp2label_seg_forward.2} parent=43 // pred_check_branch
          %857 = sbr.rel (%p855) target = $region80
        $region79: #{xp2label_seg_forward.2} parent=43 // pred_region
          %s858 = sand.u32 %s55, 1
          %s859 = scalar_lea.sflag [#allocation20], %s858
          %s860 = sand.u32 %s420, 1
          %s861 = scalar_lea.vmem [#allocation19], %s860
          %s863 = ssub.s32 16, 16
          %864 = vsyncadd %s859, %s863
          %s865 = smul.addr %s55, 16
          %s866 = scalar_lea.hbm %s15, %s865
          %s868 = sshll.u32 %s861, 4
          %s869 = int_to_ptr.vmem [resolvable:$true] %s868
          %871 = dma.hbm_to_vmem [thread:$0]  %s866, 16, %s869, %s859
        $region80: #{xp2label_seg_forward.2} parent=43 // pred_fallthru
          _
        // Predicated region
        $region81: #{xp2label_seg_forward.2} parent=43 // pred_check
          %p872 = pneg %p456
        $region82: #{xp2label_seg_forward.2} parent=43 // pred_check_branch
          %874 = sbr.rel (%p872) target = $region84
        $region83: #{xp2label_seg_forward.2} parent=43 // pred_region
          %s875 = sand.u32 %s55, 1
          %s876 = scalar_lea.sflag [#allocation20], %s875
          %s877 = sand.u32 %s446, 1
          %s878 = scalar_lea.vmem [#allocation21], %s877
          %s880 = ssub.s32 16, 16
          %881 = vsyncadd %s876, %s880
          %s882 = smul.addr %s55, 16
          %s883 = scalar_lea.hbm %s16, %s882
          %s885 = sshll.u32 %s878, 4
          %s886 = int_to_ptr.vmem [resolvable:$true] %s885
          %888 = dma.hbm_to_vmem [thread:$0]  %s883, 16, %s886, %s876
        $region84: #{xp2label_seg_forward.2} parent=43 // pred_fallthru
          _
        // Predicated region
        $region85: #{xp2label_seg_forward.2} parent=43 // pred_check
          %p889 = pneg %p482
        $region86: #{xp2label_seg_forward.2} parent=43 // pred_check_branch
          %891 = sbr.rel (%p889) target = $region88
        $region87: #{xp2label_seg_forward.2} parent=43 // pred_region
          %s892 = sand.u32 %s55, 1
          %s893 = scalar_lea.sflag [#allocation23], %s892
          %s894 = sand.u32 %s472, 1
          %s895 = smul.addr %s894, 16
          %s896 = scalar_lea.vmem [#allocation22], %s895
          %s898 = ssub.s32 256, 256
          %899 = vsyncadd %s893, %s898
          %s900 = smul.addr %s55, 4
          %s901 = smul.addr %s900, 64
          %s902 = scalar_lea.hbm %s17, %s901
          %s903 = sshll.u32 %s896, 4
          %s904 = int_to_ptr.vmem [resolvable:$true] %s903
          %909 = dma.hbm_to_vmem [thread:$0]  %s902, 256, %s904, %s893, 64, 64, 4
        $region88: #{xp2label_seg_forward.2} parent=43 // pred_fallthru
          _
        // Predicated region
        $region89: #{xp2label_seg_forward.2} parent=43 // pred_check
          %p910 = pneg %p508
        $region90: #{xp2label_seg_forward.2} parent=43 // pred_check_branch
          %912 = sbr.rel (%p910) target = $region92
        $region91: #{xp2label_seg_forward.2} parent=43 // pred_region
          %s913 = sand.u32 %s55, 1
          %s914 = scalar_lea.sflag [#allocation23], %s913
          %s915 = sand.u32 %s498, 1
          %s916 = scalar_lea.vmem [#allocation24], %s915
          %s918 = ssub.s32 16, 16
          %919 = vsyncadd %s914, %s918
          %s920 = smul.addr %s55, 16
          %s921 = scalar_lea.hbm %s18, %s920
          %s923 = sshll.u32 %s916, 4
          %s924 = int_to_ptr.vmem [resolvable:$true] %s923
          %926 = dma.hbm_to_vmem [thread:$0]  %s921, 16, %s924, %s914
        $region92: #{xp2label_seg_forward.2} parent=43 // pred_fallthru
          _
        // Predicated region
        $region93: #{xp2label_seg_forward.2} parent=43 // pred_check
          %p927 = pneg %p534
        $region94: #{xp2label_seg_forward.2} parent=43 // pred_check_branch
          %929 = sbr.rel (%p927) target = $region96
        $region95: #{xp2label_seg_forward.2} parent=43 // pred_region
          %p930 = scmp.lt.s32.totalorder %s55, 1
          %s931 = scalar_select %p930, %s55, 1
          %s932 = smul.addr %s931, 16
          %s933 = smul.addr %s932, 4
          %s934 = scalar_lea.vmem %s19, %s933
        $region96: #{xp2label_seg_forward.2} parent=43 // pred_fallthru
          _
        // Predicated region
        $region97: #{xp2label_seg_forward.2} parent=43 // pred_check
          %p935 = pneg %p560
        $region98: #{xp2label_seg_forward.2} parent=43 // pred_check_branch
          %937 = sbr.rel (%p935) target = $region100
        $region99: #{xp2label_seg_forward.2} parent=43 // pred_region
          %s938 = sand.u32 %s55, 1
          %s939 = scalar_lea.sflag [#allocation26], %s938
          %s940 = sand.u32 %s550, 1
          %s941 = scalar_lea.vmem [#allocation25], %s940
          %s943 = ssub.s32 16, 16
          %944 = vsyncadd %s939, %s943
          %s945 = smul.addr %s55, 16
          %s946 = scalar_lea.hbm %s20, %s945
          %s948 = sshll.u32 %s941, 4
          %s949 = int_to_ptr.vmem [resolvable:$true] %s948
          %951 = dma.hbm_to_vmem [thread:$0]  %s946, 16, %s949, %s939
        $region100: #{xp2label_seg_forward.2} parent=43 // pred_fallthru
          _
        // Predicated region
        $region101: #{xp2label_seg_forward.2} parent=43 // pred_check
          %p952 = pneg %p586
        $region102: #{xp2label_seg_forward.2} parent=43 // pred_check_branch
          %954 = sbr.rel (%p952) target = $region104
        $region103: #{xp2label_seg_forward.2} parent=43 // pred_region
          %s955 = sand.u32 %s55, 1
          %s956 = scalar_lea.sflag [#allocation26], %s955
          %s957 = sand.u32 %s576, 1
          %s958 = scalar_lea.vmem [#allocation27], %s957
          %s960 = ssub.s32 16, 16
          %961 = vsyncadd %s956, %s960
          %s962 = smul.addr %s55, 16
          %s963 = scalar_lea.hbm %s21, %s962
          %s965 = sshll.u32 %s958, 4
          %s966 = int_to_ptr.vmem [resolvable:$true] %s965
          %968 = dma.hbm_to_vmem [thread:$0]  %s963, 16, %s966, %s956
        $region104: #{xp2label_seg_forward.2} parent=43 // pred_fallthru
          _
        // Predicated region
        $region105: #{xp2label_seg_forward.2} parent=43 // pred_check
          %p969 = pneg %p612
        $region106: #{xp2label_seg_forward.2} parent=43 // pred_check_branch
          %971 = sbr.rel (%p969) target = $region108
        $region107: #{xp2label_seg_forward.2} parent=43 // pred_region
          %s972 = sand.u32 %s602, 1
          %s973 = scalar_lea.sflag [#allocation29], %s972
          %s974 = sand.u32 %s602, 1
          %s975 = scalar_lea.vmem [#allocation28], %s974
          %s977 = ssub.s32 16, 16
          %978 = vsyncadd %s973, %s977
          %s979 = smul.addr %s55, 16
          %s980 = scalar_lea.hbm %s22, %s979
          %s982 = sshll.u32 %s975, 4
          %s983 = int_to_ptr.vmem [resolvable:$true] %s982
          %985 = dma.hbm_to_vmem [thread:$0]  %s980, 16, %s983, %s973
        $region108: #{xp2label_seg_forward.2} parent=43 // pred_fallthru
          _
      $region44: #{xp2label_seg_forward.2} parent=5 // pred_fallthru
        _
      %p986 = scmp.le.s32.totalorder 1, %s55
      %p987 = scmp.lt.s32.totalorder %s55, 3
      %p988 = pnand %p986, %p987
      %p989 = pneg %p988
      // Predicated region
      $region109: #{xp2label_seg_forward.2} parent=5 // pred_check
        _
      $region110: #{xp2label_seg_forward.2} parent=5 // pred_check_branch
        %991 = sbr.rel (%p988) target = $region112
      $region111: #{xp2label_seg_forward.2} parent=5 // pred_region
        %s992 = ssub.s32 %s55, 1
        // Predicated region
        $region113: #{xp2label_seg_forward.2} parent=111 // pred_check
          %p993 = pneg %p139
        $region114: #{xp2label_seg_forward.2} parent=111 // pred_check_branch
          %995 = sbr.rel (%p993) target = $region116
        $region115: #{xp2label_seg_forward.2} parent=111 // pred_region
          %996 = dma.done [#allocation3], 16
        $region116: #{xp2label_seg_forward.2} parent=111 // pred_fallthru
          _
        // Predicated region
        $region117: #{xp2label_seg_forward.2} parent=111 // pred_check
          %p997 = pneg %p160
        $region118: #{xp2label_seg_forward.2} parent=111 // pred_check_branch
          %999 = sbr.rel (%p997) target = $region120
        $region119: #{xp2label_seg_forward.2} parent=111 // pred_region
          %1000 = dma.done [#allocation5], 16
        $region120: #{xp2label_seg_forward.2} parent=111 // pred_fallthru
          _
        // Predicated region
        $region121: #{xp2label_seg_forward.2} parent=111 // pred_check
          %p1001 = pneg %p181
        $region122: #{xp2label_seg_forward.2} parent=111 // pred_check_branch
          %1003 = sbr.rel (%p1001) target = $region124
        $region123: #{xp2label_seg_forward.2} parent=111 // pred_region
          %1004 = dma.done [#allocation5], 16
        $region124: #{xp2label_seg_forward.2} parent=111 // pred_fallthru
          _
        %s1005 = sand.u32 %s60, 1
        %s1006 = scalar_lea.sflag [#allocation8], %s1005
        %s1007 = sand.u32 %s215, 1
        %s1008 = smul.addr %s1007, 16
        %s1009 = scalar_lea.vmem [#allocation7], %s1008
        // Predicated region
        $region125: #{xp2label_seg_forward.2} parent=111 // pred_check
          %p1010 = pneg %p228
        $region126: #{xp2label_seg_forward.2} parent=111 // pred_check_branch
          %1012 = sbr.rel (%p1010) target = $region128
        $region127: #{xp2label_seg_forward.2} parent=111 // pred_region
          %1013 = dma.done %s1006, 256
        $region128: #{xp2label_seg_forward.2} parent=111 // pred_fallthru
          _
        %s1014 = sand.u32 %s60, 1
        %s1015 = scalar_lea.sflag [#allocation8], %s1014
        %s1016 = sand.u32 %s241, 1
        %s1017 = scalar_lea.vmem [#allocation9], %s1016
        // Predicated region
        $region129: #{xp2label_seg_forward.2} parent=111 // pred_check
          %p1018 = pneg %p254
        $region130: #{xp2label_seg_forward.2} parent=111 // pred_check_branch
          %1020 = sbr.rel (%p1018) target = $region132
        $region131: #{xp2label_seg_forward.2} parent=111 // pred_region
          %1021 = dma.done %s1015, 16
        $region132: #{xp2label_seg_forward.2} parent=111 // pred_fallthru
          _
        %s1022 = sand.u32 %s60, 1
        %s1023 = scalar_lea.sflag [#allocation11], %s1022
        %s1024 = sand.u32 %s267, 1
        %s1025 = smul.addr %s1024, 16
        %s1026 = scalar_lea.vmem [#allocation10], %s1025
        // Predicated region
        $region133: #{xp2label_seg_forward.2} parent=111 // pred_check
          %p1027 = pneg %p280
        $region134: #{xp2label_seg_forward.2} parent=111 // pred_check_branch
          %1029 = sbr.rel (%p1027) target = $region136
        $region135: #{xp2label_seg_forward.2} parent=111 // pred_region
          %1030 = dma.done %s1023, 256
        $region136: #{xp2label_seg_forward.2} parent=111 // pred_fallthru
          _
        %s1031 = sand.u32 %s60, 1
        %s1032 = scalar_lea.sflag [#allocation11], %s1031
        %s1033 = sand.u32 %s293, 1
        %s1034 = scalar_lea.vmem [#allocation12], %s1033
        // Predicated region
        $region137: #{xp2label_seg_forward.2} parent=111 // pred_check
          %p1035 = pneg %p306
        $region138: #{xp2label_seg_forward.2} parent=111 // pred_check_branch
          %1037 = sbr.rel (%p1035) target = $region140
        $region139: #{xp2label_seg_forward.2} parent=111 // pred_region
          %1038 = dma.done %s1032, 16
        $region140: #{xp2label_seg_forward.2} parent=111 // pred_fallthru
          _
        %s1039 = sand.u32 %s60, 1
        %s1040 = scalar_lea.sflag [#allocation14], %s1039
        %s1041 = sand.u32 %s319, 1
        %s1042 = smul.addr %s1041, 16
        %s1043 = scalar_lea.vmem [#allocation13], %s1042
        // Predicated region
        $region141: #{xp2label_seg_forward.2} parent=111 // pred_check
          %p1044 = pneg %p332
        $region142: #{xp2label_seg_forward.2} parent=111 // pred_check_branch
          %1046 = sbr.rel (%p1044) target = $region144
        $region143: #{xp2label_seg_forward.2} parent=111 // pred_region
          %1047 = dma.done %s1040, 256
        $region144: #{xp2label_seg_forward.2} parent=111 // pred_fallthru
          _
        %s1048 = sand.u32 %s60, 1
        %s1049 = scalar_lea.sflag [#allocation14], %s1048
        %s1050 = sand.u32 %s345, 1
        %s1051 = scalar_lea.vmem [#allocation15], %s1050
        // Predicated region
        $region145: #{xp2label_seg_forward.2} parent=111 // pred_check
          %p1052 = pneg %p358
        $region146: #{xp2label_seg_forward.2} parent=111 // pred_check_branch
          %1054 = sbr.rel (%p1052) target = $region148
        $region147: #{xp2label_seg_forward.2} parent=111 // pred_region
          %1055 = dma.done %s1049, 16
        $region148: #{xp2label_seg_forward.2} parent=111 // pred_fallthru
          _
        %s1056 = sand.u32 %s60, 1
        %s1057 = scalar_lea.sflag [#allocation17], %s1056
        %s1058 = sand.u32 %s371, 1
        %s1059 = smul.addr %s1058, 16
        %s1060 = scalar_lea.vmem [#allocation16], %s1059
        // Predicated region
        $region149: #{xp2label_seg_forward.2} parent=111 // pred_check
          %p1061 = pneg %p384
        $region150: #{xp2label_seg_forward.2} parent=111 // pred_check_branch
          %1063 = sbr.rel (%p1061) target = $region152
        $region151: #{xp2label_seg_forward.2} parent=111 // pred_region
          %1064 = dma.done %s1057, 256
        $region152: #{xp2label_seg_forward.2} parent=111 // pred_fallthru
          _
        %s1065 = sand.u32 %s60, 1
        %s1066 = scalar_lea.sflag [#allocation17], %s1065
        %s1067 = sand.u32 %s397, 1
        %s1068 = scalar_lea.vmem [#allocation18], %s1067
        // Predicated region
        $region153: #{xp2label_seg_forward.2} parent=111 // pred_check
          %p1069 = pneg %p410
        $region154: #{xp2label_seg_forward.2} parent=111 // pred_check_branch
          %1071 = sbr.rel (%p1069) target = $region156
        $region155: #{xp2label_seg_forward.2} parent=111 // pred_region
          %1072 = dma.done %s1066, 16
        $region156: #{xp2label_seg_forward.2} parent=111 // pred_fallthru
          _
        %s1073 = sand.u32 %s60, 1
        %s1074 = scalar_lea.sflag [#allocation20], %s1073
        %s1075 = sand.u32 %s423, 1
        %s1076 = scalar_lea.vmem [#allocation19], %s1075
        // Predicated region
        $region157: #{xp2label_seg_forward.2} parent=111 // pred_check
          %p1077 = pneg %p436
        $region158: #{xp2label_seg_forward.2} parent=111 // pred_check_branch
          %1079 = sbr.rel (%p1077) target = $region160
        $region159: #{xp2label_seg_forward.2} parent=111 // pred_region
          %1080 = dma.done %s1074, 16
        $region160: #{xp2label_seg_forward.2} parent=111 // pred_fallthru
          _
        %s1081 = sand.u32 %s60, 1
        %s1082 = scalar_lea.sflag [#allocation20], %s1081
        %s1083 = sand.u32 %s449, 1
        %s1084 = scalar_lea.vmem [#allocation21], %s1083
        // Predicated region
        $region161: #{xp2label_seg_forward.2} parent=111 // pred_check
          %p1085 = pneg %p462
        $region162: #{xp2label_seg_forward.2} parent=111 // pred_check_branch
          %1087 = sbr.rel (%p1085) target = $region164
        $region163: #{xp2label_seg_forward.2} parent=111 // pred_region
          %1088 = dma.done %s1082, 16
        $region164: #{xp2label_seg_forward.2} parent=111 // pred_fallthru
          _
        %s1089 = sand.u32 %s60, 1
        %s1090 = scalar_lea.sflag [#allocation23], %s1089
        %s1091 = sand.u32 %s475, 1
        %s1092 = smul.addr %s1091, 16
        %s1093 = scalar_lea.vmem [#allocation22], %s1092
        // Predicated region
        $region165: #{xp2label_seg_forward.2} parent=111 // pred_check
          %p1094 = pneg %p488
        $region166: #{xp2label_seg_forward.2} parent=111 // pred_check_branch
          %1096 = sbr.rel (%p1094) target = $region168
        $region167: #{xp2label_seg_forward.2} parent=111 // pred_region
          %1097 = dma.done %s1090, 256
        $region168: #{xp2label_seg_forward.2} parent=111 // pred_fallthru
          _
        %s1098 = sand.u32 %s60, 1
        %s1099 = scalar_lea.sflag [#allocation23], %s1098
        %s1100 = sand.u32 %s501, 1
        %s1101 = scalar_lea.vmem [#allocation24], %s1100
        // Predicated region
        $region169: #{xp2label_seg_forward.2} parent=111 // pred_check
          %p1102 = pneg %p514
        $region170: #{xp2label_seg_forward.2} parent=111 // pred_check_branch
          %1104 = sbr.rel (%p1102) target = $region172
        $region171: #{xp2label_seg_forward.2} parent=111 // pred_region
          %1105 = dma.done %s1099, 16
        $region172: #{xp2label_seg_forward.2} parent=111 // pred_fallthru
          _
        %s1106 = sand.u32 %s60, 1
        %s1107 = scalar_lea.sflag [#allocation26], %s1106
        %s1108 = sand.u32 %s553, 1
        %s1109 = scalar_lea.vmem [#allocation25], %s1108
        // Predicated region
        $region173: #{xp2label_seg_forward.2} parent=111 // pred_check
          %p1110 = pneg %p566
        $region174: #{xp2label_seg_forward.2} parent=111 // pred_check_branch
          %1112 = sbr.rel (%p1110) target = $region176
        $region175: #{xp2label_seg_forward.2} parent=111 // pred_region
          %1113 = dma.done %s1107, 16
        $region176: #{xp2label_seg_forward.2} parent=111 // pred_fallthru
          _
        %s1114 = sand.u32 %s60, 1
        %s1115 = scalar_lea.sflag [#allocation26], %s1114
        %s1116 = sand.u32 %s579, 1
        %s1117 = scalar_lea.vmem [#allocation27], %s1116
        // Predicated region
        $region177: #{xp2label_seg_forward.2} parent=111 // pred_check
          %p1118 = pneg %p592
        $region178: #{xp2label_seg_forward.2} parent=111 // pred_check_branch
          %1120 = sbr.rel (%p1118) target = $region180
        $region179: #{xp2label_seg_forward.2} parent=111 // pred_region
          %1121 = dma.done %s1115, 16
        $region180: #{xp2label_seg_forward.2} parent=111 // pred_fallthru
          _
        %s1122 = sand.u32 %s605, 1
        %s1123 = scalar_lea.sflag [#allocation29], %s1122
        %s1124 = sand.u32 %s605, 1
        %s1125 = scalar_lea.vmem [#allocation28], %s1124
        // Predicated region
        $region181: #{xp2label_seg_forward.2} parent=111 // pred_check
          %p1126 = pneg %p618
        $region182: #{xp2label_seg_forward.2} parent=111 // pred_check_branch
          %1128 = sbr.rel (%p1126) target = $region184
        $region183: #{xp2label_seg_forward.2} parent=111 // pred_region
          %1129 = dma.done %s1123, 16
        $region184: #{xp2label_seg_forward.2} parent=111 // pred_fallthru
          _
        %p1130 = pneg %p76
        %p1131 = pneg %p73
        %p1132 = pneg %p97
        %p1133 = pneg %p94
        %p1134 = pneg %p118
        %p1135 = pneg %p115
        %p1136 = pneg %p139
        %p1137 = pneg %p136
        %p1138 = pneg %p160
        %p1139 = pneg %p157
        %p1140 = pneg %p181
        %p1141 = pneg %p178
        %p1142 = pneg %p202
        %p1143 = pneg %p199
        %s1144 = sand.u32 %s60, 1
        %s1145 = scalar_lea.sflag [#allocation8], %s1144
        %s1146 = sand.u32 %s215, 1
        %s1147 = smul.addr %s1146, 16
        %s1148 = scalar_lea.vmem [#allocation7], %s1147
        %p1149 = pneg %p228
        %p1150 = pneg %p225
        %s1151 = sand.u32 %s60, 1
        %s1152 = scalar_lea.sflag [#allocation8], %s1151
        %s1153 = sand.u32 %s241, 1
        %s1154 = scalar_lea.vmem [#allocation9], %s1153
        %p1155 = pneg %p254
        %p1156 = pneg %p251
        %s1157 = sand.u32 %s60, 1
        %s1158 = scalar_lea.sflag [#allocation11], %s1157
        %s1159 = sand.u32 %s267, 1
        %s1160 = smul.addr %s1159, 16
        %s1161 = scalar_lea.vmem [#allocation10], %s1160
        %p1162 = pneg %p280
        %p1163 = pneg %p277
        %s1164 = sand.u32 %s60, 1
        %s1165 = scalar_lea.sflag [#allocation11], %s1164
        %s1166 = sand.u32 %s293, 1
        %s1167 = scalar_lea.vmem [#allocation12], %s1166
        %p1168 = pneg %p306
        %p1169 = pneg %p303
        %s1170 = sand.u32 %s60, 1
        %s1171 = scalar_lea.sflag [#allocation14], %s1170
        %s1172 = sand.u32 %s319, 1
        %s1173 = smul.addr %s1172, 16
        %s1174 = scalar_lea.vmem [#allocation13], %s1173
        %p1175 = pneg %p332
        %p1176 = pneg %p329
        %s1177 = sand.u32 %s60, 1
        %s1178 = scalar_lea.sflag [#allocation14], %s1177
        %s1179 = sand.u32 %s345, 1
        %s1180 = scalar_lea.vmem [#allocation15], %s1179
        %p1181 = pneg %p358
        %p1182 = pneg %p355
        %s1183 = sand.u32 %s60, 1
        %s1184 = scalar_lea.sflag [#allocation17], %s1183
        %s1185 = sand.u32 %s371, 1
        %s1186 = smul.addr %s1185, 16
        %s1187 = scalar_lea.vmem [#allocation16], %s1186
        %p1188 = pneg %p384
        %p1189 = pneg %p381
        %s1190 = sand.u32 %s60, 1
        %s1191 = scalar_lea.sflag [#allocation17], %s1190
        %s1192 = sand.u32 %s397, 1
        %s1193 = scalar_lea.vmem [#allocation18], %s1192
        %p1194 = pneg %p410
        %p1195 = pneg %p407
        %s1196 = sand.u32 %s60, 1
        %s1197 = scalar_lea.sflag [#allocation20], %s1196
        %s1198 = sand.u32 %s423, 1
        %s1199 = scalar_lea.vmem [#allocation19], %s1198
        %p1200 = pneg %p436
        %p1201 = pneg %p433
        %s1202 = sand.u32 %s60, 1
        %s1203 = scalar_lea.sflag [#allocation20], %s1202
        %s1204 = sand.u32 %s449, 1
        %s1205 = scalar_lea.vmem [#allocation21], %s1204
        %p1206 = pneg %p462
        %p1207 = pneg %p459
        %s1208 = sand.u32 %s60, 1
        %s1209 = scalar_lea.sflag [#allocation23], %s1208
        %s1210 = sand.u32 %s475, 1
        %s1211 = smul.addr %s1210, 16
        %s1212 = scalar_lea.vmem [#allocation22], %s1211
        %p1213 = pneg %p488
        %p1214 = pneg %p485
        %s1215 = sand.u32 %s60, 1
        %s1216 = scalar_lea.sflag [#allocation23], %s1215
        %s1217 = sand.u32 %s501, 1
        %s1218 = scalar_lea.vmem [#allocation24], %s1217
        %p1219 = pneg %p514
        %p1220 = pneg %p511
        %p1221 = scmp.lt.s32.totalorder %s60, 1
        %s1222 = scalar_select %p1221, %s60, 1
        %s1223 = smul.addr %s1222, 16
        %s1224 = smul.addr %s1223, 4
        %s1225 = scalar_lea.vmem %s19, %s1224
        %p1226 = pneg %p540
        %p1227 = pneg %p537
        %s1228 = sand.u32 %s60, 1
        %s1229 = scalar_lea.sflag [#allocation26], %s1228
        %s1230 = sand.u32 %s553, 1
        %s1231 = scalar_lea.vmem [#allocation25], %s1230
        %p1232 = pneg %p566
        %p1233 = pneg %p563
        %s1234 = sand.u32 %s60, 1
        %s1235 = scalar_lea.sflag [#allocation26], %s1234
        %s1236 = sand.u32 %s579, 1
        %s1237 = scalar_lea.vmem [#allocation27], %s1236
        %p1238 = pneg %p592
        %p1239 = pneg %p589
        %s1240 = sand.u32 %s605, 1
        %s1241 = scalar_lea.sflag [#allocation29], %s1240
        %s1242 = sand.u32 %s605, 1
        %s1243 = scalar_lea.vmem [#allocation28], %s1242
        %p1244 = pneg %p618
        %p1245 = pneg %p615
        %p1246 = pneg %p639
        %p1247 = pneg %p636
        %p1248 = scmp.lt.s32.totalorder %s60, 1
        %s1249 = scalar_select %p1248, %s60, 1
        %s1250 = smul.addr %s1249, 16
        %s1251 = smul.addr %s1250, 4
        %s1252 = scalar_lea.vmem %s19, %s1251
        %p1254 = scmp.eq.s32.totalorder %s60, 0
        // Predicated region
        $region185: #{xp2label_seg_forward.2} parent=111 // pred_check
          %p1255 = pneg %p1254
        $region186: #{xp2label_seg_forward.2} parent=111 // pred_check_branch
          %1257 = sbr.rel (%p1255) target = $region188
        $region187: #{xp2label_seg_forward.2} parent=111 // pred_region
          %v1258 = vld [vmem:[%s1] sm:$0xf]
          %v1261 = vunpack.c.l.s4 1983009808
          %v1262 = vunpack.c.0.s8 %v1261
          %v1263 = vlaneseq
          %v1264 = vshrl.u32 %v1263, 7
          %v1265 = vsub.s32 %v1262, %v1264
          %v1266 = vrot.slane %v1258, %v1265
          %v1267 = vcombine.high %v1266, %v1266
          %v1270 = vpack.c.bf16 %v1266, %v1266
          %v1271 = vpack.c.bf16 %v1267, %v1267
          %v1272 = vld [vmem:[%s2] sm:$0xf]
          %v1273 = vld [vmem:[%s2 + $0x4] sm:$0xf]
          %v1274 = vld [vmem:[%s2 + $0x8] sm:$0xf]
          %v1275 = vld [vmem:[%s2 + $0xc] sm:$0xf]
          %v1276 = vld [vmem:[%s2 + $0x10] sm:$0xf]
          %v1277 = vld [vmem:[%s2 + $0x14] sm:$0xf]
          %v1278 = vld [vmem:[%s2 + $0x18] sm:$0xf]
          %v1279 = vld [vmem:[%s2 + $0x1c] sm:$0xf]
          %v1280 = vld [vmem:[%s2 + $0x20] sm:$0xf]
          %v1281 = vld [vmem:[%s2 + $0x24] sm:$0xf]
          %v1282 = vld [vmem:[%s2 + $0x28] sm:$0xf]
          %v1283 = vld [vmem:[%s2 + $0x2c] sm:$0xf]
          %v1284 = vld [vmem:[%s2 + $0x30] sm:$0xf]
          %v1285 = vld [vmem:[%s2 + $0x34] sm:$0xf]
          %v1286 = vld [vmem:[%s2 + $0x38] sm:$0xf]
          %v1287 = vld [vmem:[%s2 + $0x3c] sm:$0xf]
          %v1288 = vld [vmem:[%s2 + $0x40] sm:$0xf]
          %v1289 = vld [vmem:[%s2 + $0x44] sm:$0xf]
          %v1290 = vld [vmem:[%s2 + $0x48] sm:$0xf]
          %v1291 = vld [vmem:[%s2 + $0x4c] sm:$0xf]
          %v1292 = vld [vmem:[%s2 + $0x50] sm:$0xf]
          %v1293 = vld [vmem:[%s2 + $0x54] sm:$0xf]
          %v1294 = vld [vmem:[%s2 + $0x58] sm:$0xf]
          %v1295 = vld [vmem:[%s2 + $0x5c] sm:$0xf]
          %v1296 = vld [vmem:[%s2 + $0x60] sm:$0xf]
          %v1297 = vld [vmem:[%s2 + $0x64] sm:$0xf]
          %v1298 = vld [vmem:[%s2 + $0x68] sm:$0xf]
          %v1299 = vld [vmem:[%s2 + $0x6c] sm:$0xf]
          %v1300 = vld [vmem:[%s2 + $0x70] sm:$0xf]
          %v1301 = vld [vmem:[%s2 + $0x74] sm:$0xf]
          %v1302 = vld [vmem:[%s2 + $0x78] sm:$0x7]
          %v1303 = vld [vmem:[#allocation2] sm:$0x1]
          %v1305 = vlaneseq
          %v1306 = vshrl.u32 %v1305, 7
          %v1307 = vsub.s32 0, %v1306
          %v1308 = vrot.slane %v1303, %v1307
          %v1341 = vunpack.c.l.b16 %v1272
          %v1342 = vunpack.c.l.b16 %v1273
          %v1343 = vunpack.c.l.b16 %v1274
          %v1344 = vunpack.c.l.b16 %v1275
          %v1345 = vunpack.c.l.b16 %v1276
          %v1346 = vunpack.c.l.b16 %v1277
          %v1347 = vunpack.c.l.b16 %v1278
          %v1348 = vunpack.c.l.b16 %v1279
          %v1349 = vunpack.c.l.b16 %v1280
          %v1350 = vunpack.c.l.b16 %v1281
          %v1351 = vunpack.c.l.b16 %v1282
          %v1352 = vunpack.c.l.b16 %v1283
          %v1353 = vunpack.c.l.b16 %v1284
          %v1354 = vunpack.c.l.b16 %v1285
          %v1355 = vunpack.c.l.b16 %v1286
          %v1356 = vunpack.c.l.b16 %v1287
          %v1357 = vunpack.c.l.b16 %v1288
          %v1358 = vunpack.c.l.b16 %v1289
          %v1359 = vunpack.c.l.b16 %v1290
          %v1360 = vunpack.c.l.b16 %v1291
          %v1361 = vunpack.c.l.b16 %v1292
          %v1362 = vunpack.c.l.b16 %v1293
          %v1363 = vunpack.c.l.b16 %v1294
          %v1364 = vunpack.c.l.b16 %v1295
          %v1365 = vunpack.c.l.b16 %v1296
          %v1366 = vunpack.c.l.b16 %v1297
          %v1367 = vunpack.c.l.b16 %v1298
          %v1368 = vunpack.c.l.b16 %v1299
          %v1369 = vunpack.c.l.b16 %v1300
          %v1370 = vunpack.c.l.b16 %v1301
          %v1371 = vunpack.c.l.b16 %v1302
          %v1372 = vpack.c.b16 %v1342, %v1341
          %v1373 = vpack.c.b16 %v1344, %v1343
          %v1374 = vpack.c.b16 %v1346, %v1345
          %v1375 = vpack.c.b16 %v1348, %v1347
          %v1376 = vpack.c.b16 %v1350, %v1349
          %v1377 = vpack.c.b16 %v1352, %v1351
          %v1378 = vpack.c.b16 %v1354, %v1353
          %v1379 = vpack.c.b16 %v1356, %v1355
          %v1380 = vpack.c.b16 %v1358, %v1357
          %v1381 = vpack.c.b16 %v1360, %v1359
          %v1382 = vpack.c.b16 %v1362, %v1361
          %v1383 = vpack.c.b16 %v1364, %v1363
          %v1384 = vpack.c.b16 %v1366, %v1365
          %v1385 = vpack.c.b16 %v1368, %v1367
          %v1386 = vpack.c.b16 %v1370, %v1369
          %v1387 = vpack.c.b16 %v1371, %v1371
          %vm1403 = vcmask 965632
          %v1405 = vsel %vm1403, %v1271, 0
          %vm1407 = vcmask 1042432
          %v1409 = vsel %vm1407, %v1387, 0
          %1411 = vmatprep.subr.bf16.mxu0 0
          %1412 = vmatpush1.bf16.msra.mxu0 %v1372
          %1413 = vmatprep.subr.bf16.mxu0 0
          %1414 = vmatpush1.bf16.msra.mxu0 %v1373
          %1415 = vmatprep.subr.bf16.mxu0 0
          %1416 = vmatpush1.bf16.msra.mxu0 %v1374
          %1417 = vmatprep.subr.bf16.mxu0 0
          %1418 = vmatpush1.bf16.msra.mxu0 %v1375
          %1419 = vmatprep.subr.bf16.mxu0 0
          %1420 = vmatpush1.bf16.msra.mxu0 %v1376
          %1421 = vmatprep.subr.bf16.mxu0 0
          %1422 = vmatpush1.bf16.msra.mxu0 %v1377
          %1423 = vmatprep.subr.bf16.mxu0 0
          %1424 = vmatpush1.bf16.msra.mxu0 %v1378
          %1425 = vmatprep.subr.bf16.mxu0 0
          %1426 = vmatpush1.bf16.msra.mxu0 %v1379
          %1427 = vmatprep.subr.bf16.mxu0 0
          %1428 = vmatpush1.bf16.msra.mxu0 %v1380
          %1429 = vmatprep.subr.bf16.mxu0 0
          %1430 = vmatpush1.bf16.msra.mxu0 %v1381
          %1431 = vmatprep.subr.bf16.mxu0 0
          %1432 = vmatpush1.bf16.msra.mxu0 %v1382
          %1433 = vmatprep.subr.bf16.mxu0 0
          %1434 = vmatpush1.bf16.msra.mxu0 %v1383
          %1435 = vmatprep.subr.bf16.mxu0 0
          %1436 = vmatpush1.bf16.msra.mxu0 %v1384
          %1437 = vmatprep.subr.bf16.mxu0 0
          %1438 = vmatpush1.bf16.msra.mxu0 %v1385
          %1439 = vmatprep.subr.bf16.mxu0 0
          %1440 = vmatpush1.bf16.msra.mxu0 %v1386
          %1441 = vmatprep.subr.bf16.mxu0 0
          %1442 = vmatpush1.bf16.msra.mxu0 %v1409
          %1443 = vmatprep.mubr.bf16.mxu0 %v1405
          %1444 = vmatmul.mubr.bf16.gmra.mrb[0].mxu0 %v1270
          %v1445 = vpop.f32.mrb[0].mxu0
          %v1446 = vadd.f32 %v1308, %v1445
          %v1447 = vpop.f32.mrb[0].mxu0
          %v1448 = vpop.f32.mrb[0].mxu0
          %v1449 = vpop.f32.mrb[0].mxu0
          %1450 = vdwg.mxu0
          %v1451 = vld [vmem:[%s0] sm:$0x3]
          %1453 = vrot.lane.b32.xlu0 %v1446, 10
          %v1454 = vpop.permute.xlu0 %1453
          %vm1456 = vcmask 80896
          %v1457 = vsel %vm1456, %v1451, %v1454
          %v1458 = vlaneseq
          %v1459 = vshrl.u32 %v1458, 7
          %v1460 = vsub.s32 0, %v1459
          %v1461 = vrot.slane %v1457, %v1460
          %1463 = vbcast.lane.b32.xlu0 %v1461, 256
          %v1464 = vpop.permute.xlu0 %1463
          %s1466 = sor.u32 256, 8
          %1467 = vbcast.lane.b32.xlu0 %v1461, %s1466
          %v1468 = vpop.permute.xlu0 %1467
          %s1470 = sor.u32 256, 16
          %1471 = vbcast.lane.b32.xlu0 %v1461, %s1470
          %v1472 = vpop.permute.xlu0 %1471
          %v1473 = vlaneseq
          %v1474 = vshrl.u32 %v1473, 7
          %v1475 = vsub.s32 1, %v1474
          %v1476 = vrot.slane %v1457, %v1475
          %1478 = vbcast.lane.b32.xlu0 %v1476, 256
          %v1479 = vpop.permute.xlu0 %1478
          %s1481 = sor.u32 256, 8
          %1482 = vbcast.lane.b32.xlu0 %v1476, %s1481
          %v1483 = vpop.permute.xlu0 %1482
          %s1485 = sor.u32 256, 16
          %1486 = vbcast.lane.b32.xlu0 %v1476, %s1485
          %v1487 = vpop.permute.xlu0 %1486
          %v1488 = vld [vmem:[#allocation4] sm:$0x1]
          %v1490 = vlaneseq
          %v1491 = vshrl.u32 %v1490, 7
          %v1492 = vsub.s32 0, %v1491
          %v1493 = vrot.slane %v1488, %v1492
          %v1495 = vmul.f32 %v1464, %v1493
          %v1496 = vmul.f32 %v1468, %v1493
          %v1497 = vmul.f32 %v1472, %v1493
          %v1498 = vmul.f32 %v1479, %v1493
          %v1499 = vmul.f32 %v1483, %v1493
          %v1500 = vmul.f32 %v1487, %v1493
          %v1501 = vld [vmem:[#allocation6] sm:$0x1]
          %v1503 = vlaneseq
          %v1504 = vshrl.u32 %v1503, 7
          %v1505 = vsub.s32 0, %v1504
          %v1506 = vrot.slane %v1501, %v1505
          %v1508 = vadd.f32 %v1495, %v1506
          %v1509 = vadd.f32 %v1496, %v1506
          %v1510 = vadd.f32 %v1497, %v1506
          %v1511 = vadd.f32 %v1498, %v1506
          %v1512 = vadd.f32 %v1499, %v1506
          %v1513 = vadd.f32 %v1500, %v1506
          %v1514 = vld [vmem:[%s6] sm:$0xff]
          %v1515 = vld [vmem:[%s6 + $0x8] sm:$0xff]
          %v1516 = vld [vmem:[%s6 + $0x10] sm:$0xf]
          %v1517 = vadd.f32 %v1508, %v1514
          %v1518 = vadd.f32 %v1509, %v1515
          %v1519 = vadd.f32 %v1510, %v1516
          %v1520 = vadd.f32 %v1511, %v1514
          %v1521 = vadd.f32 %v1512, %v1515
          %v1522 = vadd.f32 %v1513, %v1516
          %vm1523 = vcmask 261120
          %1524 = vst.msk [vmem:[%s23] sm:$0xff] %vm1523, %v1517
          %1525 = vst.msk [vmem:[%s23 + $0x8] sm:$0xff] %vm1523, %v1518
          %vm1526 = vcmask 257024
          %1527 = vst.msk [vmem:[%s23 + $0x10] sm:$0xf] %vm1526, %v1519
          %1528 = vst.msk [vmem:[%s23 + $0x18] sm:$0xff] %vm1523, %v1520
          %1529 = vst.msk [vmem:[%s23 + $0x20] sm:$0xff] %vm1523, %v1521
          %1530 = vst.msk [vmem:[%s23 + $0x28] sm:$0xf] %vm1526, %v1522
        $region188: #{xp2label_seg_forward.2} parent=111 // pred_fallthru
          _
        %v1531 = vld [vmem:[%s23] sm:$0xff]
        %v1532 = vld [vmem:[%s23 + $0x8] sm:$0xff]
        %v1533 = vld [vmem:[%s23 + $0x10] sm:$0xf]
        %v1534 = vld [vmem:[%s23 + $0x18] sm:$0xff]
        %v1535 = vld [vmem:[%s23 + $0x20] sm:$0xff]
        %v1536 = vld [vmem:[%s23 + $0x28] sm:$0xf]
        %v1543 = vcombine.high %v1531, %v1531
        %v1544 = vcombine.high %v1532, %v1532
        %v1545 = vcombine.high %v1534, %v1534
        %v1546 = vcombine.high %v1535, %v1535
        %v1551 = vcombine.low %v1531, %v1543
        %v1552 = vcombine.low %v1532, %v1544
        %v1553 = vcombine.low %v1533, %v1534
        %v1554 = vcombine.low %v1545, %v1535
        %v1555 = vcombine.low %v1546, %v1536
        %v1561 = vpack.c.bf16 %v1552, %v1551
        %v1562 = vpack.c.bf16 %v1554, %v1553
        %v1563 = vpack.c.bf16 %v1555, %v1555
        %v1564 = vld [vmem:[%s1009] sm:$0xf]
        %v1565 = vld [vmem:[%s1009 + $0x4] sm:$0xf]
        %v1566 = vld [vmem:[%s1009 + $0x8] sm:$0xf]
        %v1567 = vld [vmem:[%s1009 + $0xc] sm:$0xf]
        %v1568 = vld [vmem:[%s1017] sm:$0x1]
        %v1570 = vlaneseq
        %v1571 = vshrl.u32 %v1570, 7
        %v1572 = vsub.s32 0, %v1571
        %v1573 = vrot.slane %v1568, %v1572
        %v1579 = vunpack.c.l.b16 %v1564
        %v1580 = vunpack.c.l.b16 %v1565
        %v1581 = vunpack.c.l.b16 %v1566
        %v1582 = vunpack.c.l.b16 %v1567
        %v1583 = vpack.c.b16 %v1580, %v1579
        %v1584 = vpack.c.b16 %v1582, %v1581
        %vm1587 = vcmask 261120
        %v1589 = vsel %vm1587, %v1561, 0
        %v1592 = vsel %vm1587, %v1562, 0
        %v1595 = vsel %vm1587, %v1563, 0
        %1597 = vmatprep.subr.bf16.mxu0 0
        %1598 = vmatpush1.bf16.msra.mxu0 %v1583
        %1599 = vmatprep.subr.bf16.mxu0 0
        %1600 = vmatpush1.bf16.msra.mxu0 %v1584
        %1601 = vmatprep.subr.bf16.mxu0 0
        %1602 = vmatpush1.bf16.msra.mxu0 0
        %1603 = vmatprep.subr.bf16.mxu0 0
        %1604 = vmatpush1.bf16.msra.mxu0 0
        %1605 = vmatprep.subr.bf16.mxu0 0
        %1606 = vmatpush1.bf16.msra.mxu0 0
        %1607 = vmatprep.subr.bf16.mxu0 0
        %1608 = vmatpush1.bf16.msra.mxu0 0
        %1609 = vmatprep.subr.bf16.mxu0 0
        %1610 = vmatpush1.bf16.msra.mxu0 0
        %1611 = vmatprep.subr.bf16.mxu0 0
        %1612 = vmatpush1.bf16.msra.mxu0 0
        %1613 = vmatprep.subr.bf16.mxu0 0
        %1614 = vmatpush1.bf16.msra.mxu0 0
        %1615 = vmatprep.subr.bf16.mxu0 0
        %1616 = vmatpush1.bf16.msra.mxu0 0
        %1617 = vmatprep.subr.bf16.mxu0 0
        %1618 = vmatpush1.bf16.msra.mxu0 0
        %1619 = vmatprep.subr.bf16.mxu0 0
        %1620 = vmatpush1.bf16.msra.mxu0 0
        %1621 = vmatprep.subr.bf16.mxu0 0
        %1622 = vmatpush1.bf16.msra.mxu0 0
        %1623 = vmatprep.subr.bf16.mxu0 0
        %1624 = vmatpush1.bf16.msra.mxu0 0
        %1625 = vmatprep.subr.bf16.mxu0 0
        %1626 = vmatpush1.bf16.msra.mxu0 0
        %1627 = vmatprep.subr.bf16.mxu0 0
        %1628 = vmatpush1.bf16.msra.mxu0 0
        %1629 = vmatprep.mubr.bf16.mxu0 0
        %1630 = vmatmul.mubr.bf16.gmra.mrb[0].mxu0 %v1589
        %v1631 = vpop.f32.mrb[0].mxu0
        %v1632 = vadd.f32 %v1573, %v1631
        %v1633 = vpop.f32.mrb[0].mxu0
        %v1634 = vpop.f32.mrb[0].mxu0
        %v1635 = vadd.f32 %v1573, %v1634
        %v1636 = vpop.f32.mrb[0].mxu0
        %1637 = vmatprep.mubr.bf16.mxu0 0
        %1638 = vmatmul.mubr.bf16.gmra.mrb[0].mxu0 %v1592
        %v1639 = vpop.f32.mrb[0].mxu0
        %v1640 = vadd.f32 %v1573, %v1639
        %v1641 = vpop.f32.mrb[0].mxu0
        %v1642 = vpop.f32.mrb[0].mxu0
        %v1643 = vadd.f32 %v1573, %v1642
        %v1644 = vpop.f32.mrb[0].mxu0
        %1645 = vmatprep.mubr.bf16.mxu0 0
        %1646 = vmatmul.mubr.bf16.gmra.mrb[0].mxu0 %v1595
        %v1647 = vpop.f32.mrb[0].mxu0
        %v1648 = vadd.f32 %v1573, %v1647
        %v1649 = vpop.f32.mrb[0].mxu0
        %v1650 = vpop.f32.mrb[0].mxu0
        %v1651 = vpop.f32.mrb[0].mxu0
        %1652 = vdwg.mxu0
        %v1653 = vmul.f32 %v1632, 0.35355338
        %v1654 = vmul.f32 %v1635, 0.35355338
        %v1655 = vmul.f32 %v1640, 0.35355338
        %v1656 = vmul.f32 %v1643, 0.35355338
        %v1657 = vmul.f32 %v1648, 0.35355338
        %v1663 = vcombine.high %v1653, %v1653
        %v1664 = vcombine.high %v1654, %v1654
        %v1665 = vcombine.high %v1655, %v1655
        %v1666 = vcombine.high %v1656, %v1656
        %v1667 = vcombine.high %v1657, %v1657
        %v1669 = vcombine.low %v1653, %v1663
        %v1670 = vcombine.low %v1654, %v1664
        %v1671 = vcombine.low %v1665, %v1656
        %v1672 = vcombine.low %v1666, %v1657
        %v1677 = vpack.c.bf16 %v1670, %v1669
        %v1678 = vpack.c.bf16 %v1655, %v1655
        %v1679 = vpack.c.bf16 %v1672, %v1671
        %v1680 = vpack.c.bf16 %v1667, %v1667
        %v1681 = vld [vmem:[%s1026] sm:$0xf]
        %v1682 = vld [vmem:[%s1026 + $0x4] sm:$0xf]
        %v1683 = vld [vmem:[%s1026 + $0x8] sm:$0xf]
        %v1684 = vld [vmem:[%s1026 + $0xc] sm:$0xf]
        %v1685 = vld [vmem:[%s1034] sm:$0x1]
        %v1687 = vlaneseq
        %v1688 = vshrl.u32 %v1687, 7
        %v1689 = vsub.s32 0, %v1688
        %v1690 = vrot.slane %v1685, %v1689
        %v1696 = vunpack.c.l.b16 %v1681
        %v1697 = vunpack.c.l.b16 %v1682
        %v1698 = vunpack.c.l.b16 %v1683
        %v1699 = vunpack.c.l.b16 %v1684
        %v1700 = vpack.c.b16 %v1697, %v1696
        %v1701 = vpack.c.b16 %v1699, %v1698
        %1704 = vmatprep.subr.bf16.mxu0 0
        %1705 = vmatpush1.bf16.msra.mxu0 %v1700
        %1706 = vmatprep.subr.bf16.mxu0 0
        %1707 = vmatpush1.bf16.msra.mxu0 %v1701
        %1708 = vmatprep.subr.bf16.mxu0 0
        %1709 = vmatpush1.bf16.msra.mxu0 0
        %1710 = vmatprep.subr.bf16.mxu0 0
        %1711 = vmatpush1.bf16.msra.mxu0 0
        %1712 = vmatprep.subr.bf16.mxu0 0
        %1713 = vmatpush1.bf16.msra.mxu0 0
        %1714 = vmatprep.subr.bf16.mxu0 0
        %1715 = vmatpush1.bf16.msra.mxu0 0
        %1716 = vmatprep.subr.bf16.mxu0 0
        %1717 = vmatpush1.bf16.msra.mxu0 0
        %1718 = vmatprep.subr.bf16.mxu0 0
        %1719 = vmatpush1.bf16.msra.mxu0 0
        %1720 = vmatprep.subr.bf16.mxu0 0
        %1721 = vmatpush1.bf16.msra.mxu0 0
        %1722 = vmatprep.subr.bf16.mxu0 0
        %1723 = vmatpush1.bf16.msra.mxu0 0
        %1724 = vmatprep.subr.bf16.mxu0 0
        %1725 = vmatpush1.bf16.msra.mxu0 0
        %1726 = vmatprep.subr.bf16.mxu0 0
        %1727 = vmatpush1.bf16.msra.mxu0 0
        %1728 = vmatprep.subr.bf16.mxu0 0
        %1729 = vmatpush1.bf16.msra.mxu0 0
        %1730 = vmatprep.subr.bf16.mxu0 0
        %1731 = vmatpush1.bf16.msra.mxu0 0
        %1732 = vmatprep.subr.bf16.mxu0 0
        %1733 = vmatpush1.bf16.msra.mxu0 0
        %1734 = vmatprep.subr.bf16.mxu0 0
        %1735 = vmatpush1.bf16.msra.mxu0 0
        %1736 = vmatprep.mubr.bf16.mxu0 0
        %1737 = vmatmul.mubr.bf16.gmra.mrb[0].mxu0 %v1589
        %v1738 = vpop.f32.mrb[0].mxu0
        %v1739 = vadd.f32 %v1690, %v1738
        %v1740 = vpop.f32.mrb[0].mxu0
        %v1741 = vpop.f32.mrb[0].mxu0
        %v1742 = vadd.f32 %v1690, %v1741
        %v1743 = vpop.f32.mrb[0].mxu0
        %1744 = vmatprep.mubr.bf16.mxu0 0
        %1745 = vmatmul.mubr.bf16.gmra.mrb[0].mxu0 %v1592
        %v1746 = vpop.f32.mrb[0].mxu0
        %v1747 = vadd.f32 %v1690, %v1746
        %v1748 = vpop.f32.mrb[0].mxu0
        %v1749 = vpop.f32.mrb[0].mxu0
        %v1750 = vadd.f32 %v1690, %v1749
        %v1751 = vpop.f32.mrb[0].mxu0
        %1752 = vmatprep.mubr.bf16.mxu0 0
        %1753 = vmatmul.mubr.bf16.gmra.mrb[0].mxu0 %v1595
        %v1754 = vpop.f32.mrb[0].mxu0
        %v1755 = vadd.f32 %v1690, %v1754
        %v1756 = vpop.f32.mrb[0].mxu0
        %v1757 = vpop.f32.mrb[0].mxu0
        %v1758 = vpop.f32.mrb[0].mxu0
        %1759 = vdwg.mxu0
        %v1765 = vcombine.high %v1739, %v1739
        %v1766 = vcombine.high %v1742, %v1742
        %v1767 = vcombine.high %v1747, %v1747
        %v1768 = vcombine.high %v1750, %v1750
        %v1769 = vcombine.high %v1755, %v1755
        %v1771 = vcombine.low %v1739, %v1765
        %v1772 = vcombine.low %v1742, %v1766
        %v1773 = vcombine.low %v1767, %v1750
        %v1774 = vcombine.low %v1768, %v1755
        %v1779 = vpack.c.bf16 %v1772, %v1771
        %v1780 = vpack.c.bf16 %v1747, %v1747
        %v1781 = vpack.c.bf16 %v1774, %v1773
        %v1782 = vpack.c.bf16 %v1769, %v1769
        %v1783 = vld [vmem:[%s1043] sm:$0xf]
        %v1784 = vld [vmem:[%s1043 + $0x4] sm:$0xf]
        %v1785 = vld [vmem:[%s1043 + $0x8] sm:$0xf]
        %v1786 = vld [vmem:[%s1043 + $0xc] sm:$0xf]
        %v1787 = vld [vmem:[%s1051] sm:$0x1]
        %v1789 = vlaneseq
        %v1790 = vshrl.u32 %v1789, 7
        %v1791 = vsub.s32 0, %v1790
        %v1792 = vrot.slane %v1787, %v1791
        %v1798 = vunpack.c.l.b16 %v1783
        %v1799 = vunpack.c.l.b16 %v1784
        %v1800 = vunpack.c.l.b16 %v1785
        %v1801 = vunpack.c.l.b16 %v1786
        %v1802 = vpack.c.b16 %v1799, %v1798
        %v1803 = vpack.c.b16 %v1801, %v1800
        %1806 = vmatprep.subr.bf16.mxu0 0
        %1807 = vmatpush1.bf16.msra.mxu0 %v1802
        %1808 = vmatprep.subr.bf16.mxu0 0
        %1809 = vmatpush1.bf16.msra.mxu0 %v1803
        %1810 = vmatprep.subr.bf16.mxu0 0
        %1811 = vmatpush1.bf16.msra.mxu0 0
        %1812 = vmatprep.subr.bf16.mxu0 0
        %1813 = vmatpush1.bf16.msra.mxu0 0
        %1814 = vmatprep.subr.bf16.mxu0 0
        %1815 = vmatpush1.bf16.msra.mxu0 0
        %1816 = vmatprep.subr.bf16.mxu0 0
        %1817 = vmatpush1.bf16.msra.mxu0 0
        %1818 = vmatprep.subr.bf16.mxu0 0
        %1819 = vmatpush1.bf16.msra.mxu0 0
        %1820 = vmatprep.subr.bf16.mxu0 0
        %1821 = vmatpush1.bf16.msra.mxu0 0
        %1822 = vmatprep.subr.bf16.mxu0 0
        %1823 = vmatpush1.bf16.msra.mxu0 0
        %1824 = vmatprep.subr.bf16.mxu0 0
        %1825 = vmatpush1.bf16.msra.mxu0 0
        %1826 = vmatprep.subr.bf16.mxu0 0
        %1827 = vmatpush1.bf16.msra.mxu0 0
        %1828 = vmatprep.subr.bf16.mxu0 0
        %1829 = vmatpush1.bf16.msra.mxu0 0
        %1830 = vmatprep.subr.bf16.mxu0 0
        %1831 = vmatpush1.bf16.msra.mxu0 0
        %1832 = vmatprep.subr.bf16.mxu0 0
        %1833 = vmatpush1.bf16.msra.mxu0 0
        %1834 = vmatprep.subr.bf16.mxu0 0
        %1835 = vmatpush1.bf16.msra.mxu0 0
        %1836 = vmatprep.subr.bf16.mxu0 0
        %1837 = vmatpush1.bf16.msra.mxu0 0
        %1838 = vmatprep.mubr.bf16.mxu0 0
        %1839 = vmatmul.mubr.bf16.gmra.mrb[0].mxu0 %v1589
        %v1840 = vpop.f32.mrb[0].mxu0
        %v1841 = vadd.f32 %v1792, %v1840
        %v1842 = vpop.f32.mrb[0].mxu0
        %v1843 = vpop.f32.mrb[0].mxu0
        %v1844 = vadd.f32 %v1792, %v1843
        %v1845 = vpop.f32.mrb[0].mxu0
        %1846 = vmatprep.mubr.bf16.mxu0 0
        %1847 = vmatmul.mubr.bf16.gmra.mrb[0].mxu0 %v1592
        %v1848 = vpop.f32.mrb[0].mxu0
        %v1849 = vadd.f32 %v1792, %v1848
        %v1850 = vpop.f32.mrb[0].mxu0
        %v1851 = vpop.f32.mrb[0].mxu0
        %v1852 = vadd.f32 %v1792, %v1851
        %v1853 = vpop.f32.mrb[0].mxu0
        %1854 = vmatprep.mubr.bf16.mxu0 0
        %1855 = vmatmul.mubr.bf16.gmra.mrb[0].mxu0 %v1595
        %v1856 = vpop.f32.mrb[0].mxu0
        %v1857 = vadd.f32 %v1792, %v1856
        %v1858 = vpop.f32.mrb[0].mxu0
        %v1859 = vpop.f32.mrb[0].mxu0
        %v1860 = vpop.f32.mrb[0].mxu0
        %1861 = vdwg.mxu0
        %v1867 = vcombine.high %v1841, %v1841
        %v1868 = vcombine.high %v1844, %v1844
        %v1869 = vcombine.high %v1849, %v1849
        %v1870 = vcombine.high %v1852, %v1852
        %v1871 = vcombine.high %v1857, %v1857
        %v1873 = vcombine.low %v1841, %v1867
        %v1874 = vcombine.low %v1844, %v1868
        %v1875 = vcombine.low %v1869, %v1852
        %v1876 = vcombine.low %v1870, %v1857
        %v1881 = vpack.c.bf16 %v1874, %v1873
        %v1882 = vpack.c.bf16 %v1849, %v1849
        %v1883 = vpack.c.bf16 %v1876, %v1875
        %v1884 = vpack.c.bf16 %v1871, %v1871
        %vm1885 = vcmask 64512
        %v1887 = vsel %vm1885, %v1677, 0
        %v1890 = vsel %vm1885, %v1678, 0
        %v1893 = vsel %vm1885, %v1779, 0
        %v1896 = vsel %vm1885, %v1780, 0
        %1898 = vmatprep.subr.bf16.mxu0 0
        %1899 = vmatpush1.bf16.xpose.msra.mxu0 %v1893
        %1900 = vmatprep.subr.bf16.mxu0 0
        %1901 = vmatpush1.bf16.xpose.msra.mxu0 %v1896
        %1902 = vmatprep.subr.bf16.mxu0 0
        %1903 = vmatpush1.bf16.xpose.msra.mxu0 0
        %1904 = vmatprep.subr.bf16.mxu0 0
        %1905 = vmatpush1.bf16.xpose.msra.mxu0 0
        %1906 = vmatprep.subr.bf16.mxu0 0
        %1907 = vmatpush1.bf16.xpose.msra.mxu0 0
        %1908 = vmatprep.subr.bf16.mxu0 0
        %1909 = vmatpush1.bf16.xpose.msra.mxu0 0
        %1910 = vmatprep.subr.bf16.mxu0 0
        %1911 = vmatpush1.bf16.xpose.msra.mxu0 0
        %1912 = vmatprep.subr.bf16.mxu0 0
        %1913 = vmatpush1.bf16.xpose.msra.mxu0 0
        %1914 = vmatprep.subr.bf16.mxu0 0
        %1915 = vmatpush1.bf16.xpose.msra.mxu0 0
        %1916 = vmatprep.subr.bf16.mxu0 0
        %1917 = vmatpush1.bf16.xpose.msra.mxu0 0
        %1918 = vmatprep.subr.bf16.mxu0 0
        %1919 = vmatpush1.bf16.xpose.msra.mxu0 0
        %1920 = vmatprep.subr.bf16.mxu0 0
        %1921 = vmatpush1.bf16.xpose.msra.mxu0 0
        %1922 = vmatprep.subr.bf16.mxu0 0
        %1923 = vmatpush1.bf16.xpose.msra.mxu0 0
        %1924 = vmatprep.subr.bf16.mxu0 0
        %1925 = vmatpush1.bf16.xpose.msra.mxu0 0
        %1926 = vmatprep.subr.bf16.mxu0 0
        %1927 = vmatpush1.bf16.xpose.msra.mxu0 0
        %1928 = vmatprep.subr.bf16.mxu0 0
        %1929 = vmatpush1.bf16.xpose.msra.mxu0 0
        %1930 = vmatprep.mubr.bf16.mxu0 0
        %1931 = vmatmul.mubr.bf16.gmra.mrb[0].mxu0 %v1887
        %v1932 = vpop.f32.mrb[0].mxu0
        %v1933 = vadd.f32 0.0, %v1932
        %v1934 = vpop.f32.mrb[0].mxu0
        %v1935 = vpop.f32.mrb[0].mxu0
        %v1936 = vadd.f32 0.0, %v1935
        %v1937 = vpop.f32.mrb[0].mxu0
        %1938 = vmatprep.mubr.bf16.mxu0 0
        %1939 = vmatmul.mubr.bf16.gmra.mrb[0].mxu0 %v1890
        %v1940 = vpop.f32.mrb[0].mxu0
        %v1941 = vadd.f32 0.0, %v1940
        %v1942 = vpop.f32.mrb[0].mxu0
        %v1943 = vpop.f32.mrb[0].mxu0
        %v1944 = vpop.f32.mrb[0].mxu0
        %1945 = vdwg.mxu0
        %v1947 = vsel %vm1885, %v1679, 0
        %v1950 = vsel %vm1885, %v1680, 0
        %v1953 = vsel %vm1885, %v1781, 0
        %v1956 = vsel %vm1885, %v1782, 0
        %1958 = vmatprep.subr.bf16.mxu0 0
        %1959 = vmatpush1.bf16.xpose.msra.mxu0 %v1953
        %1960 = vmatprep.subr.bf16.mxu0 0
        %1961 = vmatpush1.bf16.xpose.msra.mxu0 %v1956
        %1962 = vmatprep.subr.bf16.mxu0 0
        %1963 = vmatpush1.bf16.xpose.msra.mxu0 0
        %1964 = vmatprep.subr.bf16.mxu0 0
        %1965 = vmatpush1.bf16.xpose.msra.mxu0 0
        %1966 = vmatprep.subr.bf16.mxu0 0
        %1967 = vmatpush1.bf16.xpose.msra.mxu0 0
        %1968 = vmatprep.subr.bf16.mxu0 0
        %1969 = vmatpush1.bf16.xpose.msra.mxu0 0
        %1970 = vmatprep.subr.bf16.mxu0 0
        %1971 = vmatpush1.bf16.xpose.msra.mxu0 0
        %1972 = vmatprep.subr.bf16.mxu0 0
        %1973 = vmatpush1.bf16.xpose.msra.mxu0 0
        %1974 = vmatprep.subr.bf16.mxu0 0
        %1975 = vmatpush1.bf16.xpose.msra.mxu0 0
        %1976 = vmatprep.subr.bf16.mxu0 0
        %1977 = vmatpush1.bf16.xpose.msra.mxu0 0
        %1978 = vmatprep.subr.bf16.mxu0 0
        %1979 = vmatpush1.bf16.xpose.msra.mxu0 0
        %1980 = vmatprep.subr.bf16.mxu0 0
        %1981 = vmatpush1.bf16.xpose.msra.mxu0 0
        %1982 = vmatprep.subr.bf16.mxu0 0
        %1983 = vmatpush1.bf16.xpose.msra.mxu0 0
        %1984 = vmatprep.subr.bf16.mxu0 0
        %1985 = vmatpush1.bf16.xpose.msra.mxu0 0
        %1986 = vmatprep.subr.bf16.mxu0 0
        %1987 = vmatpush1.bf16.xpose.msra.mxu0 0
        %1988 = vmatprep.subr.bf16.mxu0 0
        %1989 = vmatpush1.bf16.xpose.msra.mxu0 0
        %1990 = vmatprep.mubr.bf16.mxu0 0
        %1991 = vmatmul.mubr.bf16.gmra.mrb[0].mxu0 %v1947
        %v1992 = vpop.f32.mrb[0].mxu0
        %v1993 = vadd.f32 0.0, %v1992
        %v1994 = vpop.f32.mrb[0].mxu0
        %v1995 = vpop.f32.mrb[0].mxu0
        %v1996 = vadd.f32 0.0, %v1995
        %v1997 = vpop.f32.mrb[0].mxu0
        %1998 = vmatprep.mubr.bf16.mxu0 0
        %1999 = vmatmul.mubr.bf16.gmra.mrb[0].mxu0 %v1950
        %v2000 = vpop.f32.mrb[0].mxu0
        %v2001 = vadd.f32 0.0, %v2000
        %v2002 = vpop.f32.mrb[0].mxu0
        %v2003 = vpop.f32.mrb[0].mxu0
        %v2004 = vpop.f32.mrb[0].mxu0
        %2005 = vdwg.mxu0
        %vm2006 = vcmask 162816
        %v2007 = vsel %vm2006, %v1933, -inf
        %2008 = vmax.xlane.f32.xlu0 %v2007
        %v2009 = vpop.xlane.xlu0 %2008
        %v2010 = vsel %vm2006, %v1936, -inf
        %2011 = vmax.xlane.f32.xlu0 %v2010
        %v2012 = vpop.xlane.xlu0 %2011
        %vm2013 = vcmask 158720
        %v2014 = vsel %vm2013, %v1941, -inf
        %2015 = vmax.xlane.f32.xlu0 %v2014
        %v2016 = vpop.xlane.xlu0 %2015
        %v2017 = vsel %vm2006, %v1993, -inf
        %2018 = vmax.xlane.f32.xlu0 %v2017
        %v2019 = vpop.xlane.xlu0 %2018
        %v2020 = vsel %vm2006, %v1996, -inf
        %2021 = vmax.xlane.f32.xlu0 %v2020
        %v2022 = vpop.xlane.xlu0 %2021
        %v2023 = vsel %vm2013, %v2001, -inf
        %2024 = vmax.xlane.f32.xlu0 %v2023
        %v2025 = vpop.xlane.xlu0 %2024
        %v2026 = vsub.f32 %v1933, %v2009
        %v2027 = vsub.f32 %v1936, %v2012
        %v2028 = vsub.f32 %v1941, %v2016
        %v2029 = vsub.f32 %v1993, %v2019
        %v2030 = vsub.f32 %v1996, %v2022
        %v2031 = vsub.f32 %v2001, %v2025
        %v2032 = vmul.f32 %v2026, 1.442695
        %v2033 = vpow.pop %v2032
        %v2034 = vmul.f32 %v2027, 1.442695
        %v2035 = vpow.pop %v2034
        %v2036 = vmul.f32 %v2028, 1.442695
        %v2037 = vpow.pop %v2036
        %v2038 = vmul.f32 %v2029, 1.442695
        %v2039 = vpow.pop %v2038
        %v2040 = vmul.f32 %v2030, 1.442695
        %v2041 = vpow.pop %v2040
        %v2042 = vmul.f32 %v2031, 1.442695
        %v2043 = vpow.pop %v2042
        %v2044 = vsel %vm2006, %v2033, 0.0
        %2045 = vadd.xlane.f32.xlu0 %v2044
        %v2046 = vpop.xlane.xlu0 %2045
        %v2047 = vsel %vm2006, %v2035, 0.0
        %2048 = vadd.xlane.f32.xlu0 %v2047
        %v2049 = vpop.xlane.xlu0 %2048
        %v2050 = vsel %vm2013, %v2037, 0.0
        %2051 = vadd.xlane.f32.xlu0 %v2050
        %v2052 = vpop.xlane.xlu0 %2051
        %v2053 = vsel %vm2006, %v2039, 0.0
        %2054 = vadd.xlane.f32.xlu0 %v2053
        %v2055 = vpop.xlane.xlu0 %2054
        %v2056 = vsel %vm2006, %v2041, 0.0
        %2057 = vadd.xlane.f32.xlu0 %v2056
        %v2058 = vpop.xlane.xlu0 %2057
        %v2059 = vsel %vm2013, %v2043, 0.0
        %2060 = vadd.xlane.f32.xlu0 %v2059
        %v2061 = vpop.xlane.xlu0 %2060
        %v2062 = vrcp.pop %v2046
        %v2063 = vrcp.pop %v2049
        %v2064 = vrcp.pop %v2052
        %v2065 = vrcp.pop %v2055
        %v2066 = vrcp.pop %v2058
        %v2067 = vrcp.pop %v2061
        %v2068 = vmul.f32 %v2033, %v2062
        %v2069 = vmul.f32 %v2035, %v2063
        %v2070 = vmul.f32 %v2037, %v2064
        %v2071 = vmul.f32 %v2039, %v2065
        %v2072 = vmul.f32 %v2041, %v2066
        %v2073 = vmul.f32 %v2043, %v2067
        %v2074 = vpack.c.bf16 %v2069, %v2068
        %v2075 = vpack.c.bf16 %v2070, %v2070
        %v2076 = vpack.c.bf16 %v2072, %v2071
        %v2077 = vpack.c.bf16 %v2073, %v2073
        %v2079 = vsel %vm2006, %v2074, 0
        %v2082 = vsel %vm2006, %v2075, 0
        %vm2084 = vcmask 1041408
        %v2086 = vsel %vm2084, %v1882, 0
        %2088 = vmatprep.subr.bf16.mxu0 0
        %2089 = vmatpush1.bf16.msra.mxu0 %v1881
        %2090 = vmatprep.subr.bf16.mxu0 0
        %2091 = vmatpush1.bf16.msra.mxu0 %v2086
        %2092 = vmatprep.subr.bf16.mxu0 0
        %2093 = vmatpush1.bf16.msra.mxu0 0
        %2094 = vmatprep.subr.bf16.mxu0 0
        %2095 = vmatpush1.bf16.msra.mxu0 0
        %2096 = vmatprep.subr.bf16.mxu0 0
        %2097 = vmatpush1.bf16.msra.mxu0 0
        %2098 = vmatprep.subr.bf16.mxu0 0
        %2099 = vmatpush1.bf16.msra.mxu0 0
        %2100 = vmatprep.subr.bf16.mxu0 0
        %2101 = vmatpush1.bf16.msra.mxu0 0
        %2102 = vmatprep.subr.bf16.mxu0 0
        %2103 = vmatpush1.bf16.msra.mxu0 0
        %2104 = vmatprep.subr.bf16.mxu0 0
        %2105 = vmatpush1.bf16.msra.mxu0 0
        %2106 = vmatprep.subr.bf16.mxu0 0
        %2107 = vmatpush1.bf16.msra.mxu0 0
        %2108 = vmatprep.subr.bf16.mxu0 0
        %2109 = vmatpush1.bf16.msra.mxu0 0
        %2110 = vmatprep.subr.bf16.mxu0 0
        %2111 = vmatpush1.bf16.msra.mxu0 0
        %2112 = vmatprep.subr.bf16.mxu0 0
        %2113 = vmatpush1.bf16.msra.mxu0 0
        %2114 = vmatprep.subr.bf16.mxu0 0
        %2115 = vmatpush1.bf16.msra.mxu0 0
        %2116 = vmatprep.subr.bf16.mxu0 0
        %2117 = vmatpush1.bf16.msra.mxu0 0
        %2118 = vmatprep.subr.bf16.mxu0 0
        %2119 = vmatpush1.bf16.msra.mxu0 0
        %2120 = vmatprep.mubr.bf16.mxu0 0
        %2121 = vmatmul.mubr.bf16.gmra.mrb[0].mxu0 %v2079
        %v2122 = vpop.f32.mrb[0].mxu0
        %v2123 = vadd.f32 0.0, %v2122
        %v2124 = vpop.f32.mrb[0].mxu0
        %v2125 = vpop.f32.mrb[0].mxu0
        %v2126 = vadd.f32 0.0, %v2125
        %v2127 = vpop.f32.mrb[0].mxu0
        %2128 = vmatprep.mubr.bf16.mxu0 0
        %2129 = vmatmul.mubr.bf16.gmra.mrb[0].mxu0 %v2082
        %v2130 = vpop.f32.mrb[0].mxu0
        %v2131 = vadd.f32 0.0, %v2130
        %v2132 = vpop.f32.mrb[0].mxu0
        %v2133 = vpop.f32.mrb[0].mxu0
        %v2134 = vpop.f32.mrb[0].mxu0
        %2135 = vdwg.mxu0
        %v2137 = vsel %vm2006, %v2076, 0
        %v2140 = vsel %vm2006, %v2077, 0
        %v2143 = vsel %vm2084, %v1884, 0
        %2145 = vmatprep.subr.bf16.mxu0 0
        %2146 = vmatpush1.bf16.msra.mxu0 %v1883
        %2147 = vmatprep.subr.bf16.mxu0 0
        %2148 = vmatpush1.bf16.msra.mxu0 %v2143
        %2149 = vmatprep.subr.bf16.mxu0 0
        %2150 = vmatpush1.bf16.msra.mxu0 0
        %2151 = vmatprep.subr.bf16.mxu0 0
        %2152 = vmatpush1.bf16.msra.mxu0 0
        %2153 = vmatprep.subr.bf16.mxu0 0
        %2154 = vmatpush1.bf16.msra.mxu0 0
        %2155 = vmatprep.subr.bf16.mxu0 0
        %2156 = vmatpush1.bf16.msra.mxu0 0
        %2157 = vmatprep.subr.bf16.mxu0 0
        %2158 = vmatpush1.bf16.msra.mxu0 0
        %2159 = vmatprep.subr.bf16.mxu0 0
        %2160 = vmatpush1.bf16.msra.mxu0 0
        %2161 = vmatprep.subr.bf16.mxu0 0
        %2162 = vmatpush1.bf16.msra.mxu0 0
        %2163 = vmatprep.subr.bf16.mxu0 0
        %2164 = vmatpush1.bf16.msra.mxu0 0
        %2165 = vmatprep.subr.bf16.mxu0 0
        %2166 = vmatpush1.bf16.msra.mxu0 0
        %2167 = vmatprep.subr.bf16.mxu0 0
        %2168 = vmatpush1.bf16.msra.mxu0 0
        %2169 = vmatprep.subr.bf16.mxu0 0
        %2170 = vmatpush1.bf16.msra.mxu0 0
        %2171 = vmatprep.subr.bf16.mxu0 0
        %2172 = vmatpush1.bf16.msra.mxu0 0
        %2173 = vmatprep.subr.bf16.mxu0 0
        %2174 = vmatpush1.bf16.msra.mxu0 0
        %2175 = vmatprep.subr.bf16.mxu0 0
        %2176 = vmatpush1.bf16.msra.mxu0 0
        %2177 = vmatprep.mubr.bf16.mxu0 0
        %2178 = vmatmul.mubr.bf16.gmra.mrb[0].mxu0 %v2137
        %v2179 = vpop.f32.mrb[0].mxu0
        %v2180 = vadd.f32 0.0, %v2179
        %v2181 = vpop.f32.mrb[0].mxu0
        %v2182 = vpop.f32.mrb[0].mxu0
        %v2183 = vadd.f32 0.0, %v2182
        %v2184 = vpop.f32.mrb[0].mxu0
        %2185 = vmatprep.mubr.bf16.mxu0 0
        %2186 = vmatmul.mubr.bf16.gmra.mrb[0].mxu0 %v2140
        %v2187 = vpop.f32.mrb[0].mxu0
        %v2188 = vadd.f32 0.0, %v2187
        %v2189 = vpop.f32.mrb[0].mxu0
        %v2190 = vpop.f32.mrb[0].mxu0
        %v2191 = vpop.f32.mrb[0].mxu0
        %2192 = vdwg.mxu0
        %2195 = vrot.lane.b32.xlu0 %v1677, 120
        %v2196 = vpop.permute.xlu0 %2195
        %2197 = vrot.lane.b32.xlu0 %v1678, 120
        %v2198 = vpop.permute.xlu0 %2197
        %2201 = vrot.lane.b32.xlu0 %v1779, 120
        %v2202 = vpop.permute.xlu0 %2201
        %2203 = vrot.lane.b32.xlu0 %v1780, 120
        %v2204 = vpop.permute.xlu0 %2203
        %v2206 = vsel %vm1885, %v2196, 0
        %v2209 = vsel %vm1885, %v2198, 0
        %v2212 = vsel %vm1885, %v2202, 0
        %v2215 = vsel %vm1885, %v2204, 0
        %2217 = vmatprep.subr.bf16.mxu0 0
        %2218 = vmatpush1.bf16.xpose.msra.mxu0 %v2212
        %2219 = vmatprep.subr.bf16.mxu0 0
        %2220 = vmatpush1.bf16.xpose.msra.mxu0 %v2215
        %2221 = vmatprep.subr.bf16.mxu0 0
        %2222 = vmatpush1.bf16.xpose.msra.mxu0 0
        %2223 = vmatprep.subr.bf16.mxu0 0
        %2224 = vmatpush1.bf16.xpose.msra.mxu0 0
        %2225 = vmatprep.subr.bf16.mxu0 0
        %2226 = vmatpush1.bf16.xpose.msra.mxu0 0
        %2227 = vmatprep.subr.bf16.mxu0 0
        %2228 = vmatpush1.bf16.xpose.msra.mxu0 0
        %2229 = vmatprep.subr.bf16.mxu0 0
        %2230 = vmatpush1.bf16.xpose.msra.mxu0 0
        %2231 = vmatprep.subr.bf16.mxu0 0
        %2232 = vmatpush1.bf16.xpose.msra.mxu0 0
        %2233 = vmatprep.subr.bf16.mxu0 0
        %2234 = vmatpush1.bf16.xpose.msra.mxu0 0
        %2235 = vmatprep.subr.bf16.mxu0 0
        %2236 = vmatpush1.bf16.xpose.msra.mxu0 0
        %2237 = vmatprep.subr.bf16.mxu0 0
        %2238 = vmatpush1.bf16.xpose.msra.mxu0 0
        %2239 = vmatprep.subr.bf16.mxu0 0
        %2240 = vmatpush1.bf16.xpose.msra.mxu0 0
        %2241 = vmatprep.subr.bf16.mxu0 0
        %2242 = vmatpush1.bf16.xpose.msra.mxu0 0
        %2243 = vmatprep.subr.bf16.mxu0 0
        %2244 = vmatpush1.bf16.xpose.msra.mxu0 0
        %2245 = vmatprep.subr.bf16.mxu0 0
        %2246 = vmatpush1.bf16.xpose.msra.mxu0 0
        %2247 = vmatprep.subr.bf16.mxu0 0
        %2248 = vmatpush1.bf16.xpose.msra.mxu0 0
        %2249 = vmatprep.mubr.bf16.mxu0 0
        %2250 = vmatmul.mubr.bf16.gmra.mrb[0].mxu0 %v2206
        %v2251 = vpop.f32.mrb[0].mxu0
        %v2252 = vadd.f32 0.0, %v2251
        %v2253 = vpop.f32.mrb[0].mxu0
        %v2254 = vpop.f32.mrb[0].mxu0
        %v2255 = vadd.f32 0.0, %v2254
        %v2256 = vpop.f32.mrb[0].mxu0
        %2257 = vmatprep.mubr.bf16.mxu0 0
        %2258 = vmatmul.mubr.bf16.gmra.mrb[0].mxu0 %v2209
        %v2259 = vpop.f32.mrb[0].mxu0
        %v2260 = vadd.f32 0.0, %v2259
        %v2261 = vpop.f32.mrb[0].mxu0
        %v2262 = vpop.f32.mrb[0].mxu0
        %v2263 = vpop.f32.mrb[0].mxu0
        %2264 = vdwg.mxu0
        %2267 = vrot.lane.b32.xlu0 %v1679, 120
        %v2268 = vpop.permute.xlu0 %2267
        %2269 = vrot.lane.b32.xlu0 %v1680, 120
        %v2270 = vpop.permute.xlu0 %2269
        %2273 = vrot.lane.b32.xlu0 %v1781, 120
        %v2274 = vpop.permute.xlu0 %2273
        %2275 = vrot.lane.b32.xlu0 %v1782, 120
        %v2276 = vpop.permute.xlu0 %2275
        %v2278 = vsel %vm1885, %v2268, 0
        %v2281 = vsel %vm1885, %v2270, 0
        %v2284 = vsel %vm1885, %v2274, 0
        %v2287 = vsel %vm1885, %v2276, 0
        %2289 = vmatprep.subr.bf16.mxu0 0
        %2290 = vmatpush1.bf16.xpose.msra.mxu0 %v2284
        %2291 = vmatprep.subr.bf16.mxu0 0
        %2292 = vmatpush1.bf16.xpose.msra.mxu0 %v2287
        %2293 = vmatprep.subr.bf16.mxu0 0
        %2294 = vmatpush1.bf16.xpose.msra.mxu0 0
        %2295 = vmatprep.subr.bf16.mxu0 0
        %2296 = vmatpush1.bf16.xpose.msra.mxu0 0
        %2297 = vmatprep.subr.bf16.mxu0 0
        %2298 = vmatpush1.bf16.xpose.msra.mxu0 0
        %2299 = vmatprep.subr.bf16.mxu0 0
        %2300 = vmatpush1.bf16.xpose.msra.mxu0 0
        %2301 = vmatprep.subr.bf16.mxu0 0
        %2302 = vmatpush1.bf16.xpose.msra.mxu0 0
        %2303 = vmatprep.subr.bf16.mxu0 0
        %2304 = vmatpush1.bf16.xpose.msra.mxu0 0
        %2305 = vmatprep.subr.bf16.mxu0 0
        %2306 = vmatpush1.bf16.xpose.msra.mxu0 0
        %2307 = vmatprep.subr.bf16.mxu0 0
        %2308 = vmatpush1.bf16.xpose.msra.mxu0 0
        %2309 = vmatprep.subr.bf16.mxu0 0
        %2310 = vmatpush1.bf16.xpose.msra.mxu0 0
        %2311 = vmatprep.subr.bf16.mxu0 0
        %2312 = vmatpush1.bf16.xpose.msra.mxu0 0
        %2313 = vmatprep.subr.bf16.mxu0 0
        %2314 = vmatpush1.bf16.xpose.msra.mxu0 0
        %2315 = vmatprep.subr.bf16.mxu0 0
        %2316 = vmatpush1.bf16.xpose.msra.mxu0 0
        %2317 = vmatprep.subr.bf16.mxu0 0
        %2318 = vmatpush1.bf16.xpose.msra.mxu0 0
        %2319 = vmatprep.subr.bf16.mxu0 0
        %2320 = vmatpush1.bf16.xpose.msra.mxu0 0
        %2321 = vmatprep.mubr.bf16.mxu0 0
        %2322 = vmatmul.mubr.bf16.gmra.mrb[0].mxu0 %v2278
        %v2323 = vpop.f32.mrb[0].mxu0
        %v2324 = vadd.f32 0.0, %v2323
        %v2325 = vpop.f32.mrb[0].mxu0
        %v2326 = vpop.f32.mrb[0].mxu0
        %v2327 = vadd.f32 0.0, %v2326
        %v2328 = vpop.f32.mrb[0].mxu0
        %2329 = vmatprep.mubr.bf16.mxu0 0
        %2330 = vmatmul.mubr.bf16.gmra.mrb[0].mxu0 %v2281
        %v2331 = vpop.f32.mrb[0].mxu0
        %v2332 = vadd.f32 0.0, %v2331
        %v2333 = vpop.f32.mrb[0].mxu0
        %v2334 = vpop.f32.mrb[0].mxu0
        %v2335 = vpop.f32.mrb[0].mxu0
        %2336 = vdwg.mxu0
        %v2337 = vsel %vm2006, %v2252, -inf
        %2338 = vmax.xlane.f32.xlu0 %v2337
        %v2339 = vpop.xlane.xlu0 %2338
        %v2340 = vsel %vm2006, %v2255, -inf
        %2341 = vmax.xlane.f32.xlu0 %v2340
        %v2342 = vpop.xlane.xlu0 %2341
        %v2343 = vsel %vm2013, %v2260, -inf
        %2344 = vmax.xlane.f32.xlu0 %v2343
        %v2345 = vpop.xlane.xlu0 %2344
        %v2346 = vsel %vm2006, %v2324, -inf
        %2347 = vmax.xlane.f32.xlu0 %v2346
        %v2348 = vpop.xlane.xlu0 %2347
        %v2349 = vsel %vm2006, %v2327, -inf
        %2350 = vmax.xlane.f32.xlu0 %v2349
        %v2351 = vpop.xlane.xlu0 %2350
        %v2352 = vsel %vm2013, %v2332, -inf
        %2353 = vmax.xlane.f32.xlu0 %v2352
        %v2354 = vpop.xlane.xlu0 %2353
        %v2355 = vsub.f32 %v2252, %v2339
        %v2356 = vsub.f32 %v2255, %v2342
        %v2357 = vsub.f32 %v2260, %v2345
        %v2358 = vsub.f32 %v2324, %v2348
        %v2359 = vsub.f32 %v2327, %v2351
        %v2360 = vsub.f32 %v2332, %v2354
        %v2361 = vmul.f32 %v2355, 1.442695
        %v2362 = vpow.pop %v2361
        %v2363 = vmul.f32 %v2356, 1.442695
        %v2364 = vpow.pop %v2363
        %v2365 = vmul.f32 %v2357, 1.442695
        %v2366 = vpow.pop %v2365
        %v2367 = vmul.f32 %v2358, 1.442695
        %v2368 = vpow.pop %v2367
        %v2369 = vmul.f32 %v2359, 1.442695
        %v2370 = vpow.pop %v2369
        %v2371 = vmul.f32 %v2360, 1.442695
        %v2372 = vpow.pop %v2371
        %v2373 = vsel %vm2006, %v2362, 0.0
        %2374 = vadd.xlane.f32.xlu0 %v2373
        %v2375 = vpop.xlane.xlu0 %2374
        %v2376 = vsel %vm2006, %v2364, 0.0
        %2377 = vadd.xlane.f32.xlu0 %v2376
        %v2378 = vpop.xlane.xlu0 %2377
        %v2379 = vsel %vm2013, %v2366, 0.0
        %2380 = vadd.xlane.f32.xlu0 %v2379
        %v2381 = vpop.xlane.xlu0 %2380
        %v2382 = vsel %vm2006, %v2368, 0.0
        %2383 = vadd.xlane.f32.xlu0 %v2382
        %v2384 = vpop.xlane.xlu0 %2383
        %v2385 = vsel %vm2006, %v2370, 0.0
        %2386 = vadd.xlane.f32.xlu0 %v2385
        %v2387 = vpop.xlane.xlu0 %2386
        %v2388 = vsel %vm2013, %v2372, 0.0
        %2389 = vadd.xlane.f32.xlu0 %v2388
        %v2390 = vpop.xlane.xlu0 %2389
        %v2391 = vrcp.pop %v2375
        %v2392 = vrcp.pop %v2378
        %v2393 = vrcp.pop %v2381
        %v2394 = vrcp.pop %v2384
        %v2395 = vrcp.pop %v2387
        %v2396 = vrcp.pop %v2390
        %v2397 = vmul.f32 %v2362, %v2391
        %v2398 = vmul.f32 %v2364, %v2392
        %v2399 = vmul.f32 %v2366, %v2393
        %v2400 = vmul.f32 %v2368, %v2394
        %v2401 = vmul.f32 %v2370, %v2395
        %v2402 = vmul.f32 %v2372, %v2396
        %v2403 = vpack.c.bf16 %v2398, %v2397
        %v2404 = vpack.c.bf16 %v2399, %v2399
        %v2405 = vpack.c.bf16 %v2401, %v2400
        %v2406 = vpack.c.bf16 %v2402, %v2402
        %2409 = vrot.lane.b32.xlu0 %v1881, 120
        %v2410 = vpop.permute.xlu0 %2409
        %2411 = vrot.lane.b32.xlu0 %v1882, 120
        %v2412 = vpop.permute.xlu0 %2411
        %v2415 = vsel %vm2006, %v2403, 0
        %v2418 = vsel %vm2006, %v2404, 0
        %v2421 = vsel %vm2084, %v2412, 0
        %2423 = vmatprep.subr.bf16.mxu0 0
        %2424 = vmatpush1.bf16.msra.mxu0 %v2410
        %2425 = vmatprep.subr.bf16.mxu0 0
        %2426 = vmatpush1.bf16.msra.mxu0 %v2421
        %2427 = vmatprep.subr.bf16.mxu0 0
        %2428 = vmatpush1.bf16.msra.mxu0 0
        %2429 = vmatprep.subr.bf16.mxu0 0
        %2430 = vmatpush1.bf16.msra.mxu0 0
        %2431 = vmatprep.subr.bf16.mxu0 0
        %2432 = vmatpush1.bf16.msra.mxu0 0
        %2433 = vmatprep.subr.bf16.mxu0 0
        %2434 = vmatpush1.bf16.msra.mxu0 0
        %2435 = vmatprep.subr.bf16.mxu0 0
        %2436 = vmatpush1.bf16.msra.mxu0 0
        %2437 = vmatprep.subr.bf16.mxu0 0
        %2438 = vmatpush1.bf16.msra.mxu0 0
        %2439 = vmatprep.subr.bf16.mxu0 0
        %2440 = vmatpush1.bf16.msra.mxu0 0
        %2441 = vmatprep.subr.bf16.mxu0 0
        %2442 = vmatpush1.bf16.msra.mxu0 0
        %2443 = vmatprep.subr.bf16.mxu0 0
        %2444 = vmatpush1.bf16.msra.mxu0 0
        %2445 = vmatprep.subr.bf16.mxu0 0
        %2446 = vmatpush1.bf16.msra.mxu0 0
        %2447 = vmatprep.subr.bf16.mxu0 0
        %2448 = vmatpush1.bf16.msra.mxu0 0
        %2449 = vmatprep.subr.bf16.mxu0 0
        %2450 = vmatpush1.bf16.msra.mxu0 0
        %2451 = vmatprep.subr.bf16.mxu0 0
        %2452 = vmatpush1.bf16.msra.mxu0 0
        %2453 = vmatprep.subr.bf16.mxu0 0
        %2454 = vmatpush1.bf16.msra.mxu0 0
        %2455 = vmatprep.mubr.bf16.mxu0 0
        %2456 = vmatmul.mubr.bf16.gmra.mrb[0].mxu0 %v2415
        %v2457 = vpop.f32.mrb[0].mxu0
        %v2458 = vadd.f32 0.0, %v2457
        %v2459 = vpop.f32.mrb[0].mxu0
        %v2460 = vpop.f32.mrb[0].mxu0
        %v2461 = vadd.f32 0.0, %v2460
        %v2462 = vpop.f32.mrb[0].mxu0
        %2463 = vmatprep.mubr.bf16.mxu0 0
        %2464 = vmatmul.mubr.bf16.gmra.mrb[0].mxu0 %v2418
        %v2465 = vpop.f32.mrb[0].mxu0
        %v2466 = vadd.f32 0.0, %v2465
        %v2467 = vpop.f32.mrb[0].mxu0
        %v2468 = vpop.f32.mrb[0].mxu0
        %v2469 = vpop.f32.mrb[0].mxu0
        %2470 = vdwg.mxu0
        %2473 = vrot.lane.b32.xlu0 %v1883, 120
        %v2474 = vpop.permute.xlu0 %2473
        %2475 = vrot.lane.b32.xlu0 %v1884, 120
        %v2476 = vpop.permute.xlu0 %2475
        %v2479 = vsel %vm2006, %v2405, 0
        %v2482 = vsel %vm2006, %v2406, 0
        %v2485 = vsel %vm2084, %v2476, 0
        %2487 = vmatprep.subr.bf16.mxu0 0
        %2488 = vmatpush1.bf16.msra.mxu0 %v2474
        %2489 = vmatprep.subr.bf16.mxu0 0
        %2490 = vmatpush1.bf16.msra.mxu0 %v2485
        %2491 = vmatprep.subr.bf16.mxu0 0
        %2492 = vmatpush1.bf16.msra.mxu0 0
        %2493 = vmatprep.subr.bf16.mxu0 0
        %2494 = vmatpush1.bf16.msra.mxu0 0
        %2495 = vmatprep.subr.bf16.mxu0 0
        %2496 = vmatpush1.bf16.msra.mxu0 0
        %2497 = vmatprep.subr.bf16.mxu0 0
        %2498 = vmatpush1.bf16.msra.mxu0 0
        %2499 = vmatprep.subr.bf16.mxu0 0
        %2500 = vmatpush1.bf16.msra.mxu0 0
        %2501 = vmatprep.subr.bf16.mxu0 0
        %2502 = vmatpush1.bf16.msra.mxu0 0
        %2503 = vmatprep.subr.bf16.mxu0 0
        %2504 = vmatpush1.bf16.msra.mxu0 0
        %2505 = vmatprep.subr.bf16.mxu0 0
        %2506 = vmatpush1.bf16.msra.mxu0 0
        %2507 = vmatprep.subr.bf16.mxu0 0
        %2508 = vmatpush1.bf16.msra.mxu0 0
        %2509 = vmatprep.subr.bf16.mxu0 0
        %2510 = vmatpush1.bf16.msra.mxu0 0
        %2511 = vmatprep.subr.bf16.mxu0 0
        %2512 = vmatpush1.bf16.msra.mxu0 0
        %2513 = vmatprep.subr.bf16.mxu0 0
        %2514 = vmatpush1.bf16.msra.mxu0 0
        %2515 = vmatprep.subr.bf16.mxu0 0
        %2516 = vmatpush1.bf16.msra.mxu0 0
        %2517 = vmatprep.subr.bf16.mxu0 0
        %2518 = vmatpush1.bf16.msra.mxu0 0
        %2519 = vmatprep.mubr.bf16.mxu0 0
        %2520 = vmatmul.mubr.bf16.gmra.mrb[0].mxu0 %v2479
        %v2521 = vpop.f32.mrb[0].mxu0
        %v2522 = vadd.f32 0.0, %v2521
        %v2523 = vpop.f32.mrb[0].mxu0
        %v2524 = vpop.f32.mrb[0].mxu0
        %v2525 = vadd.f32 0.0, %v2524
        %v2526 = vpop.f32.mrb[0].mxu0
        %2527 = vmatprep.mubr.bf16.mxu0 0
        %2528 = vmatmul.mubr.bf16.gmra.mrb[0].mxu0 %v2482
        %v2529 = vpop.f32.mrb[0].mxu0
        %v2530 = vadd.f32 0.0, %v2529
        %v2531 = vpop.f32.mrb[0].mxu0
        %v2532 = vpop.f32.mrb[0].mxu0
        %v2533 = vpop.f32.mrb[0].mxu0
        %2534 = vdwg.mxu0
        %2535 = vrot.lane.b32.xlu0 %v1677, 112
        %v2536 = vpop.permute.xlu0 %2535
        %2537 = vrot.lane.b32.xlu0 %v1678, 112
        %v2538 = vpop.permute.xlu0 %2537
        %2539 = vrot.lane.b32.xlu0 %v1779, 112
        %v2540 = vpop.permute.xlu0 %2539
        %2541 = vrot.lane.b32.xlu0 %v1780, 112
        %v2542 = vpop.permute.xlu0 %2541
        %v2544 = vsel %vm1885, %v2536, 0
        %v2547 = vsel %vm1885, %v2538, 0
        %v2550 = vsel %vm1885, %v2540, 0
        %v2553 = vsel %vm1885, %v2542, 0
        %2555 = vmatprep.subr.bf16.mxu0 0
        %2556 = vmatpush1.bf16.xpose.msra.mxu0 %v2550
        %2557 = vmatprep.subr.bf16.mxu0 0
        %2558 = vmatpush1.bf16.xpose.msra.mxu0 %v2553
        %2559 = vmatprep.subr.bf16.mxu0 0
        %2560 = vmatpush1.bf16.xpose.msra.mxu0 0
        %2561 = vmatprep.subr.bf16.mxu0 0
        %2562 = vmatpush1.bf16.xpose.msra.mxu0 0
        %2563 = vmatprep.subr.bf16.mxu0 0
        %2564 = vmatpush1.bf16.xpose.msra.mxu0 0
        %2565 = vmatprep.subr.bf16.mxu0 0
        %2566 = vmatpush1.bf16.xpose.msra.mxu0 0
        %2567 = vmatprep.subr.bf16.mxu0 0
        %2568 = vmatpush1.bf16.xpose.msra.mxu0 0
        %2569 = vmatprep.subr.bf16.mxu0 0
        %2570 = vmatpush1.bf16.xpose.msra.mxu0 0
        %2571 = vmatprep.subr.bf16.mxu0 0
        %2572 = vmatpush1.bf16.xpose.msra.mxu0 0
        %2573 = vmatprep.subr.bf16.mxu0 0
        %2574 = vmatpush1.bf16.xpose.msra.mxu0 0
        %2575 = vmatprep.subr.bf16.mxu0 0
        %2576 = vmatpush1.bf16.xpose.msra.mxu0 0
        %2577 = vmatprep.subr.bf16.mxu0 0
        %2578 = vmatpush1.bf16.xpose.msra.mxu0 0
        %2579 = vmatprep.subr.bf16.mxu0 0
        %2580 = vmatpush1.bf16.xpose.msra.mxu0 0
        %2581 = vmatprep.subr.bf16.mxu0 0
        %2582 = vmatpush1.bf16.xpose.msra.mxu0 0
        %2583 = vmatprep.subr.bf16.mxu0 0
        %2584 = vmatpush1.bf16.xpose.msra.mxu0 0
        %2585 = vmatprep.subr.bf16.mxu0 0
        %2586 = vmatpush1.bf16.xpose.msra.mxu0 0
        %2587 = vmatprep.mubr.bf16.mxu0 0
        %2588 = vmatmul.mubr.bf16.gmra.mrb[0].mxu0 %v2544
        %v2589 = vpop.f32.mrb[0].mxu0
        %v2590 = vadd.f32 0.0, %v2589
        %v2591 = vpop.f32.mrb[0].mxu0
        %v2592 = vpop.f32.mrb[0].mxu0
        %v2593 = vadd.f32 0.0, %v2592
        %v2594 = vpop.f32.mrb[0].mxu0
        %2595 = vmatprep.mubr.bf16.mxu0 0
        %2596 = vmatmul.mubr.bf16.gmra.mrb[0].mxu0 %v2547
        %v2597 = vpop.f32.mrb[0].mxu0
        %v2598 = vadd.f32 0.0, %v2597
        %v2599 = vpop.f32.mrb[0].mxu0
        %v2600 = vpop.f32.mrb[0].mxu0
        %v2601 = vpop.f32.mrb[0].mxu0
        %2602 = vdwg.mxu0
        %2603 = vrot.lane.b32.xlu0 %v1679, 112
        %v2604 = vpop.permute.xlu0 %2603
        %2605 = vrot.lane.b32.xlu0 %v1680, 112
        %v2606 = vpop.permute.xlu0 %2605
        %2607 = vrot.lane.b32.xlu0 %v1781, 112
        %v2608 = vpop.permute.xlu0 %2607
        %2609 = vrot.lane.b32.xlu0 %v1782, 112
        %v2610 = vpop.permute.xlu0 %2609
        %v2612 = vsel %vm1885, %v2604, 0
        %v2615 = vsel %vm1885, %v2606, 0
        %v2618 = vsel %vm1885, %v2608, 0
        %v2621 = vsel %vm1885, %v2610, 0
        %2623 = vmatprep.subr.bf16.mxu0 0
        %2624 = vmatpush1.bf16.xpose.msra.mxu0 %v2618
        %2625 = vmatprep.subr.bf16.mxu0 0
        %2626 = vmatpush1.bf16.xpose.msra.mxu0 %v2621
        %2627 = vmatprep.subr.bf16.mxu0 0
        %2628 = vmatpush1.bf16.xpose.msra.mxu0 0
        %2629 = vmatprep.subr.bf16.mxu0 0
        %2630 = vmatpush1.bf16.xpose.msra.mxu0 0
        %2631 = vmatprep.subr.bf16.mxu0 0
        %2632 = vmatpush1.bf16.xpose.msra.mxu0 0
        %2633 = vmatprep.subr.bf16.mxu0 0
        %2634 = vmatpush1.bf16.xpose.msra.mxu0 0
        %2635 = vmatprep.subr.bf16.mxu0 0
        %2636 = vmatpush1.bf16.xpose.msra.mxu0 0
        %2637 = vmatprep.subr.bf16.mxu0 0
        %2638 = vmatpush1.bf16.xpose.msra.mxu0 0
        %2639 = vmatprep.subr.bf16.mxu0 0
        %2640 = vmatpush1.bf16.xpose.msra.mxu0 0
        %2641 = vmatprep.subr.bf16.mxu0 0
        %2642 = vmatpush1.bf16.xpose.msra.mxu0 0
        %2643 = vmatprep.subr.bf16.mxu0 0
        %2644 = vmatpush1.bf16.xpose.msra.mxu0 0
        %2645 = vmatprep.subr.bf16.mxu0 0
        %2646 = vmatpush1.bf16.xpose.msra.mxu0 0
        %2647 = vmatprep.subr.bf16.mxu0 0
        %2648 = vmatpush1.bf16.xpose.msra.mxu0 0
        %2649 = vmatprep.subr.bf16.mxu0 0
        %2650 = vmatpush1.bf16.xpose.msra.mxu0 0
        %2651 = vmatprep.subr.bf16.mxu0 0
        %2652 = vmatpush1.bf16.xpose.msra.mxu0 0
        %2653 = vmatprep.subr.bf16.mxu0 0
        %2654 = vmatpush1.bf16.xpose.msra.mxu0 0
        %2655 = vmatprep.mubr.bf16.mxu0 0
        %2656 = vmatmul.mubr.bf16.gmra.mrb[0].mxu0 %v2612
        %v2657 = vpop.f32.mrb[0].mxu0
        %v2658 = vadd.f32 0.0, %v2657
        %v2659 = vpop.f32.mrb[0].mxu0
        %v2660 = vpop.f32.mrb[0].mxu0
        %v2661 = vadd.f32 0.0, %v2660
        %v2662 = vpop.f32.mrb[0].mxu0
        %2663 = vmatprep.mubr.bf16.mxu0 0
        %2664 = vmatmul.mubr.bf16.gmra.mrb[0].mxu0 %v2615
        %v2665 = vpop.f32.mrb[0].mxu0
        %v2666 = vadd.f32 0.0, %v2665
        %v2667 = vpop.f32.mrb[0].mxu0
        %v2668 = vpop.f32.mrb[0].mxu0
        %v2669 = vpop.f32.mrb[0].mxu0
        %2670 = vdwg.mxu0
        %v2671 = vsel %vm2006, %v2590, -inf
        %2672 = vmax.xlane.f32.xlu0 %v2671
        %v2673 = vpop.xlane.xlu0 %2672
        %v2674 = vsel %vm2006, %v2593, -inf
        %2675 = vmax.xlane.f32.xlu0 %v2674
        %v2676 = vpop.xlane.xlu0 %2675
        %v2677 = vsel %vm2013, %v2598, -inf
        %2678 = vmax.xlane.f32.xlu0 %v2677
        %v2679 = vpop.xlane.xlu0 %2678
        %v2680 = vsel %vm2006, %v2658, -inf
        %2681 = vmax.xlane.f32.xlu0 %v2680
        %v2682 = vpop.xlane.xlu0 %2681
        %v2683 = vsel %vm2006, %v2661, -inf
        %2684 = vmax.xlane.f32.xlu0 %v2683
        %v2685 = vpop.xlane.xlu0 %2684
        %v2686 = vsel %vm2013, %v2666, -inf
        %2687 = vmax.xlane.f32.xlu0 %v2686
        %v2688 = vpop.xlane.xlu0 %2687
        %v2689 = vsub.f32 %v2590, %v2673
        %v2690 = vsub.f32 %v2593, %v2676
        %v2691 = vsub.f32 %v2598, %v2679
        %v2692 = vsub.f32 %v2658, %v2682
        %v2693 = vsub.f32 %v2661, %v2685
        %v2694 = vsub.f32 %v2666, %v2688
        %v2695 = vmul.f32 %v2689, 1.442695
        %v2696 = vpow.pop %v2695
        %v2697 = vmul.f32 %v2690, 1.442695
        %v2698 = vpow.pop %v2697
        %v2699 = vmul.f32 %v2691, 1.442695
        %v2700 = vpow.pop %v2699
        %v2701 = vmul.f32 %v2692, 1.442695
        %v2702 = vpow.pop %v2701
        %v2703 = vmul.f32 %v2693, 1.442695
        %v2704 = vpow.pop %v2703
        %v2705 = vmul.f32 %v2694, 1.442695
        %v2706 = vpow.pop %v2705
        %v2707 = vsel %vm2006, %v2696, 0.0
        %2708 = vadd.xlane.f32.xlu0 %v2707
        %v2709 = vpop.xlane.xlu0 %2708
        %v2710 = vsel %vm2006, %v2698, 0.0
        %2711 = vadd.xlane.f32.xlu0 %v2710
        %v2712 = vpop.xlane.xlu0 %2711
        %v2713 = vsel %vm2013, %v2700, 0.0
        %2714 = vadd.xlane.f32.xlu0 %v2713
        %v2715 = vpop.xlane.xlu0 %2714
        %v2716 = vsel %vm2006, %v2702, 0.0
        %2717 = vadd.xlane.f32.xlu0 %v2716
        %v2718 = vpop.xlane.xlu0 %2717
        %v2719 = vsel %vm2006, %v2704, 0.0
        %2720 = vadd.xlane.f32.xlu0 %v2719
        %v2721 = vpop.xlane.xlu0 %2720
        %v2722 = vsel %vm2013, %v2706, 0.0
        %2723 = vadd.xlane.f32.xlu0 %v2722
        %v2724 = vpop.xlane.xlu0 %2723
        %v2725 = vrcp.pop %v2709
        %v2726 = vrcp.pop %v2712
        %v2727 = vrcp.pop %v2715
        %v2728 = vrcp.pop %v2718
        %v2729 = vrcp.pop %v2721
        %v2730 = vrcp.pop %v2724
        %v2731 = vmul.f32 %v2696, %v2725
        %v2732 = vmul.f32 %v2698, %v2726
        %v2733 = vmul.f32 %v2700, %v2727
        %v2734 = vmul.f32 %v2702, %v2728
        %v2735 = vmul.f32 %v2704, %v2729
        %v2736 = vmul.f32 %v2706, %v2730
        %v2737 = vpack.c.bf16 %v2732, %v2731
        %v2738 = vpack.c.bf16 %v2733, %v2733
        %v2739 = vpack.c.bf16 %v2735, %v2734
        %v2740 = vpack.c.bf16 %v2736, %v2736
        %2741 = vrot.lane.b32.xlu0 %v1881, 112
        %v2742 = vpop.permute.xlu0 %2741
        %2743 = vrot.lane.b32.xlu0 %v1882, 112
        %v2744 = vpop.permute.xlu0 %2743
        %v2747 = vsel %vm2006, %v2737, 0
        %v2750 = vsel %vm2006, %v2738, 0
        %v2753 = vsel %vm2084, %v2744, 0
        %2755 = vmatprep.subr.bf16.mxu0 0
        %2756 = vmatpush1.bf16.msra.mxu0 %v2742
        %2757 = vmatprep.subr.bf16.mxu0 0
        %2758 = vmatpush1.bf16.msra.mxu0 %v2753
        %2759 = vmatprep.subr.bf16.mxu0 0
        %2760 = vmatpush1.bf16.msra.mxu0 0
        %2761 = vmatprep.subr.bf16.mxu0 0
        %2762 = vmatpush1.bf16.msra.mxu0 0
        %2763 = vmatprep.subr.bf16.mxu0 0
        %2764 = vmatpush1.bf16.msra.mxu0 0
        %2765 = vmatprep.subr.bf16.mxu0 0
        %2766 = vmatpush1.bf16.msra.mxu0 0
        %2767 = vmatprep.subr.bf16.mxu0 0
        %2768 = vmatpush1.bf16.msra.mxu0 0
        %2769 = vmatprep.subr.bf16.mxu0 0
        %2770 = vmatpush1.bf16.msra.mxu0 0
        %2771 = vmatprep.subr.bf16.mxu0 0
        %2772 = vmatpush1.bf16.msra.mxu0 0
        %2773 = vmatprep.subr.bf16.mxu0 0
        %2774 = vmatpush1.bf16.msra.mxu0 0
        %2775 = vmatprep.subr.bf16.mxu0 0
        %2776 = vmatpush1.bf16.msra.mxu0 0
        %2777 = vmatprep.subr.bf16.mxu0 0
        %2778 = vmatpush1.bf16.msra.mxu0 0
        %2779 = vmatprep.subr.bf16.mxu0 0
        %2780 = vmatpush1.bf16.msra.mxu0 0
        %2781 = vmatprep.subr.bf16.mxu0 0
        %2782 = vmatpush1.bf16.msra.mxu0 0
        %2783 = vmatprep.subr.bf16.mxu0 0
        %2784 = vmatpush1.bf16.msra.mxu0 0
        %2785 = vmatprep.subr.bf16.mxu0 0
        %2786 = vmatpush1.bf16.msra.mxu0 0
        %2787 = vmatprep.mubr.bf16.mxu0 0
        %2788 = vmatmul.mubr.bf16.gmra.mrb[0].mxu0 %v2747
        %v2789 = vpop.f32.mrb[0].mxu0
        %v2790 = vadd.f32 0.0, %v2789
        %v2791 = vpop.f32.mrb[0].mxu0
        %v2792 = vpop.f32.mrb[0].mxu0
        %v2793 = vadd.f32 0.0, %v2792
        %v2794 = vpop.f32.mrb[0].mxu0
        %2795 = vmatprep.mubr.bf16.mxu0 0
        %2796 = vmatmul.mubr.bf16.gmra.mrb[0].mxu0 %v2750
        %v2797 = vpop.f32.mrb[0].mxu0
        %v2798 = vadd.f32 0.0, %v2797
        %v2799 = vpop.f32.mrb[0].mxu0
        %v2800 = vpop.f32.mrb[0].mxu0
        %v2801 = vpop.f32.mrb[0].mxu0
        %2802 = vdwg.mxu0
        %2803 = vrot.lane.b32.xlu0 %v1883, 112
        %v2804 = vpop.permute.xlu0 %2803
        %2805 = vrot.lane.b32.xlu0 %v1884, 112
        %v2806 = vpop.permute.xlu0 %2805
        %v2809 = vsel %vm2006, %v2739, 0
        %v2812 = vsel %vm2006, %v2740, 0
        %v2815 = vsel %vm2084, %v2806, 0
        %2817 = vmatprep.subr.bf16.mxu0 0
        %2818 = vmatpush1.bf16.msra.mxu0 %v2804
        %2819 = vmatprep.subr.bf16.mxu0 0
        %2820 = vmatpush1.bf16.msra.mxu0 %v2815
        %2821 = vmatprep.subr.bf16.mxu0 0
        %2822 = vmatpush1.bf16.msra.mxu0 0
        %2823 = vmatprep.subr.bf16.mxu0 0
        %2824 = vmatpush1.bf16.msra.mxu0 0
        %2825 = vmatprep.subr.bf16.mxu0 0
        %2826 = vmatpush1.bf16.msra.mxu0 0
        %2827 = vmatprep.subr.bf16.mxu0 0
        %2828 = vmatpush1.bf16.msra.mxu0 0
        %2829 = vmatprep.subr.bf16.mxu0 0
        %2830 = vmatpush1.bf16.msra.mxu0 0
        %2831 = vmatprep.subr.bf16.mxu0 0
        %2832 = vmatpush1.bf16.msra.mxu0 0
        %2833 = vmatprep.subr.bf16.mxu0 0
        %2834 = vmatpush1.bf16.msra.mxu0 0
        %2835 = vmatprep.subr.bf16.mxu0 0
        %2836 = vmatpush1.bf16.msra.mxu0 0
        %2837 = vmatprep.subr.bf16.mxu0 0
        %2838 = vmatpush1.bf16.msra.mxu0 0
        %2839 = vmatprep.subr.bf16.mxu0 0
        %2840 = vmatpush1.bf16.msra.mxu0 0
        %2841 = vmatprep.subr.bf16.mxu0 0
        %2842 = vmatpush1.bf16.msra.mxu0 0
        %2843 = vmatprep.subr.bf16.mxu0 0
        %2844 = vmatpush1.bf16.msra.mxu0 0
        %2845 = vmatprep.subr.bf16.mxu0 0
        %2846 = vmatpush1.bf16.msra.mxu0 0
        %2847 = vmatprep.subr.bf16.mxu0 0
        %2848 = vmatpush1.bf16.msra.mxu0 0
        %2849 = vmatprep.mubr.bf16.mxu0 0
        %2850 = vmatmul.mubr.bf16.gmra.mrb[0].mxu0 %v2809
        %v2851 = vpop.f32.mrb[0].mxu0
        %v2852 = vadd.f32 0.0, %v2851
        %v2853 = vpop.f32.mrb[0].mxu0
        %v2854 = vpop.f32.mrb[0].mxu0
        %v2855 = vadd.f32 0.0, %v2854
        %v2856 = vpop.f32.mrb[0].mxu0
        %2857 = vmatprep.mubr.bf16.mxu0 0
        %2858 = vmatmul.mubr.bf16.gmra.mrb[0].mxu0 %v2812
        %v2859 = vpop.f32.mrb[0].mxu0
        %v2860 = vadd.f32 0.0, %v2859
        %v2861 = vpop.f32.mrb[0].mxu0
        %v2862 = vpop.f32.mrb[0].mxu0
        %v2863 = vpop.f32.mrb[0].mxu0
        %2864 = vdwg.mxu0
        %2865 = vrot.lane.b32.xlu0 %v1677, 104
        %v2866 = vpop.permute.xlu0 %2865
        %2867 = vrot.lane.b32.xlu0 %v1678, 104
        %v2868 = vpop.permute.xlu0 %2867
        %2869 = vrot.lane.b32.xlu0 %v1779, 104
        %v2870 = vpop.permute.xlu0 %2869
        %2871 = vrot.lane.b32.xlu0 %v1780, 104
        %v2872 = vpop.permute.xlu0 %2871
        %v2874 = vsel %vm1885, %v2866, 0
        %v2877 = vsel %vm1885, %v2868, 0
        %v2880 = vsel %vm1885, %v2870, 0
        %v2883 = vsel %vm1885, %v2872, 0
        %2885 = vmatprep.subr.bf16.mxu0 0
        %2886 = vmatpush1.bf16.xpose.msra.mxu0 %v2880
        %2887 = vmatprep.subr.bf16.mxu0 0
        %2888 = vmatpush1.bf16.xpose.msra.mxu0 %v2883
        %2889 = vmatprep.subr.bf16.mxu0 0
        %2890 = vmatpush1.bf16.xpose.msra.mxu0 0
        %2891 = vmatprep.subr.bf16.mxu0 0
        %2892 = vmatpush1.bf16.xpose.msra.mxu0 0
        %2893 = vmatprep.subr.bf16.mxu0 0
        %2894 = vmatpush1.bf16.xpose.msra.mxu0 0
        %2895 = vmatprep.subr.bf16.mxu0 0
        %2896 = vmatpush1.bf16.xpose.msra.mxu0 0
        %2897 = vmatprep.subr.bf16.mxu0 0
        %2898 = vmatpush1.bf16.xpose.msra.mxu0 0
        %2899 = vmatprep.subr.bf16.mxu0 0
        %2900 = vmatpush1.bf16.xpose.msra.mxu0 0
        %2901 = vmatprep.subr.bf16.mxu0 0
        %2902 = vmatpush1.bf16.xpose.msra.mxu0 0
        %2903 = vmatprep.subr.bf16.mxu0 0
        %2904 = vmatpush1.bf16.xpose.msra.mxu0 0
        %2905 = vmatprep.subr.bf16.mxu0 0
        %2906 = vmatpush1.bf16.xpose.msra.mxu0 0
        %2907 = vmatprep.subr.bf16.mxu0 0
        %2908 = vmatpush1.bf16.xpose.msra.mxu0 0
        %2909 = vmatprep.subr.bf16.mxu0 0
        %2910 = vmatpush1.bf16.xpose.msra.mxu0 0
        %2911 = vmatprep.subr.bf16.mxu0 0
        %2912 = vmatpush1.bf16.xpose.msra.mxu0 0
        %2913 = vmatprep.subr.bf16.mxu0 0
        %2914 = vmatpush1.bf16.xpose.msra.mxu0 0
        %2915 = vmatprep.subr.bf16.mxu0 0
        %2916 = vmatpush1.bf16.xpose.msra.mxu0 0
        %2917 = vmatprep.mubr.bf16.mxu0 0
        %2918 = vmatmul.mubr.bf16.gmra.mrb[0].mxu0 %v2874
        %v2919 = vpop.f32.mrb[0].mxu0
        %v2920 = vadd.f32 0.0, %v2919
        %v2921 = vpop.f32.mrb[0].mxu0
        %v2922 = vpop.f32.mrb[0].mxu0
        %v2923 = vadd.f32 0.0, %v2922
        %v2924 = vpop.f32.mrb[0].mxu0
        %2925 = vmatprep.mubr.bf16.mxu0 0
        %2926 = vmatmul.mubr.bf16.gmra.mrb[0].mxu0 %v2877
        %v2927 = vpop.f32.mrb[0].mxu0
        %v2928 = vadd.f32 0.0, %v2927
        %v2929 = vpop.f32.mrb[0].mxu0
        %v2930 = vpop.f32.mrb[0].mxu0
        %v2931 = vpop.f32.mrb[0].mxu0
        %2932 = vdwg.mxu0
        %2933 = vrot.lane.b32.xlu0 %v1679, 104
        %v2934 = vpop.permute.xlu0 %2933
        %2935 = vrot.lane.b32.xlu0 %v1680, 104
        %v2936 = vpop.permute.xlu0 %2935
        %2937 = vrot.lane.b32.xlu0 %v1781, 104
        %v2938 = vpop.permute.xlu0 %2937
        %2939 = vrot.lane.b32.xlu0 %v1782, 104
        %v2940 = vpop.permute.xlu0 %2939
        %v2942 = vsel %vm1885, %v2934, 0
        %v2945 = vsel %vm1885, %v2936, 0
        %v2948 = vsel %vm1885, %v2938, 0
        %v2951 = vsel %vm1885, %v2940, 0
        %2953 = vmatprep.subr.bf16.mxu0 0
        %2954 = vmatpush1.bf16.xpose.msra.mxu0 %v2948
        %2955 = vmatprep.subr.bf16.mxu0 0
        %2956 = vmatpush1.bf16.xpose.msra.mxu0 %v2951
        %2957 = vmatprep.subr.bf16.mxu0 0
        %2958 = vmatpush1.bf16.xpose.msra.mxu0 0
        %2959 = vmatprep.subr.bf16.mxu0 0
        %2960 = vmatpush1.bf16.xpose.msra.mxu0 0
        %2961 = vmatprep.subr.bf16.mxu0 0
        %2962 = vmatpush1.bf16.xpose.msra.mxu0 0
        %2963 = vmatprep.subr.bf16.mxu0 0
        %2964 = vmatpush1.bf16.xpose.msra.mxu0 0
        %2965 = vmatprep.subr.bf16.mxu0 0
        %2966 = vmatpush1.bf16.xpose.msra.mxu0 0
        %2967 = vmatprep.subr.bf16.mxu0 0
        %2968 = vmatpush1.bf16.xpose.msra.mxu0 0
        %2969 = vmatprep.subr.bf16.mxu0 0
        %2970 = vmatpush1.bf16.xpose.msra.mxu0 0
        %2971 = vmatprep.subr.bf16.mxu0 0
        %2972 = vmatpush1.bf16.xpose.msra.mxu0 0
        %2973 = vmatprep.subr.bf16.mxu0 0
        %2974 = vmatpush1.bf16.xpose.msra.mxu0 0
        %2975 = vmatprep.subr.bf16.mxu0 0
        %2976 = vmatpush1.bf16.xpose.msra.mxu0 0
        %2977 = vmatprep.subr.bf16.mxu0 0
        %2978 = vmatpush1.bf16.xpose.msra.mxu0 0
        %2979 = vmatprep.subr.bf16.mxu0 0
        %2980 = vmatpush1.bf16.xpose.msra.mxu0 0
        %2981 = vmatprep.subr.bf16.mxu0 0
        %2982 = vmatpush1.bf16.xpose.msra.mxu0 0
        %2983 = vmatprep.subr.bf16.mxu0 0
        %2984 = vmatpush1.bf16.xpose.msra.mxu0 0
        %2985 = vmatprep.mubr.bf16.mxu0 0
        %2986 = vmatmul.mubr.bf16.gmra.mrb[0].mxu0 %v2942
        %v2987 = vpop.f32.mrb[0].mxu0
        %v2988 = vadd.f32 0.0, %v2987
        %v2989 = vpop.f32.mrb[0].mxu0
        %v2990 = vpop.f32.mrb[0].mxu0
        %v2991 = vadd.f32 0.0, %v2990
        %v2992 = vpop.f32.mrb[0].mxu0
        %2993 = vmatprep.mubr.bf16.mxu0 0
        %2994 = vmatmul.mubr.bf16.gmra.mrb[0].mxu0 %v2945
        %v2995 = vpop.f32.mrb[0].mxu0
        %v2996 = vadd.f32 0.0, %v2995
        %v2997 = vpop.f32.mrb[0].mxu0
        %v2998 = vpop.f32.mrb[0].mxu0
        %v2999 = vpop.f32.mrb[0].mxu0
        %3000 = vdwg.mxu0
        %v3001 = vsel %vm2006, %v2920, -inf
        %3002 = vmax.xlane.f32.xlu0 %v3001
        %v3003 = vpop.xlane.xlu0 %3002
        %v3004 = vsel %vm2006, %v2923, -inf
        %3005 = vmax.xlane.f32.xlu0 %v3004
        %v3006 = vpop.xlane.xlu0 %3005
        %v3007 = vsel %vm2013, %v2928, -inf
        %3008 = vmax.xlane.f32.xlu0 %v3007
        %v3009 = vpop.xlane.xlu0 %3008
        %v3010 = vsel %vm2006, %v2988, -inf
        %3011 = vmax.xlane.f32.xlu0 %v3010
        %v3012 = vpop.xlane.xlu0 %3011
        %v3013 = vsel %vm2006, %v2991, -inf
        %3014 = vmax.xlane.f32.xlu0 %v3013
        %v3015 = vpop.xlane.xlu0 %3014
        %v3016 = vsel %vm2013, %v2996, -inf
        %3017 = vmax.xlane.f32.xlu0 %v3016
        %v3018 = vpop.xlane.xlu0 %3017
        %v3019 = vsub.f32 %v2920, %v3003
        %v3020 = vsub.f32 %v2923, %v3006
        %v3021 = vsub.f32 %v2928, %v3009
        %v3022 = vsub.f32 %v2988, %v3012
        %v3023 = vsub.f32 %v2991, %v3015
        %v3024 = vsub.f32 %v2996, %v3018
        %v3025 = vmul.f32 %v3019, 1.442695
        %v3026 = vpow.pop %v3025
        %v3027 = vmul.f32 %v3020, 1.442695
        %v3028 = vpow.pop %v3027
        %v3029 = vmul.f32 %v3021, 1.442695
        %v3030 = vpow.pop %v3029
        %v3031 = vmul.f32 %v3022, 1.442695
        %v3032 = vpow.pop %v3031
        %v3033 = vmul.f32 %v3023, 1.442695
        %v3034 = vpow.pop %v3033
        %v3035 = vmul.f32 %v3024, 1.442695
        %v3036 = vpow.pop %v3035
        %v3037 = vsel %vm2006, %v3026, 0.0
        %3038 = vadd.xlane.f32.xlu0 %v3037
        %v3039 = vpop.xlane.xlu0 %3038
        %v3040 = vsel %vm2006, %v3028, 0.0
        %3041 = vadd.xlane.f32.xlu0 %v3040
        %v3042 = vpop.xlane.xlu0 %3041
        %v3043 = vsel %vm2013, %v3030, 0.0
        %3044 = vadd.xlane.f32.xlu0 %v3043
        %v3045 = vpop.xlane.xlu0 %3044
        %v3046 = vsel %vm2006, %v3032, 0.0
        %3047 = vadd.xlane.f32.xlu0 %v3046
        %v3048 = vpop.xlane.xlu0 %3047
        %v3049 = vsel %vm2006, %v3034, 0.0
        %3050 = vadd.xlane.f32.xlu0 %v3049
        %v3051 = vpop.xlane.xlu0 %3050
        %v3052 = vsel %vm2013, %v3036, 0.0
        %3053 = vadd.xlane.f32.xlu0 %v3052
        %v3054 = vpop.xlane.xlu0 %3053
        %v3055 = vrcp.pop %v3039
        %v3056 = vrcp.pop %v3042
        %v3057 = vrcp.pop %v3045
        %v3058 = vrcp.pop %v3048
        %v3059 = vrcp.pop %v3051
        %v3060 = vrcp.pop %v3054
        %v3061 = vmul.f32 %v3026, %v3055
        %v3062 = vmul.f32 %v3028, %v3056
        %v3063 = vmul.f32 %v3030, %v3057
        %v3064 = vmul.f32 %v3032, %v3058
        %v3065 = vmul.f32 %v3034, %v3059
        %v3066 = vmul.f32 %v3036, %v3060
        %v3067 = vpack.c.bf16 %v3062, %v3061
        %v3068 = vpack.c.bf16 %v3063, %v3063
        %v3069 = vpack.c.bf16 %v3065, %v3064
        %v3070 = vpack.c.bf16 %v3066, %v3066
        %3071 = vrot.lane.b32.xlu0 %v1881, 104
        %v3072 = vpop.permute.xlu0 %3071
        %3073 = vrot.lane.b32.xlu0 %v1882, 104
        %v3074 = vpop.permute.xlu0 %3073
        %v3077 = vsel %vm2006, %v3067, 0
        %v3080 = vsel %vm2006, %v3068, 0
        %v3083 = vsel %vm2084, %v3074, 0
        %3085 = vmatprep.subr.bf16.mxu0 0
        %3086 = vmatpush1.bf16.msra.mxu0 %v3072
        %3087 = vmatprep.subr.bf16.mxu0 0
        %3088 = vmatpush1.bf16.msra.mxu0 %v3083
        %3089 = vmatprep.subr.bf16.mxu0 0
        %3090 = vmatpush1.bf16.msra.mxu0 0
        %3091 = vmatprep.subr.bf16.mxu0 0
        %3092 = vmatpush1.bf16.msra.mxu0 0
        %3093 = vmatprep.subr.bf16.mxu0 0
        %3094 = vmatpush1.bf16.msra.mxu0 0
        %3095 = vmatprep.subr.bf16.mxu0 0
        %3096 = vmatpush1.bf16.msra.mxu0 0
        %3097 = vmatprep.subr.bf16.mxu0 0
        %3098 = vmatpush1.bf16.msra.mxu0 0
        %3099 = vmatprep.subr.bf16.mxu0 0
        %3100 = vmatpush1.bf16.msra.mxu0 0
        %3101 = vmatprep.subr.bf16.mxu0 0
        %3102 = vmatpush1.bf16.msra.mxu0 0
        %3103 = vmatprep.subr.bf16.mxu0 0
        %3104 = vmatpush1.bf16.msra.mxu0 0
        %3105 = vmatprep.subr.bf16.mxu0 0
        %3106 = vmatpush1.bf16.msra.mxu0 0
        %3107 = vmatprep.subr.bf16.mxu0 0
        %3108 = vmatpush1.bf16.msra.mxu0 0
        %3109 = vmatprep.subr.bf16.mxu0 0
        %3110 = vmatpush1.bf16.msra.mxu0 0
        %3111 = vmatprep.subr.bf16.mxu0 0
        %3112 = vmatpush1.bf16.msra.mxu0 0
        %3113 = vmatprep.subr.bf16.mxu0 0
        %3114 = vmatpush1.bf16.msra.mxu0 0
        %3115 = vmatprep.subr.bf16.mxu0 0
        %3116 = vmatpush1.bf16.msra.mxu0 0
        %3117 = vmatprep.mubr.bf16.mxu0 0
        %3118 = vmatmul.mubr.bf16.gmra.mrb[0].mxu0 %v3077
        %v3119 = vpop.f32.mrb[0].mxu0
        %v3120 = vadd.f32 0.0, %v3119
        %v3121 = vpop.f32.mrb[0].mxu0
        %v3122 = vpop.f32.mrb[0].mxu0
        %v3123 = vadd.f32 0.0, %v3122
        %v3124 = vpop.f32.mrb[0].mxu0
        %3125 = vmatprep.mubr.bf16.mxu0 0
        %3126 = vmatmul.mubr.bf16.gmra.mrb[0].mxu0 %v3080
        %v3127 = vpop.f32.mrb[0].mxu0
        %v3128 = vadd.f32 0.0, %v3127
        %v3129 = vpop.f32.mrb[0].mxu0
        %v3130 = vpop.f32.mrb[0].mxu0
        %v3131 = vpop.f32.mrb[0].mxu0
        %3132 = vdwg.mxu0
        %3133 = vrot.lane.b32.xlu0 %v1883, 104
        %v3134 = vpop.permute.xlu0 %3133
        %3135 = vrot.lane.b32.xlu0 %v1884, 104
        %v3136 = vpop.permute.xlu0 %3135
        %v3139 = vsel %vm2006, %v3069, 0
        %v3142 = vsel %vm2006, %v3070, 0
        %v3145 = vsel %vm2084, %v3136, 0
        %3147 = vmatprep.subr.bf16.mxu0 0
        %3148 = vmatpush1.bf16.msra.mxu0 %v3134
        %3149 = vmatprep.subr.bf16.mxu0 0
        %3150 = vmatpush1.bf16.msra.mxu0 %v3145
        %3151 = vmatprep.subr.bf16.mxu0 0
        %3152 = vmatpush1.bf16.msra.mxu0 0
        %3153 = vmatprep.subr.bf16.mxu0 0
        %3154 = vmatpush1.bf16.msra.mxu0 0
        %3155 = vmatprep.subr.bf16.mxu0 0
        %3156 = vmatpush1.bf16.msra.mxu0 0
        %3157 = vmatprep.subr.bf16.mxu0 0
        %3158 = vmatpush1.bf16.msra.mxu0 0
        %3159 = vmatprep.subr.bf16.mxu0 0
        %3160 = vmatpush1.bf16.msra.mxu0 0
        %3161 = vmatprep.subr.bf16.mxu0 0
        %3162 = vmatpush1.bf16.msra.mxu0 0
        %3163 = vmatprep.subr.bf16.mxu0 0
        %3164 = vmatpush1.bf16.msra.mxu0 0
        %3165 = vmatprep.subr.bf16.mxu0 0
        %3166 = vmatpush1.bf16.msra.mxu0 0
        %3167 = vmatprep.subr.bf16.mxu0 0
        %3168 = vmatpush1.bf16.msra.mxu0 0
        %3169 = vmatprep.subr.bf16.mxu0 0
        %3170 = vmatpush1.bf16.msra.mxu0 0
        %3171 = vmatprep.subr.bf16.mxu0 0
        %3172 = vmatpush1.bf16.msra.mxu0 0
        %3173 = vmatprep.subr.bf16.mxu0 0
        %3174 = vmatpush1.bf16.msra.mxu0 0
        %3175 = vmatprep.subr.bf16.mxu0 0
        %3176 = vmatpush1.bf16.msra.mxu0 0
        %3177 = vmatprep.subr.bf16.mxu0 0
        %3178 = vmatpush1.bf16.msra.mxu0 0
        %3179 = vmatprep.mubr.bf16.mxu0 0
        %3180 = vmatmul.mubr.bf16.gmra.mrb[0].mxu0 %v3139
        %v3181 = vpop.f32.mrb[0].mxu0
        %v3182 = vadd.f32 0.0, %v3181
        %v3183 = vpop.f32.mrb[0].mxu0
        %v3184 = vpop.f32.mrb[0].mxu0
        %v3185 = vadd.f32 0.0, %v3184
        %v3186 = vpop.f32.mrb[0].mxu0
        %3187 = vmatprep.mubr.bf16.mxu0 0
        %3188 = vmatmul.mubr.bf16.gmra.mrb[0].mxu0 %v3142
        %v3189 = vpop.f32.mrb[0].mxu0
        %v3190 = vadd.f32 0.0, %v3189
        %v3191 = vpop.f32.mrb[0].mxu0
        %v3192 = vpop.f32.mrb[0].mxu0
        %v3193 = vpop.f32.mrb[0].mxu0
        %3194 = vdwg.mxu0
        %3201 = vrot.lane.b32.xlu0 %v2458, 8
        %v3202 = vpop.permute.xlu0 %3201
        %3203 = vrot.lane.b32.xlu0 %v2461, 8
        %v3204 = vpop.permute.xlu0 %3203
        %3205 = vrot.lane.b32.xlu0 %v2466, 8
        %v3206 = vpop.permute.xlu0 %3205
        %3207 = vrot.lane.b32.xlu0 %v2522, 8
        %v3208 = vpop.permute.xlu0 %3207
        %3209 = vrot.lane.b32.xlu0 %v2525, 8
        %v3210 = vpop.permute.xlu0 %3209
        %3211 = vrot.lane.b32.xlu0 %v2530, 8
        %v3212 = vpop.permute.xlu0 %3211
        %3225 = vrot.lane.b32.xlu0 %v2790, 16
        %v3226 = vpop.permute.xlu0 %3225
        %3227 = vrot.lane.b32.xlu0 %v2793, 16
        %v3228 = vpop.permute.xlu0 %3227
        %3229 = vrot.lane.b32.xlu0 %v2798, 16
        %v3230 = vpop.permute.xlu0 %3229
        %3231 = vrot.lane.b32.xlu0 %v2852, 16
        %v3232 = vpop.permute.xlu0 %3231
        %3233 = vrot.lane.b32.xlu0 %v2855, 16
        %v3234 = vpop.permute.xlu0 %3233
        %3235 = vrot.lane.b32.xlu0 %v2860, 16
        %v3236 = vpop.permute.xlu0 %3235
        %3249 = vrot.lane.b32.xlu0 %v3120, 24
        %v3250 = vpop.permute.xlu0 %3249
        %3251 = vrot.lane.b32.xlu0 %v3123, 24
        %v3252 = vpop.permute.xlu0 %3251
        %3253 = vrot.lane.b32.xlu0 %v3128, 24
        %v3254 = vpop.permute.xlu0 %3253
        %3255 = vrot.lane.b32.xlu0 %v3182, 24
        %v3256 = vpop.permute.xlu0 %3255
        %3257 = vrot.lane.b32.xlu0 %v3185, 24
        %v3258 = vpop.permute.xlu0 %3257
        %3259 = vrot.lane.b32.xlu0 %v3190, 24
        %v3260 = vpop.permute.xlu0 %3259
        %v3267 = vsel %vm1885, %v2123, %v3202
        %v3268 = vsel %vm1885, %v2126, %v3204
        %v3269 = vsel %vm1885, %v2131, %v3206
        %v3270 = vsel %vm1885, %v2180, %v3208
        %v3271 = vsel %vm1885, %v2183, %v3210
        %v3272 = vsel %vm1885, %v2188, %v3212
        %vm3273 = vcmask 130048
        %v3274 = vsel %vm3273, %v3267, %v3226
        %v3275 = vsel %vm3273, %v3268, %v3228
        %v3276 = vsel %vm3273, %v3269, %v3230
        %v3277 = vsel %vm3273, %v3270, %v3232
        %v3278 = vsel %vm3273, %v3271, %v3234
        %v3279 = vsel %vm3273, %v3272, %v3236
        %vm3280 = vcmask 195584
        %v3281 = vsel %vm3280, %v3274, %v3250
        %v3282 = vsel %vm3280, %v3275, %v3252
        %v3283 = vsel %vm3280, %v3276, %v3254
        %v3284 = vsel %vm3280, %v3277, %v3256
        %v3285 = vsel %vm3280, %v3278, %v3258
        %v3286 = vsel %vm3280, %v3279, %v3260
        %v3293 = vcombine.high %v3281, %v3281
        %v3294 = vcombine.high %v3282, %v3282
        %v3295 = vcombine.high %v3284, %v3284
        %v3296 = vcombine.high %v3285, %v3285
        %v3297 = vcombine.low %v3281, %v3293
        %v3298 = vcombine.low %v3282, %v3294
        %v3299 = vcombine.low %v3283, %v3284
        %v3300 = vcombine.low %v3295, %v3285
        %v3301 = vcombine.low %v3296, %v3286
        %v3307 = vpack.c.bf16 %v3298, %v3297
        %v3308 = vpack.c.bf16 %v3300, %v3299
        %v3309 = vpack.c.bf16 %v3301, %v3301
        %v3310 = vld [vmem:[%s1060] sm:$0xf]
        %v3311 = vld [vmem:[%s1060 + $0x4] sm:$0xf]
        %v3312 = vld [vmem:[%s1060 + $0x8] sm:$0xf]
        %v3313 = vld [vmem:[%s1060 + $0xc] sm:$0xf]
        %v3314 = vld [vmem:[%s1068] sm:$0x1]
        %v3316 = vlaneseq
        %v3317 = vshrl.u32 %v3316, 7
        %v3318 = vsub.s32 0, %v3317
        %v3319 = vrot.slane %v3314, %v3318
        %v3325 = vunpack.c.l.b16 %v3310
        %v3326 = vunpack.c.l.b16 %v3311
        %v3327 = vunpack.c.l.b16 %v3312
        %v3328 = vunpack.c.l.b16 %v3313
        %v3329 = vpack.c.b16 %v3326, %v3325
        %v3330 = vpack.c.b16 %v3328, %v3327
        %v3334 = vsel %vm1587, %v3307, 0
        %v3337 = vsel %vm1587, %v3308, 0
        %v3340 = vsel %vm1587, %v3309, 0
        %3342 = vmatprep.subr.bf16.mxu0 0
        %3343 = vmatpush1.bf16.msra.mxu0 %v3329
        %3344 = vmatprep.subr.bf16.mxu0 0
        %3345 = vmatpush1.bf16.msra.mxu0 %v3330
        %3346 = vmatprep.subr.bf16.mxu0 0
        %3347 = vmatpush1.bf16.msra.mxu0 0
        %3348 = vmatprep.subr.bf16.mxu0 0
        %3349 = vmatpush1.bf16.msra.mxu0 0
        %3350 = vmatprep.subr.bf16.mxu0 0
        %3351 = vmatpush1.bf16.msra.mxu0 0
        %3352 = vmatprep.subr.bf16.mxu0 0
        %3353 = vmatpush1.bf16.msra.mxu0 0
        %3354 = vmatprep.subr.bf16.mxu0 0
        %3355 = vmatpush1.bf16.msra.mxu0 0
        %3356 = vmatprep.subr.bf16.mxu0 0
        %3357 = vmatpush1.bf16.msra.mxu0 0
        %3358 = vmatprep.subr.bf16.mxu0 0
        %3359 = vmatpush1.bf16.msra.mxu0 0
        %3360 = vmatprep.subr.bf16.mxu0 0
        %3361 = vmatpush1.bf16.msra.mxu0 0
        %3362 = vmatprep.subr.bf16.mxu0 0
        %3363 = vmatpush1.bf16.msra.mxu0 0
        %3364 = vmatprep.subr.bf16.mxu0 0
        %3365 = vmatpush1.bf16.msra.mxu0 0
        %3366 = vmatprep.subr.bf16.mxu0 0
        %3367 = vmatpush1.bf16.msra.mxu0 0
        %3368 = vmatprep.subr.bf16.mxu0 0
        %3369 = vmatpush1.bf16.msra.mxu0 0
        %3370 = vmatprep.subr.bf16.mxu0 0
        %3371 = vmatpush1.bf16.msra.mxu0 0
        %3372 = vmatprep.subr.bf16.mxu0 0
        %3373 = vmatpush1.bf16.msra.mxu0 0
        %3374 = vmatprep.mubr.bf16.mxu0 0
        %3375 = vmatmul.mubr.bf16.gmra.mrb[0].mxu0 %v3334
        %v3376 = vpop.f32.mrb[0].mxu0
        %v3377 = vadd.f32 %v3319, %v3376
        %v3378 = vpop.f32.mrb[0].mxu0
        %v3379 = vpop.f32.mrb[0].mxu0
        %v3380 = vadd.f32 %v3319, %v3379
        %v3381 = vpop.f32.mrb[0].mxu0
        %3382 = vmatprep.mubr.bf16.mxu0 0
        %3383 = vmatmul.mubr.bf16.gmra.mrb[0].mxu0 %v3337
        %v3384 = vpop.f32.mrb[0].mxu0
        %v3385 = vadd.f32 %v3319, %v3384
        %v3386 = vpop.f32.mrb[0].mxu0
        %v3387 = vpop.f32.mrb[0].mxu0
        %v3388 = vadd.f32 %v3319, %v3387
        %v3389 = vpop.f32.mrb[0].mxu0
        %3390 = vmatprep.mubr.bf16.mxu0 0
        %3391 = vmatmul.mubr.bf16.gmra.mrb[0].mxu0 %v3340
        %v3392 = vpop.f32.mrb[0].mxu0
        %v3393 = vadd.f32 %v3319, %v3392
        %v3394 = vpop.f32.mrb[0].mxu0
        %v3395 = vpop.f32.mrb[0].mxu0
        %v3396 = vpop.f32.mrb[0].mxu0
        %3397 = vdwg.mxu0
        %v3403 = vcombine.high %v3377, %v3377
        %v3404 = vcombine.high %v3380, %v3380
        %v3405 = vcombine.high %v3385, %v3385
        %v3406 = vcombine.high %v3388, %v3388
        %v3407 = vcombine.high %v3393, %v3393
        %v3413 = vadd.f32 %v1531, %v3377
        %v3414 = vadd.f32 %v1543, %v3403
        %v3415 = vadd.f32 %v1532, %v3380
        %v3416 = vadd.f32 %v1544, %v3404
        %v3417 = vadd.f32 %v1533, %v3385
        %v3418 = vadd.f32 %v1534, %v3405
        %v3419 = vadd.f32 %v1545, %v3388
        %v3420 = vadd.f32 %v1535, %v3406
        %v3421 = vadd.f32 %v1546, %v3393
        %v3422 = vadd.f32 %v1536, %v3407
        %v3423 = vld [vmem:[%s1076] sm:$0x1]
        %v3424 = vld [vmem:[%s1084] sm:$0x1]
        %v3435 = vcombine.low %v3413, %v3414
        %v3436 = vcombine.low %v3415, %v3416
        %v3437 = vcombine.low %v3417, %v3418
        %v3438 = vcombine.low %v3419, %v3420
        %v3439 = vcombine.low %v3421, %v3422
        %v3445 = vsel %vm1587, %v3435, 0.0
        %3446 = vadd.xlane.f32.xlu0 %v3445
        %v3447 = vpop.xlane.xlu0 %3446
        %v3448 = vsel %vm1587, %v3436, 0.0
        %3449 = vadd.xlane.f32.xlu0 %v3448
        %v3450 = vpop.xlane.xlu0 %3449
        %v3451 = vsel %vm1587, %v3437, 0.0
        %3452 = vadd.xlane.f32.xlu0 %v3451
        %v3453 = vpop.xlane.xlu0 %3452
        %v3454 = vsel %vm1587, %v3438, 0.0
        %3455 = vadd.xlane.f32.xlu0 %v3454
        %v3456 = vpop.xlane.xlu0 %3455
        %v3457 = vsel %vm1587, %v3439, 0.0
        %3458 = vadd.xlane.f32.xlu0 %v3457
        %v3459 = vpop.xlane.xlu0 %3458
        %v3460 = vrcp.pop 32.0
        %v3461 = vmul.f32 %v3447, %v3460
        %v3462 = vmul.f32 %v3450, %v3460
        %v3463 = vmul.f32 %v3453, %v3460
        %v3464 = vmul.f32 %v3456, %v3460
        %v3465 = vmul.f32 %v3459, %v3460
        %v3472 = vunpack.c.l.s4 839922192
        %v3473 = vunpack.c.0.s8 %v3472
        %v3474 = vlaneseq
        %v3475 = vshrl.u32 %v3474, 7
        %v3476 = vsub.s32 %v3473, %v3475
        %v3477 = vrot.slane %v3461, %v3476
        %v3479 = vunpack.c.l.s4 1985246804
        %v3480 = vunpack.c.0.s8 %v3479
        %v3481 = vlaneseq
        %v3482 = vshrl.u32 %v3481, 7
        %v3483 = vsub.s32 %v3480, %v3482
        %v3484 = vrot.slane %v3461, %v3483
        %v3486 = vunpack.c.l.s4 839922192
        %v3487 = vunpack.c.0.s8 %v3486
        %v3488 = vlaneseq
        %v3489 = vshrl.u32 %v3488, 7
        %v3490 = vsub.s32 %v3487, %v3489
        %v3491 = vrot.slane %v3462, %v3490
        %v3493 = vunpack.c.l.s4 1985246804
        %v3494 = vunpack.c.0.s8 %v3493
        %v3495 = vlaneseq
        %v3496 = vshrl.u32 %v3495, 7
        %v3497 = vsub.s32 %v3494, %v3496
        %v3498 = vrot.slane %v3462, %v3497
        %v3500 = vunpack.c.l.s4 839922192
        %v3501 = vunpack.c.0.s8 %v3500
        %v3502 = vlaneseq
        %v3503 = vshrl.u32 %v3502, 7
        %v3504 = vsub.s32 %v3501, %v3503
        %v3505 = vrot.slane %v3463, %v3504
        %v3507 = vunpack.c.l.s4 1985246804
        %v3508 = vunpack.c.0.s8 %v3507
        %v3509 = vlaneseq
        %v3510 = vshrl.u32 %v3509, 7
        %v3511 = vsub.s32 %v3508, %v3510
        %v3512 = vrot.slane %v3463, %v3511
        %v3514 = vunpack.c.l.s4 839922192
        %v3515 = vunpack.c.0.s8 %v3514
        %v3516 = vlaneseq
        %v3517 = vshrl.u32 %v3516, 7
        %v3518 = vsub.s32 %v3515, %v3517
        %v3519 = vrot.slane %v3464, %v3518
        %v3521 = vunpack.c.l.s4 1985246804
        %v3522 = vunpack.c.0.s8 %v3521
        %v3523 = vlaneseq
        %v3524 = vshrl.u32 %v3523, 7
        %v3525 = vsub.s32 %v3522, %v3524
        %v3526 = vrot.slane %v3464, %v3525
        %v3528 = vunpack.c.l.s4 839922192
        %v3529 = vunpack.c.0.s8 %v3528
        %v3530 = vlaneseq
        %v3531 = vshrl.u32 %v3530, 7
        %v3532 = vsub.s32 %v3529, %v3531
        %v3533 = vrot.slane %v3465, %v3532
        %v3535 = vunpack.c.l.s4 1985246804
        %v3536 = vunpack.c.0.s8 %v3535
        %v3537 = vlaneseq
        %v3538 = vshrl.u32 %v3537, 7
        %v3539 = vsub.s32 %v3536, %v3538
        %v3540 = vrot.slane %v3465, %v3539
        %v3551 = vsub.f32 %v3413, %v3477
        %v3552 = vsub.f32 %v3414, %v3484
        %v3553 = vsub.f32 %v3415, %v3491
        %v3554 = vsub.f32 %v3416, %v3498
        %v3555 = vsub.f32 %v3417, %v3505
        %v3556 = vsub.f32 %v3418, %v3512
        %v3557 = vsub.f32 %v3419, %v3519
        %v3558 = vsub.f32 %v3420, %v3526
        %v3559 = vsub.f32 %v3421, %v3533
        %v3560 = vsub.f32 %v3422, %v3540
        %v3561 = vmul.f32 %v3551, %v3551
        %v3562 = vmul.f32 %v3552, %v3552
        %v3563 = vmul.f32 %v3553, %v3553
        %v3564 = vmul.f32 %v3554, %v3554
        %v3565 = vmul.f32 %v3555, %v3555
        %v3566 = vmul.f32 %v3556, %v3556
        %v3567 = vmul.f32 %v3557, %v3557
        %v3568 = vmul.f32 %v3558, %v3558
        %v3569 = vmul.f32 %v3559, %v3559
        %v3570 = vmul.f32 %v3560, %v3560
        %v3581 = vcombine.low %v3561, %v3562
        %v3582 = vcombine.low %v3563, %v3564
        %v3583 = vcombine.low %v3565, %v3566
        %v3584 = vcombine.low %v3567, %v3568
        %v3585 = vcombine.low %v3569, %v3570
        %v3591 = vsel %vm1587, %v3581, 0.0
        %3592 = vadd.xlane.f32.xlu0 %v3591
        %v3593 = vpop.xlane.xlu0 %3592
        %v3594 = vsel %vm1587, %v3582, 0.0
        %3595 = vadd.xlane.f32.xlu0 %v3594
        %v3596 = vpop.xlane.xlu0 %3595
        %v3597 = vsel %vm1587, %v3583, 0.0
        %3598 = vadd.xlane.f32.xlu0 %v3597
        %v3599 = vpop.xlane.xlu0 %3598
        %v3600 = vsel %vm1587, %v3584, 0.0
        %3601 = vadd.xlane.f32.xlu0 %v3600
        %v3602 = vpop.xlane.xlu0 %3601
        %v3603 = vsel %vm1587, %v3585, 0.0
        %3604 = vadd.xlane.f32.xlu0 %v3603
        %v3605 = vpop.xlane.xlu0 %3604
        %v3606 = vmul.f32 %v3593, %v3460
        %v3607 = vmul.f32 %v3596, %v3460
        %v3608 = vmul.f32 %v3599, %v3460
        %v3609 = vmul.f32 %v3602, %v3460
        %v3610 = vmul.f32 %v3605, %v3460
        %v3611 = vadd.f32 %v3606, 1e-05
        %v3612 = vadd.f32 %v3607, 1e-05
        %v3613 = vadd.f32 %v3608, 1e-05
        %v3614 = vadd.f32 %v3609, 1e-05
        %v3615 = vadd.f32 %v3610, 1e-05
        %v3616 = vrsqrt.pop %v3611
        %v3617 = vrsqrt.pop %v3612
        %v3618 = vrsqrt.pop %v3613
        %v3619 = vrsqrt.pop %v3614
        %v3620 = vrsqrt.pop %v3615
        %v3627 = vunpack.c.l.s4 839922192
        %v3628 = vunpack.c.0.s8 %v3627
        %v3629 = vlaneseq
        %v3630 = vshrl.u32 %v3629, 7
        %v3631 = vsub.s32 %v3628, %v3630
        %v3632 = vrot.slane %v3616, %v3631
        %v3634 = vunpack.c.l.s4 1985246804
        %v3635 = vunpack.c.0.s8 %v3634
        %v3636 = vlaneseq
        %v3637 = vshrl.u32 %v3636, 7
        %v3638 = vsub.s32 %v3635, %v3637
        %v3639 = vrot.slane %v3616, %v3638
        %v3641 = vunpack.c.l.s4 839922192
        %v3642 = vunpack.c.0.s8 %v3641
        %v3643 = vlaneseq
        %v3644 = vshrl.u32 %v3643, 7
        %v3645 = vsub.s32 %v3642, %v3644
        %v3646 = vrot.slane %v3617, %v3645
        %v3648 = vunpack.c.l.s4 1985246804
        %v3649 = vunpack.c.0.s8 %v3648
        %v3650 = vlaneseq
        %v3651 = vshrl.u32 %v3650, 7
        %v3652 = vsub.s32 %v3649, %v3651
        %v3653 = vrot.slane %v3617, %v3652
        %v3655 = vunpack.c.l.s4 839922192
        %v3656 = vunpack.c.0.s8 %v3655
        %v3657 = vlaneseq
        %v3658 = vshrl.u32 %v3657, 7
        %v3659 = vsub.s32 %v3656, %v3658
        %v3660 = vrot.slane %v3618, %v3659
        %v3662 = vunpack.c.l.s4 1985246804
        %v3663 = vunpack.c.0.s8 %v3662
        %v3664 = vlaneseq
        %v3665 = vshrl.u32 %v3664, 7
        %v3666 = vsub.s32 %v3663, %v3665
        %v3667 = vrot.slane %v3618, %v3666
        %v3669 = vunpack.c.l.s4 839922192
        %v3670 = vunpack.c.0.s8 %v3669
        %v3671 = vlaneseq
        %v3672 = vshrl.u32 %v3671, 7
        %v3673 = vsub.s32 %v3670, %v3672
        %v3674 = vrot.slane %v3619, %v3673
        %v3676 = vunpack.c.l.s4 1985246804
        %v3677 = vunpack.c.0.s8 %v3676
        %v3678 = vlaneseq
        %v3679 = vshrl.u32 %v3678, 7
        %v3680 = vsub.s32 %v3677, %v3679
        %v3681 = vrot.slane %v3619, %v3680
        %v3683 = vunpack.c.l.s4 839922192
        %v3684 = vunpack.c.0.s8 %v3683
        %v3685 = vlaneseq
        %v3686 = vshrl.u32 %v3685, 7
        %v3687 = vsub.s32 %v3684, %v3686
        %v3688 = vrot.slane %v3620, %v3687
        %v3690 = vunpack.c.l.s4 1985246804
        %v3691 = vunpack.c.0.s8 %v3690
        %v3692 = vlaneseq
        %v3693 = vshrl.u32 %v3692, 7
        %v3694 = vsub.s32 %v3691, %v3693
        %v3695 = vrot.slane %v3620, %v3694
        %v3706 = vmul.f32 %v3551, %v3632
        %v3707 = vmul.f32 %v3552, %v3639
        %v3708 = vmul.f32 %v3553, %v3646
        %v3709 = vmul.f32 %v3554, %v3653
        %v3710 = vmul.f32 %v3555, %v3660
        %v3711 = vmul.f32 %v3556, %v3667
        %v3712 = vmul.f32 %v3557, %v3674
        %v3713 = vmul.f32 %v3558, %v3681
        %v3714 = vmul.f32 %v3559, %v3688
        %v3715 = vmul.f32 %v3560, %v3695
        %v3717 = vlaneseq
        %v3718 = vshrl.u32 %v3717, 7
        %v3719 = vsub.s32 0, %v3718
        %v3720 = vrot.slane %v3423, %v3719
        %v3722 = vcombine.high %v3720, %v3720
        %v3724 = vmul.f32 %v3706, %v3720
        %v3725 = vmul.f32 %v3707, %v3722
        %v3726 = vmul.f32 %v3708, %v3720
        %v3727 = vmul.f32 %v3709, %v3722
        %v3728 = vmul.f32 %v3710, %v3720
        %v3729 = vmul.f32 %v3711, %v3722
        %v3730 = vmul.f32 %v3712, %v3720
        %v3731 = vmul.f32 %v3713, %v3722
        %v3732 = vmul.f32 %v3714, %v3720
        %v3733 = vmul.f32 %v3715, %v3722
        %v3735 = vlaneseq
        %v3736 = vshrl.u32 %v3735, 7
        %v3737 = vsub.s32 0, %v3736
        %v3738 = vrot.slane %v3424, %v3737
        %v3740 = vcombine.high %v3738, %v3738
        %v3742 = vadd.f32 %v3724, %v3738
        %v3743 = vadd.f32 %v3725, %v3740
        %v3744 = vadd.f32 %v3726, %v3738
        %v3745 = vadd.f32 %v3727, %v3740
        %v3746 = vadd.f32 %v3728, %v3738
        %v3747 = vadd.f32 %v3729, %v3740
        %v3748 = vadd.f32 %v3730, %v3738
        %v3749 = vadd.f32 %v3731, %v3740
        %v3750 = vadd.f32 %v3732, %v3738
        %v3751 = vadd.f32 %v3733, %v3740
        %v3762 = vcombine.low %v3742, %v3743
        %v3763 = vcombine.low %v3744, %v3745
        %v3764 = vcombine.low %v3746, %v3747
        %v3765 = vcombine.low %v3748, %v3749
        %v3766 = vcombine.low %v3750, %v3751
        %v3772 = vpack.c.bf16 %v3763, %v3762
        %v3773 = vpack.c.bf16 %v3765, %v3764
        %v3774 = vpack.c.bf16 %v3766, %v3766
        %v3775 = vld [vmem:[%s1093] sm:$0xf]
        %v3776 = vld [vmem:[%s1093 + $0x4] sm:$0xf]
        %v3777 = vld [vmem:[%s1093 + $0x8] sm:$0xf]
        %v3778 = vld [vmem:[%s1093 + $0xc] sm:$0xf]
        %v3779 = vld [vmem:[%s1101] sm:$0x1]
        %v3781 = vlaneseq
        %v3782 = vshrl.u32 %v3781, 7
        %v3783 = vsub.s32 0, %v3782
        %v3784 = vrot.slane %v3779, %v3783
        %v3790 = vunpack.c.l.b16 %v3775
        %v3791 = vunpack.c.l.b16 %v3776
        %v3792 = vunpack.c.l.b16 %v3777
        %v3793 = vunpack.c.l.b16 %v3778
        %v3794 = vpack.c.b16 %v3791, %v3790
        %v3795 = vpack.c.b16 %v3793, %v3792
        %v3799 = vsel %vm1587, %v3772, 0
        %v3802 = vsel %vm1587, %v3773, 0
        %v3805 = vsel %vm1587, %v3774, 0
        %3807 = vmatprep.subr.bf16.mxu0 0
        %3808 = vmatpush1.bf16.msra.mxu0 %v3794
        %3809 = vmatprep.subr.bf16.mxu0 0
        %3810 = vmatpush1.bf16.msra.mxu0 %v3795
        %3811 = vmatprep.subr.bf16.mxu0 0
        %3812 = vmatpush1.bf16.msra.mxu0 0
        %3813 = vmatprep.subr.bf16.mxu0 0
        %3814 = vmatpush1.bf16.msra.mxu0 0
        %3815 = vmatprep.subr.bf16.mxu0 0
        %3816 = vmatpush1.bf16.msra.mxu0 0
        %3817 = vmatprep.subr.bf16.mxu0 0
        %3818 = vmatpush1.bf16.msra.mxu0 0
        %3819 = vmatprep.subr.bf16.mxu0 0
        %3820 = vmatpush1.bf16.msra.mxu0 0
        %3821 = vmatprep.subr.bf16.mxu0 0
        %3822 = vmatpush1.bf16.msra.mxu0 0
        %3823 = vmatprep.subr.bf16.mxu0 0
        %3824 = vmatpush1.bf16.msra.mxu0 0
        %3825 = vmatprep.subr.bf16.mxu0 0
        %3826 = vmatpush1.bf16.msra.mxu0 0
        %3827 = vmatprep.subr.bf16.mxu0 0
        %3828 = vmatpush1.bf16.msra.mxu0 0
        %3829 = vmatprep.subr.bf16.mxu0 0
        %3830 = vmatpush1.bf16.msra.mxu0 0
        %3831 = vmatprep.subr.bf16.mxu0 0
        %3832 = vmatpush1.bf16.msra.mxu0 0
        %3833 = vmatprep.subr.bf16.mxu0 0
        %3834 = vmatpush1.bf16.msra.mxu0 0
        %3835 = vmatprep.subr.bf16.mxu0 0
        %3836 = vmatpush1.bf16.msra.mxu0 0
        %3837 = vmatprep.subr.bf16.mxu0 0
        %3838 = vmatpush1.bf16.msra.mxu0 0
        %3839 = vmatprep.mubr.bf16.mxu0 0
        %3840 = vmatmul.mubr.bf16.gmra.mrb[0].mxu0 %v3799
        %v3841 = vpop.f32.mrb[0].mxu0
        %v3842 = vadd.f32 %v3784, %v3841
        %v3843 = vpop.f32.mrb[0].mxu0
        %v3844 = vpop.f32.mrb[0].mxu0
        %v3845 = vadd.f32 %v3784, %v3844
        %v3846 = vpop.f32.mrb[0].mxu0
        %3847 = vmatprep.mubr.bf16.mxu0 0
        %3848 = vmatmul.mubr.bf16.gmra.mrb[0].mxu0 %v3802
        %v3849 = vpop.f32.mrb[0].mxu0
        %v3850 = vadd.f32 %v3784, %v3849
        %v3851 = vpop.f32.mrb[0].mxu0
        %v3852 = vpop.f32.mrb[0].mxu0
        %v3853 = vadd.f32 %v3784, %v3852
        %v3854 = vpop.f32.mrb[0].mxu0
        %3855 = vmatprep.mubr.bf16.mxu0 0
        %3856 = vmatmul.mubr.bf16.gmra.mrb[0].mxu0 %v3805
        %v3857 = vpop.f32.mrb[0].mxu0
        %v3858 = vadd.f32 %v3784, %v3857
        %v3859 = vpop.f32.mrb[0].mxu0
        %v3860 = vpop.f32.mrb[0].mxu0
        %v3861 = vpop.f32.mrb[0].mxu0
        %3862 = vdwg.mxu0
        %v3863 = vmax.f32 %v3842, 0.0
        %v3864 = vmax.f32 %v3845, 0.0
        %v3865 = vmax.f32 %v3850, 0.0
        %v3866 = vmax.f32 %v3853, 0.0
        %v3867 = vmax.f32 %v3858, 0.0
        %v3868 = vpack.c.bf16 %v3864, %v3863
        %v3869 = vpack.c.bf16 %v3866, %v3865
        %v3870 = vpack.c.bf16 %v3867, %v3867
        %v3871 = vld [vmem:[%s1252] sm:$0xf]
        %v3872 = vld [vmem:[%s1252 + $0x4] sm:$0xf]
        %v3873 = vld [vmem:[%s1252 + $0x8] sm:$0xf]
        %v3874 = vld [vmem:[%s1252 + $0xc] sm:$0xf]
        %v3875 = vld [vmem:[%s1252 + $0x10] sm:$0xf]
        %v3876 = vld [vmem:[%s1252 + $0x14] sm:$0xf]
        %v3877 = vld [vmem:[%s1252 + $0x18] sm:$0xf]
        %v3878 = vld [vmem:[%s1252 + $0x1c] sm:$0xf]
        %v3879 = vld [vmem:[%s1252 + $0x20] sm:$0xf]
        %v3880 = vld [vmem:[%s1252 + $0x24] sm:$0xf]
        %v3881 = vld [vmem:[%s1252 + $0x28] sm:$0xf]
        %v3882 = vld [vmem:[%s1252 + $0x2c] sm:$0xf]
        %v3883 = vld [vmem:[%s1252 + $0x30] sm:$0xf]
        %v3884 = vld [vmem:[%s1252 + $0x34] sm:$0xf]
        %v3885 = vld [vmem:[%s1252 + $0x38] sm:$0xf]
        %v3886 = vld [vmem:[%s1252 + $0x3c] sm:$0xf]
        %v3887 = vld [vmem:[%s1109] sm:$0x1]
        %v3889 = vlaneseq
        %v3890 = vshrl.u32 %v3889, 7
        %v3891 = vsub.s32 0, %v3890
        %v3892 = vrot.slane %v3887, %v3891
        %v3910 = vunpack.c.l.b16 %v3871
        %v3911 = vunpack.c.l.b16 %v3872
        %v3912 = vunpack.c.l.b16 %v3873
        %v3913 = vunpack.c.l.b16 %v3874
        %v3914 = vunpack.c.l.b16 %v3875
        %v3915 = vunpack.c.l.b16 %v3876
        %v3916 = vunpack.c.l.b16 %v3877
        %v3917 = vunpack.c.l.b16 %v3878
        %v3918 = vunpack.c.l.b16 %v3879
        %v3919 = vunpack.c.l.b16 %v3880
        %v3920 = vunpack.c.l.b16 %v3881
        %v3921 = vunpack.c.l.b16 %v3882
        %v3922 = vunpack.c.l.b16 %v3883
        %v3923 = vunpack.c.l.b16 %v3884
        %v3924 = vunpack.c.l.b16 %v3885
        %v3925 = vunpack.c.l.b16 %v3886
        %v3926 = vpack.c.b16 %v3911, %v3910
        %v3927 = vpack.c.b16 %v3913, %v3912
        %v3928 = vpack.c.b16 %v3915, %v3914
        %v3929 = vpack.c.b16 %v3917, %v3916
        %v3930 = vpack.c.b16 %v3919, %v3918
        %v3931 = vpack.c.b16 %v3921, %v3920
        %v3932 = vpack.c.b16 %v3923, %v3922
        %v3933 = vpack.c.b16 %v3925, %v3924
        %3942 = vmatprep.subr.bf16.mxu0 0
        %3943 = vmatpush1.bf16.msra.mxu0 %v3926
        %3944 = vmatprep.subr.bf16.mxu0 0
        %3945 = vmatpush1.bf16.msra.mxu0 %v3927
        %3946 = vmatprep.subr.bf16.mxu0 0
        %3947 = vmatpush1.bf16.msra.mxu0 %v3928
        %3948 = vmatprep.subr.bf16.mxu0 0
        %3949 = vmatpush1.bf16.msra.mxu0 %v3929
        %3950 = vmatprep.subr.bf16.mxu0 0
        %3951 = vmatpush1.bf16.msra.mxu0 %v3930
        %3952 = vmatprep.subr.bf16.mxu0 0
        %3953 = vmatpush1.bf16.msra.mxu0 %v3931
        %3954 = vmatprep.subr.bf16.mxu0 0
        %3955 = vmatpush1.bf16.msra.mxu0 %v3932
        %3956 = vmatprep.subr.bf16.mxu0 0
        %3957 = vmatpush1.bf16.msra.mxu0 %v3933
        %3958 = vmatprep.subr.bf16.mxu0 0
        %3959 = vmatpush1.bf16.msra.mxu0 0
        %3960 = vmatprep.subr.bf16.mxu0 0
        %3961 = vmatpush1.bf16.msra.mxu0 0
        %3962 = vmatprep.subr.bf16.mxu0 0
        %3963 = vmatpush1.bf16.msra.mxu0 0
        %3964 = vmatprep.subr.bf16.mxu0 0
        %3965 = vmatpush1.bf16.msra.mxu0 0
        %3966 = vmatprep.subr.bf16.mxu0 0
        %3967 = vmatpush1.bf16.msra.mxu0 0
        %3968 = vmatprep.subr.bf16.mxu0 0
        %3969 = vmatpush1.bf16.msra.mxu0 0
        %3970 = vmatprep.subr.bf16.mxu0 0
        %3971 = vmatpush1.bf16.msra.mxu0 0
        %3972 = vmatprep.subr.bf16.mxu0 0
        %3973 = vmatpush1.bf16.msra.mxu0 0
        %3974 = vmatprep.mubr.bf16.mxu0 0
        %3975 = vmatmul.mubr.bf16.gmra.mrb[0].mxu0 %v3868
        %v3976 = vpop.f32.mrb[0].mxu0
        %v3977 = vadd.f32 %v3892, %v3976
        %v3978 = vpop.f32.mrb[0].mxu0
        %v3979 = vpop.f32.mrb[0].mxu0
        %v3980 = vadd.f32 %v3892, %v3979
        %v3981 = vpop.f32.mrb[0].mxu0
        %3982 = vmatprep.mubr.bf16.mxu0 0
        %3983 = vmatmul.mubr.bf16.gmra.mrb[0].mxu0 %v3869
        %v3984 = vpop.f32.mrb[0].mxu0
        %v3985 = vadd.f32 %v3892, %v3984
        %v3986 = vpop.f32.mrb[0].mxu0
        %v3987 = vpop.f32.mrb[0].mxu0
        %v3988 = vadd.f32 %v3892, %v3987
        %v3989 = vpop.f32.mrb[0].mxu0
        %3990 = vmatprep.mubr.bf16.mxu0 0
        %3991 = vmatmul.mubr.bf16.gmra.mrb[0].mxu0 %v3870
        %v3992 = vpop.f32.mrb[0].mxu0
        %v3993 = vadd.f32 %v3892, %v3992
        %v3994 = vpop.f32.mrb[0].mxu0
        %v3995 = vpop.f32.mrb[0].mxu0
        %v3996 = vpop.f32.mrb[0].mxu0
        %3997 = vdwg.mxu0
        %v4003 = vcombine.high %v3977, %v3977
        %v4004 = vcombine.high %v3980, %v3980
        %v4005 = vcombine.high %v3985, %v3985
        %v4006 = vcombine.high %v3988, %v3988
        %v4007 = vcombine.high %v3993, %v3993
        %v4013 = vadd.f32 %v3742, %v3977
        %v4014 = vadd.f32 %v3743, %v4003
        %v4015 = vadd.f32 %v3744, %v3980
        %v4016 = vadd.f32 %v3745, %v4004
        %v4017 = vadd.f32 %v3746, %v3985
        %v4018 = vadd.f32 %v3747, %v4005
        %v4019 = vadd.f32 %v3748, %v3988
        %v4020 = vadd.f32 %v3749, %v4006
        %v4021 = vadd.f32 %v3750, %v3993
        %v4022 = vadd.f32 %v3751, %v4007
        %v4023 = vld [vmem:[%s1117] sm:$0x1]
        %v4024 = vld [vmem:[%s1125] sm:$0x1]
        %v4035 = vcombine.low %v4013, %v4014
        %v4036 = vcombine.low %v4015, %v4016
        %v4037 = vcombine.low %v4017, %v4018
        %v4038 = vcombine.low %v4019, %v4020
        %v4039 = vcombine.low %v4021, %v4022
        %v4045 = vsel %vm1587, %v4035, 0.0
        %4046 = vadd.xlane.f32.xlu0 %v4045
        %v4047 = vpop.xlane.xlu0 %4046
        %v4048 = vsel %vm1587, %v4036, 0.0
        %4049 = vadd.xlane.f32.xlu0 %v4048
        %v4050 = vpop.xlane.xlu0 %4049
        %v4051 = vsel %vm1587, %v4037, 0.0
        %4052 = vadd.xlane.f32.xlu0 %v4051
        %v4053 = vpop.xlane.xlu0 %4052
        %v4054 = vsel %vm1587, %v4038, 0.0
        %4055 = vadd.xlane.f32.xlu0 %v4054
        %v4056 = vpop.xlane.xlu0 %4055
        %v4057 = vsel %vm1587, %v4039, 0.0
        %4058 = vadd.xlane.f32.xlu0 %v4057
        %v4059 = vpop.xlane.xlu0 %4058
        %v4060 = vmul.f32 %v4047, %v3460
        %v4061 = vmul.f32 %v4050, %v3460
        %v4062 = vmul.f32 %v4053, %v3460
        %v4063 = vmul.f32 %v4056, %v3460
        %v4064 = vmul.f32 %v4059, %v3460
        %v4071 = vunpack.c.l.s4 839922192
        %v4072 = vunpack.c.0.s8 %v4071
        %v4073 = vlaneseq
        %v4074 = vshrl.u32 %v4073, 7
        %v4075 = vsub.s32 %v4072, %v4074
        %v4076 = vrot.slane %v4060, %v4075
        %v4078 = vunpack.c.l.s4 1985246804
        %v4079 = vunpack.c.0.s8 %v4078
        %v4080 = vlaneseq
        %v4081 = vshrl.u32 %v4080, 7
        %v4082 = vsub.s32 %v4079, %v4081
        %v4083 = vrot.slane %v4060, %v4082
        %v4085 = vunpack.c.l.s4 839922192
        %v4086 = vunpack.c.0.s8 %v4085
        %v4087 = vlaneseq
        %v4088 = vshrl.u32 %v4087, 7
        %v4089 = vsub.s32 %v4086, %v4088
        %v4090 = vrot.slane %v4061, %v4089
        %v4092 = vunpack.c.l.s4 1985246804
        %v4093 = vunpack.c.0.s8 %v4092
        %v4094 = vlaneseq
        %v4095 = vshrl.u32 %v4094, 7
        %v4096 = vsub.s32 %v4093, %v4095
        %v4097 = vrot.slane %v4061, %v4096
        %v4099 = vunpack.c.l.s4 839922192
        %v4100 = vunpack.c.0.s8 %v4099
        %v4101 = vlaneseq
        %v4102 = vshrl.u32 %v4101, 7
        %v4103 = vsub.s32 %v4100, %v4102
        %v4104 = vrot.slane %v4062, %v4103
        %v4106 = vunpack.c.l.s4 1985246804
        %v4107 = vunpack.c.0.s8 %v4106
        %v4108 = vlaneseq
        %v4109 = vshrl.u32 %v4108, 7
        %v4110 = vsub.s32 %v4107, %v4109
        %v4111 = vrot.slane %v4062, %v4110
        %v4113 = vunpack.c.l.s4 839922192
        %v4114 = vunpack.c.0.s8 %v4113
        %v4115 = vlaneseq
        %v4116 = vshrl.u32 %v4115, 7
        %v4117 = vsub.s32 %v4114, %v4116
        %v4118 = vrot.slane %v4063, %v4117
        %v4120 = vunpack.c.l.s4 1985246804
        %v4121 = vunpack.c.0.s8 %v4120
        %v4122 = vlaneseq
        %v4123 = vshrl.u32 %v4122, 7
        %v4124 = vsub.s32 %v4121, %v4123
        %v4125 = vrot.slane %v4063, %v4124
        %v4127 = vunpack.c.l.s4 839922192
        %v4128 = vunpack.c.0.s8 %v4127
        %v4129 = vlaneseq
        %v4130 = vshrl.u32 %v4129, 7
        %v4131 = vsub.s32 %v4128, %v4130
        %v4132 = vrot.slane %v4064, %v4131
        %v4134 = vunpack.c.l.s4 1985246804
        %v4135 = vunpack.c.0.s8 %v4134
        %v4136 = vlaneseq
        %v4137 = vshrl.u32 %v4136, 7
        %v4138 = vsub.s32 %v4135, %v4137
        %v4139 = vrot.slane %v4064, %v4138
        %v4150 = vsub.f32 %v4013, %v4076
        %v4151 = vsub.f32 %v4014, %v4083
        %v4152 = vsub.f32 %v4015, %v4090
        %v4153 = vsub.f32 %v4016, %v4097
        %v4154 = vsub.f32 %v4017, %v4104
        %v4155 = vsub.f32 %v4018, %v4111
        %v4156 = vsub.f32 %v4019, %v4118
        %v4157 = vsub.f32 %v4020, %v4125
        %v4158 = vsub.f32 %v4021, %v4132
        %v4159 = vsub.f32 %v4022, %v4139
        %v4160 = vmul.f32 %v4150, %v4150
        %v4161 = vmul.f32 %v4151, %v4151
        %v4162 = vmul.f32 %v4152, %v4152
        %v4163 = vmul.f32 %v4153, %v4153
        %v4164 = vmul.f32 %v4154, %v4154
        %v4165 = vmul.f32 %v4155, %v4155
        %v4166 = vmul.f32 %v4156, %v4156
        %v4167 = vmul.f32 %v4157, %v4157
        %v4168 = vmul.f32 %v4158, %v4158
        %v4169 = vmul.f32 %v4159, %v4159
        %v4180 = vcombine.low %v4160, %v4161
        %v4181 = vcombine.low %v4162, %v4163
        %v4182 = vcombine.low %v4164, %v4165
        %v4183 = vcombine.low %v4166, %v4167
        %v4184 = vcombine.low %v4168, %v4169
        %v4190 = vsel %vm1587, %v4180, 0.0
        %4191 = vadd.xlane.f32.xlu0 %v4190
        %v4192 = vpop.xlane.xlu0 %4191
        %v4193 = vsel %vm1587, %v4181, 0.0
        %4194 = vadd.xlane.f32.xlu0 %v4193
        %v4195 = vpop.xlane.xlu0 %4194
        %v4196 = vsel %vm1587, %v4182, 0.0
        %4197 = vadd.xlane.f32.xlu0 %v4196
        %v4198 = vpop.xlane.xlu0 %4197
        %v4199 = vsel %vm1587, %v4183, 0.0
        %4200 = vadd.xlane.f32.xlu0 %v4199
        %v4201 = vpop.xlane.xlu0 %4200
        %v4202 = vsel %vm1587, %v4184, 0.0
        %4203 = vadd.xlane.f32.xlu0 %v4202
        %v4204 = vpop.xlane.xlu0 %4203
        %v4205 = vmul.f32 %v4192, %v3460
        %v4206 = vmul.f32 %v4195, %v3460
        %v4207 = vmul.f32 %v4198, %v3460
        %v4208 = vmul.f32 %v4201, %v3460
        %v4209 = vmul.f32 %v4204, %v3460
        %v4210 = vadd.f32 %v4205, 1e-05
        %v4211 = vadd.f32 %v4206, 1e-05
        %v4212 = vadd.f32 %v4207, 1e-05
        %v4213 = vadd.f32 %v4208, 1e-05
        %v4214 = vadd.f32 %v4209, 1e-05
        %v4215 = vrsqrt.pop %v4210
        %v4216 = vrsqrt.pop %v4211
        %v4217 = vrsqrt.pop %v4212
        %v4218 = vrsqrt.pop %v4213
        %v4219 = vrsqrt.pop %v4214
        %v4226 = vunpack.c.l.s4 839922192
        %v4227 = vunpack.c.0.s8 %v4226
        %v4228 = vlaneseq
        %v4229 = vshrl.u32 %v4228, 7
        %v4230 = vsub.s32 %v4227, %v4229
        %v4231 = vrot.slane %v4215, %v4230
        %v4233 = vunpack.c.l.s4 1985246804
        %v4234 = vunpack.c.0.s8 %v4233
        %v4235 = vlaneseq
        %v4236 = vshrl.u32 %v4235, 7
        %v4237 = vsub.s32 %v4234, %v4236
        %v4238 = vrot.slane %v4215, %v4237
        %v4240 = vunpack.c.l.s4 839922192
        %v4241 = vunpack.c.0.s8 %v4240
        %v4242 = vlaneseq
        %v4243 = vshrl.u32 %v4242, 7
        %v4244 = vsub.s32 %v4241, %v4243
        %v4245 = vrot.slane %v4216, %v4244
        %v4247 = vunpack.c.l.s4 1985246804
        %v4248 = vunpack.c.0.s8 %v4247
        %v4249 = vlaneseq
        %v4250 = vshrl.u32 %v4249, 7
        %v4251 = vsub.s32 %v4248, %v4250
        %v4252 = vrot.slane %v4216, %v4251
        %v4254 = vunpack.c.l.s4 839922192
        %v4255 = vunpack.c.0.s8 %v4254
        %v4256 = vlaneseq
        %v4257 = vshrl.u32 %v4256, 7
        %v4258 = vsub.s32 %v4255, %v4257
        %v4259 = vrot.slane %v4217, %v4258
        %v4261 = vunpack.c.l.s4 1985246804
        %v4262 = vunpack.c.0.s8 %v4261
        %v4263 = vlaneseq
        %v4264 = vshrl.u32 %v4263, 7
        %v4265 = vsub.s32 %v4262, %v4264
        %v4266 = vrot.slane %v4217, %v4265
        %v4268 = vunpack.c.l.s4 839922192
        %v4269 = vunpack.c.0.s8 %v4268
        %v4270 = vlaneseq
        %v4271 = vshrl.u32 %v4270, 7
        %v4272 = vsub.s32 %v4269, %v4271
        %v4273 = vrot.slane %v4218, %v4272
        %v4275 = vunpack.c.l.s4 1985246804
        %v4276 = vunpack.c.0.s8 %v4275
        %v4277 = vlaneseq
        %v4278 = vshrl.u32 %v4277, 7
        %v4279 = vsub.s32 %v4276, %v4278
        %v4280 = vrot.slane %v4218, %v4279
        %v4282 = vunpack.c.l.s4 839922192
        %v4283 = vunpack.c.0.s8 %v4282
        %v4284 = vlaneseq
        %v4285 = vshrl.u32 %v4284, 7
        %v4286 = vsub.s32 %v4283, %v4285
        %v4287 = vrot.slane %v4219, %v4286
        %v4289 = vunpack.c.l.s4 1985246804
        %v4290 = vunpack.c.0.s8 %v4289
        %v4291 = vlaneseq
        %v4292 = vshrl.u32 %v4291, 7
        %v4293 = vsub.s32 %v4290, %v4292
        %v4294 = vrot.slane %v4219, %v4293
        %v4305 = vmul.f32 %v4150, %v4231
        %v4306 = vmul.f32 %v4151, %v4238
        %v4307 = vmul.f32 %v4152, %v4245
        %v4308 = vmul.f32 %v4153, %v4252
        %v4309 = vmul.f32 %v4154, %v4259
        %v4310 = vmul.f32 %v4155, %v4266
        %v4311 = vmul.f32 %v4156, %v4273
        %v4312 = vmul.f32 %v4157, %v4280
        %v4313 = vmul.f32 %v4158, %v4287
        %v4314 = vmul.f32 %v4159, %v4294
        %v4316 = vlaneseq
        %v4317 = vshrl.u32 %v4316, 7
        %v4318 = vsub.s32 0, %v4317
        %v4319 = vrot.slane %v4023, %v4318
        %v4321 = vcombine.high %v4319, %v4319
        %v4323 = vmul.f32 %v4305, %v4319
        %v4324 = vmul.f32 %v4306, %v4321
        %v4325 = vmul.f32 %v4307, %v4319
        %v4326 = vmul.f32 %v4308, %v4321
        %v4327 = vmul.f32 %v4309, %v4319
        %v4328 = vmul.f32 %v4310, %v4321
        %v4329 = vmul.f32 %v4311, %v4319
        %v4330 = vmul.f32 %v4312, %v4321
        %v4331 = vmul.f32 %v4313, %v4319
        %v4332 = vmul.f32 %v4314, %v4321
        %v4334 = vlaneseq
        %v4335 = vshrl.u32 %v4334, 7
        %v4336 = vsub.s32 0, %v4335
        %v4337 = vrot.slane %v4024, %v4336
        %v4339 = vcombine.high %v4337, %v4337
        %v4341 = vadd.f32 %v4323, %v4337
        %v4342 = vadd.f32 %v4324, %v4339
        %v4343 = vadd.f32 %v4325, %v4337
        %v4344 = vadd.f32 %v4326, %v4339
        %v4345 = vadd.f32 %v4327, %v4337
        %v4346 = vadd.f32 %v4328, %v4339
        %v4347 = vadd.f32 %v4329, %v4337
        %v4348 = vadd.f32 %v4330, %v4339
        %v4349 = vadd.f32 %v4331, %v4337
        %v4350 = vadd.f32 %v4332, %v4339
        %v4359 = vcombine.low %v4341, %v4342
        %v4360 = vcombine.low %v4343, %v4344
        %v4361 = vcombine.low %v4346, %v4347
        %v4362 = vcombine.low %v4348, %v4349
        %4367 = vst.msk [vmem:[%s23] sm:$0xff] %vm1587, %v4359
        %4368 = vst.msk [vmem:[%s23 + $0x8] sm:$0xff] %vm1587, %v4360
        %vm4369 = vcmask 257024
        %4370 = vst.msk [vmem:[%s23 + $0x10] sm:$0xf] %vm4369, %v4345
        %4371 = vst.msk [vmem:[%s23 + $0x18] sm:$0xff] %vm1587, %v4361
        %4372 = vst.msk [vmem:[%s23 + $0x20] sm:$0xff] %vm1587, %v4362
        %4373 = vst.msk [vmem:[%s23 + $0x28] sm:$0xf] %vm4369, %v4350
        // Predicated region
        $region189: #{xp2label_seg_forward.2} parent=111 // pred_check
          %p4374 = pneg %p636
        $region190: #{xp2label_seg_forward.2} parent=111 // pred_check_branch
          %4376 = sbr.rel (%p4374) target = $region192
        $region191: #{xp2label_seg_forward.2} parent=111 // pred_region
          _
        $region192: #{xp2label_seg_forward.2} parent=111 // pred_fallthru
          _
        // Predicated region
        $region193: #{xp2label_seg_forward.2} parent=111 // pred_check
          %p4377 = pneg %p636
        $region194: #{xp2label_seg_forward.2} parent=111 // pred_check_branch
          %4379 = sbr.rel (%p4377) target = $region196
        $region195: #{xp2label_seg_forward.2} parent=111 // pred_region
          _
        $region196: #{xp2label_seg_forward.2} parent=111 // pred_fallthru
          _
      $region112: #{xp2label_seg_forward.2} parent=5 // pred_fallthru
        _
      %p4380 = scmp.le.s32.totalorder 2, %s55
      // Predicated region
      $region197: #{xp2label_seg_forward.2} parent=5 // pred_check
        %p4381 = pneg %p4380
      $region198: #{xp2label_seg_forward.2} parent=5 // pred_check_branch
        %4383 = sbr.rel (%p4381) target = $region200
      $region199: #{xp2label_seg_forward.2} parent=5 // pred_region
        %s4384 = ssub.s32 %s55, 2
      $region200: #{xp2label_seg_forward.2} parent=5 // pred_fallthru
        _
    $region6: #{xp2label_seg_forward.2} parent=1 // loop_footer
      %s59 = sadd.s32 1, %s55
    $region7: #{xp2label_seg_forward.2} parent=1 // loop_footer_branch
      %54 = sbr.rel target = $region3
    $region8: #{xp2label_seg_forward.2} parent=1 // loop_exit
      _
    %4385 = vsyncpa [#allocation3], 1
    %s4386 = scalar_lea.sflag [#allocation3], 1
    %4387 = vsyncpa %s4386, 1
    %4388 = vsyncpa [#allocation5], 1
    %4389 = vsyncpa [#allocation8], 1
    %s4390 = scalar_lea.sflag [#allocation8], 1
    %4391 = vsyncpa %s4390, 1
    %4392 = vsyncpa [#allocation11], 1
    %s4393 = scalar_lea.sflag [#allocation11], 1
    %4394 = vsyncpa %s4393, 1
    %4395 = vsyncpa [#allocation14], 1
    %s4396 = scalar_lea.sflag [#allocation14], 1
    %4397 = vsyncpa %s4396, 1
    %4398 = vsyncpa [#allocation17], 1
    %s4399 = scalar_lea.sflag [#allocation17], 1
    %4400 = vsyncpa %s4399, 1
    %4401 = vsyncpa [#allocation20], 1
    %s4402 = scalar_lea.sflag [#allocation20], 1
    %4403 = vsyncpa %s4402, 1
    %4404 = vsyncpa [#allocation23], 1
    %s4405 = scalar_lea.sflag [#allocation23], 1
    %4406 = vsyncpa %s4405, 1
    %4407 = vsyncpa [#allocation26], 1
    %s4408 = scalar_lea.sflag [#allocation26], 1
    %4409 = vsyncpa %s4408, 1
    %4410 = vsyncpa [#allocation29], 1
    %s4411 = scalar_lea.sflag [#allocation29], 1
    %4412 = vsyncpa %s4411, 1

// kernel: xp2label_seg_forward.3
$region0: #{xp2label_seg_forward.3}
  #allocation0 [shape = 'u32[]', space=smem, size = 0x4, offset = 0x4, fixed_abs, tag = 'smem constant byte address 0x4 - core index']
  #allocation1 [shape = 'u32[144,128]{1,0:T(1,128)}', space=vmem, size = 0x12000, scoped, tag = 'internal scratch']
  %s0 = inlined_call_operand.vmem [shape: f32[2,640], index: 0, kind: input, shape index: {}]
  %s1 = inlined_call_operand.hbm [shape: bf16[640,1024], index: 1, kind: input, shape index: {}]
  %s2 = inlined_call_operand.hbm [shape: f32[1,1024], index: 2, kind: input, shape index: {}]
  %s3 = inlined_call_operand.vmem [shape: bf16[1024,64], index: 3, kind: input, shape index: {}]
  %s4 = inlined_call_operand.hbm [shape: f32[1,64], index: 4, kind: input, shape index: {}]
  %s5 = inlined_call_operand.vmem [shape: bf16[64,4], index: 5, kind: input, shape index: {}]
  %s6 = inlined_call_operand.hbm [shape: f32[1,4], index: 6, kind: input, shape index: {}]
  %s7 = inlined_call_operand.hbm [shape: f32[2,4], index: 7, kind: output, shape index: {}]
  %s8 = sld [smem:[#allocation0]]
  $region54: #{xp2label_seg_forward.3} parent=0
    _
  %s10 = ssub.s32 1, %s8
  %s11 = scalar_select 0, %s10, %s8
  $region1: #{xp2label_seg_forward.3} parent=0
    #allocation2 [shape = 'u8[1310720]{0}', space=vmem, size = 0x140000, scoped, tag = 'input window, operand 1, single buffered']
    #allocation3 [shape = 's32[1]{0}', space=sflag, size = 0x4, scoped, tag = 'scoped memory for xp2label_seg_forward.3']
    #allocation4 [shape = 's32[1]{0}', space=sflag, size = 0x4, scoped, tag = 'scoped memory for xp2label_seg_forward.3']
    #allocation5 [shape = 'u8[4096]{0}', space=vmem, size = 0x1000, scoped, tag = 'input window, operand 2, single buffered']
    #allocation6 [shape = 's32[1]{0}', space=sflag, size = 0x4, scoped, tag = 'scoped memory for xp2label_seg_forward.3']
    #allocation7 [shape = 'u8[512]{0}', space=vmem, size = 0x400, scoped, tag = 'input window, operand 4, single buffered']
    #allocation8 [shape = 'u8[512]{0}', space=vmem, size = 0x400, scoped, tag = 'input window, operand 6, single buffered']
    #allocation9 [shape = 's32[1]{0}', space=sflag, size = 0x4, scoped, tag = 'scoped memory for xp2label_seg_forward.3']
    #allocation10 [shape = 'u8[1024]{0}', space=vmem, size = 0x400, scoped, tag = 'output window, operand 0, single buffered']
    %12 = vsyncpa [#allocation3], 0
    %13 = vsyncpa [#allocation6], 0
    %14 = vsyncpa [#allocation9], 0
    %15 = vsyncpa [#allocation4], 0
    // Predicated region
    $region2: #{xp2label_seg_forward.3} parent=1 // pred_check
      _
    $region3: #{xp2label_seg_forward.3} parent=1 // pred_check_branch
      %17 = sbr.rel (0) target = $region5
    $region4: #{xp2label_seg_forward.3} parent=1 // pred_region
      _
    $region5: #{xp2label_seg_forward.3} parent=1 // pred_fallthru
      _
    // Predicated region
    $region6: #{xp2label_seg_forward.3} parent=1 // pred_check
      _
    $region7: #{xp2label_seg_forward.3} parent=1 // pred_check_branch
      %19 = sbr.rel (0) target = $region9
    $region8: #{xp2label_seg_forward.3} parent=1 // pred_region
      %s21 = ssub.s32 40960, 40960
      %22 = vsyncadd [#allocation3], %s21
      %s23 = sshll.u32 [#allocation2], 4
      %s24 = int_to_ptr.vmem [resolvable:$true] %s23
      %29 = dma.hbm_to_vmem [thread:$0]  %s1, 40960, %s24, [#allocation3], 512, 512, 32
    $region9: #{xp2label_seg_forward.3} parent=1 // pred_fallthru
      _
    // Predicated region
    $region10: #{xp2label_seg_forward.3} parent=1 // pred_check
      _
    $region11: #{xp2label_seg_forward.3} parent=1 // pred_check_branch
      %31 = sbr.rel (0) target = $region13
    $region12: #{xp2label_seg_forward.3} parent=1 // pred_region
      %s33 = ssub.s32 128, 128
      %34 = vsyncadd [#allocation6], %s33
      %s36 = sshll.u32 [#allocation5], 4
      %s37 = int_to_ptr.vmem [resolvable:$true] %s36
      %39 = dma.hbm_to_vmem [thread:$0]  %s2, 128, %s37, [#allocation6]
    $region13: #{xp2label_seg_forward.3} parent=1 // pred_fallthru
      _
    // Predicated region
    $region14: #{xp2label_seg_forward.3} parent=1 // pred_check
      _
    $region15: #{xp2label_seg_forward.3} parent=1 // pred_check_branch
      %41 = sbr.rel (0) target = $region17
    $region16: #{xp2label_seg_forward.3} parent=1 // pred_region
      _
    $region17: #{xp2label_seg_forward.3} parent=1 // pred_fallthru
      _
    // Predicated region
    $region18: #{xp2label_seg_forward.3} parent=1 // pred_check
      _
    $region19: #{xp2label_seg_forward.3} parent=1 // pred_check_branch
      %43 = sbr.rel (0) target = $region21
    $region20: #{xp2label_seg_forward.3} parent=1 // pred_region
      %s45 = ssub.s32 16, 16
      %46 = vsyncadd [#allocation6], %s45
      %s48 = sshll.u32 [#allocation7], 4
      %s49 = int_to_ptr.vmem [resolvable:$true] %s48
      %51 = dma.hbm_to_vmem [thread:$0]  %s4, 16, %s49, [#allocation6]
    $region21: #{xp2label_seg_forward.3} parent=1 // pred_fallthru
      _
    // Predicated region
    $region22: #{xp2label_seg_forward.3} parent=1 // pred_check
      _
    $region23: #{xp2label_seg_forward.3} parent=1 // pred_check_branch
      %53 = sbr.rel (0) target = $region25
    $region24: #{xp2label_seg_forward.3} parent=1 // pred_region
      _
    $region25: #{xp2label_seg_forward.3} parent=1 // pred_fallthru
      _
    // Predicated region
    $region26: #{xp2label_seg_forward.3} parent=1 // pred_check
      _
    $region27: #{xp2label_seg_forward.3} parent=1 // pred_check_branch
      %55 = sbr.rel (0) target = $region29
    $region28: #{xp2label_seg_forward.3} parent=1 // pred_region
      %s57 = ssub.s32 16, 16
      %58 = vsyncadd [#allocation9], %s57
      %s60 = sshll.u32 [#allocation8], 4
      %s61 = int_to_ptr.vmem [resolvable:$true] %s60
      %63 = dma.hbm_to_vmem [thread:$0]  %s6, 16, %s61, [#allocation9]
    $region29: #{xp2label_seg_forward.3} parent=1 // pred_fallthru
      _
    // Predicated region
    $region30: #{xp2label_seg_forward.3} parent=1 // pred_check
      _
    $region31: #{xp2label_seg_forward.3} parent=1 // pred_check_branch
      %65 = sbr.rel (0) target = $region33
    $region32: #{xp2label_seg_forward.3} parent=1 // pred_region
      %66 = dma.done [#allocation3], 40960
    $region33: #{xp2label_seg_forward.3} parent=1 // pred_fallthru
      _
    // Predicated region
    $region34: #{xp2label_seg_forward.3} parent=1 // pred_check
      _
    $region35: #{xp2label_seg_forward.3} parent=1 // pred_check_branch
      %68 = sbr.rel (0) target = $region37
    $region36: #{xp2label_seg_forward.3} parent=1 // pred_region
      %69 = dma.done [#allocation6], 128
    $region37: #{xp2label_seg_forward.3} parent=1 // pred_fallthru
      _
    // Predicated region
    $region38: #{xp2label_seg_forward.3} parent=1 // pred_check
      _
    $region39: #{xp2label_seg_forward.3} parent=1 // pred_check_branch
      %71 = sbr.rel (0) target = $region41
    $region40: #{xp2label_seg_forward.3} parent=1 // pred_region
      %72 = dma.done [#allocation6], 16
    $region41: #{xp2label_seg_forward.3} parent=1 // pred_fallthru
      _
    // Predicated region
    $region42: #{xp2label_seg_forward.3} parent=1 // pred_check
      _
    $region43: #{xp2label_seg_forward.3} parent=1 // pred_check_branch
      %74 = sbr.rel (0) target = $region45
    $region44: #{xp2label_seg_forward.3} parent=1 // pred_region
      %75 = dma.done [#allocation9], 16
    $region45: #{xp2label_seg_forward.3} parent=1 // pred_fallthru
      _
    %v77 = vld [vmem:[%s0] sm:$0xff]
    %v78 = vld [vmem:[%s0 + $0x8] sm:$0x3]
    %v81 = vcombine.high %v77, %v77
    %v83 = vunpack.c.l.s4 1983009808
    %v84 = vunpack.c.0.s8 %v83
    %v85 = vlaneseq
    %v86 = vshrl.u32 %v85, 7
    %v87 = vsub.s32 %v84, %v86
    %v88 = vrot.slane %v77, %v87
    %v90 = vunpack.c.l.s4 1983009808
    %v91 = vunpack.c.0.s8 %v90
    %v92 = vlaneseq
    %v93 = vshrl.u32 %v92, 7
    %v94 = vsub.s32 %v91, %v93
    %v95 = vrot.slane %v81, %v94
    %v96 = vcombine.high %v88, %v88
    %v97 = vcombine.high %v95, %v95
    %v99 = vunpack.c.l.s4 1983009808
    %v100 = vunpack.c.0.s8 %v99
    %v101 = vlaneseq
    %v102 = vshrl.u32 %v101, 7
    %v103 = vsub.s32 %v100, %v102
    %v104 = vrot.slane %v78, %v103
    %v110 = vpack.c.bf16 %v88, %v88
    %v111 = vpack.c.bf16 %v96, %v96
    %v112 = vpack.c.bf16 %v95, %v95
    %v113 = vpack.c.bf16 %v97, %v97
    %v114 = vpack.c.bf16 %v104, %v104
    %v115 = vld [vmem:[#allocation2] sm:$0xff]
    %v116 = vld [vmem:[#allocation2 + $0x8] sm:$0xff]
    %v117 = vld [vmem:[#allocation2 + $0x10] sm:$0xff]
    %v118 = vld [vmem:[#allocation2 + $0x18] sm:$0xff]
    %v119 = vld [vmem:[#allocation2 + $0x20] sm:$0xff]
    %v120 = vld [vmem:[#allocation2 + $0x28] sm:$0xff]
    %v121 = vld [vmem:[#allocation2 + $0x30] sm:$0xff]
    %v122 = vld [vmem:[#allocation2 + $0x38] sm:$0xff]
    %v123 = vld [vmem:[#allocation2 + $0x40] sm:$0xff]
    %v124 = vld [vmem:[#allocation2 + $0x48] sm:$0xff]
    %v125 = vld [vmem:[#allocation2 + $0x50] sm:$0xff]
    %v126 = vld [vmem:[#allocation2 + $0x58] sm:$0xff]
    %v127 = vld [vmem:[#allocation2 + $0x60] sm:$0xff]
    %v128 = vld [vmem:[#allocation2 + $0x68] sm:$0xff]
    %v129 = vld [vmem:[#allocation2 + $0x70] sm:$0xff]
    %v130 = vld [vmem:[#allocation2 + $0x78] sm:$0xff]
    %v131 = vld [vmem:[#allocation2 + $0x80] sm:$0xff]
    %v132 = vld [vmem:[#allocation2 + $0x88] sm:$0xff]
    %v133 = vld [vmem:[#allocation2 + $0x90] sm:$0xff]
    %v134 = vld [vmem:[#allocation2 + $0x98] sm:$0xff]
    %v135 = vld [vmem:[#allocation2 + $0xa0] sm:$0xff]
    %v136 = vld [vmem:[#allocation2 + $0xa8] sm:$0xff]
    %v137 = vld [vmem:[#allocation2 + $0xb0] sm:$0xff]
    %v138 = vld [vmem:[#allocation2 + $0xb8] sm:$0xff]
    %v139 = vld [vmem:[#allocation2 + $0xc0] sm:$0xff]
    %v140 = vld [vmem:[#allocation2 + $0xc8] sm:$0xff]
    %v141 = vld [vmem:[#allocation2 + $0xd0] sm:$0xff]
    %v142 = vld [vmem:[#allocation2 + $0xd8] sm:$0xff]
    %v143 = vld [vmem:[#allocation2 + $0xe0] sm:$0xff]
    %v144 = vld [vmem:[#allocation2 + $0xe8] sm:$0xff]
    %v145 = vld [vmem:[#allocation2 + $0xf0] sm:$0xff]
    %v146 = vld [vmem:[#allocation2 + $0xf8] sm:$0xff]
    %v147 = vld [vmem:[#allocation2 + $0x100] sm:$0xff]
    %v148 = vld [vmem:[#allocation2 + $0x108] sm:$0xff]
    %v149 = vld [vmem:[#allocation2 + $0x110] sm:$0xff]
    %v150 = vld [vmem:[#allocation2 + $0x118] sm:$0xff]
    %v151 = vld [vmem:[#allocation2 + $0x120] sm:$0xff]
    %v152 = vld [vmem:[#allocation2 + $0x128] sm:$0xff]
    %v153 = vld [vmem:[#allocation2 + $0x130] sm:$0xff]
    %v154 = vld [vmem:[#allocation2 + $0x138] sm:$0xff]
    %v155 = vld [vmem:[#allocation2 + $0x140] sm:$0xff]
    %v156 = vld [vmem:[#allocation2 + $0x148] sm:$0xff]
    %v157 = vld [vmem:[#allocation2 + $0x150] sm:$0xff]
    %v158 = vld [vmem:[#allocation2 + $0x158] sm:$0xff]
    %v159 = vld [vmem:[#allocation2 + $0x160] sm:$0xff]
    %v160 = vld [vmem:[#allocation2 + $0x168] sm:$0xff]
    %v161 = vld [vmem:[#allocation2 + $0x170] sm:$0xff]
    %v162 = vld [vmem:[#allocation2 + $0x178] sm:$0xff]
    %v163 = vld [vmem:[#allocation2 + $0x180] sm:$0xff]
    %v164 = vld [vmem:[#allocation2 + $0x188] sm:$0xff]
    %v165 = vld [vmem:[#allocation2 + $0x190] sm:$0xff]
    %v166 = vld [vmem:[#allocation2 + $0x198] sm:$0xff]
    %v167 = vld [vmem:[#allocation2 + $0x1a0] sm:$0xff]
    %v168 = vld [vmem:[#allocation2 + $0x1a8] sm:$0xff]
    %v169 = vld [vmem:[#allocation2 + $0x1b0] sm:$0xff]
    %v170 = vld [vmem:[#allocation2 + $0x1b8] sm:$0xff]
    %v171 = vld [vmem:[#allocation2 + $0x1c0] sm:$0xff]
    %v172 = vld [vmem:[#allocation2 + $0x1c8] sm:$0xff]
    %v173 = vld [vmem:[#allocation2 + $0x1d0] sm:$0xff]
    %v174 = vld [vmem:[#allocation2 + $0x1d8] sm:$0xff]
    %v175 = vld [vmem:[#allocation2 + $0x1e0] sm:$0xff]
    %v176 = vld [vmem:[#allocation2 + $0x1e8] sm:$0xff]
    %v177 = vld [vmem:[#allocation2 + $0x1f0] sm:$0xff]
    %v178 = vld [vmem:[#allocation2 + $0x1f8] sm:$0xff]
    %v179 = vld [vmem:[#allocation2 + $0x200] sm:$0xff]
    %v180 = vld [vmem:[#allocation2 + $0x208] sm:$0xff]
    %v181 = vld [vmem:[#allocation2 + $0x210] sm:$0xff]
    %v182 = vld [vmem:[#allocation2 + $0x218] sm:$0xff]
    %v183 = vld [vmem:[#allocation2 + $0x220] sm:$0xff]
    %v184 = vld [vmem:[#allocation2 + $0x228] sm:$0xff]
    %v185 = vld [vmem:[#allocation2 + $0x230] sm:$0xff]
    %v186 = vld [vmem:[#allocation2 + $0x238] sm:$0xff]
    %v187 = vld [vmem:[#allocation2 + $0x240] sm:$0xff]
    %v188 = vld [vmem:[#allocation2 + $0x248] sm:$0xff]
    %v189 = vld [vmem:[#allocation2 + $0x250] sm:$0xff]
    %v190 = vld [vmem:[#allocation2 + $0x258] sm:$0xff]
    %v191 = vld [vmem:[#allocation2 + $0x260] sm:$0xff]
    %v192 = vld [vmem:[#allocation2 + $0x268] sm:$0xff]
    %v193 = vld [vmem:[#allocation2 + $0x270] sm:$0xff]
    %v194 = vld [vmem:[#allocation2 + $0x278] sm:$0xff]
    %v195 = vld [vmem:[#allocation2 + $0x280] sm:$0xff]
    %v196 = vld [vmem:[#allocation2 + $0x288] sm:$0xff]
    %v197 = vld [vmem:[#allocation2 + $0x290] sm:$0xff]
    %v198 = vld [vmem:[#allocation2 + $0x298] sm:$0xff]
    %v199 = vld [vmem:[#allocation2 + $0x2a0] sm:$0xff]
    %v200 = vld [vmem:[#allocation2 + $0x2a8] sm:$0xff]
    %v201 = vld [vmem:[#allocation2 + $0x2b0] sm:$0xff]
    %v202 = vld [vmem:[#allocation2 + $0x2b8] sm:$0xff]
    %v203 = vld [vmem:[#allocation2 + $0x2c0] sm:$0xff]
    %v204 = vld [vmem:[#allocation2 + $0x2c8] sm:$0xff]
    %v205 = vld [vmem:[#allocation2 + $0x2d0] sm:$0xff]
    %v206 = vld [vmem:[#allocation2 + $0x2d8] sm:$0xff]
    %v207 = vld [vmem:[#allocation2 + $0x2e0] sm:$0xff]
    %v208 = vld [vmem:[#allocation2 + $0x2e8] sm:$0xff]
    %v209 = vld [vmem:[#allocation2 + $0x2f0] sm:$0xff]
    %v210 = vld [vmem:[#allocation2 + $0x2f8] sm:$0xff]
    %v211 = vld [vmem:[#allocation2 + $0x300] sm:$0xff]
    %v212 = vld [vmem:[#allocation2 + $0x308] sm:$0xff]
    %v213 = vld [vmem:[#allocation2 + $0x310] sm:$0xff]
    %v214 = vld [vmem:[#allocation2 + $0x318] sm:$0xff]
    %v215 = vld [vmem:[#allocation2 + $0x320] sm:$0xff]
    %v216 = vld [vmem:[#allocation2 + $0x328] sm:$0xff]
    %v217 = vld [vmem:[#allocation2 + $0x330] sm:$0xff]
    %v218 = vld [vmem:[#allocation2 + $0x338] sm:$0xff]
    %v219 = vld [vmem:[#allocation2 + $0x340] sm:$0xff]
    %v220 = vld [vmem:[#allocation2 + $0x348] sm:$0xff]
    %v221 = vld [vmem:[#allocation2 + $0x350] sm:$0xff]
    %v222 = vld [vmem:[#allocation2 + $0x358] sm:$0xff]
    %v223 = vld [vmem:[#allocation2 + $0x360] sm:$0xff]
    %v224 = vld [vmem:[#allocation2 + $0x368] sm:$0xff]
    %v225 = vld [vmem:[#allocation2 + $0x370] sm:$0xff]
    %v226 = vld [vmem:[#allocation2 + $0x378] sm:$0xff]
    %v227 = vld [vmem:[#allocation2 + $0x380] sm:$0xff]
    %v228 = vld [vmem:[#allocation2 + $0x388] sm:$0xff]
    %v229 = vld [vmem:[#allocation2 + $0x390] sm:$0xff]
    %v230 = vld [vmem:[#allocation2 + $0x398] sm:$0xff]
    %v231 = vld [vmem:[#allocation2 + $0x3a0] sm:$0xff]
    %v232 = vld [vmem:[#allocation2 + $0x3a8] sm:$0xff]
    %v233 = vld [vmem:[#allocation2 + $0x3b0] sm:$0xff]
    %v234 = vld [vmem:[#allocation2 + $0x3b8] sm:$0xff]
    %v235 = vld [vmem:[#allocation2 + $0x3c0] sm:$0xff]
    %v236 = vld [vmem:[#allocation2 + $0x3c8] sm:$0xff]
    %v237 = vld [vmem:[#allocation2 + $0x3d0] sm:$0xff]
    %v238 = vld [vmem:[#allocation2 + $0x3d8] sm:$0xff]
    %v239 = vld [vmem:[#allocation2 + $0x3e0] sm:$0xff]
    %v240 = vld [vmem:[#allocation2 + $0x3e8] sm:$0xff]
    %v241 = vld [vmem:[#allocation2 + $0x3f0] sm:$0xff]
    %v242 = vld [vmem:[#allocation2 + $0x3f8] sm:$0xff]
    %v243 = vld [vmem:[#allocation2 + $0x400] sm:$0xff]
    %v244 = vld [vmem:[#allocation2 + $0x408] sm:$0xff]
    %v245 = vld [vmem:[#allocation2 + $0x410] sm:$0xff]
    %v246 = vld [vmem:[#allocation2 + $0x418] sm:$0xff]
    %v247 = vld [vmem:[#allocation2 + $0x420] sm:$0xff]
    %v248 = vld [vmem:[#allocation2 + $0x428] sm:$0xff]
    %v249 = vld [vmem:[#allocation2 + $0x430] sm:$0xff]
    %v250 = vld [vmem:[#allocation2 + $0x438] sm:$0xff]
    %v251 = vld [vmem:[#allocation2 + $0x440] sm:$0xff]
    %v252 = vld [vmem:[#allocation2 + $0x448] sm:$0xff]
    %v253 = vld [vmem:[#allocation2 + $0x450] sm:$0xff]
    %v254 = vld [vmem:[#allocation2 + $0x458] sm:$0xff]
    %v255 = vld [vmem:[#allocation2 + $0x460] sm:$0xff]
    %v256 = vld [vmem:[#allocation2 + $0x468] sm:$0xff]
    %v257 = vld [vmem:[#allocation2 + $0x470] sm:$0xff]
    %v258 = vld [vmem:[#allocation2 + $0x478] sm:$0xff]
    %v259 = vld [vmem:[#allocation2 + $0x480] sm:$0xff]
    %v260 = vld [vmem:[#allocation2 + $0x488] sm:$0xff]
    %v261 = vld [vmem:[#allocation2 + $0x490] sm:$0xff]
    %v262 = vld [vmem:[#allocation2 + $0x498] sm:$0xff]
    %v263 = vld [vmem:[#allocation2 + $0x4a0] sm:$0xff]
    %v264 = vld [vmem:[#allocation2 + $0x4a8] sm:$0xff]
    %v265 = vld [vmem:[#allocation2 + $0x4b0] sm:$0xff]
    %v266 = vld [vmem:[#allocation2 + $0x4b8] sm:$0xff]
    %v267 = vld [vmem:[#allocation2 + $0x4c0] sm:$0xff]
    %v268 = vld [vmem:[#allocation2 + $0x4c8] sm:$0xff]
    %v269 = vld [vmem:[#allocation2 + $0x4d0] sm:$0xff]
    %v270 = vld [vmem:[#allocation2 + $0x4d8] sm:$0xff]
    %v271 = vld [vmem:[#allocation2 + $0x4e0] sm:$0xff]
    %v272 = vld [vmem:[#allocation2 + $0x4e8] sm:$0xff]
    %v273 = vld [vmem:[#allocation2 + $0x4f0] sm:$0xff]
    %v274 = vld [vmem:[#allocation2 + $0x4f8] sm:$0xff]
    %v275 = vld [vmem:[#allocation2 + $0x500] sm:$0xff]
    %v276 = vld [vmem:[#allocation2 + $0x508] sm:$0xff]
    %v277 = vld [vmem:[#allocation2 + $0x510] sm:$0xff]
    %v278 = vld [vmem:[#allocation2 + $0x518] sm:$0xff]
    %v279 = vld [vmem:[#allocation2 + $0x520] sm:$0xff]
    %v280 = vld [vmem:[#allocation2 + $0x528] sm:$0xff]
    %v281 = vld [vmem:[#allocation2 + $0x530] sm:$0xff]
    %v282 = vld [vmem:[#allocation2 + $0x538] sm:$0xff]
    %v283 = vld [vmem:[#allocation2 + $0x540] sm:$0xff]
    %v284 = vld [vmem:[#allocation2 + $0x548] sm:$0xff]
    %v285 = vld [vmem:[#allocation2 + $0x550] sm:$0xff]
    %v286 = vld [vmem:[#allocation2 + $0x558] sm:$0xff]
    %v287 = vld [vmem:[#allocation2 + $0x560] sm:$0xff]
    %v288 = vld [vmem:[#allocation2 + $0x568] sm:$0xff]
    %v289 = vld [vmem:[#allocation2 + $0x570] sm:$0xff]
    %v290 = vld [vmem:[#allocation2 + $0x578] sm:$0xff]
    %v291 = vld [vmem:[#allocation2 + $0x580] sm:$0xff]
    %v292 = vld [vmem:[#allocation2 + $0x588] sm:$0xff]
    %v293 = vld [vmem:[#allocation2 + $0x590] sm:$0xff]
    %v294 = vld [vmem:[#allocation2 + $0x598] sm:$0xff]
    %v295 = vld [vmem:[#allocation2 + $0x5a0] sm:$0xff]
    %v296 = vld [vmem:[#allocation2 + $0x5a8] sm:$0xff]
    %v297 = vld [vmem:[#allocation2 + $0x5b0] sm:$0xff]
    %v298 = vld [vmem:[#allocation2 + $0x5b8] sm:$0xff]
    %v299 = vld [vmem:[#allocation2 + $0x5c0] sm:$0xff]
    %v300 = vld [vmem:[#allocation2 + $0x5c8] sm:$0xff]
    %v301 = vld [vmem:[#allocation2 + $0x5d0] sm:$0xff]
    %v302 = vld [vmem:[#allocation2 + $0x5d8] sm:$0xff]
    %v303 = vld [vmem:[#allocation2 + $0x5e0] sm:$0xff]
    %v304 = vld [vmem:[#allocation2 + $0x5e8] sm:$0xff]
    %v305 = vld [vmem:[#allocation2 + $0x5f0] sm:$0xff]
    %v306 = vld [vmem:[#allocation2 + $0x5f8] sm:$0xff]
    %v307 = vld [vmem:[#allocation2 + $0x600] sm:$0xff]
    %v308 = vld [vmem:[#allocation2 + $0x608] sm:$0xff]
    %v309 = vld [vmem:[#allocation2 + $0x610] sm:$0xff]
    %v310 = vld [vmem:[#allocation2 + $0x618] sm:$0xff]
    %v311 = vld [vmem:[#allocation2 + $0x620] sm:$0xff]
    %v312 = vld [vmem:[#allocation2 + $0x628] sm:$0xff]
    %v313 = vld [vmem:[#allocation2 + $0x630] sm:$0xff]
    %v314 = vld [vmem:[#allocation2 + $0x638] sm:$0xff]
    %v315 = vld [vmem:[#allocation2 + $0x640] sm:$0xff]
    %v316 = vld [vmem:[#allocation2 + $0x648] sm:$0xff]
    %v317 = vld [vmem:[#allocation2 + $0x650] sm:$0xff]
    %v318 = vld [vmem:[#allocation2 + $0x658] sm:$0xff]
    %v319 = vld [vmem:[#allocation2 + $0x660] sm:$0xff]
    %v320 = vld [vmem:[#allocation2 + $0x668] sm:$0xff]
    %v321 = vld [vmem:[#allocation2 + $0x670] sm:$0xff]
    %v322 = vld [vmem:[#allocation2 + $0x678] sm:$0xff]
    %v323 = vld [vmem:[#allocation2 + $0x680] sm:$0xff]
    %v324 = vld [vmem:[#allocation2 + $0x688] sm:$0xff]
    %v325 = vld [vmem:[#allocation2 + $0x690] sm:$0xff]
    %v326 = vld [vmem:[#allocation2 + $0x698] sm:$0xff]
    %v327 = vld [vmem:[#allocation2 + $0x6a0] sm:$0xff]
    %v328 = vld [vmem:[#allocation2 + $0x6a8] sm:$0xff]
    %v329 = vld [vmem:[#allocation2 + $0x6b0] sm:$0xff]
    %v330 = vld [vmem:[#allocation2 + $0x6b8] sm:$0xff]
    %v331 = vld [vmem:[#allocation2 + $0x6c0] sm:$0xff]
    %v332 = vld [vmem:[#allocation2 + $0x6c8] sm:$0xff]
    %v333 = vld [vmem:[#allocation2 + $0x6d0] sm:$0xff]
    %v334 = vld [vmem:[#allocation2 + $0x6d8] sm:$0xff]
    %v335 = vld [vmem:[#allocation2 + $0x6e0] sm:$0xff]
    %v336 = vld [vmem:[#allocation2 + $0x6e8] sm:$0xff]
    %v337 = vld [vmem:[#allocation2 + $0x6f0] sm:$0xff]
    %v338 = vld [vmem:[#allocation2 + $0x6f8] sm:$0xff]
    %v339 = vld [vmem:[#allocation2 + $0x700] sm:$0xff]
    %v340 = vld [vmem:[#allocation2 + $0x708] sm:$0xff]
    %v341 = vld [vmem:[#allocation2 + $0x710] sm:$0xff]
    %v342 = vld [vmem:[#allocation2 + $0x718] sm:$0xff]
    %v343 = vld [vmem:[#allocation2 + $0x720] sm:$0xff]
    %v344 = vld [vmem:[#allocation2 + $0x728] sm:$0xff]
    %v345 = vld [vmem:[#allocation2 + $0x730] sm:$0xff]
    %v346 = vld [vmem:[#allocation2 + $0x738] sm:$0xff]
    %v347 = vld [vmem:[#allocation2 + $0x740] sm:$0xff]
    %v348 = vld [vmem:[#allocation2 + $0x748] sm:$0xff]
    %v349 = vld [vmem:[#allocation2 + $0x750] sm:$0xff]
    %v350 = vld [vmem:[#allocation2 + $0x758] sm:$0xff]
    %v351 = vld [vmem:[#allocation2 + $0x760] sm:$0xff]
    %v352 = vld [vmem:[#allocation2 + $0x768] sm:$0xff]
    %v353 = vld [vmem:[#allocation2 + $0x770] sm:$0xff]
    %v354 = vld [vmem:[#allocation2 + $0x778] sm:$0xff]
    %v355 = vld [vmem:[#allocation2 + $0x780] sm:$0xff]
    %v356 = vld [vmem:[#allocation2 + $0x788] sm:$0xff]
    %v357 = vld [vmem:[#allocation2 + $0x790] sm:$0xff]
    %v358 = vld [vmem:[#allocation2 + $0x798] sm:$0xff]
    %v359 = vld [vmem:[#allocation2 + $0x7a0] sm:$0xff]
    %v360 = vld [vmem:[#allocation2 + $0x7a8] sm:$0xff]
    %v361 = vld [vmem:[#allocation2 + $0x7b0] sm:$0xff]
    %v362 = vld [vmem:[#allocation2 + $0x7b8] sm:$0xff]
    %v363 = vld [vmem:[#allocation2 + $0x7c0] sm:$0xff]
    %v364 = vld [vmem:[#allocation2 + $0x7c8] sm:$0xff]
    %v365 = vld [vmem:[#allocation2 + $0x7d0] sm:$0xff]
    %v366 = vld [vmem:[#allocation2 + $0x7d8] sm:$0xff]
    %v367 = vld [vmem:[#allocation2 + $0x7e0] sm:$0xff]
    %v368 = vld [vmem:[#allocation2 + $0x7e8] sm:$0xff]
    %v369 = vld [vmem:[#allocation2 + $0x7f0] sm:$0xff]
    %v370 = vld [vmem:[#allocation2 + $0x7f8] sm:$0xff]
    %v371 = vld [vmem:[#allocation2 + $0x800] sm:$0xff]
    %v372 = vld [vmem:[#allocation2 + $0x808] sm:$0xff]
    %v373 = vld [vmem:[#allocation2 + $0x810] sm:$0xff]
    %v374 = vld [vmem:[#allocation2 + $0x818] sm:$0xff]
    %v375 = vld [vmem:[#allocation2 + $0x820] sm:$0xff]
    %v376 = vld [vmem:[#allocation2 + $0x828] sm:$0xff]
    %v377 = vld [vmem:[#allocation2 + $0x830] sm:$0xff]
    %v378 = vld [vmem:[#allocation2 + $0x838] sm:$0xff]
    %v379 = vld [vmem:[#allocation2 + $0x840] sm:$0xff]
    %v380 = vld [vmem:[#allocation2 + $0x848] sm:$0xff]
    %v381 = vld [vmem:[#allocation2 + $0x850] sm:$0xff]
    %v382 = vld [vmem:[#allocation2 + $0x858] sm:$0xff]
    %v383 = vld [vmem:[#allocation2 + $0x860] sm:$0xff]
    %v384 = vld [vmem:[#allocation2 + $0x868] sm:$0xff]
    %v385 = vld [vmem:[#allocation2 + $0x870] sm:$0xff]
    %v386 = vld [vmem:[#allocation2 + $0x878] sm:$0xff]
    %v387 = vld [vmem:[#allocation2 + $0x880] sm:$0xff]
    %v388 = vld [vmem:[#allocation2 + $0x888] sm:$0xff]
    %v389 = vld [vmem:[#allocation2 + $0x890] sm:$0xff]
    %v390 = vld [vmem:[#allocation2 + $0x898] sm:$0xff]
    %v391 = vld [vmem:[#allocation2 + $0x8a0] sm:$0xff]
    %v392 = vld [vmem:[#allocation2 + $0x8a8] sm:$0xff]
    %v393 = vld [vmem:[#allocation2 + $0x8b0] sm:$0xff]
    %v394 = vld [vmem:[#allocation2 + $0x8b8] sm:$0xff]
    %v395 = vld [vmem:[#allocation2 + $0x8c0] sm:$0xff]
    %v396 = vld [vmem:[#allocation2 + $0x8c8] sm:$0xff]
    %v397 = vld [vmem:[#allocation2 + $0x8d0] sm:$0xff]
    %v398 = vld [vmem:[#allocation2 + $0x8d8] sm:$0xff]
    %v399 = vld [vmem:[#allocation2 + $0x8e0] sm:$0xff]
    %v400 = vld [vmem:[#allocation2 + $0x8e8] sm:$0xff]
    %v401 = vld [vmem:[#allocation2 + $0x8f0] sm:$0xff]
    %v402 = vld [vmem:[#allocation2 + $0x8f8] sm:$0xff]
    %v403 = vld [vmem:[#allocation2 + $0x900] sm:$0xff]
    %v404 = vld [vmem:[#allocation2 + $0x908] sm:$0xff]
    %v405 = vld [vmem:[#allocation2 + $0x910] sm:$0xff]
    %v406 = vld [vmem:[#allocation2 + $0x918] sm:$0xff]
    %v407 = vld [vmem:[#allocation2 + $0x920] sm:$0xff]
    %v408 = vld [vmem:[#allocation2 + $0x928] sm:$0xff]
    %v409 = vld [vmem:[#allocation2 + $0x930] sm:$0xff]
    %v410 = vld [vmem:[#allocation2 + $0x938] sm:$0xff]
    %v411 = vld [vmem:[#allocation2 + $0x940] sm:$0xff]
    %v412 = vld [vmem:[#allocation2 + $0x948] sm:$0xff]
    %v413 = vld [vmem:[#allocation2 + $0x950] sm:$0xff]
    %v414 = vld [vmem:[#allocation2 + $0x958] sm:$0xff]
    %v415 = vld [vmem:[#allocation2 + $0x960] sm:$0xff]
    %v416 = vld [vmem:[#allocation2 + $0x968] sm:$0xff]
    %v417 = vld [vmem:[#allocation2 + $0x970] sm:$0xff]
    %v418 = vld [vmem:[#allocation2 + $0x978] sm:$0xff]
    %v419 = vld [vmem:[#allocation2 + $0x980] sm:$0xff]
    %v420 = vld [vmem:[#allocation2 + $0x988] sm:$0xff]
    %v421 = vld [vmem:[#allocation2 + $0x990] sm:$0xff]
    %v422 = vld [vmem:[#allocation2 + $0x998] sm:$0xff]
    %v423 = vld [vmem:[#allocation2 + $0x9a0] sm:$0xff]
    %v424 = vld [vmem:[#allocation2 + $0x9a8] sm:$0xff]
    %v425 = vld [vmem:[#allocation2 + $0x9b0] sm:$0xff]
    %v426 = vld [vmem:[#allocation2 + $0x9b8] sm:$0xff]
    %v427 = vld [vmem:[#allocation2 + $0x9c0] sm:$0xff]
    %v428 = vld [vmem:[#allocation2 + $0x9c8] sm:$0xff]
    %v429 = vld [vmem:[#allocation2 + $0x9d0] sm:$0xff]
    %v430 = vld [vmem:[#allocation2 + $0x9d8] sm:$0xff]
    %v431 = vld [vmem:[#allocation2 + $0x9e0] sm:$0xff]
    %v432 = vld [vmem:[#allocation2 + $0x9e8] sm:$0xff]
    %v433 = vld [vmem:[#allocation2 + $0x9f0] sm:$0xff]
    %v434 = vld [vmem:[#allocation2 + $0x9f8] sm:$0xff]
    %v435 = vld [vmem:[#allocation5] sm:$0xff]
    %v437 = vlaneseq
    %v438 = vshrl.u32 %v437, 7
    %v439 = vsub.s32 0, %v438
    %v440 = vrot.slane %v435, %v439
    %v441 = vlaneseq
    %v442 = vshrl.u32 %v441, 7
    %v443 = vsub.s32 1, %v442
    %v444 = vrot.slane %v435, %v443
    %v445 = vlaneseq
    %v446 = vshrl.u32 %v445, 7
    %v447 = vsub.s32 2, %v446
    %v448 = vrot.slane %v435, %v447
    %v449 = vlaneseq
    %v450 = vshrl.u32 %v449, 7
    %v451 = vsub.s32 3, %v450
    %v452 = vrot.slane %v435, %v451
    %v453 = vlaneseq
    %v454 = vshrl.u32 %v453, 7
    %v455 = vsub.s32 4, %v454
    %v456 = vrot.slane %v435, %v455
    %v457 = vlaneseq
    %v458 = vshrl.u32 %v457, 7
    %v459 = vsub.s32 5, %v458
    %v460 = vrot.slane %v435, %v459
    %v461 = vlaneseq
    %v462 = vshrl.u32 %v461, 7
    %v463 = vsub.s32 6, %v462
    %v464 = vrot.slane %v435, %v463
    %v465 = vlaneseq
    %v466 = vshrl.u32 %v465, 7
    %v467 = vsub.s32 7, %v466
    %v468 = vrot.slane %v435, %v467
    %v797 = vunpack.c.l.b16 %v115
    %v798 = vunpack.c.h.b16 %v115
    %v799 = vunpack.c.l.b16 %v116
    %v800 = vunpack.c.h.b16 %v116
    %v801 = vunpack.c.l.b16 %v117
    %v802 = vunpack.c.h.b16 %v117
    %v803 = vunpack.c.l.b16 %v118
    %v804 = vunpack.c.h.b16 %v118
    %v805 = vunpack.c.l.b16 %v119
    %v806 = vunpack.c.h.b16 %v119
    %v807 = vunpack.c.l.b16 %v120
    %v808 = vunpack.c.h.b16 %v120
    %v809 = vunpack.c.l.b16 %v121
    %v810 = vunpack.c.h.b16 %v121
    %v811 = vunpack.c.l.b16 %v122
    %v812 = vunpack.c.h.b16 %v122
    %v813 = vunpack.c.l.b16 %v123
    %v814 = vunpack.c.h.b16 %v123
    %v815 = vunpack.c.l.b16 %v124
    %v816 = vunpack.c.h.b16 %v124
    %v817 = vunpack.c.l.b16 %v125
    %v818 = vunpack.c.h.b16 %v125
    %v819 = vunpack.c.l.b16 %v126
    %v820 = vunpack.c.h.b16 %v126
    %v821 = vunpack.c.l.b16 %v127
    %v822 = vunpack.c.h.b16 %v127
    %v823 = vunpack.c.l.b16 %v128
    %v824 = vunpack.c.h.b16 %v128
    %v825 = vunpack.c.l.b16 %v129
    %v826 = vunpack.c.h.b16 %v129
    %v827 = vunpack.c.l.b16 %v130
    %v828 = vunpack.c.h.b16 %v130
    %v829 = vunpack.c.l.b16 %v131
    %v830 = vunpack.c.h.b16 %v131
    %v831 = vunpack.c.l.b16 %v132
    %v832 = vunpack.c.h.b16 %v132
    %v833 = vunpack.c.l.b16 %v133
    %v834 = vunpack.c.h.b16 %v133
    %v835 = vunpack.c.l.b16 %v134
    %v836 = vunpack.c.h.b16 %v134
    %v837 = vunpack.c.l.b16 %v135
    %v838 = vunpack.c.h.b16 %v135
    %v839 = vunpack.c.l.b16 %v136
    %v840 = vunpack.c.h.b16 %v136
    %v841 = vunpack.c.l.b16 %v137
    %v842 = vunpack.c.h.b16 %v137
    %v843 = vunpack.c.l.b16 %v138
    %v844 = vunpack.c.h.b16 %v138
    %v845 = vunpack.c.l.b16 %v139
    %v846 = vunpack.c.h.b16 %v139
    %v847 = vunpack.c.l.b16 %v140
    %v848 = vunpack.c.h.b16 %v140
    %v849 = vunpack.c.l.b16 %v141
    %v850 = vunpack.c.h.b16 %v141
    %v851 = vunpack.c.l.b16 %v142
    %v852 = vunpack.c.h.b16 %v142
    %v853 = vunpack.c.l.b16 %v143
    %v854 = vunpack.c.h.b16 %v143
    %v855 = vunpack.c.l.b16 %v144
    %v856 = vunpack.c.h.b16 %v144
    %v857 = vunpack.c.l.b16 %v145
    %v858 = vunpack.c.h.b16 %v145
    %v859 = vunpack.c.l.b16 %v146
    %v860 = vunpack.c.h.b16 %v146
    %v861 = vunpack.c.l.b16 %v147
    %v862 = vunpack.c.h.b16 %v147
    %v863 = vunpack.c.l.b16 %v148
    %v864 = vunpack.c.h.b16 %v148
    %v865 = vunpack.c.l.b16 %v149
    %v866 = vunpack.c.h.b16 %v149
    %v867 = vunpack.c.l.b16 %v150
    %v868 = vunpack.c.h.b16 %v150
    %v869 = vunpack.c.l.b16 %v151
    %v870 = vunpack.c.h.b16 %v151
    %v871 = vunpack.c.l.b16 %v152
    %v872 = vunpack.c.h.b16 %v152
    %v873 = vunpack.c.l.b16 %v153
    %v874 = vunpack.c.h.b16 %v153
    %v875 = vunpack.c.l.b16 %v154
    %v876 = vunpack.c.h.b16 %v154
    %v877 = vunpack.c.l.b16 %v155
    %v878 = vunpack.c.h.b16 %v155
    %v879 = vunpack.c.l.b16 %v156
    %v880 = vunpack.c.h.b16 %v156
    %v881 = vunpack.c.l.b16 %v157
    %v882 = vunpack.c.h.b16 %v157
    %v883 = vunpack.c.l.b16 %v158
    %v884 = vunpack.c.h.b16 %v158
    %v885 = vunpack.c.l.b16 %v159
    %v886 = vunpack.c.h.b16 %v159
    %v887 = vunpack.c.l.b16 %v160
    %v888 = vunpack.c.h.b16 %v160
    %v889 = vunpack.c.l.b16 %v161
    %v890 = vunpack.c.h.b16 %v161
    %v891 = vunpack.c.l.b16 %v162
    %v892 = vunpack.c.h.b16 %v162
    %v893 = vunpack.c.l.b16 %v163
    %v894 = vunpack.c.h.b16 %v163
    %v895 = vunpack.c.l.b16 %v164
    %v896 = vunpack.c.h.b16 %v164
    %v897 = vunpack.c.l.b16 %v165
    %v898 = vunpack.c.h.b16 %v165
    %v899 = vunpack.c.l.b16 %v166
    %v900 = vunpack.c.h.b16 %v166
    %v901 = vunpack.c.l.b16 %v167
    %v902 = vunpack.c.h.b16 %v167
    %v903 = vunpack.c.l.b16 %v168
    %v904 = vunpack.c.h.b16 %v168
    %v905 = vunpack.c.l.b16 %v169
    %v906 = vunpack.c.h.b16 %v169
    %v907 = vunpack.c.l.b16 %v170
    %v908 = vunpack.c.h.b16 %v170
    %v909 = vunpack.c.l.b16 %v171
    %v910 = vunpack.c.h.b16 %v171
    %v911 = vunpack.c.l.b16 %v172
    %v912 = vunpack.c.h.b16 %v172
    %v913 = vunpack.c.l.b16 %v173
    %v914 = vunpack.c.h.b16 %v173
    %v915 = vunpack.c.l.b16 %v174
    %v916 = vunpack.c.h.b16 %v174
    %v917 = vunpack.c.l.b16 %v175
    %v918 = vunpack.c.h.b16 %v175
    %v919 = vunpack.c.l.b16 %v176
    %v920 = vunpack.c.h.b16 %v176
    %v921 = vunpack.c.l.b16 %v177
    %v922 = vunpack.c.h.b16 %v177
    %v923 = vunpack.c.l.b16 %v178
    %v924 = vunpack.c.h.b16 %v178
    %v925 = vunpack.c.l.b16 %v179
    %v926 = vunpack.c.h.b16 %v179
    %v927 = vunpack.c.l.b16 %v180
    %v928 = vunpack.c.h.b16 %v180
    %v929 = vunpack.c.l.b16 %v181
    %v930 = vunpack.c.h.b16 %v181
    %v931 = vunpack.c.l.b16 %v182
    %v932 = vunpack.c.h.b16 %v182
    %v933 = vunpack.c.l.b16 %v183
    %v934 = vunpack.c.h.b16 %v183
    %v935 = vunpack.c.l.b16 %v184
    %v936 = vunpack.c.h.b16 %v184
    %v937 = vunpack.c.l.b16 %v185
    %v938 = vunpack.c.h.b16 %v185
    %v939 = vunpack.c.l.b16 %v186
    %v940 = vunpack.c.h.b16 %v186
    %v941 = vunpack.c.l.b16 %v187
    %v942 = vunpack.c.h.b16 %v187
    %v943 = vunpack.c.l.b16 %v188
    %v944 = vunpack.c.h.b16 %v188
    %v945 = vunpack.c.l.b16 %v189
    %v946 = vunpack.c.h.b16 %v189
    %v947 = vunpack.c.l.b16 %v190
    %v948 = vunpack.c.h.b16 %v190
    %v949 = vunpack.c.l.b16 %v191
    %v950 = vunpack.c.h.b16 %v191
    %v951 = vunpack.c.l.b16 %v192
    %v952 = vunpack.c.h.b16 %v192
    %v953 = vunpack.c.l.b16 %v193
    %v954 = vunpack.c.h.b16 %v193
    %v955 = vunpack.c.l.b16 %v194
    %v956 = vunpack.c.h.b16 %v194
    %v957 = vunpack.c.l.b16 %v195
    %v958 = vunpack.c.h.b16 %v195
    %v959 = vunpack.c.l.b16 %v196
    %v960 = vunpack.c.h.b16 %v196
    %v961 = vunpack.c.l.b16 %v197
    %v962 = vunpack.c.h.b16 %v197
    %v963 = vunpack.c.l.b16 %v198
    %v964 = vunpack.c.h.b16 %v198
    %v965 = vunpack.c.l.b16 %v199
    %v966 = vunpack.c.h.b16 %v199
    %v967 = vunpack.c.l.b16 %v200
    %v968 = vunpack.c.h.b16 %v200
    %v969 = vunpack.c.l.b16 %v201
    %v970 = vunpack.c.h.b16 %v201
    %v971 = vunpack.c.l.b16 %v202
    %v972 = vunpack.c.h.b16 %v202
    %v973 = vunpack.c.l.b16 %v203
    %v974 = vunpack.c.h.b16 %v203
    %v975 = vunpack.c.l.b16 %v204
    %v976 = vunpack.c.h.b16 %v204
    %v977 = vunpack.c.l.b16 %v205
    %v978 = vunpack.c.h.b16 %v205
    %v979 = vunpack.c.l.b16 %v206
    %v980 = vunpack.c.h.b16 %v206
    %v981 = vunpack.c.l.b16 %v207
    %v982 = vunpack.c.h.b16 %v207
    %v983 = vunpack.c.l.b16 %v208
    %v984 = vunpack.c.h.b16 %v208
    %v985 = vunpack.c.l.b16 %v209
    %v986 = vunpack.c.h.b16 %v209
    %v987 = vunpack.c.l.b16 %v210
    %v988 = vunpack.c.h.b16 %v210
    %v989 = vunpack.c.l.b16 %v211
    %v990 = vunpack.c.h.b16 %v211
    %v991 = vunpack.c.l.b16 %v212
    %v992 = vunpack.c.h.b16 %v212
    %v993 = vunpack.c.l.b16 %v213
    %v994 = vunpack.c.h.b16 %v213
    %v995 = vunpack.c.l.b16 %v214
    %v996 = vunpack.c.h.b16 %v214
    %v997 = vunpack.c.l.b16 %v215
    %v998 = vunpack.c.h.b16 %v215
    %v999 = vunpack.c.l.b16 %v216
    %v1000 = vunpack.c.h.b16 %v216
    %v1001 = vunpack.c.l.b16 %v217
    %v1002 = vunpack.c.h.b16 %v217
    %v1003 = vunpack.c.l.b16 %v218
    %v1004 = vunpack.c.h.b16 %v218
    %v1005 = vunpack.c.l.b16 %v219
    %v1006 = vunpack.c.h.b16 %v219
    %v1007 = vunpack.c.l.b16 %v220
    %v1008 = vunpack.c.h.b16 %v220
    %v1009 = vunpack.c.l.b16 %v221
    %v1010 = vunpack.c.h.b16 %v221
    %v1011 = vunpack.c.l.b16 %v222
    %v1012 = vunpack.c.h.b16 %v222
    %v1013 = vunpack.c.l.b16 %v223
    %v1014 = vunpack.c.h.b16 %v223
    %v1015 = vunpack.c.l.b16 %v224
    %v1016 = vunpack.c.h.b16 %v224
    %v1017 = vunpack.c.l.b16 %v225
    %v1018 = vunpack.c.h.b16 %v225
    %v1019 = vunpack.c.l.b16 %v226
    %v1020 = vunpack.c.h.b16 %v226
    %v1021 = vunpack.c.l.b16 %v227
    %v1022 = vunpack.c.h.b16 %v227
    %v1023 = vunpack.c.l.b16 %v228
    %v1024 = vunpack.c.h.b16 %v228
    %v1025 = vunpack.c.l.b16 %v229
    %v1026 = vunpack.c.h.b16 %v229
    %v1027 = vunpack.c.l.b16 %v230
    %v1028 = vunpack.c.h.b16 %v230
    %v1029 = vunpack.c.l.b16 %v231
    %v1030 = vunpack.c.h.b16 %v231
    %v1031 = vunpack.c.l.b16 %v232
    %v1032 = vunpack.c.h.b16 %v232
    %v1033 = vunpack.c.l.b16 %v233
    %v1034 = vunpack.c.h.b16 %v233
    %v1035 = vunpack.c.l.b16 %v234
    %v1036 = vunpack.c.h.b16 %v234
    %v1037 = vunpack.c.l.b16 %v235
    %v1038 = vunpack.c.h.b16 %v235
    %v1039 = vunpack.c.l.b16 %v236
    %v1040 = vunpack.c.h.b16 %v236
    %v1041 = vunpack.c.l.b16 %v237
    %v1042 = vunpack.c.h.b16 %v237
    %v1043 = vunpack.c.l.b16 %v238
    %v1044 = vunpack.c.h.b16 %v238
    %v1045 = vunpack.c.l.b16 %v239
    %v1046 = vunpack.c.h.b16 %v239
    %v1047 = vunpack.c.l.b16 %v240
    %v1048 = vunpack.c.h.b16 %v240
    %v1049 = vunpack.c.l.b16 %v241
    %v1050 = vunpack.c.h.b16 %v241
    %v1051 = vunpack.c.l.b16 %v242
    %v1052 = vunpack.c.h.b16 %v242
    %v1053 = vunpack.c.l.b16 %v243
    %v1054 = vunpack.c.h.b16 %v243
    %v1055 = vunpack.c.l.b16 %v244
    %v1056 = vunpack.c.h.b16 %v244
    %v1057 = vunpack.c.l.b16 %v245
    %v1058 = vunpack.c.h.b16 %v245
    %v1059 = vunpack.c.l.b16 %v246
    %v1060 = vunpack.c.h.b16 %v246
    %v1061 = vunpack.c.l.b16 %v247
    %v1062 = vunpack.c.h.b16 %v247
    %v1063 = vunpack.c.l.b16 %v248
    %v1064 = vunpack.c.h.b16 %v248
    %v1065 = vunpack.c.l.b16 %v249
    %v1066 = vunpack.c.h.b16 %v249
    %v1067 = vunpack.c.l.b16 %v250
    %v1068 = vunpack.c.h.b16 %v250
    %v1069 = vunpack.c.l.b16 %v251
    %v1070 = vunpack.c.h.b16 %v251
    %v1071 = vunpack.c.l.b16 %v252
    %v1072 = vunpack.c.h.b16 %v252
    %v1073 = vunpack.c.l.b16 %v253
    %v1074 = vunpack.c.h.b16 %v253
    %v1075 = vunpack.c.l.b16 %v254
    %v1076 = vunpack.c.h.b16 %v254
    %v1077 = vunpack.c.l.b16 %v255
    %v1078 = vunpack.c.h.b16 %v255
    %v1079 = vunpack.c.l.b16 %v256
    %v1080 = vunpack.c.h.b16 %v256
    %v1081 = vunpack.c.l.b16 %v257
    %v1082 = vunpack.c.h.b16 %v257
    %v1083 = vunpack.c.l.b16 %v258
    %v1084 = vunpack.c.h.b16 %v258
    %v1085 = vunpack.c.l.b16 %v259
    %v1086 = vunpack.c.h.b16 %v259
    %v1087 = vunpack.c.l.b16 %v260
    %v1088 = vunpack.c.h.b16 %v260
    %v1089 = vunpack.c.l.b16 %v261
    %v1090 = vunpack.c.h.b16 %v261
    %v1091 = vunpack.c.l.b16 %v262
    %v1092 = vunpack.c.h.b16 %v262
    %v1093 = vunpack.c.l.b16 %v263
    %v1094 = vunpack.c.h.b16 %v263
    %v1095 = vunpack.c.l.b16 %v264
    %v1096 = vunpack.c.h.b16 %v264
    %v1097 = vunpack.c.l.b16 %v265
    %v1098 = vunpack.c.h.b16 %v265
    %v1099 = vunpack.c.l.b16 %v266
    %v1100 = vunpack.c.h.b16 %v266
    %v1101 = vunpack.c.l.b16 %v267
    %v1102 = vunpack.c.h.b16 %v267
    %v1103 = vunpack.c.l.b16 %v268
    %v1104 = vunpack.c.h.b16 %v268
    %v1105 = vunpack.c.l.b16 %v269
    %v1106 = vunpack.c.h.b16 %v269
    %v1107 = vunpack.c.l.b16 %v270
    %v1108 = vunpack.c.h.b16 %v270
    %v1109 = vunpack.c.l.b16 %v271
    %v1110 = vunpack.c.h.b16 %v271
    %v1111 = vunpack.c.l.b16 %v272
    %v1112 = vunpack.c.h.b16 %v272
    %v1113 = vunpack.c.l.b16 %v273
    %v1114 = vunpack.c.h.b16 %v273
    %v1115 = vunpack.c.l.b16 %v274
    %v1116 = vunpack.c.h.b16 %v274
    %v1117 = vunpack.c.l.b16 %v275
    %v1118 = vunpack.c.h.b16 %v275
    %v1119 = vunpack.c.l.b16 %v276
    %v1120 = vunpack.c.h.b16 %v276
    %v1121 = vunpack.c.l.b16 %v277
    %v1122 = vunpack.c.h.b16 %v277
    %v1123 = vunpack.c.l.b16 %v278
    %v1124 = vunpack.c.h.b16 %v278
    %v1125 = vunpack.c.l.b16 %v279
    %v1126 = vunpack.c.h.b16 %v279
    %v1127 = vunpack.c.l.b16 %v280
    %v1128 = vunpack.c.h.b16 %v280
    %v1129 = vunpack.c.l.b16 %v281
    %v1130 = vunpack.c.h.b16 %v281
    %v1131 = vunpack.c.l.b16 %v282
    %v1132 = vunpack.c.h.b16 %v282
    %v1133 = vunpack.c.l.b16 %v283
    %v1134 = vunpack.c.h.b16 %v283
    %v1135 = vunpack.c.l.b16 %v284
    %v1136 = vunpack.c.h.b16 %v284
    %v1137 = vunpack.c.l.b16 %v285
    %v1138 = vunpack.c.h.b16 %v285
    %v1139 = vunpack.c.l.b16 %v286
    %v1140 = vunpack.c.h.b16 %v286
    %v1141 = vunpack.c.l.b16 %v287
    %v1142 = vunpack.c.h.b16 %v287
    %v1143 = vunpack.c.l.b16 %v288
    %v1144 = vunpack.c.h.b16 %v288
    %v1145 = vunpack.c.l.b16 %v289
    %v1146 = vunpack.c.h.b16 %v289
    %v1147 = vunpack.c.l.b16 %v290
    %v1148 = vunpack.c.h.b16 %v290
    %v1149 = vunpack.c.l.b16 %v291
    %v1150 = vunpack.c.h.b16 %v291
    %v1151 = vunpack.c.l.b16 %v292
    %v1152 = vunpack.c.h.b16 %v292
    %v1153 = vunpack.c.l.b16 %v293
    %v1154 = vunpack.c.h.b16 %v293
    %v1155 = vunpack.c.l.b16 %v294
    %v1156 = vunpack.c.h.b16 %v294
    %v1157 = vunpack.c.l.b16 %v295
    %v1158 = vunpack.c.h.b16 %v295
    %v1159 = vunpack.c.l.b16 %v296
    %v1160 = vunpack.c.h.b16 %v296
    %v1161 = vunpack.c.l.b16 %v297
    %v1162 = vunpack.c.h.b16 %v297
    %v1163 = vunpack.c.l.b16 %v298
    %v1164 = vunpack.c.h.b16 %v298
    %v1165 = vunpack.c.l.b16 %v299
    %v1166 = vunpack.c.h.b16 %v299
    %v1167 = vunpack.c.l.b16 %v300
    %v1168 = vunpack.c.h.b16 %v300
    %v1169 = vunpack.c.l.b16 %v301
    %v1170 = vunpack.c.h.b16 %v301
    %v1171 = vunpack.c.l.b16 %v302
    %v1172 = vunpack.c.h.b16 %v302
    %v1173 = vunpack.c.l.b16 %v303
    %v1174 = vunpack.c.h.b16 %v303
    %v1175 = vunpack.c.l.b16 %v304
    %v1176 = vunpack.c.h.b16 %v304
    %v1177 = vunpack.c.l.b16 %v305
    %v1178 = vunpack.c.h.b16 %v305
    %v1179 = vunpack.c.l.b16 %v306
    %v1180 = vunpack.c.h.b16 %v306
    %v1181 = vunpack.c.l.b16 %v307
    %v1182 = vunpack.c.h.b16 %v307
    %v1183 = vunpack.c.l.b16 %v308
    %v1184 = vunpack.c.h.b16 %v308
    %v1185 = vunpack.c.l.b16 %v309
    %v1186 = vunpack.c.h.b16 %v309
    %v1187 = vunpack.c.l.b16 %v310
    %v1188 = vunpack.c.h.b16 %v310
    %v1189 = vunpack.c.l.b16 %v311
    %v1190 = vunpack.c.h.b16 %v311
    %v1191 = vunpack.c.l.b16 %v312
    %v1192 = vunpack.c.h.b16 %v312
    %v1193 = vunpack.c.l.b16 %v313
    %v1194 = vunpack.c.h.b16 %v313
    %v1195 = vunpack.c.l.b16 %v314
    %v1196 = vunpack.c.h.b16 %v314
    %v1197 = vunpack.c.l.b16 %v315
    %v1198 = vunpack.c.h.b16 %v315
    %v1199 = vunpack.c.l.b16 %v316
    %v1200 = vunpack.c.h.b16 %v316
    %v1201 = vunpack.c.l.b16 %v317
    %v1202 = vunpack.c.h.b16 %v317
    %v1203 = vunpack.c.l.b16 %v318
    %v1204 = vunpack.c.h.b16 %v318
    %v1205 = vunpack.c.l.b16 %v319
    %v1206 = vunpack.c.h.b16 %v319
    %v1207 = vunpack.c.l.b16 %v320
    %v1208 = vunpack.c.h.b16 %v320
    %v1209 = vunpack.c.l.b16 %v321
    %v1210 = vunpack.c.h.b16 %v321
    %v1211 = vunpack.c.l.b16 %v322
    %v1212 = vunpack.c.h.b16 %v322
    %v1213 = vunpack.c.l.b16 %v323
    %v1214 = vunpack.c.h.b16 %v323
    %v1215 = vunpack.c.l.b16 %v324
    %v1216 = vunpack.c.h.b16 %v324
    %v1217 = vunpack.c.l.b16 %v325
    %v1218 = vunpack.c.h.b16 %v325
    %v1219 = vunpack.c.l.b16 %v326
    %v1220 = vunpack.c.h.b16 %v326
    %v1221 = vunpack.c.l.b16 %v327
    %v1222 = vunpack.c.h.b16 %v327
    %v1223 = vunpack.c.l.b16 %v328
    %v1224 = vunpack.c.h.b16 %v328
    %v1225 = vunpack.c.l.b16 %v329
    %v1226 = vunpack.c.h.b16 %v329
    %v1227 = vunpack.c.l.b16 %v330
    %v1228 = vunpack.c.h.b16 %v330
    %v1229 = vunpack.c.l.b16 %v331
    %v1230 = vunpack.c.h.b16 %v331
    %v1231 = vunpack.c.l.b16 %v332
    %v1232 = vunpack.c.h.b16 %v332
    %v1233 = vunpack.c.l.b16 %v333
    %v1234 = vunpack.c.h.b16 %v333
    %v1235 = vunpack.c.l.b16 %v334
    %v1236 = vunpack.c.h.b16 %v334
    %v1237 = vunpack.c.l.b16 %v335
    %v1238 = vunpack.c.h.b16 %v335
    %v1239 = vunpack.c.l.b16 %v336
    %v1240 = vunpack.c.h.b16 %v336
    %v1241 = vunpack.c.l.b16 %v337
    %v1242 = vunpack.c.h.b16 %v337
    %v1243 = vunpack.c.l.b16 %v338
    %v1244 = vunpack.c.h.b16 %v338
    %v1245 = vunpack.c.l.b16 %v339
    %v1246 = vunpack.c.h.b16 %v339
    %v1247 = vunpack.c.l.b16 %v340
    %v1248 = vunpack.c.h.b16 %v340
    %v1249 = vunpack.c.l.b16 %v341
    %v1250 = vunpack.c.h.b16 %v341
    %v1251 = vunpack.c.l.b16 %v342
    %v1252 = vunpack.c.h.b16 %v342
    %v1253 = vunpack.c.l.b16 %v343
    %v1254 = vunpack.c.h.b16 %v343
    %v1255 = vunpack.c.l.b16 %v344
    %v1256 = vunpack.c.h.b16 %v344
    %v1257 = vunpack.c.l.b16 %v345
    %v1258 = vunpack.c.h.b16 %v345
    %v1259 = vunpack.c.l.b16 %v346
    %v1260 = vunpack.c.h.b16 %v346
    %v1261 = vunpack.c.l.b16 %v347
    %v1262 = vunpack.c.h.b16 %v347
    %v1263 = vunpack.c.l.b16 %v348
    %v1264 = vunpack.c.h.b16 %v348
    %v1265 = vunpack.c.l.b16 %v349
    %v1266 = vunpack.c.h.b16 %v349
    %v1267 = vunpack.c.l.b16 %v350
    %v1268 = vunpack.c.h.b16 %v350
    %v1269 = vunpack.c.l.b16 %v351
    %v1270 = vunpack.c.h.b16 %v351
    %v1271 = vunpack.c.l.b16 %v352
    %v1272 = vunpack.c.h.b16 %v352
    %v1273 = vunpack.c.l.b16 %v353
    %v1274 = vunpack.c.h.b16 %v353
    %v1275 = vunpack.c.l.b16 %v354
    %v1276 = vunpack.c.h.b16 %v354
    %v1277 = vunpack.c.l.b16 %v355
    %v1278 = vunpack.c.h.b16 %v355
    %v1279 = vunpack.c.l.b16 %v356
    %v1280 = vunpack.c.h.b16 %v356
    %v1281 = vunpack.c.l.b16 %v357
    %v1282 = vunpack.c.h.b16 %v357
    %v1283 = vunpack.c.l.b16 %v358
    %v1284 = vunpack.c.h.b16 %v358
    %v1285 = vunpack.c.l.b16 %v359
    %v1286 = vunpack.c.h.b16 %v359
    %v1287 = vunpack.c.l.b16 %v360
    %v1288 = vunpack.c.h.b16 %v360
    %v1289 = vunpack.c.l.b16 %v361
    %v1290 = vunpack.c.h.b16 %v361
    %v1291 = vunpack.c.l.b16 %v362
    %v1292 = vunpack.c.h.b16 %v362
    %v1293 = vunpack.c.l.b16 %v363
    %v1294 = vunpack.c.h.b16 %v363
    %v1295 = vunpack.c.l.b16 %v364
    %v1296 = vunpack.c.h.b16 %v364
    %v1297 = vunpack.c.l.b16 %v365
    %v1298 = vunpack.c.h.b16 %v365
    %v1299 = vunpack.c.l.b16 %v366
    %v1300 = vunpack.c.h.b16 %v366
    %v1301 = vunpack.c.l.b16 %v367
    %v1302 = vunpack.c.h.b16 %v367
    %v1303 = vunpack.c.l.b16 %v368
    %v1304 = vunpack.c.h.b16 %v368
    %v1305 = vunpack.c.l.b16 %v369
    %v1306 = vunpack.c.h.b16 %v369
    %v1307 = vunpack.c.l.b16 %v370
    %v1308 = vunpack.c.h.b16 %v370
    %v1309 = vunpack.c.l.b16 %v371
    %v1310 = vunpack.c.h.b16 %v371
    %v1311 = vunpack.c.l.b16 %v372
    %v1312 = vunpack.c.h.b16 %v372
    %v1313 = vunpack.c.l.b16 %v373
    %v1314 = vunpack.c.h.b16 %v373
    %v1315 = vunpack.c.l.b16 %v374
    %v1316 = vunpack.c.h.b16 %v374
    %v1317 = vunpack.c.l.b16 %v375
    %v1318 = vunpack.c.h.b16 %v375
    %v1319 = vunpack.c.l.b16 %v376
    %v1320 = vunpack.c.h.b16 %v376
    %v1321 = vunpack.c.l.b16 %v377
    %v1322 = vunpack.c.h.b16 %v377
    %v1323 = vunpack.c.l.b16 %v378
    %v1324 = vunpack.c.h.b16 %v378
    %v1325 = vunpack.c.l.b16 %v379
    %v1326 = vunpack.c.h.b16 %v379
    %v1327 = vunpack.c.l.b16 %v380
    %v1328 = vunpack.c.h.b16 %v380
    %v1329 = vunpack.c.l.b16 %v381
    %v1330 = vunpack.c.h.b16 %v381
    %v1331 = vunpack.c.l.b16 %v382
    %v1332 = vunpack.c.h.b16 %v382
    %v1333 = vunpack.c.l.b16 %v383
    %v1334 = vunpack.c.h.b16 %v383
    %v1335 = vunpack.c.l.b16 %v384
    %v1336 = vunpack.c.h.b16 %v384
    %v1337 = vunpack.c.l.b16 %v385
    %v1338 = vunpack.c.h.b16 %v385
    %v1339 = vunpack.c.l.b16 %v386
    %v1340 = vunpack.c.h.b16 %v386
    %v1341 = vunpack.c.l.b16 %v387
    %v1342 = vunpack.c.h.b16 %v387
    %v1343 = vunpack.c.l.b16 %v388
    %v1344 = vunpack.c.h.b16 %v388
    %v1345 = vunpack.c.l.b16 %v389
    %v1346 = vunpack.c.h.b16 %v389
    %v1347 = vunpack.c.l.b16 %v390
    %v1348 = vunpack.c.h.b16 %v390
    %v1349 = vunpack.c.l.b16 %v391
    %v1350 = vunpack.c.h.b16 %v391
    %v1351 = vunpack.c.l.b16 %v392
    %v1352 = vunpack.c.h.b16 %v392
    %v1353 = vunpack.c.l.b16 %v393
    %v1354 = vunpack.c.h.b16 %v393
    %v1355 = vunpack.c.l.b16 %v394
    %v1356 = vunpack.c.h.b16 %v394
    %v1357 = vunpack.c.l.b16 %v395
    %v1358 = vunpack.c.h.b16 %v395
    %v1359 = vunpack.c.l.b16 %v396
    %v1360 = vunpack.c.h.b16 %v396
    %v1361 = vunpack.c.l.b16 %v397
    %v1362 = vunpack.c.h.b16 %v397
    %v1363 = vunpack.c.l.b16 %v398
    %v1364 = vunpack.c.h.b16 %v398
    %v1365 = vunpack.c.l.b16 %v399
    %v1366 = vunpack.c.h.b16 %v399
    %v1367 = vunpack.c.l.b16 %v400
    %v1368 = vunpack.c.h.b16 %v400
    %v1369 = vunpack.c.l.b16 %v401
    %v1370 = vunpack.c.h.b16 %v401
    %v1371 = vunpack.c.l.b16 %v402
    %v1372 = vunpack.c.h.b16 %v402
    %v1373 = vunpack.c.l.b16 %v403
    %v1374 = vunpack.c.h.b16 %v403
    %v1375 = vunpack.c.l.b16 %v404
    %v1376 = vunpack.c.h.b16 %v404
    %v1377 = vunpack.c.l.b16 %v405
    %v1378 = vunpack.c.h.b16 %v405
    %v1379 = vunpack.c.l.b16 %v406
    %v1380 = vunpack.c.h.b16 %v406
    %v1381 = vunpack.c.l.b16 %v407
    %v1382 = vunpack.c.h.b16 %v407
    %v1383 = vunpack.c.l.b16 %v408
    %v1384 = vunpack.c.h.b16 %v408
    %v1385 = vunpack.c.l.b16 %v409
    %v1386 = vunpack.c.h.b16 %v409
    %v1387 = vunpack.c.l.b16 %v410
    %v1388 = vunpack.c.h.b16 %v410
    %v1389 = vunpack.c.l.b16 %v411
    %v1390 = vunpack.c.h.b16 %v411
    %v1391 = vunpack.c.l.b16 %v412
    %v1392 = vunpack.c.h.b16 %v412
    %v1393 = vunpack.c.l.b16 %v413
    %v1394 = vunpack.c.h.b16 %v413
    %v1395 = vunpack.c.l.b16 %v414
    %v1396 = vunpack.c.h.b16 %v414
    %v1397 = vunpack.c.l.b16 %v415
    %v1398 = vunpack.c.h.b16 %v415
    %v1399 = vunpack.c.l.b16 %v416
    %v1400 = vunpack.c.h.b16 %v416
    %v1401 = vunpack.c.l.b16 %v417
    %v1402 = vunpack.c.h.b16 %v417
    %v1403 = vunpack.c.l.b16 %v418
    %v1404 = vunpack.c.h.b16 %v418
    %v1405 = vunpack.c.l.b16 %v419
    %v1406 = vunpack.c.h.b16 %v419
    %v1407 = vunpack.c.l.b16 %v420
    %v1408 = vunpack.c.h.b16 %v420
    %v1409 = vunpack.c.l.b16 %v421
    %v1410 = vunpack.c.h.b16 %v421
    %v1411 = vunpack.c.l.b16 %v422
    %v1412 = vunpack.c.h.b16 %v422
    %v1413 = vunpack.c.l.b16 %v423
    %v1414 = vunpack.c.h.b16 %v423
    %v1415 = vunpack.c.l.b16 %v424
    %v1416 = vunpack.c.h.b16 %v424
    %v1417 = vunpack.c.l.b16 %v425
    %v1418 = vunpack.c.h.b16 %v425
    %v1419 = vunpack.c.l.b16 %v426
    %v1420 = vunpack.c.h.b16 %v426
    %v1421 = vunpack.c.l.b16 %v427
    %v1422 = vunpack.c.h.b16 %v427
    %v1423 = vunpack.c.l.b16 %v428
    %v1424 = vunpack.c.h.b16 %v428
    %v1425 = vunpack.c.l.b16 %v429
    %v1426 = vunpack.c.h.b16 %v429
    %v1427 = vunpack.c.l.b16 %v430
    %v1428 = vunpack.c.h.b16 %v430
    %v1429 = vunpack.c.l.b16 %v431
    %v1430 = vunpack.c.h.b16 %v431
    %v1431 = vunpack.c.l.b16 %v432
    %v1432 = vunpack.c.h.b16 %v432
    %v1433 = vunpack.c.l.b16 %v433
    %v1434 = vunpack.c.h.b16 %v433
    %v1435 = vunpack.c.l.b16 %v434
    %v1436 = vunpack.c.h.b16 %v434
    %v1437 = vpack.c.b16 %v805, %v797
    %v1438 = vpack.c.b16 %v806, %v798
    %v1439 = vpack.c.b16 %v807, %v799
    %v1440 = vpack.c.b16 %v808, %v800
    %v1441 = vpack.c.b16 %v809, %v801
    %v1442 = vpack.c.b16 %v810, %v802
    %v1443 = vpack.c.b16 %v811, %v803
    %v1444 = vpack.c.b16 %v812, %v804
    %v1445 = vpack.c.b16 %v821, %v813
    %v1446 = vpack.c.b16 %v822, %v814
    %v1447 = vpack.c.b16 %v823, %v815
    %v1448 = vpack.c.b16 %v824, %v816
    %v1449 = vpack.c.b16 %v825, %v817
    %v1450 = vpack.c.b16 %v826, %v818
    %v1451 = vpack.c.b16 %v827, %v819
    %v1452 = vpack.c.b16 %v828, %v820
    %v1453 = vpack.c.b16 %v837, %v829
    %v1454 = vpack.c.b16 %v838, %v830
    %v1455 = vpack.c.b16 %v839, %v831
    %v1456 = vpack.c.b16 %v840, %v832
    %v1457 = vpack.c.b16 %v841, %v833
    %v1458 = vpack.c.b16 %v842, %v834
    %v1459 = vpack.c.b16 %v843, %v835
    %v1460 = vpack.c.b16 %v844, %v836
    %v1461 = vpack.c.b16 %v853, %v845
    %v1462 = vpack.c.b16 %v854, %v846
    %v1463 = vpack.c.b16 %v855, %v847
    %v1464 = vpack.c.b16 %v856, %v848
    %v1465 = vpack.c.b16 %v857, %v849
    %v1466 = vpack.c.b16 %v858, %v850
    %v1467 = vpack.c.b16 %v859, %v851
    %v1468 = vpack.c.b16 %v860, %v852
    %v1469 = vpack.c.b16 %v869, %v861
    %v1470 = vpack.c.b16 %v870, %v862
    %v1471 = vpack.c.b16 %v871, %v863
    %v1472 = vpack.c.b16 %v872, %v864
    %v1473 = vpack.c.b16 %v873, %v865
    %v1474 = vpack.c.b16 %v874, %v866
    %v1475 = vpack.c.b16 %v875, %v867
    %v1476 = vpack.c.b16 %v876, %v868
    %v1477 = vpack.c.b16 %v885, %v877
    %v1478 = vpack.c.b16 %v886, %v878
    %v1479 = vpack.c.b16 %v887, %v879
    %v1480 = vpack.c.b16 %v888, %v880
    %v1481 = vpack.c.b16 %v889, %v881
    %v1482 = vpack.c.b16 %v890, %v882
    %v1483 = vpack.c.b16 %v891, %v883
    %v1484 = vpack.c.b16 %v892, %v884
    %v1485 = vpack.c.b16 %v901, %v893
    %v1486 = vpack.c.b16 %v902, %v894
    %v1487 = vpack.c.b16 %v903, %v895
    %v1488 = vpack.c.b16 %v904, %v896
    %v1489 = vpack.c.b16 %v905, %v897
    %v1490 = vpack.c.b16 %v906, %v898
    %v1491 = vpack.c.b16 %v907, %v899
    %v1492 = vpack.c.b16 %v908, %v900
    %v1493 = vpack.c.b16 %v917, %v909
    %v1494 = vpack.c.b16 %v918, %v910
    %v1495 = vpack.c.b16 %v919, %v911
    %v1496 = vpack.c.b16 %v920, %v912
    %v1497 = vpack.c.b16 %v921, %v913
    %v1498 = vpack.c.b16 %v922, %v914
    %v1499 = vpack.c.b16 %v923, %v915
    %v1500 = vpack.c.b16 %v924, %v916
    %v1501 = vpack.c.b16 %v933, %v925
    %v1502 = vpack.c.b16 %v934, %v926
    %v1503 = vpack.c.b16 %v935, %v927
    %v1504 = vpack.c.b16 %v936, %v928
    %v1505 = vpack.c.b16 %v937, %v929
    %v1506 = vpack.c.b16 %v938, %v930
    %v1507 = vpack.c.b16 %v939, %v931
    %v1508 = vpack.c.b16 %v940, %v932
    %v1509 = vpack.c.b16 %v949, %v941
    %v1510 = vpack.c.b16 %v950, %v942
    %v1511 = vpack.c.b16 %v951, %v943
    %v1512 = vpack.c.b16 %v952, %v944
    %v1513 = vpack.c.b16 %v953, %v945
    %v1514 = vpack.c.b16 %v954, %v946
    %v1515 = vpack.c.b16 %v955, %v947
    %v1516 = vpack.c.b16 %v956, %v948
    %v1517 = vpack.c.b16 %v965, %v957
    %v1518 = vpack.c.b16 %v966, %v958
    %v1519 = vpack.c.b16 %v967, %v959
    %v1520 = vpack.c.b16 %v968, %v960
    %v1521 = vpack.c.b16 %v969, %v961
    %v1522 = vpack.c.b16 %v970, %v962
    %v1523 = vpack.c.b16 %v971, %v963
    %v1524 = vpack.c.b16 %v972, %v964
    %v1525 = vpack.c.b16 %v981, %v973
    %v1526 = vpack.c.b16 %v982, %v974
    %v1527 = vpack.c.b16 %v983, %v975
    %v1528 = vpack.c.b16 %v984, %v976
    %v1529 = vpack.c.b16 %v985, %v977
    %v1530 = vpack.c.b16 %v986, %v978
    %v1531 = vpack.c.b16 %v987, %v979
    %v1532 = vpack.c.b16 %v988, %v980
    %v1533 = vpack.c.b16 %v997, %v989
    %v1534 = vpack.c.b16 %v998, %v990
    %v1535 = vpack.c.b16 %v999, %v991
    %v1536 = vpack.c.b16 %v1000, %v992
    %v1537 = vpack.c.b16 %v1001, %v993
    %v1538 = vpack.c.b16 %v1002, %v994
    %v1539 = vpack.c.b16 %v1003, %v995
    %v1540 = vpack.c.b16 %v1004, %v996
    %v1541 = vpack.c.b16 %v1013, %v1005
    %v1542 = vpack.c.b16 %v1014, %v1006
    %v1543 = vpack.c.b16 %v1015, %v1007
    %v1544 = vpack.c.b16 %v1016, %v1008
    %v1545 = vpack.c.b16 %v1017, %v1009
    %v1546 = vpack.c.b16 %v1018, %v1010
    %v1547 = vpack.c.b16 %v1019, %v1011
    %v1548 = vpack.c.b16 %v1020, %v1012
    %v1549 = vpack.c.b16 %v1029, %v1021
    %v1550 = vpack.c.b16 %v1030, %v1022
    %v1551 = vpack.c.b16 %v1031, %v1023
    %v1552 = vpack.c.b16 %v1032, %v1024
    %v1553 = vpack.c.b16 %v1033, %v1025
    %v1554 = vpack.c.b16 %v1034, %v1026
    %v1555 = vpack.c.b16 %v1035, %v1027
    %v1556 = vpack.c.b16 %v1036, %v1028
    %v1557 = vpack.c.b16 %v1045, %v1037
    %v1558 = vpack.c.b16 %v1046, %v1038
    %v1559 = vpack.c.b16 %v1047, %v1039
    %v1560 = vpack.c.b16 %v1048, %v1040
    %v1561 = vpack.c.b16 %v1049, %v1041
    %v1562 = vpack.c.b16 %v1050, %v1042
    %v1563 = vpack.c.b16 %v1051, %v1043
    %v1564 = vpack.c.b16 %v1052, %v1044
    %v1565 = vpack.c.b16 %v1061, %v1053
    %v1566 = vpack.c.b16 %v1062, %v1054
    %v1567 = vpack.c.b16 %v1063, %v1055
    %v1568 = vpack.c.b16 %v1064, %v1056
    %v1569 = vpack.c.b16 %v1065, %v1057
    %v1570 = vpack.c.b16 %v1066, %v1058
    %v1571 = vpack.c.b16 %v1067, %v1059
    %v1572 = vpack.c.b16 %v1068, %v1060
    %v1573 = vpack.c.b16 %v1077, %v1069
    %v1574 = vpack.c.b16 %v1078, %v1070
    %v1575 = vpack.c.b16 %v1079, %v1071
    %v1576 = vpack.c.b16 %v1080, %v1072
    %v1577 = vpack.c.b16 %v1081, %v1073
    %v1578 = vpack.c.b16 %v1082, %v1074
    %v1579 = vpack.c.b16 %v1083, %v1075
    %v1580 = vpack.c.b16 %v1084, %v1076
    %v1581 = vpack.c.b16 %v1093, %v1085
    %v1582 = vpack.c.b16 %v1094, %v1086
    %v1583 = vpack.c.b16 %v1095, %v1087
    %v1584 = vpack.c.b16 %v1096, %v1088
    %v1585 = vpack.c.b16 %v1097, %v1089
    %v1586 = vpack.c.b16 %v1098, %v1090
    %v1587 = vpack.c.b16 %v1099, %v1091
    %v1588 = vpack.c.b16 %v1100, %v1092
    %v1589 = vpack.c.b16 %v1109, %v1101
    %v1590 = vpack.c.b16 %v1110, %v1102
    %v1591 = vpack.c.b16 %v1111, %v1103
    %v1592 = vpack.c.b16 %v1112, %v1104
    %v1593 = vpack.c.b16 %v1113, %v1105
    %v1594 = vpack.c.b16 %v1114, %v1106
    %v1595 = vpack.c.b16 %v1115, %v1107
    %v1596 = vpack.c.b16 %v1116, %v1108
    %v1597 = vpack.c.b16 %v1125, %v1117
    %v1598 = vpack.c.b16 %v1126, %v1118
    %v1599 = vpack.c.b16 %v1127, %v1119
    %v1600 = vpack.c.b16 %v1128, %v1120
    %v1601 = vpack.c.b16 %v1129, %v1121
    %v1602 = vpack.c.b16 %v1130, %v1122
    %v1603 = vpack.c.b16 %v1131, %v1123
    %v1604 = vpack.c.b16 %v1132, %v1124
    %v1605 = vpack.c.b16 %v1141, %v1133
    %v1606 = vpack.c.b16 %v1142, %v1134
    %v1607 = vpack.c.b16 %v1143, %v1135
    %v1608 = vpack.c.b16 %v1144, %v1136
    %v1609 = vpack.c.b16 %v1145, %v1137
    %v1610 = vpack.c.b16 %v1146, %v1138
    %v1611 = vpack.c.b16 %v1147, %v1139
    %v1612 = vpack.c.b16 %v1148, %v1140
    %v1613 = vpack.c.b16 %v1157, %v1149
    %v1614 = vpack.c.b16 %v1158, %v1150
    %v1615 = vpack.c.b16 %v1159, %v1151
    %v1616 = vpack.c.b16 %v1160, %v1152
    %v1617 = vpack.c.b16 %v1161, %v1153
    %v1618 = vpack.c.b16 %v1162, %v1154
    %v1619 = vpack.c.b16 %v1163, %v1155
    %v1620 = vpack.c.b16 %v1164, %v1156
    %v1621 = vpack.c.b16 %v1173, %v1165
    %v1622 = vpack.c.b16 %v1174, %v1166
    %v1623 = vpack.c.b16 %v1175, %v1167
    %v1624 = vpack.c.b16 %v1176, %v1168
    %v1625 = vpack.c.b16 %v1177, %v1169
    %v1626 = vpack.c.b16 %v1178, %v1170
    %v1627 = vpack.c.b16 %v1179, %v1171
    %v1628 = vpack.c.b16 %v1180, %v1172
    %v1629 = vpack.c.b16 %v1189, %v1181
    %v1630 = vpack.c.b16 %v1190, %v1182
    %v1631 = vpack.c.b16 %v1191, %v1183
    %v1632 = vpack.c.b16 %v1192, %v1184
    %v1633 = vpack.c.b16 %v1193, %v1185
    %v1634 = vpack.c.b16 %v1194, %v1186
    %v1635 = vpack.c.b16 %v1195, %v1187
    %v1636 = vpack.c.b16 %v1196, %v1188
    %v1637 = vpack.c.b16 %v1205, %v1197
    %v1638 = vpack.c.b16 %v1206, %v1198
    %v1639 = vpack.c.b16 %v1207, %v1199
    %v1640 = vpack.c.b16 %v1208, %v1200
    %v1641 = vpack.c.b16 %v1209, %v1201
    %v1642 = vpack.c.b16 %v1210, %v1202
    %v1643 = vpack.c.b16 %v1211, %v1203
    %v1644 = vpack.c.b16 %v1212, %v1204
    %v1645 = vpack.c.b16 %v1221, %v1213
    %v1646 = vpack.c.b16 %v1222, %v1214
    %v1647 = vpack.c.b16 %v1223, %v1215
    %v1648 = vpack.c.b16 %v1224, %v1216
    %v1649 = vpack.c.b16 %v1225, %v1217
    %v1650 = vpack.c.b16 %v1226, %v1218
    %v1651 = vpack.c.b16 %v1227, %v1219
    %v1652 = vpack.c.b16 %v1228, %v1220
    %v1653 = vpack.c.b16 %v1237, %v1229
    %v1654 = vpack.c.b16 %v1238, %v1230
    %v1655 = vpack.c.b16 %v1239, %v1231
    %v1656 = vpack.c.b16 %v1240, %v1232
    %v1657 = vpack.c.b16 %v1241, %v1233
    %v1658 = vpack.c.b16 %v1242, %v1234
    %v1659 = vpack.c.b16 %v1243, %v1235
    %v1660 = vpack.c.b16 %v1244, %v1236
    %v1661 = vpack.c.b16 %v1253, %v1245
    %v1662 = vpack.c.b16 %v1254, %v1246
    %v1663 = vpack.c.b16 %v1255, %v1247
    %v1664 = vpack.c.b16 %v1256, %v1248
    %v1665 = vpack.c.b16 %v1257, %v1249
    %v1666 = vpack.c.b16 %v1258, %v1250
    %v1667 = vpack.c.b16 %v1259, %v1251
    %v1668 = vpack.c.b16 %v1260, %v1252
    %v1669 = vpack.c.b16 %v1269, %v1261
    %v1670 = vpack.c.b16 %v1270, %v1262
    %v1671 = vpack.c.b16 %v1271, %v1263
    %v1672 = vpack.c.b16 %v1272, %v1264
    %v1673 = vpack.c.b16 %v1273, %v1265
    %v1674 = vpack.c.b16 %v1274, %v1266
    %v1675 = vpack.c.b16 %v1275, %v1267
    %v1676 = vpack.c.b16 %v1276, %v1268
    %v1677 = vpack.c.b16 %v1285, %v1277
    %v1678 = vpack.c.b16 %v1286, %v1278
    %v1679 = vpack.c.b16 %v1287, %v1279
    %v1680 = vpack.c.b16 %v1288, %v1280
    %v1681 = vpack.c.b16 %v1289, %v1281
    %v1682 = vpack.c.b16 %v1290, %v1282
    %v1683 = vpack.c.b16 %v1291, %v1283
    %v1684 = vpack.c.b16 %v1292, %v1284
    %v1685 = vpack.c.b16 %v1301, %v1293
    %v1686 = vpack.c.b16 %v1302, %v1294
    %v1687 = vpack.c.b16 %v1303, %v1295
    %v1688 = vpack.c.b16 %v1304, %v1296
    %v1689 = vpack.c.b16 %v1305, %v1297
    %v1690 = vpack.c.b16 %v1306, %v1298
    %v1691 = vpack.c.b16 %v1307, %v1299
    %v1692 = vpack.c.b16 %v1308, %v1300
    %v1693 = vpack.c.b16 %v1317, %v1309
    %v1694 = vpack.c.b16 %v1318, %v1310
    %v1695 = vpack.c.b16 %v1319, %v1311
    %v1696 = vpack.c.b16 %v1320, %v1312
    %v1697 = vpack.c.b16 %v1321, %v1313
    %v1698 = vpack.c.b16 %v1322, %v1314
    %v1699 = vpack.c.b16 %v1323, %v1315
    %v1700 = vpack.c.b16 %v1324, %v1316
    %v1701 = vpack.c.b16 %v1333, %v1325
    %v1702 = vpack.c.b16 %v1334, %v1326
    %v1703 = vpack.c.b16 %v1335, %v1327
    %v1704 = vpack.c.b16 %v1336, %v1328
    %v1705 = vpack.c.b16 %v1337, %v1329
    %v1706 = vpack.c.b16 %v1338, %v1330
    %v1707 = vpack.c.b16 %v1339, %v1331
    %v1708 = vpack.c.b16 %v1340, %v1332
    %v1709 = vpack.c.b16 %v1349, %v1341
    %v1710 = vpack.c.b16 %v1350, %v1342
    %v1711 = vpack.c.b16 %v1351, %v1343
    %v1712 = vpack.c.b16 %v1352, %v1344
    %v1713 = vpack.c.b16 %v1353, %v1345
    %v1714 = vpack.c.b16 %v1354, %v1346
    %v1715 = vpack.c.b16 %v1355, %v1347
    %v1716 = vpack.c.b16 %v1356, %v1348
    %v1717 = vpack.c.b16 %v1365, %v1357
    %v1718 = vpack.c.b16 %v1366, %v1358
    %v1719 = vpack.c.b16 %v1367, %v1359
    %v1720 = vpack.c.b16 %v1368, %v1360
    %v1721 = vpack.c.b16 %v1369, %v1361
    %v1722 = vpack.c.b16 %v1370, %v1362
    %v1723 = vpack.c.b16 %v1371, %v1363
    %v1724 = vpack.c.b16 %v1372, %v1364
    %v1725 = vpack.c.b16 %v1381, %v1373
    %v1726 = vpack.c.b16 %v1382, %v1374
    %v1727 = vpack.c.b16 %v1383, %v1375
    %v1728 = vpack.c.b16 %v1384, %v1376
    %v1729 = vpack.c.b16 %v1385, %v1377
    %v1730 = vpack.c.b16 %v1386, %v1378
    %v1731 = vpack.c.b16 %v1387, %v1379
    %v1732 = vpack.c.b16 %v1388, %v1380
    %v1733 = vpack.c.b16 %v1397, %v1389
    %v1734 = vpack.c.b16 %v1398, %v1390
    %v1735 = vpack.c.b16 %v1399, %v1391
    %v1736 = vpack.c.b16 %v1400, %v1392
    %v1737 = vpack.c.b16 %v1401, %v1393
    %v1738 = vpack.c.b16 %v1402, %v1394
    %v1739 = vpack.c.b16 %v1403, %v1395
    %v1740 = vpack.c.b16 %v1404, %v1396
    %v1741 = vpack.c.b16 %v1413, %v1405
    %v1742 = vpack.c.b16 %v1414, %v1406
    %v1743 = vpack.c.b16 %v1415, %v1407
    %v1744 = vpack.c.b16 %v1416, %v1408
    %v1745 = vpack.c.b16 %v1417, %v1409
    %v1746 = vpack.c.b16 %v1418, %v1410
    %v1747 = vpack.c.b16 %v1419, %v1411
    %v1748 = vpack.c.b16 %v1420, %v1412
    %v1749 = vpack.c.b16 %v1429, %v1421
    %v1750 = vpack.c.b16 %v1430, %v1422
    %v1751 = vpack.c.b16 %v1431, %v1423
    %v1752 = vpack.c.b16 %v1432, %v1424
    %v1753 = vpack.c.b16 %v1433, %v1425
    %v1754 = vpack.c.b16 %v1434, %v1426
    %v1755 = vpack.c.b16 %v1435, %v1427
    %v1756 = vpack.c.b16 %v1436, %v1428
    %2077 = vmatprep.subr.bf16.mxu0 %v1438
    %2078 = vmatpush1.bf16.msra.mxu0 %v1437
    %2079 = vmatprep.subr.bf16.mxu0 %v1446
    %2080 = vmatpush1.bf16.msra.mxu0 %v1445
    %2081 = vmatprep.subr.bf16.mxu0 %v1454
    %2082 = vmatpush1.bf16.msra.mxu0 %v1453
    %2083 = vmatprep.subr.bf16.mxu0 %v1462
    %2084 = vmatpush1.bf16.msra.mxu0 %v1461
    %2085 = vmatprep.subr.bf16.mxu0 %v1470
    %2086 = vmatpush1.bf16.msra.mxu0 %v1469
    %2087 = vmatprep.subr.bf16.mxu0 %v1478
    %2088 = vmatpush1.bf16.msra.mxu0 %v1477
    %2089 = vmatprep.subr.bf16.mxu0 %v1486
    %2090 = vmatpush1.bf16.msra.mxu0 %v1485
    %2091 = vmatprep.subr.bf16.mxu0 %v1494
    %2092 = vmatpush1.bf16.msra.mxu0 %v1493
    %2093 = vmatprep.subr.bf16.mxu0 %v1502
    %2094 = vmatpush1.bf16.msra.mxu0 %v1501
    %2095 = vmatprep.subr.bf16.mxu0 %v1510
    %2096 = vmatpush1.bf16.msra.mxu0 %v1509
    %2097 = vmatprep.subr.bf16.mxu0 %v1518
    %2098 = vmatpush1.bf16.msra.mxu0 %v1517
    %2099 = vmatprep.subr.bf16.mxu0 %v1526
    %2100 = vmatpush1.bf16.msra.mxu0 %v1525
    %2101 = vmatprep.subr.bf16.mxu0 %v1534
    %2102 = vmatpush1.bf16.msra.mxu0 %v1533
    %2103 = vmatprep.subr.bf16.mxu0 %v1542
    %2104 = vmatpush1.bf16.msra.mxu0 %v1541
    %2105 = vmatprep.subr.bf16.mxu0 %v1550
    %2106 = vmatpush1.bf16.msra.mxu0 %v1549
    %2107 = vmatprep.subr.bf16.mxu0 %v1558
    %2108 = vmatpush1.bf16.msra.mxu0 %v1557
    %2109 = vmatprep.mubr.bf16.mxu0 %v111
    %2110 = vmatmul.mubr.bf16.gmra.mrb[0].mxu0 %v110
    %v2111 = vpop.f32.mrb[0].mxu0
    %v2112 = vadd.f32 %v440, %v2111
    %v2113 = vpop.f32.mrb[0].mxu0
    %v2114 = vadd.f32 %v444, %v2113
    %v2115 = vpop.f32.mrb[0].mxu0
    %v2116 = vpop.f32.mrb[0].mxu0
    %2117 = vdwg.mxu0
    %2118 = vmatprep.subr.bf16.mxu0 %v1566
    %2119 = vmatpush1.bf16.msra.mxu0 %v1565
    %2120 = vmatprep.subr.bf16.mxu0 %v1574
    %2121 = vmatpush1.bf16.msra.mxu0 %v1573
    %2122 = vmatprep.subr.bf16.mxu0 %v1582
    %2123 = vmatpush1.bf16.msra.mxu0 %v1581
    %2124 = vmatprep.subr.bf16.mxu0 %v1590
    %2125 = vmatpush1.bf16.msra.mxu0 %v1589
    %2126 = vmatprep.subr.bf16.mxu0 %v1598
    %2127 = vmatpush1.bf16.msra.mxu0 %v1597
    %2128 = vmatprep.subr.bf16.mxu0 %v1606
    %2129 = vmatpush1.bf16.msra.mxu0 %v1605
    %2130 = vmatprep.subr.bf16.mxu0 %v1614
    %2131 = vmatpush1.bf16.msra.mxu0 %v1613
    %2132 = vmatprep.subr.bf16.mxu0 %v1622
    %2133 = vmatpush1.bf16.msra.mxu0 %v1621
    %2134 = vmatprep.subr.bf16.mxu0 %v1630
    %2135 = vmatpush1.bf16.msra.mxu0 %v1629
    %2136 = vmatprep.subr.bf16.mxu0 %v1638
    %2137 = vmatpush1.bf16.msra.mxu0 %v1637
    %2138 = vmatprep.subr.bf16.mxu0 %v1646
    %2139 = vmatpush1.bf16.msra.mxu0 %v1645
    %2140 = vmatprep.subr.bf16.mxu0 %v1654
    %2141 = vmatpush1.bf16.msra.mxu0 %v1653
    %2142 = vmatprep.subr.bf16.mxu0 %v1662
    %2143 = vmatpush1.bf16.msra.mxu0 %v1661
    %2144 = vmatprep.subr.bf16.mxu0 %v1670
    %2145 = vmatpush1.bf16.msra.mxu0 %v1669
    %2146 = vmatprep.subr.bf16.mxu0 %v1678
    %2147 = vmatpush1.bf16.msra.mxu0 %v1677
    %2148 = vmatprep.subr.bf16.mxu0 %v1686
    %2149 = vmatpush1.bf16.msra.mxu0 %v1685
    %2150 = vmatprep.mubr.bf16.mxu0 %v113
    %2151 = vmatmul.mubr.bf16.gmra.mrb[0].mxu0 %v112
    %v2152 = vpop.f32.mrb[0].mxu0
    %v2153 = vadd.f32 %v2112, %v2152
    %v2154 = vpop.f32.mrb[0].mxu0
    %v2155 = vadd.f32 %v2114, %v2154
    %v2156 = vpop.f32.mrb[0].mxu0
    %v2157 = vpop.f32.mrb[0].mxu0
    %2158 = vdwg.mxu0
    %2159 = vmatprep.subr.bf16.mxu0 %v1694
    %2160 = vmatpush1.bf16.msra.mxu0 %v1693
    %2161 = vmatprep.subr.bf16.mxu0 %v1702
    %2162 = vmatpush1.bf16.msra.mxu0 %v1701
    %2163 = vmatprep.subr.bf16.mxu0 %v1710
    %2164 = vmatpush1.bf16.msra.mxu0 %v1709
    %2165 = vmatprep.subr.bf16.mxu0 %v1718
    %2166 = vmatpush1.bf16.msra.mxu0 %v1717
    %2167 = vmatprep.subr.bf16.mxu0 %v1726
    %2168 = vmatpush1.bf16.msra.mxu0 %v1725
    %2169 = vmatprep.subr.bf16.mxu0 %v1734
    %2170 = vmatpush1.bf16.msra.mxu0 %v1733
    %2171 = vmatprep.subr.bf16.mxu0 %v1742
    %2172 = vmatpush1.bf16.msra.mxu0 %v1741
    %2173 = vmatprep.subr.bf16.mxu0 %v1750
    %2174 = vmatpush1.bf16.msra.mxu0 %v1749
    %2175 = vmatprep.subr.bf16.mxu0 0
    %2176 = vmatpush1.bf16.msra.mxu0 0
    %2177 = vmatprep.subr.bf16.mxu0 0
    %2178 = vmatpush1.bf16.msra.mxu0 0
    %2179 = vmatprep.subr.bf16.mxu0 0
    %2180 = vmatpush1.bf16.msra.mxu0 0
    %2181 = vmatprep.subr.bf16.mxu0 0
    %2182 = vmatpush1.bf16.msra.mxu0 0
    %2183 = vmatprep.subr.bf16.mxu0 0
    %2184 = vmatpush1.bf16.msra.mxu0 0
    %2185 = vmatprep.subr.bf16.mxu0 0
    %2186 = vmatpush1.bf16.msra.mxu0 0
    %2187 = vmatprep.subr.bf16.mxu0 0
    %2188 = vmatpush1.bf16.msra.mxu0 0
    %2189 = vmatprep.subr.bf16.mxu0 0
    %2190 = vmatpush1.bf16.msra.mxu0 0
    %2191 = vmatprep.mubr.bf16.mxu0 0
    %2192 = vmatmul.mubr.bf16.gmra.mrb[0].mxu0 %v114
    %v2193 = vpop.f32.mrb[0].mxu0
    %v2194 = vadd.f32 %v2153, %v2193
    %v2195 = vpop.f32.mrb[0].mxu0
    %v2196 = vadd.f32 %v2155, %v2195
    %v2197 = vpop.f32.mrb[0].mxu0
    %v2198 = vpop.f32.mrb[0].mxu0
    %2199 = vdwg.mxu0
    %2200 = vmatprep.subr.bf16.mxu0 %v1440
    %2201 = vmatpush1.bf16.msra.mxu0 %v1439
    %2202 = vmatprep.subr.bf16.mxu0 %v1448
    %2203 = vmatpush1.bf16.msra.mxu0 %v1447
    %2204 = vmatprep.subr.bf16.mxu0 %v1456
    %2205 = vmatpush1.bf16.msra.mxu0 %v1455
    %2206 = vmatprep.subr.bf16.mxu0 %v1464
    %2207 = vmatpush1.bf16.msra.mxu0 %v1463
    %2208 = vmatprep.subr.bf16.mxu0 %v1472
    %2209 = vmatpush1.bf16.msra.mxu0 %v1471
    %2210 = vmatprep.subr.bf16.mxu0 %v1480
    %2211 = vmatpush1.bf16.msra.mxu0 %v1479
    %2212 = vmatprep.subr.bf16.mxu0 %v1488
    %2213 = vmatpush1.bf16.msra.mxu0 %v1487
    %2214 = vmatprep.subr.bf16.mxu0 %v1496
    %2215 = vmatpush1.bf16.msra.mxu0 %v1495
    %2216 = vmatprep.subr.bf16.mxu0 %v1504
    %2217 = vmatpush1.bf16.msra.mxu0 %v1503
    %2218 = vmatprep.subr.bf16.mxu0 %v1512
    %2219 = vmatpush1.bf16.msra.mxu0 %v1511
    %2220 = vmatprep.subr.bf16.mxu0 %v1520
    %2221 = vmatpush1.bf16.msra.mxu0 %v1519
    %2222 = vmatprep.subr.bf16.mxu0 %v1528
    %2223 = vmatpush1.bf16.msra.mxu0 %v1527
    %2224 = vmatprep.subr.bf16.mxu0 %v1536
    %2225 = vmatpush1.bf16.msra.mxu0 %v1535
    %2226 = vmatprep.subr.bf16.mxu0 %v1544
    %2227 = vmatpush1.bf16.msra.mxu0 %v1543
    %2228 = vmatprep.subr.bf16.mxu0 %v1552
    %2229 = vmatpush1.bf16.msra.mxu0 %v1551
    %2230 = vmatprep.subr.bf16.mxu0 %v1560
    %2231 = vmatpush1.bf16.msra.mxu0 %v1559
    %2232 = vmatprep.mubr.bf16.mxu0 %v111
    %2233 = vmatmul.mubr.bf16.gmra.mrb[0].mxu0 %v110
    %v2234 = vpop.f32.mrb[0].mxu0
    %v2235 = vadd.f32 %v448, %v2234
    %v2236 = vpop.f32.mrb[0].mxu0
    %v2237 = vadd.f32 %v452, %v2236
    %v2238 = vpop.f32.mrb[0].mxu0
    %v2239 = vpop.f32.mrb[0].mxu0
    %2240 = vdwg.mxu0
    %2241 = vmatprep.subr.bf16.mxu0 %v1568
    %2242 = vmatpush1.bf16.msra.mxu0 %v1567
    %2243 = vmatprep.subr.bf16.mxu0 %v1576
    %2244 = vmatpush1.bf16.msra.mxu0 %v1575
    %2245 = vmatprep.subr.bf16.mxu0 %v1584
    %2246 = vmatpush1.bf16.msra.mxu0 %v1583
    %2247 = vmatprep.subr.bf16.mxu0 %v1592
    %2248 = vmatpush1.bf16.msra.mxu0 %v1591
    %2249 = vmatprep.subr.bf16.mxu0 %v1600
    %2250 = vmatpush1.bf16.msra.mxu0 %v1599
    %2251 = vmatprep.subr.bf16.mxu0 %v1608
    %2252 = vmatpush1.bf16.msra.mxu0 %v1607
    %2253 = vmatprep.subr.bf16.mxu0 %v1616
    %2254 = vmatpush1.bf16.msra.mxu0 %v1615
    %2255 = vmatprep.subr.bf16.mxu0 %v1624
    %2256 = vmatpush1.bf16.msra.mxu0 %v1623
    %2257 = vmatprep.subr.bf16.mxu0 %v1632
    %2258 = vmatpush1.bf16.msra.mxu0 %v1631
    %2259 = vmatprep.subr.bf16.mxu0 %v1640
    %2260 = vmatpush1.bf16.msra.mxu0 %v1639
    %2261 = vmatprep.subr.bf16.mxu0 %v1648
    %2262 = vmatpush1.bf16.msra.mxu0 %v1647
    %2263 = vmatprep.subr.bf16.mxu0 %v1656
    %2264 = vmatpush1.bf16.msra.mxu0 %v1655
    %2265 = vmatprep.subr.bf16.mxu0 %v1664
    %2266 = vmatpush1.bf16.msra.mxu0 %v1663
    %2267 = vmatprep.subr.bf16.mxu0 %v1672
    %2268 = vmatpush1.bf16.msra.mxu0 %v1671
    %2269 = vmatprep.subr.bf16.mxu0 %v1680
    %2270 = vmatpush1.bf16.msra.mxu0 %v1679
    %2271 = vmatprep.subr.bf16.mxu0 %v1688
    %2272 = vmatpush1.bf16.msra.mxu0 %v1687
    %2273 = vmatprep.mubr.bf16.mxu0 %v113
    %2274 = vmatmul.mubr.bf16.gmra.mrb[0].mxu0 %v112
    %v2275 = vpop.f32.mrb[0].mxu0
    %v2276 = vadd.f32 %v2235, %v2275
    %v2277 = vpop.f32.mrb[0].mxu0
    %v2278 = vadd.f32 %v2237, %v2277
    %v2279 = vpop.f32.mrb[0].mxu0
    %v2280 = vpop.f32.mrb[0].mxu0
    %2281 = vdwg.mxu0
    %2282 = vmatprep.subr.bf16.mxu0 %v1696
    %2283 = vmatpush1.bf16.msra.mxu0 %v1695
    %2284 = vmatprep.subr.bf16.mxu0 %v1704
    %2285 = vmatpush1.bf16.msra.mxu0 %v1703
    %2286 = vmatprep.subr.bf16.mxu0 %v1712
    %2287 = vmatpush1.bf16.msra.mxu0 %v1711
    %2288 = vmatprep.subr.bf16.mxu0 %v1720
    %2289 = vmatpush1.bf16.msra.mxu0 %v1719
    %2290 = vmatprep.subr.bf16.mxu0 %v1728
    %2291 = vmatpush1.bf16.msra.mxu0 %v1727
    %2292 = vmatprep.subr.bf16.mxu0 %v1736
    %2293 = vmatpush1.bf16.msra.mxu0 %v1735
    %2294 = vmatprep.subr.bf16.mxu0 %v1744
    %2295 = vmatpush1.bf16.msra.mxu0 %v1743
    %2296 = vmatprep.subr.bf16.mxu0 %v1752
    %2297 = vmatpush1.bf16.msra.mxu0 %v1751
    %2298 = vmatprep.subr.bf16.mxu0 0
    %2299 = vmatpush1.bf16.msra.mxu0 0
    %2300 = vmatprep.subr.bf16.mxu0 0
    %2301 = vmatpush1.bf16.msra.mxu0 0
    %2302 = vmatprep.subr.bf16.mxu0 0
    %2303 = vmatpush1.bf16.msra.mxu0 0
    %2304 = vmatprep.subr.bf16.mxu0 0
    %2305 = vmatpush1.bf16.msra.mxu0 0
    %2306 = vmatprep.subr.bf16.mxu0 0
    %2307 = vmatpush1.bf16.msra.mxu0 0
    %2308 = vmatprep.subr.bf16.mxu0 0
    %2309 = vmatpush1.bf16.msra.mxu0 0
    %2310 = vmatprep.subr.bf16.mxu0 0
    %2311 = vmatpush1.bf16.msra.mxu0 0
    %2312 = vmatprep.subr.bf16.mxu0 0
    %2313 = vmatpush1.bf16.msra.mxu0 0
    %2314 = vmatprep.mubr.bf16.mxu0 0
    %2315 = vmatmul.mubr.bf16.gmra.mrb[0].mxu0 %v114
    %v2316 = vpop.f32.mrb[0].mxu0
    %v2317 = vadd.f32 %v2276, %v2316
    %v2318 = vpop.f32.mrb[0].mxu0
    %v2319 = vadd.f32 %v2278, %v2318
    %v2320 = vpop.f32.mrb[0].mxu0
    %v2321 = vpop.f32.mrb[0].mxu0
    %2322 = vdwg.mxu0
    %2323 = vmatprep.subr.bf16.mxu0 %v1442
    %2324 = vmatpush1.bf16.msra.mxu0 %v1441
    %2325 = vmatprep.subr.bf16.mxu0 %v1450
    %2326 = vmatpush1.bf16.msra.mxu0 %v1449
    %2327 = vmatprep.subr.bf16.mxu0 %v1458
    %2328 = vmatpush1.bf16.msra.mxu0 %v1457
    %2329 = vmatprep.subr.bf16.mxu0 %v1466
    %2330 = vmatpush1.bf16.msra.mxu0 %v1465
    %2331 = vmatprep.subr.bf16.mxu0 %v1474
    %2332 = vmatpush1.bf16.msra.mxu0 %v1473
    %2333 = vmatprep.subr.bf16.mxu0 %v1482
    %2334 = vmatpush1.bf16.msra.mxu0 %v1481
    %2335 = vmatprep.subr.bf16.mxu0 %v1490
    %2336 = vmatpush1.bf16.msra.mxu0 %v1489
    %2337 = vmatprep.subr.bf16.mxu0 %v1498
    %2338 = vmatpush1.bf16.msra.mxu0 %v1497
    %2339 = vmatprep.subr.bf16.mxu0 %v1506
    %2340 = vmatpush1.bf16.msra.mxu0 %v1505
    %2341 = vmatprep.subr.bf16.mxu0 %v1514
    %2342 = vmatpush1.bf16.msra.mxu0 %v1513
    %2343 = vmatprep.subr.bf16.mxu0 %v1522
    %2344 = vmatpush1.bf16.msra.mxu0 %v1521
    %2345 = vmatprep.subr.bf16.mxu0 %v1530
    %2346 = vmatpush1.bf16.msra.mxu0 %v1529
    %2347 = vmatprep.subr.bf16.mxu0 %v1538
    %2348 = vmatpush1.bf16.msra.mxu0 %v1537
    %2349 = vmatprep.subr.bf16.mxu0 %v1546
    %2350 = vmatpush1.bf16.msra.mxu0 %v1545
    %2351 = vmatprep.subr.bf16.mxu0 %v1554
    %2352 = vmatpush1.bf16.msra.mxu0 %v1553
    %2353 = vmatprep.subr.bf16.mxu0 %v1562
    %2354 = vmatpush1.bf16.msra.mxu0 %v1561
    %2355 = vmatprep.mubr.bf16.mxu0 %v111
    %2356 = vmatmul.mubr.bf16.gmra.mrb[0].mxu0 %v110
    %v2357 = vpop.f32.mrb[0].mxu0
    %v2358 = vadd.f32 %v456, %v2357
    %v2359 = vpop.f32.mrb[0].mxu0
    %v2360 = vadd.f32 %v460, %v2359
    %v2361 = vpop.f32.mrb[0].mxu0
    %v2362 = vpop.f32.mrb[0].mxu0
    %2363 = vdwg.mxu0
    %2364 = vmatprep.subr.bf16.mxu0 %v1570
    %2365 = vmatpush1.bf16.msra.mxu0 %v1569
    %2366 = vmatprep.subr.bf16.mxu0 %v1578
    %2367 = vmatpush1.bf16.msra.mxu0 %v1577
    %2368 = vmatprep.subr.bf16.mxu0 %v1586
    %2369 = vmatpush1.bf16.msra.mxu0 %v1585
    %2370 = vmatprep.subr.bf16.mxu0 %v1594
    %2371 = vmatpush1.bf16.msra.mxu0 %v1593
    %2372 = vmatprep.subr.bf16.mxu0 %v1602
    %2373 = vmatpush1.bf16.msra.mxu0 %v1601
    %2374 = vmatprep.subr.bf16.mxu0 %v1610
    %2375 = vmatpush1.bf16.msra.mxu0 %v1609
    %2376 = vmatprep.subr.bf16.mxu0 %v1618
    %2377 = vmatpush1.bf16.msra.mxu0 %v1617
    %2378 = vmatprep.subr.bf16.mxu0 %v1626
    %2379 = vmatpush1.bf16.msra.mxu0 %v1625
    %2380 = vmatprep.subr.bf16.mxu0 %v1634
    %2381 = vmatpush1.bf16.msra.mxu0 %v1633
    %2382 = vmatprep.subr.bf16.mxu0 %v1642
    %2383 = vmatpush1.bf16.msra.mxu0 %v1641
    %2384 = vmatprep.subr.bf16.mxu0 %v1650
    %2385 = vmatpush1.bf16.msra.mxu0 %v1649
    %2386 = vmatprep.subr.bf16.mxu0 %v1658
    %2387 = vmatpush1.bf16.msra.mxu0 %v1657
    %2388 = vmatprep.subr.bf16.mxu0 %v1666
    %2389 = vmatpush1.bf16.msra.mxu0 %v1665
    %2390 = vmatprep.subr.bf16.mxu0 %v1674
    %2391 = vmatpush1.bf16.msra.mxu0 %v1673
    %2392 = vmatprep.subr.bf16.mxu0 %v1682
    %2393 = vmatpush1.bf16.msra.mxu0 %v1681
    %2394 = vmatprep.subr.bf16.mxu0 %v1690
    %2395 = vmatpush1.bf16.msra.mxu0 %v1689
    %2396 = vmatprep.mubr.bf16.mxu0 %v113
    %2397 = vmatmul.mubr.bf16.gmra.mrb[0].mxu0 %v112
    %v2398 = vpop.f32.mrb[0].mxu0
    %v2399 = vadd.f32 %v2358, %v2398
    %v2400 = vpop.f32.mrb[0].mxu0
    %v2401 = vadd.f32 %v2360, %v2400
    %v2402 = vpop.f32.mrb[0].mxu0
    %v2403 = vpop.f32.mrb[0].mxu0
    %2404 = vdwg.mxu0
    %2405 = vmatprep.subr.bf16.mxu0 %v1698
    %2406 = vmatpush1.bf16.msra.mxu0 %v1697
    %2407 = vmatprep.subr.bf16.mxu0 %v1706
    %2408 = vmatpush1.bf16.msra.mxu0 %v1705
    %2409 = vmatprep.subr.bf16.mxu0 %v1714
    %2410 = vmatpush1.bf16.msra.mxu0 %v1713
    %2411 = vmatprep.subr.bf16.mxu0 %v1722
    %2412 = vmatpush1.bf16.msra.mxu0 %v1721
    %2413 = vmatprep.subr.bf16.mxu0 %v1730
    %2414 = vmatpush1.bf16.msra.mxu0 %v1729
    %2415 = vmatprep.subr.bf16.mxu0 %v1738
    %2416 = vmatpush1.bf16.msra.mxu0 %v1737
    %2417 = vmatprep.subr.bf16.mxu0 %v1746
    %2418 = vmatpush1.bf16.msra.mxu0 %v1745
    %2419 = vmatprep.subr.bf16.mxu0 %v1754
    %2420 = vmatpush1.bf16.msra.mxu0 %v1753
    %2421 = vmatprep.subr.bf16.mxu0 0
    %2422 = vmatpush1.bf16.msra.mxu0 0
    %2423 = vmatprep.subr.bf16.mxu0 0
    %2424 = vmatpush1.bf16.msra.mxu0 0
    %2425 = vmatprep.subr.bf16.mxu0 0
    %2426 = vmatpush1.bf16.msra.mxu0 0
    %2427 = vmatprep.subr.bf16.mxu0 0
    %2428 = vmatpush1.bf16.msra.mxu0 0
    %2429 = vmatprep.subr.bf16.mxu0 0
    %2430 = vmatpush1.bf16.msra.mxu0 0
    %2431 = vmatprep.subr.bf16.mxu0 0
    %2432 = vmatpush1.bf16.msra.mxu0 0
    %2433 = vmatprep.subr.bf16.mxu0 0
    %2434 = vmatpush1.bf16.msra.mxu0 0
    %2435 = vmatprep.subr.bf16.mxu0 0
    %2436 = vmatpush1.bf16.msra.mxu0 0
    %2437 = vmatprep.mubr.bf16.mxu0 0
    %2438 = vmatmul.mubr.bf16.gmra.mrb[0].mxu0 %v114
    %v2439 = vpop.f32.mrb[0].mxu0
    %v2440 = vadd.f32 %v2399, %v2439
    %v2441 = vpop.f32.mrb[0].mxu0
    %v2442 = vadd.f32 %v2401, %v2441
    %v2443 = vpop.f32.mrb[0].mxu0
    %v2444 = vpop.f32.mrb[0].mxu0
    %2445 = vdwg.mxu0
    %2446 = vmatprep.subr.bf16.mxu0 %v1444
    %2447 = vmatpush1.bf16.msra.mxu0 %v1443
    %2448 = vmatprep.subr.bf16.mxu0 %v1452
    %2449 = vmatpush1.bf16.msra.mxu0 %v1451
    %2450 = vmatprep.subr.bf16.mxu0 %v1460
    %2451 = vmatpush1.bf16.msra.mxu0 %v1459
    %2452 = vmatprep.subr.bf16.mxu0 %v1468
    %2453 = vmatpush1.bf16.msra.mxu0 %v1467
    %2454 = vmatprep.subr.bf16.mxu0 %v1476
    %2455 = vmatpush1.bf16.msra.mxu0 %v1475
    %2456 = vmatprep.subr.bf16.mxu0 %v1484
    %2457 = vmatpush1.bf16.msra.mxu0 %v1483
    %2458 = vmatprep.subr.bf16.mxu0 %v1492
    %2459 = vmatpush1.bf16.msra.mxu0 %v1491
    %2460 = vmatprep.subr.bf16.mxu0 %v1500
    %2461 = vmatpush1.bf16.msra.mxu0 %v1499
    %2462 = vmatprep.subr.bf16.mxu0 %v1508
    %2463 = vmatpush1.bf16.msra.mxu0 %v1507
    %2464 = vmatprep.subr.bf16.mxu0 %v1516
    %2465 = vmatpush1.bf16.msra.mxu0 %v1515
    %2466 = vmatprep.subr.bf16.mxu0 %v1524
    %2467 = vmatpush1.bf16.msra.mxu0 %v1523
    %2468 = vmatprep.subr.bf16.mxu0 %v1532
    %2469 = vmatpush1.bf16.msra.mxu0 %v1531
    %2470 = vmatprep.subr.bf16.mxu0 %v1540
    %2471 = vmatpush1.bf16.msra.mxu0 %v1539
    %2472 = vmatprep.subr.bf16.mxu0 %v1548
    %2473 = vmatpush1.bf16.msra.mxu0 %v1547
    %2474 = vmatprep.subr.bf16.mxu0 %v1556
    %2475 = vmatpush1.bf16.msra.mxu0 %v1555
    %2476 = vmatprep.subr.bf16.mxu0 %v1564
    %2477 = vmatpush1.bf16.msra.mxu0 %v1563
    %2478 = vmatprep.mubr.bf16.mxu0 %v111
    %2479 = vmatmul.mubr.bf16.gmra.mrb[0].mxu0 %v110
    %v2480 = vpop.f32.mrb[0].mxu0
    %v2481 = vadd.f32 %v464, %v2480
    %v2482 = vpop.f32.mrb[0].mxu0
    %v2483 = vadd.f32 %v468, %v2482
    %v2484 = vpop.f32.mrb[0].mxu0
    %v2485 = vpop.f32.mrb[0].mxu0
    %2486 = vdwg.mxu0
    %2487 = vmatprep.subr.bf16.mxu0 %v1572
    %2488 = vmatpush1.bf16.msra.mxu0 %v1571
    %2489 = vmatprep.subr.bf16.mxu0 %v1580
    %2490 = vmatpush1.bf16.msra.mxu0 %v1579
    %2491 = vmatprep.subr.bf16.mxu0 %v1588
    %2492 = vmatpush1.bf16.msra.mxu0 %v1587
    %2493 = vmatprep.subr.bf16.mxu0 %v1596
    %2494 = vmatpush1.bf16.msra.mxu0 %v1595
    %2495 = vmatprep.subr.bf16.mxu0 %v1604
    %2496 = vmatpush1.bf16.msra.mxu0 %v1603
    %2497 = vmatprep.subr.bf16.mxu0 %v1612
    %2498 = vmatpush1.bf16.msra.mxu0 %v1611
    %2499 = vmatprep.subr.bf16.mxu0 %v1620
    %2500 = vmatpush1.bf16.msra.mxu0 %v1619
    %2501 = vmatprep.subr.bf16.mxu0 %v1628
    %2502 = vmatpush1.bf16.msra.mxu0 %v1627
    %2503 = vmatprep.subr.bf16.mxu0 %v1636
    %2504 = vmatpush1.bf16.msra.mxu0 %v1635
    %2505 = vmatprep.subr.bf16.mxu0 %v1644
    %2506 = vmatpush1.bf16.msra.mxu0 %v1643
    %2507 = vmatprep.subr.bf16.mxu0 %v1652
    %2508 = vmatpush1.bf16.msra.mxu0 %v1651
    %2509 = vmatprep.subr.bf16.mxu0 %v1660
    %2510 = vmatpush1.bf16.msra.mxu0 %v1659
    %2511 = vmatprep.subr.bf16.mxu0 %v1668
    %2512 = vmatpush1.bf16.msra.mxu0 %v1667
    %2513 = vmatprep.subr.bf16.mxu0 %v1676
    %2514 = vmatpush1.bf16.msra.mxu0 %v1675
    %2515 = vmatprep.subr.bf16.mxu0 %v1684
    %2516 = vmatpush1.bf16.msra.mxu0 %v1683
    %2517 = vmatprep.subr.bf16.mxu0 %v1692
    %2518 = vmatpush1.bf16.msra.mxu0 %v1691
    %2519 = vmatprep.mubr.bf16.mxu0 %v113
    %2520 = vmatmul.mubr.bf16.gmra.mrb[0].mxu0 %v112
    %v2521 = vpop.f32.mrb[0].mxu0
    %v2522 = vadd.f32 %v2481, %v2521
    %v2523 = vpop.f32.mrb[0].mxu0
    %v2524 = vadd.f32 %v2483, %v2523
    %v2525 = vpop.f32.mrb[0].mxu0
    %v2526 = vpop.f32.mrb[0].mxu0
    %2527 = vdwg.mxu0
    %2528 = vmatprep.subr.bf16.mxu0 %v1700
    %2529 = vmatpush1.bf16.msra.mxu0 %v1699
    %2530 = vmatprep.subr.bf16.mxu0 %v1708
    %2531 = vmatpush1.bf16.msra.mxu0 %v1707
    %2532 = vmatprep.subr.bf16.mxu0 %v1716
    %2533 = vmatpush1.bf16.msra.mxu0 %v1715
    %2534 = vmatprep.subr.bf16.mxu0 %v1724
    %2535 = vmatpush1.bf16.msra.mxu0 %v1723
    %2536 = vmatprep.subr.bf16.mxu0 %v1732
    %2537 = vmatpush1.bf16.msra.mxu0 %v1731
    %2538 = vmatprep.subr.bf16.mxu0 %v1740
    %2539 = vmatpush1.bf16.msra.mxu0 %v1739
    %2540 = vmatprep.subr.bf16.mxu0 %v1748
    %2541 = vmatpush1.bf16.msra.mxu0 %v1747
    %2542 = vmatprep.subr.bf16.mxu0 %v1756
    %2543 = vmatpush1.bf16.msra.mxu0 %v1755
    %2544 = vmatprep.subr.bf16.mxu0 0
    %2545 = vmatpush1.bf16.msra.mxu0 0
    %2546 = vmatprep.subr.bf16.mxu0 0
    %2547 = vmatpush1.bf16.msra.mxu0 0
    %2548 = vmatprep.subr.bf16.mxu0 0
    %2549 = vmatpush1.bf16.msra.mxu0 0
    %2550 = vmatprep.subr.bf16.mxu0 0
    %2551 = vmatpush1.bf16.msra.mxu0 0
    %2552 = vmatprep.subr.bf16.mxu0 0
    %2553 = vmatpush1.bf16.msra.mxu0 0
    %2554 = vmatprep.subr.bf16.mxu0 0
    %2555 = vmatpush1.bf16.msra.mxu0 0
    %2556 = vmatprep.subr.bf16.mxu0 0
    %2557 = vmatpush1.bf16.msra.mxu0 0
    %2558 = vmatprep.subr.bf16.mxu0 0
    %2559 = vmatpush1.bf16.msra.mxu0 0
    %2560 = vmatprep.mubr.bf16.mxu0 0
    %2561 = vmatmul.mubr.bf16.gmra.mrb[0].mxu0 %v114
    %v2562 = vpop.f32.mrb[0].mxu0
    %v2563 = vadd.f32 %v2522, %v2562
    %v2564 = vpop.f32.mrb[0].mxu0
    %v2565 = vadd.f32 %v2524, %v2564
    %v2566 = vpop.f32.mrb[0].mxu0
    %v2567 = vpop.f32.mrb[0].mxu0
    %2568 = vdwg.mxu0
    %vm2569 = vcmp.gt.f32.partialorder %v2194, 0.0
    %vm2570 = vcmp.gt.f32.partialorder %v2196, 0.0
    %vm2571 = vcmp.gt.f32.partialorder %v2317, 0.0
    %vm2572 = vcmp.gt.f32.partialorder %v2319, 0.0
    %vm2573 = vcmp.gt.f32.partialorder %v2440, 0.0
    %vm2574 = vcmp.gt.f32.partialorder %v2442, 0.0
    %vm2575 = vcmp.gt.f32.partialorder %v2563, 0.0
    %vm2576 = vcmp.gt.f32.partialorder %v2565, 0.0
    %v2577 = vmul.f32 %v2194, 0.01
    %v2578 = vmul.f32 %v2196, 0.01
    %v2579 = vmul.f32 %v2317, 0.01
    %v2580 = vmul.f32 %v2319, 0.01
    %v2581 = vmul.f32 %v2440, 0.01
    %v2582 = vmul.f32 %v2442, 0.01
    %v2583 = vmul.f32 %v2563, 0.01
    %v2584 = vmul.f32 %v2565, 0.01
    %v2585 = vsel %vm2569, %v2194, %v2577
    %v2586 = vsel %vm2570, %v2196, %v2578
    %v2587 = vsel %vm2571, %v2317, %v2579
    %v2588 = vsel %vm2572, %v2319, %v2580
    %v2589 = vsel %vm2573, %v2440, %v2581
    %v2590 = vsel %vm2574, %v2442, %v2582
    %v2591 = vsel %vm2575, %v2563, %v2583
    %v2592 = vsel %vm2576, %v2565, %v2584
    %v2593 = vpack.c.bf16 %v2585, %v2585
    %v2594 = vpack.c.bf16 %v2586, %v2586
    %v2595 = vpack.c.bf16 %v2587, %v2587
    %v2596 = vpack.c.bf16 %v2588, %v2588
    %v2597 = vpack.c.bf16 %v2589, %v2589
    %v2598 = vpack.c.bf16 %v2590, %v2590
    %v2599 = vpack.c.bf16 %v2591, %v2591
    %v2600 = vpack.c.bf16 %v2592, %v2592
    %v2601 = vld [vmem:[%s3] sm:$0xf]
    %v2602 = vld [vmem:[%s3 + $0x4] sm:$0xf]
    %v2603 = vld [vmem:[%s3 + $0x8] sm:$0xf]
    %v2604 = vld [vmem:[%s3 + $0xc] sm:$0xf]
    %v2605 = vld [vmem:[%s3 + $0x10] sm:$0xf]
    %v2606 = vld [vmem:[%s3 + $0x14] sm:$0xf]
    %v2607 = vld [vmem:[%s3 + $0x18] sm:$0xf]
    %v2608 = vld [vmem:[%s3 + $0x1c] sm:$0xf]
    %v2609 = vld [vmem:[%s3 + $0x20] sm:$0xf]
    %v2610 = vld [vmem:[%s3 + $0x24] sm:$0xf]
    %v2611 = vld [vmem:[%s3 + $0x28] sm:$0xf]
    %v2612 = vld [vmem:[%s3 + $0x2c] sm:$0xf]
    %v2613 = vld [vmem:[%s3 + $0x30] sm:$0xf]
    %v2614 = vld [vmem:[%s3 + $0x34] sm:$0xf]
    %v2615 = vld [vmem:[%s3 + $0x38] sm:$0xf]
    %v2616 = vld [vmem:[%s3 + $0x3c] sm:$0xf]
    %v2617 = vld [vmem:[%s3 + $0x40] sm:$0xf]
    %v2618 = vld [vmem:[%s3 + $0x44] sm:$0xf]
    %v2619 = vld [vmem:[%s3 + $0x48] sm:$0xf]
    %v2620 = vld [vmem:[%s3 + $0x4c] sm:$0xf]
    %v2621 = vld [vmem:[%s3 + $0x50] sm:$0xf]
    %v2622 = vld [vmem:[%s3 + $0x54] sm:$0xf]
    %v2623 = vld [vmem:[%s3 + $0x58] sm:$0xf]
    %v2624 = vld [vmem:[%s3 + $0x5c] sm:$0xf]
    %v2625 = vld [vmem:[%s3 + $0x60] sm:$0xf]
    %v2626 = vld [vmem:[%s3 + $0x64] sm:$0xf]
    %v2627 = vld [vmem:[%s3 + $0x68] sm:$0xf]
    %v2628 = vld [vmem:[%s3 + $0x6c] sm:$0xf]
    %v2629 = vld [vmem:[%s3 + $0x70] sm:$0xf]
    %v2630 = vld [vmem:[%s3 + $0x74] sm:$0xf]
    %v2631 = vld [vmem:[%s3 + $0x78] sm:$0xf]
    %v2632 = vld [vmem:[%s3 + $0x7c] sm:$0xf]
    %v2633 = vld [vmem:[%s3 + $0x80] sm:$0xf]
    %v2634 = vld [vmem:[%s3 + $0x84] sm:$0xf]
    %v2635 = vld [vmem:[%s3 + $0x88] sm:$0xf]
    %v2636 = vld [vmem:[%s3 + $0x8c] sm:$0xf]
    %v2637 = vld [vmem:[%s3 + $0x90] sm:$0xf]
    %v2638 = vld [vmem:[%s3 + $0x94] sm:$0xf]
    %v2639 = vld [vmem:[%s3 + $0x98] sm:$0xf]
    %v2640 = vld [vmem:[%s3 + $0x9c] sm:$0xf]
    %v2641 = vld [vmem:[%s3 + $0xa0] sm:$0xf]
    %v2642 = vld [vmem:[%s3 + $0xa4] sm:$0xf]
    %v2643 = vld [vmem:[%s3 + $0xa8] sm:$0xf]
    %v2644 = vld [vmem:[%s3 + $0xac] sm:$0xf]
    %v2645 = vld [vmem:[%s3 + $0xb0] sm:$0xf]
    %v2646 = vld [vmem:[%s3 + $0xb4] sm:$0xf]
    %v2647 = vld [vmem:[%s3 + $0xb8] sm:$0xf]
    %v2648 = vld [vmem:[%s3 + $0xbc] sm:$0xf]
    %v2649 = vld [vmem:[%s3 + $0xc0] sm:$0xf]
    %v2650 = vld [vmem:[%s3 + $0xc4] sm:$0xf]
    %v2651 = vld [vmem:[%s3 + $0xc8] sm:$0xf]
    %v2652 = vld [vmem:[%s3 + $0xcc] sm:$0xf]
    %v2653 = vld [vmem:[%s3 + $0xd0] sm:$0xf]
    %v2654 = vld [vmem:[%s3 + $0xd4] sm:$0xf]
    %v2655 = vld [vmem:[%s3 + $0xd8] sm:$0xf]
    %v2656 = vld [vmem:[%s3 + $0xdc] sm:$0xf]
    %v2657 = vld [vmem:[%s3 + $0xe0] sm:$0xf]
    %v2658 = vld [vmem:[%s3 + $0xe4] sm:$0xf]
    %v2659 = vld [vmem:[%s3 + $0xe8] sm:$0xf]
    %v2660 = vld [vmem:[%s3 + $0xec] sm:$0xf]
    %v2661 = vld [vmem:[%s3 + $0xf0] sm:$0xf]
    %v2662 = vld [vmem:[%s3 + $0xf4] sm:$0xf]
    %v2663 = vld [vmem:[%s3 + $0xf8] sm:$0xf]
    %v2664 = vld [vmem:[%s3 + $0xfc] sm:$0xf]
    %v2665 = vld [vmem:[%s3 + $0x100] sm:$0xf]
    %v2666 = vld [vmem:[%s3 + $0x104] sm:$0xf]
    %v2667 = vld [vmem:[%s3 + $0x108] sm:$0xf]
    %v2668 = vld [vmem:[%s3 + $0x10c] sm:$0xf]
    %v2669 = vld [vmem:[%s3 + $0x110] sm:$0xf]
    %v2670 = vld [vmem:[%s3 + $0x114] sm:$0xf]
    %v2671 = vld [vmem:[%s3 + $0x118] sm:$0xf]
    %v2672 = vld [vmem:[%s3 + $0x11c] sm:$0xf]
    %v2673 = vld [vmem:[%s3 + $0x120] sm:$0xf]
    %v2674 = vld [vmem:[%s3 + $0x124] sm:$0xf]
    %v2675 = vld [vmem:[%s3 + $0x128] sm:$0xf]
    %v2676 = vld [vmem:[%s3 + $0x12c] sm:$0xf]
    %v2677 = vld [vmem:[%s3 + $0x130] sm:$0xf]
    %v2678 = vld [vmem:[%s3 + $0x134] sm:$0xf]
    %v2679 = vld [vmem:[%s3 + $0x138] sm:$0xf]
    %v2680 = vld [vmem:[%s3 + $0x13c] sm:$0xf]
    %v2681 = vld [vmem:[%s3 + $0x140] sm:$0xf]
    %v2682 = vld [vmem:[%s3 + $0x144] sm:$0xf]
    %v2683 = vld [vmem:[%s3 + $0x148] sm:$0xf]
    %v2684 = vld [vmem:[%s3 + $0x14c] sm:$0xf]
    %v2685 = vld [vmem:[%s3 + $0x150] sm:$0xf]
    %v2686 = vld [vmem:[%s3 + $0x154] sm:$0xf]
    %v2687 = vld [vmem:[%s3 + $0x158] sm:$0xf]
    %v2688 = vld [vmem:[%s3 + $0x15c] sm:$0xf]
    %v2689 = vld [vmem:[%s3 + $0x160] sm:$0xf]
    %v2690 = vld [vmem:[%s3 + $0x164] sm:$0xf]
    %v2691 = vld [vmem:[%s3 + $0x168] sm:$0xf]
    %v2692 = vld [vmem:[%s3 + $0x16c] sm:$0xf]
    %v2693 = vld [vmem:[%s3 + $0x170] sm:$0xf]
    %v2694 = vld [vmem:[%s3 + $0x174] sm:$0xf]
    %v2695 = vld [vmem:[%s3 + $0x178] sm:$0xf]
    %v2696 = vld [vmem:[%s3 + $0x17c] sm:$0xf]
    %v2697 = vld [vmem:[%s3 + $0x180] sm:$0xf]
    %v2698 = vld [vmem:[%s3 + $0x184] sm:$0xf]
    %v2699 = vld [vmem:[%s3 + $0x188] sm:$0xf]
    %v2700 = vld [vmem:[%s3 + $0x18c] sm:$0xf]
    %v2701 = vld [vmem:[%s3 + $0x190] sm:$0xf]
    %v2702 = vld [vmem:[%s3 + $0x194] sm:$0xf]
    %v2703 = vld [vmem:[%s3 + $0x198] sm:$0xf]
    %v2704 = vld [vmem:[%s3 + $0x19c] sm:$0xf]
    %v2705 = vld [vmem:[%s3 + $0x1a0] sm:$0xf]
    %v2706 = vld [vmem:[%s3 + $0x1a4] sm:$0xf]
    %v2707 = vld [vmem:[%s3 + $0x1a8] sm:$0xf]
    %v2708 = vld [vmem:[%s3 + $0x1ac] sm:$0xf]
    %v2709 = vld [vmem:[%s3 + $0x1b0] sm:$0xf]
    %v2710 = vld [vmem:[%s3 + $0x1b4] sm:$0xf]
    %v2711 = vld [vmem:[%s3 + $0x1b8] sm:$0xf]
    %v2712 = vld [vmem:[%s3 + $0x1bc] sm:$0xf]
    %v2713 = vld [vmem:[%s3 + $0x1c0] sm:$0xf]
    %v2714 = vld [vmem:[%s3 + $0x1c4] sm:$0xf]
    %v2715 = vld [vmem:[%s3 + $0x1c8] sm:$0xf]
    %v2716 = vld [vmem:[%s3 + $0x1cc] sm:$0xf]
    %v2717 = vld [vmem:[%s3 + $0x1d0] sm:$0xf]
    %v2718 = vld [vmem:[%s3 + $0x1d4] sm:$0xf]
    %v2719 = vld [vmem:[%s3 + $0x1d8] sm:$0xf]
    %v2720 = vld [vmem:[%s3 + $0x1dc] sm:$0xf]
    %v2721 = vld [vmem:[%s3 + $0x1e0] sm:$0xf]
    %v2722 = vld [vmem:[%s3 + $0x1e4] sm:$0xf]
    %v2723 = vld [vmem:[%s3 + $0x1e8] sm:$0xf]
    %v2724 = vld [vmem:[%s3 + $0x1ec] sm:$0xf]
    %v2725 = vld [vmem:[%s3 + $0x1f0] sm:$0xf]
    %v2726 = vld [vmem:[%s3 + $0x1f4] sm:$0xf]
    %v2727 = vld [vmem:[%s3 + $0x1f8] sm:$0xf]
    %v2728 = vld [vmem:[%s3 + $0x1fc] sm:$0xf]
    %v2729 = vld [vmem:[#allocation7] sm:$0x1]
    %v2731 = vlaneseq
    %v2732 = vshrl.u32 %v2731, 7
    %v2733 = vsub.s32 0, %v2732
    %v2734 = vrot.slane %v2729, %v2733
    %v2864 = vunpack.c.l.b16 %v2601
    %v2865 = vunpack.c.l.b16 %v2602
    %v2866 = vunpack.c.l.b16 %v2603
    %v2867 = vunpack.c.l.b16 %v2604
    %v2868 = vunpack.c.l.b16 %v2605
    %v2869 = vunpack.c.l.b16 %v2606
    %v2870 = vunpack.c.l.b16 %v2607
    %v2871 = vunpack.c.l.b16 %v2608
    %v2872 = vunpack.c.l.b16 %v2609
    %v2873 = vunpack.c.l.b16 %v2610
    %v2874 = vunpack.c.l.b16 %v2611
    %v2875 = vunpack.c.l.b16 %v2612
    %v2876 = vunpack.c.l.b16 %v2613
    %v2877 = vunpack.c.l.b16 %v2614
    %v2878 = vunpack.c.l.b16 %v2615
    %v2879 = vunpack.c.l.b16 %v2616
    %v2880 = vunpack.c.l.b16 %v2617
    %v2881 = vunpack.c.l.b16 %v2618
    %v2882 = vunpack.c.l.b16 %v2619
    %v2883 = vunpack.c.l.b16 %v2620
    %v2884 = vunpack.c.l.b16 %v2621
    %v2885 = vunpack.c.l.b16 %v2622
    %v2886 = vunpack.c.l.b16 %v2623
    %v2887 = vunpack.c.l.b16 %v2624
    %v2888 = vunpack.c.l.b16 %v2625
    %v2889 = vunpack.c.l.b16 %v2626
    %v2890 = vunpack.c.l.b16 %v2627
    %v2891 = vunpack.c.l.b16 %v2628
    %v2892 = vunpack.c.l.b16 %v2629
    %v2893 = vunpack.c.l.b16 %v2630
    %v2894 = vunpack.c.l.b16 %v2631
    %v2895 = vunpack.c.l.b16 %v2632
    %v2896 = vunpack.c.l.b16 %v2633
    %v2897 = vunpack.c.l.b16 %v2634
    %v2898 = vunpack.c.l.b16 %v2635
    %v2899 = vunpack.c.l.b16 %v2636
    %v2900 = vunpack.c.l.b16 %v2637
    %v2901 = vunpack.c.l.b16 %v2638
    %v2902 = vunpack.c.l.b16 %v2639
    %v2903 = vunpack.c.l.b16 %v2640
    %v2904 = vunpack.c.l.b16 %v2641
    %v2905 = vunpack.c.l.b16 %v2642
    %v2906 = vunpack.c.l.b16 %v2643
    %v2907 = vunpack.c.l.b16 %v2644
    %v2908 = vunpack.c.l.b16 %v2645
    %v2909 = vunpack.c.l.b16 %v2646
    %v2910 = vunpack.c.l.b16 %v2647
    %v2911 = vunpack.c.l.b16 %v2648
    %v2912 = vunpack.c.l.b16 %v2649
    %v2913 = vunpack.c.l.b16 %v2650
    %v2914 = vunpack.c.l.b16 %v2651
    %v2915 = vunpack.c.l.b16 %v2652
    %v2916 = vunpack.c.l.b16 %v2653
    %v2917 = vunpack.c.l.b16 %v2654
    %v2918 = vunpack.c.l.b16 %v2655
    %v2919 = vunpack.c.l.b16 %v2656
    %v2920 = vunpack.c.l.b16 %v2657
    %v2921 = vunpack.c.l.b16 %v2658
    %v2922 = vunpack.c.l.b16 %v2659
    %v2923 = vunpack.c.l.b16 %v2660
    %v2924 = vunpack.c.l.b16 %v2661
    %v2925 = vunpack.c.l.b16 %v2662
    %v2926 = vunpack.c.l.b16 %v2663
    %v2927 = vunpack.c.l.b16 %v2664
    %v2928 = vunpack.c.l.b16 %v2665
    %v2929 = vunpack.c.l.b16 %v2666
    %v2930 = vunpack.c.l.b16 %v2667
    %v2931 = vunpack.c.l.b16 %v2668
    %v2932 = vunpack.c.l.b16 %v2669
    %v2933 = vunpack.c.l.b16 %v2670
    %v2934 = vunpack.c.l.b16 %v2671
    %v2935 = vunpack.c.l.b16 %v2672
    %v2936 = vunpack.c.l.b16 %v2673
    %v2937 = vunpack.c.l.b16 %v2674
    %v2938 = vunpack.c.l.b16 %v2675
    %v2939 = vunpack.c.l.b16 %v2676
    %v2940 = vunpack.c.l.b16 %v2677
    %v2941 = vunpack.c.l.b16 %v2678
    %v2942 = vunpack.c.l.b16 %v2679
    %v2943 = vunpack.c.l.b16 %v2680
    %v2944 = vunpack.c.l.b16 %v2681
    %v2945 = vunpack.c.l.b16 %v2682
    %v2946 = vunpack.c.l.b16 %v2683
    %v2947 = vunpack.c.l.b16 %v2684
    %v2948 = vunpack.c.l.b16 %v2685
    %v2949 = vunpack.c.l.b16 %v2686
    %v2950 = vunpack.c.l.b16 %v2687
    %v2951 = vunpack.c.l.b16 %v2688
    %v2952 = vunpack.c.l.b16 %v2689
    %v2953 = vunpack.c.l.b16 %v2690
    %v2954 = vunpack.c.l.b16 %v2691
    %v2955 = vunpack.c.l.b16 %v2692
    %v2956 = vunpack.c.l.b16 %v2693
    %v2957 = vunpack.c.l.b16 %v2694
    %v2958 = vunpack.c.l.b16 %v2695
    %v2959 = vunpack.c.l.b16 %v2696
    %v2960 = vunpack.c.l.b16 %v2697
    %v2961 = vunpack.c.l.b16 %v2698
    %v2962 = vunpack.c.l.b16 %v2699
    %v2963 = vunpack.c.l.b16 %v2700
    %v2964 = vunpack.c.l.b16 %v2701
    %v2965 = vunpack.c.l.b16 %v2702
    %v2966 = vunpack.c.l.b16 %v2703
    %v2967 = vunpack.c.l.b16 %v2704
    %v2968 = vunpack.c.l.b16 %v2705
    %v2969 = vunpack.c.l.b16 %v2706
    %v2970 = vunpack.c.l.b16 %v2707
    %v2971 = vunpack.c.l.b16 %v2708
    %v2972 = vunpack.c.l.b16 %v2709
    %v2973 = vunpack.c.l.b16 %v2710
    %v2974 = vunpack.c.l.b16 %v2711
    %v2975 = vunpack.c.l.b16 %v2712
    %v2976 = vunpack.c.l.b16 %v2713
    %v2977 = vunpack.c.l.b16 %v2714
    %v2978 = vunpack.c.l.b16 %v2715
    %v2979 = vunpack.c.l.b16 %v2716
    %v2980 = vunpack.c.l.b16 %v2717
    %v2981 = vunpack.c.l.b16 %v2718
    %v2982 = vunpack.c.l.b16 %v2719
    %v2983 = vunpack.c.l.b16 %v2720
    %v2984 = vunpack.c.l.b16 %v2721
    %v2985 = vunpack.c.l.b16 %v2722
    %v2986 = vunpack.c.l.b16 %v2723
    %v2987 = vunpack.c.l.b16 %v2724
    %v2988 = vunpack.c.l.b16 %v2725
    %v2989 = vunpack.c.l.b16 %v2726
    %v2990 = vunpack.c.l.b16 %v2727
    %v2991 = vunpack.c.l.b16 %v2728
    %v2992 = vpack.c.b16 %v2865, %v2864
    %v2993 = vpack.c.b16 %v2867, %v2866
    %v2994 = vpack.c.b16 %v2869, %v2868
    %v2995 = vpack.c.b16 %v2871, %v2870
    %v2996 = vpack.c.b16 %v2873, %v2872
    %v2997 = vpack.c.b16 %v2875, %v2874
    %v2998 = vpack.c.b16 %v2877, %v2876
    %v2999 = vpack.c.b16 %v2879, %v2878
    %v3000 = vpack.c.b16 %v2881, %v2880
    %v3001 = vpack.c.b16 %v2883, %v2882
    %v3002 = vpack.c.b16 %v2885, %v2884
    %v3003 = vpack.c.b16 %v2887, %v2886
    %v3004 = vpack.c.b16 %v2889, %v2888
    %v3005 = vpack.c.b16 %v2891, %v2890
    %v3006 = vpack.c.b16 %v2893, %v2892
    %v3007 = vpack.c.b16 %v2895, %v2894
    %v3008 = vpack.c.b16 %v2897, %v2896
    %v3009 = vpack.c.b16 %v2899, %v2898
    %v3010 = vpack.c.b16 %v2901, %v2900
    %v3011 = vpack.c.b16 %v2903, %v2902
    %v3012 = vpack.c.b16 %v2905, %v2904
    %v3013 = vpack.c.b16 %v2907, %v2906
    %v3014 = vpack.c.b16 %v2909, %v2908
    %v3015 = vpack.c.b16 %v2911, %v2910
    %v3016 = vpack.c.b16 %v2913, %v2912
    %v3017 = vpack.c.b16 %v2915, %v2914
    %v3018 = vpack.c.b16 %v2917, %v2916
    %v3019 = vpack.c.b16 %v2919, %v2918
    %v3020 = vpack.c.b16 %v2921, %v2920
    %v3021 = vpack.c.b16 %v2923, %v2922
    %v3022 = vpack.c.b16 %v2925, %v2924
    %v3023 = vpack.c.b16 %v2927, %v2926
    %v3024 = vpack.c.b16 %v2929, %v2928
    %v3025 = vpack.c.b16 %v2931, %v2930
    %v3026 = vpack.c.b16 %v2933, %v2932
    %v3027 = vpack.c.b16 %v2935, %v2934
    %v3028 = vpack.c.b16 %v2937, %v2936
    %v3029 = vpack.c.b16 %v2939, %v2938
    %v3030 = vpack.c.b16 %v2941, %v2940
    %v3031 = vpack.c.b16 %v2943, %v2942
    %v3032 = vpack.c.b16 %v2945, %v2944
    %v3033 = vpack.c.b16 %v2947, %v2946
    %v3034 = vpack.c.b16 %v2949, %v2948
    %v3035 = vpack.c.b16 %v2951, %v2950
    %v3036 = vpack.c.b16 %v2953, %v2952
    %v3037 = vpack.c.b16 %v2955, %v2954
    %v3038 = vpack.c.b16 %v2957, %v2956
    %v3039 = vpack.c.b16 %v2959, %v2958
    %v3040 = vpack.c.b16 %v2961, %v2960
    %v3041 = vpack.c.b16 %v2963, %v2962
    %v3042 = vpack.c.b16 %v2965, %v2964
    %v3043 = vpack.c.b16 %v2967, %v2966
    %v3044 = vpack.c.b16 %v2969, %v2968
    %v3045 = vpack.c.b16 %v2971, %v2970
    %v3046 = vpack.c.b16 %v2973, %v2972
    %v3047 = vpack.c.b16 %v2975, %v2974
    %v3048 = vpack.c.b16 %v2977, %v2976
    %v3049 = vpack.c.b16 %v2979, %v2978
    %v3050 = vpack.c.b16 %v2981, %v2980
    %v3051 = vpack.c.b16 %v2983, %v2982
    %v3052 = vpack.c.b16 %v2985, %v2984
    %v3053 = vpack.c.b16 %v2987, %v2986
    %v3054 = vpack.c.b16 %v2989, %v2988
    %v3055 = vpack.c.b16 %v2991, %v2990
    %3120 = vmatprep.subr.bf16.mxu0 0
    %3121 = vmatpush1.bf16.msra.mxu0 %v2992
    %3122 = vmatprep.subr.bf16.mxu0 0
    %3123 = vmatpush1.bf16.msra.mxu0 %v2993
    %3124 = vmatprep.subr.bf16.mxu0 0
    %3125 = vmatpush1.bf16.msra.mxu0 %v2994
    %3126 = vmatprep.subr.bf16.mxu0 0
    %3127 = vmatpush1.bf16.msra.mxu0 %v2995
    %3128 = vmatprep.subr.bf16.mxu0 0
    %3129 = vmatpush1.bf16.msra.mxu0 %v2996
    %3130 = vmatprep.subr.bf16.mxu0 0
    %3131 = vmatpush1.bf16.msra.mxu0 %v2997
    %3132 = vmatprep.subr.bf16.mxu0 0
    %3133 = vmatpush1.bf16.msra.mxu0 %v2998
    %3134 = vmatprep.subr.bf16.mxu0 0
    %3135 = vmatpush1.bf16.msra.mxu0 %v2999
    %3136 = vmatprep.subr.bf16.mxu0 0
    %3137 = vmatpush1.bf16.msra.mxu0 %v3000
    %3138 = vmatprep.subr.bf16.mxu0 0
    %3139 = vmatpush1.bf16.msra.mxu0 %v3001
    %3140 = vmatprep.subr.bf16.mxu0 0
    %3141 = vmatpush1.bf16.msra.mxu0 %v3002
    %3142 = vmatprep.subr.bf16.mxu0 0
    %3143 = vmatpush1.bf16.msra.mxu0 %v3003
    %3144 = vmatprep.subr.bf16.mxu0 0
    %3145 = vmatpush1.bf16.msra.mxu0 %v3004
    %3146 = vmatprep.subr.bf16.mxu0 0
    %3147 = vmatpush1.bf16.msra.mxu0 %v3005
    %3148 = vmatprep.subr.bf16.mxu0 0
    %3149 = vmatpush1.bf16.msra.mxu0 %v3006
    %3150 = vmatprep.subr.bf16.mxu0 0
    %3151 = vmatpush1.bf16.msra.mxu0 %v3007
    %3152 = vmatprep.mubr.bf16.mxu0 %v2594
    %3153 = vmatmul.mubr.bf16.gmra.mrb[0].mxu0 %v2593
    %v3154 = vpop.f32.mrb[0].mxu0
    %v3155 = vadd.f32 %v2734, %v3154
    %v3156 = vpop.f32.mrb[0].mxu0
    %v3157 = vpop.f32.mrb[0].mxu0
    %v3158 = vpop.f32.mrb[0].mxu0
    %3159 = vdwg.mxu0
    %3160 = vmatprep.subr.bf16.mxu0 0
    %3161 = vmatpush1.bf16.msra.mxu0 %v3008
    %3162 = vmatprep.subr.bf16.mxu0 0
    %3163 = vmatpush1.bf16.msra.mxu0 %v3009
    %3164 = vmatprep.subr.bf16.mxu0 0
    %3165 = vmatpush1.bf16.msra.mxu0 %v3010
    %3166 = vmatprep.subr.bf16.mxu0 0
    %3167 = vmatpush1.bf16.msra.mxu0 %v3011
    %3168 = vmatprep.subr.bf16.mxu0 0
    %3169 = vmatpush1.bf16.msra.mxu0 %v3012
    %3170 = vmatprep.subr.bf16.mxu0 0
    %3171 = vmatpush1.bf16.msra.mxu0 %v3013
    %3172 = vmatprep.subr.bf16.mxu0 0
    %3173 = vmatpush1.bf16.msra.mxu0 %v3014
    %3174 = vmatprep.subr.bf16.mxu0 0
    %3175 = vmatpush1.bf16.msra.mxu0 %v3015
    %3176 = vmatprep.subr.bf16.mxu0 0
    %3177 = vmatpush1.bf16.msra.mxu0 %v3016
    %3178 = vmatprep.subr.bf16.mxu0 0
    %3179 = vmatpush1.bf16.msra.mxu0 %v3017
    %3180 = vmatprep.subr.bf16.mxu0 0
    %3181 = vmatpush1.bf16.msra.mxu0 %v3018
    %3182 = vmatprep.subr.bf16.mxu0 0
    %3183 = vmatpush1.bf16.msra.mxu0 %v3019
    %3184 = vmatprep.subr.bf16.mxu0 0
    %3185 = vmatpush1.bf16.msra.mxu0 %v3020
    %3186 = vmatprep.subr.bf16.mxu0 0
    %3187 = vmatpush1.bf16.msra.mxu0 %v3021
    %3188 = vmatprep.subr.bf16.mxu0 0
    %3189 = vmatpush1.bf16.msra.mxu0 %v3022
    %3190 = vmatprep.subr.bf16.mxu0 0
    %3191 = vmatpush1.bf16.msra.mxu0 %v3023
    %3192 = vmatprep.mubr.bf16.mxu0 %v2596
    %3193 = vmatmul.mubr.bf16.gmra.mrb[0].mxu0 %v2595
    %v3194 = vpop.f32.mrb[0].mxu0
    %v3195 = vadd.f32 %v3155, %v3194
    %v3196 = vpop.f32.mrb[0].mxu0
    %v3197 = vpop.f32.mrb[0].mxu0
    %v3198 = vpop.f32.mrb[0].mxu0
    %3199 = vdwg.mxu0
    %3200 = vmatprep.subr.bf16.mxu0 0
    %3201 = vmatpush1.bf16.msra.mxu0 %v3024
    %3202 = vmatprep.subr.bf16.mxu0 0
    %3203 = vmatpush1.bf16.msra.mxu0 %v3025
    %3204 = vmatprep.subr.bf16.mxu0 0
    %3205 = vmatpush1.bf16.msra.mxu0 %v3026
    %3206 = vmatprep.subr.bf16.mxu0 0
    %3207 = vmatpush1.bf16.msra.mxu0 %v3027
    %3208 = vmatprep.subr.bf16.mxu0 0
    %3209 = vmatpush1.bf16.msra.mxu0 %v3028
    %3210 = vmatprep.subr.bf16.mxu0 0
    %3211 = vmatpush1.bf16.msra.mxu0 %v3029
    %3212 = vmatprep.subr.bf16.mxu0 0
    %3213 = vmatpush1.bf16.msra.mxu0 %v3030
    %3214 = vmatprep.subr.bf16.mxu0 0
    %3215 = vmatpush1.bf16.msra.mxu0 %v3031
    %3216 = vmatprep.subr.bf16.mxu0 0
    %3217 = vmatpush1.bf16.msra.mxu0 %v3032
    %3218 = vmatprep.subr.bf16.mxu0 0
    %3219 = vmatpush1.bf16.msra.mxu0 %v3033
    %3220 = vmatprep.subr.bf16.mxu0 0
    %3221 = vmatpush1.bf16.msra.mxu0 %v3034
    %3222 = vmatprep.subr.bf16.mxu0 0
    %3223 = vmatpush1.bf16.msra.mxu0 %v3035
    %3224 = vmatprep.subr.bf16.mxu0 0
    %3225 = vmatpush1.bf16.msra.mxu0 %v3036
    %3226 = vmatprep.subr.bf16.mxu0 0
    %3227 = vmatpush1.bf16.msra.mxu0 %v3037
    %3228 = vmatprep.subr.bf16.mxu0 0
    %3229 = vmatpush1.bf16.msra.mxu0 %v3038
    %3230 = vmatprep.subr.bf16.mxu0 0
    %3231 = vmatpush1.bf16.msra.mxu0 %v3039
    %3232 = vmatprep.mubr.bf16.mxu0 %v2598
    %3233 = vmatmul.mubr.bf16.gmra.mrb[0].mxu0 %v2597
    %v3234 = vpop.f32.mrb[0].mxu0
    %v3235 = vadd.f32 %v3195, %v3234
    %v3236 = vpop.f32.mrb[0].mxu0
    %v3237 = vpop.f32.mrb[0].mxu0
    %v3238 = vpop.f32.mrb[0].mxu0
    %3239 = vdwg.mxu0
    %3240 = vmatprep.subr.bf16.mxu0 0
    %3241 = vmatpush1.bf16.msra.mxu0 %v3040
    %3242 = vmatprep.subr.bf16.mxu0 0
    %3243 = vmatpush1.bf16.msra.mxu0 %v3041
    %3244 = vmatprep.subr.bf16.mxu0 0
    %3245 = vmatpush1.bf16.msra.mxu0 %v3042
    %3246 = vmatprep.subr.bf16.mxu0 0
    %3247 = vmatpush1.bf16.msra.mxu0 %v3043
    %3248 = vmatprep.subr.bf16.mxu0 0
    %3249 = vmatpush1.bf16.msra.mxu0 %v3044
    %3250 = vmatprep.subr.bf16.mxu0 0
    %3251 = vmatpush1.bf16.msra.mxu0 %v3045
    %3252 = vmatprep.subr.bf16.mxu0 0
    %3253 = vmatpush1.bf16.msra.mxu0 %v3046
    %3254 = vmatprep.subr.bf16.mxu0 0
    %3255 = vmatpush1.bf16.msra.mxu0 %v3047
    %3256 = vmatprep.subr.bf16.mxu0 0
    %3257 = vmatpush1.bf16.msra.mxu0 %v3048
    %3258 = vmatprep.subr.bf16.mxu0 0
    %3259 = vmatpush1.bf16.msra.mxu0 %v3049
    %3260 = vmatprep.subr.bf16.mxu0 0
    %3261 = vmatpush1.bf16.msra.mxu0 %v3050
    %3262 = vmatprep.subr.bf16.mxu0 0
    %3263 = vmatpush1.bf16.msra.mxu0 %v3051
    %3264 = vmatprep.subr.bf16.mxu0 0
    %3265 = vmatpush1.bf16.msra.mxu0 %v3052
    %3266 = vmatprep.subr.bf16.mxu0 0
    %3267 = vmatpush1.bf16.msra.mxu0 %v3053
    %3268 = vmatprep.subr.bf16.mxu0 0
    %3269 = vmatpush1.bf16.msra.mxu0 %v3054
    %3270 = vmatprep.subr.bf16.mxu0 0
    %3271 = vmatpush1.bf16.msra.mxu0 %v3055
    %3272 = vmatprep.mubr.bf16.mxu0 %v2600
    %3273 = vmatmul.mubr.bf16.gmra.mrb[0].mxu0 %v2599
    %v3274 = vpop.f32.mrb[0].mxu0
    %v3275 = vadd.f32 %v3235, %v3274
    %v3276 = vpop.f32.mrb[0].mxu0
    %v3277 = vpop.f32.mrb[0].mxu0
    %v3278 = vpop.f32.mrb[0].mxu0
    %3279 = vdwg.mxu0
    %vm3280 = vcmp.gt.f32.partialorder %v3275, 0.0
    %v3281 = vmul.f32 %v3275, 0.01
    %v3282 = vsel %vm3280, %v3275, %v3281
    %v3283 = vpack.c.bf16 %v3282, %v3282
    %v3284 = vld [vmem:[%s5] sm:$0xf]
    %v3285 = vld [vmem:[%s5 + $0x4] sm:$0xf]
    %v3286 = vld [vmem:[%s5 + $0x8] sm:$0xf]
    %v3287 = vld [vmem:[%s5 + $0xc] sm:$0xf]
    %v3288 = vld [vmem:[%s5 + $0x10] sm:$0xf]
    %v3289 = vld [vmem:[%s5 + $0x14] sm:$0xf]
    %v3290 = vld [vmem:[%s5 + $0x18] sm:$0xf]
    %v3291 = vld [vmem:[%s5 + $0x1c] sm:$0xf]
    %v3292 = vld [vmem:[#allocation8] sm:$0x1]
    %v3294 = vlaneseq
    %v3295 = vshrl.u32 %v3294, 7
    %v3296 = vsub.s32 0, %v3295
    %v3297 = vrot.slane %v3292, %v3296
    %v3307 = vunpack.c.l.b16 %v3284
    %v3308 = vunpack.c.l.b16 %v3285
    %v3309 = vunpack.c.l.b16 %v3286
    %v3310 = vunpack.c.l.b16 %v3287
    %v3311 = vunpack.c.l.b16 %v3288
    %v3312 = vunpack.c.l.b16 %v3289
    %v3313 = vunpack.c.l.b16 %v3290
    %v3314 = vunpack.c.l.b16 %v3291
    %v3315 = vpack.c.b16 %v3308, %v3307
    %v3316 = vpack.c.b16 %v3310, %v3309
    %v3317 = vpack.c.b16 %v3312, %v3311
    %v3318 = vpack.c.b16 %v3314, %v3313
    %vm3323 = vcmask 523264
    %v3325 = vsel %vm3323, %v3283, 0
    %3327 = vmatprep.subr.bf16.mxu0 0
    %3328 = vmatpush1.bf16.msra.mxu0 %v3315
    %3329 = vmatprep.subr.bf16.mxu0 0
    %3330 = vmatpush1.bf16.msra.mxu0 %v3316
    %3331 = vmatprep.subr.bf16.mxu0 0
    %3332 = vmatpush1.bf16.msra.mxu0 %v3317
    %3333 = vmatprep.subr.bf16.mxu0 0
    %3334 = vmatpush1.bf16.msra.mxu0 %v3318
    %3335 = vmatprep.subr.bf16.mxu0 0
    %3336 = vmatpush1.bf16.msra.mxu0 0
    %3337 = vmatprep.subr.bf16.mxu0 0
    %3338 = vmatpush1.bf16.msra.mxu0 0
    %3339 = vmatprep.subr.bf16.mxu0 0
    %3340 = vmatpush1.bf16.msra.mxu0 0
    %3341 = vmatprep.subr.bf16.mxu0 0
    %3342 = vmatpush1.bf16.msra.mxu0 0
    %3343 = vmatprep.subr.bf16.mxu0 0
    %3344 = vmatpush1.bf16.msra.mxu0 0
    %3345 = vmatprep.subr.bf16.mxu0 0
    %3346 = vmatpush1.bf16.msra.mxu0 0
    %3347 = vmatprep.subr.bf16.mxu0 0
    %3348 = vmatpush1.bf16.msra.mxu0 0
    %3349 = vmatprep.subr.bf16.mxu0 0
    %3350 = vmatpush1.bf16.msra.mxu0 0
    %3351 = vmatprep.subr.bf16.mxu0 0
    %3352 = vmatpush1.bf16.msra.mxu0 0
    %3353 = vmatprep.subr.bf16.mxu0 0
    %3354 = vmatpush1.bf16.msra.mxu0 0
    %3355 = vmatprep.subr.bf16.mxu0 0
    %3356 = vmatpush1.bf16.msra.mxu0 0
    %3357 = vmatprep.subr.bf16.mxu0 0
    %3358 = vmatpush1.bf16.msra.mxu0 0
    %3359 = vmatprep.mubr.bf16.mxu0 0
    %3360 = vmatmul.mubr.bf16.gmra.mrb[0].mxu0 %v3325
    %v3361 = vpop.f32.mrb[0].mxu0
    %v3362 = vadd.f32 %v3297, %v3361
    %v3363 = vpop.f32.mrb[0].mxu0
    %v3364 = vpop.f32.mrb[0].mxu0
    %v3365 = vpop.f32.mrb[0].mxu0
    %3366 = vdwg.mxu0
    %vm3367 = vcmp.gt.f32.partialorder %v3362, 0.0
    %v3368 = vmul.f32 %v3362, 0.01
    %v3369 = vsel %vm3367, %v3362, %v3368
    %vm3370 = vcmask 25600
    %3371 = vst.msk [vmem:[#allocation10] sm:$0x3] %vm3370, %v3369
    // Predicated region
    $region46: #{xp2label_seg_forward.3} parent=1 // pred_check
      _
    $region47: #{xp2label_seg_forward.3} parent=1 // pred_check_branch
      %3373 = sbr.rel (0) target = $region49
    $region48: #{xp2label_seg_forward.3} parent=1 // pred_region
      %s3375 = ssub.s32 32, 32
      %3376 = vsyncadd [#allocation4], %s3375
      %s3378 = sshll.u32 [#allocation10], 4
      %s3379 = int_to_ptr.vmem [resolvable:$true] %s3378
      %3381 = dma.vmem_to_hbm [thread:$0]  %s3379, 32, %s7, [#allocation4]
    $region49: #{xp2label_seg_forward.3} parent=1 // pred_fallthru
      _
    // Predicated region
    $region50: #{xp2label_seg_forward.3} parent=1 // pred_check
      _
    $region51: #{xp2label_seg_forward.3} parent=1 // pred_check_branch
      %3383 = sbr.rel (0) target = $region53
    $region52: #{xp2label_seg_forward.3} parent=1 // pred_region
      %3384 = dma.done [#allocation4], 32
    $region53: #{xp2label_seg_forward.3} parent=1 // pred_fallthru
      _
    %3385 = vsyncpa [#allocation3], 1
    %3386 = vsyncpa [#allocation6], 1
    %3387 = vsyncpa [#allocation9], 1
    %3388 = vsyncpa [#allocation4], 1

</llo_original>
